<compile_context>
chip_gen: v5e
topology: v5e:2x2
jax: 0.10.0
libtpu: 0.0.40
codegen_flags: <defaults>
</compile_context>

<pallas_src>
import functools
import math

import jax
import jax.numpy as jnp
from jax import lax
from jax.experimental import pallas as pl
from jax.experimental.pallas import tpu as pltpu


def _round_up(x, m):
    return ((x + m - 1) // m) * m


# --------------------------------------------------------------------------
# Kernel 1: fused backbone patch-embed + proj_head
# --------------------------------------------------------------------------

def _backbone_proj_kernel(x_ref, bw_ref, bb_ref, pw_ref, pb_ref, o_ref):
    h = jnp.dot(x_ref[...], bw_ref[...], preferred_element_type=jnp.float32)
    h = jnp.maximum(h + bb_ref[...], 0.0)
    # bf16 second matmul (f32 accumulation): 2-4x MXU rate vs f32 x f32.
    o_ref[...] = (jnp.dot(h.astype(jnp.bfloat16), pw_ref[...],
                          preferred_element_type=jnp.float32) + pb_ref[...])


def backbone_proj(x, bw, bb, pw, pb):
    m, kin = x.shape
    hid = bw.shape[1]
    feat = pw.shape[1]
    # Fixed row tile (pipeline-friendly, VMEM independent of m).  bm multiple
    # of 16 (bf16 sublane tiling); pad m up so every block is full.
    bm = 512 if m >= 512 else _round_up(m, 16)
    m_pad = _round_up(m, bm)
    if m_pad != m:
        x = jnp.concatenate([x, jnp.zeros((m_pad - m, kin), x.dtype)], axis=0)
    grid = (m_pad // bm,)
    out = pl.pallas_call(
        _backbone_proj_kernel,
        out_shape=jax.ShapeDtypeStruct((m_pad, feat), jnp.float32),
        grid=grid,
        in_specs=[
            pl.BlockSpec((bm, kin), lambda i: (i, 0)),     # x tile (bf16)
            pl.BlockSpec((kin, hid), lambda i: (0, 0)),    # resident weight
            pl.BlockSpec((1, hid), lambda i: (0, 0)),
            pl.BlockSpec((hid, feat), lambda i: (0, 0)),   # resident weight
            pl.BlockSpec((1, feat), lambda i: (0, 0)),
        ],
        out_specs=pl.BlockSpec((bm, feat), lambda i: (i, 0)),
        compiler_params=pltpu.CompilerParams(
            dimension_semantics=("parallel",),
            vmem_limit_bytes=32 * 1024 * 1024),
    )(x, bw, bb, pw, pb)
    return out[:m] if m_pad != m else out


# --------------------------------------------------------------------------
# Kernel 2: fused bidirectional recurrent loop + online CE loss
#   grid axis = direction (forward / backward).
# --------------------------------------------------------------------------

def _bidir_kernel(xseq_ref, gt_ref, wxh_ref, woh_ref, b3_ref,
                  w1_ref, b1_ref, w2_ref, b2_ref, mb_ref,
                  loss_ref, *, T, P, rows, F):
    bf16 = jnp.bfloat16
    # Per-direction weights stay resident for the whole recurrence (bf16).
    wxh = wxh_ref[...]            # (2F, 3F)  [x | h] x [update | reset | out]
    woh = woh_ref[...]            # (F, F)    out-gate weight applied to reset*h
    bu = b3_ref[:, 0 * F:1 * F]   # lane slices at 128-multiples -> tile aligned
    br = b3_ref[:, 1 * F:2 * F]
    bo = b3_ref[:, 2 * F:3 * F]
    w1 = w1_ref[...]
    b1 = b1_ref[...]
    w2 = w2_ref[...]
    b2 = b2_ref[...]
    mb = mb_ref[...]
    gt = gt_ref[...]              # (F, P*rows) f32

    def gru_step(x, h):
        # Single fused MXU pass for x- and h-gates (contraction = [x | h]).
        xh = jnp.concatenate([x.astype(bf16), h.astype(bf16)], axis=1)
        g = jnp.dot(xh, wxh, preferred_element_type=jnp.float32)   # (rows, 3F)
        update = jax.nn.sigmoid(g[:, 0 * F:1 * F] + bu)
        reset = jax.nn.sigmoid(g[:, 1 * F:2 * F] + br)
        out = jnp.tanh(g[:, 2 * F:3 * F]
                       + jnp.dot((h * reset).astype(bf16), woh,
                                 preferred_element_type=jnp.float32)
                       + bo)
        return h * (1.0 - update) + out * update

    def predict(h):
        z = jnp.maximum(
            jnp.dot(h.astype(bf16), w1, preferred_element_type=jnp.float32)
            + b1, 0.0)
        logits = jnp.dot(z.astype(bf16), w2,
                         preferred_element_type=jnp.float32) + b2
        m = jnp.max(logits, axis=-1, keepdims=True)
        e = jnp.exp(logits - m)
        s = jnp.sum(e, axis=-1, keepdims=True)
        # softmax divide after the memory-bank matmul; reciprocal -> EUP slot.
        num = jnp.dot(e.astype(bf16), mb, preferred_element_type=jnp.float32)
        return num * pl.reciprocal(s, approx=True)                 # (rows, F)

    # ---- encode phase: ConvGRU over the T context steps -------------------
    # TODO(synk): switch to lax.fori_loop(..., unroll=True) if T/P grow large.
    h = jnp.zeros((rows, F), jnp.float32)
    for t in range(T):
        h = gru_step(jnp.maximum(xseq_ref[t], 0.0), h)

    # ---- prediction phase + online contrastive CE --------------------------
    M = P * rows
    loss_acc = jnp.zeros((1, 1), jnp.float32)
    for j in range(P):
        pd = predict(h)
        sc = jnp.dot(pd, gt, preferred_element_type=jnp.float32)   # (rows, M)
        mmax = jnp.max(sc, axis=-1, keepdims=True)
        lse = jnp.log(jnp.sum(jnp.exp(sc - mmax), axis=-1,
                              keepdims=True)) + mmax
        cidx = lax.broadcasted_iota(jnp.int32, sc.shape, 1)
        ridx = lax.broadcasted_iota(jnp.int32, sc.shape, 0) + j * rows
        diag = jnp.sum(jnp.where(cidx == ridx, sc, 0.0), axis=-1,
                       keepdims=True)
        loss_acc = loss_acc + jnp.sum(lse - diag, axis=0, keepdims=True)
        if j < P - 1:
            h = gru_step(jnp.maximum(pd, 0.0), h)

    loss_ref[...] = (loss_acc / float(M)).reshape(1, 1, 1)


def bidir_recurrent_loss(x_seq, gt_mat, params, cfg, core_parallel):
    nd, T, rows, F_p = x_seq.shape
    P = cfg["pred_step"]
    mem = params["pred_w2"].shape[1]
    kernel = functools.partial(_bidir_kernel, T=T, P=P, rows=rows, F=F_p)

    if core_parallel and hasattr(pltpu, "CORE_PARALLEL"):
        dim_sem = (pltpu.CORE_PARALLEL,)   # split directions across v7x's 2 TCs
    else:
        dim_sem = ("parallel",)

    return pl.pallas_call(
        kernel,
        out_shape=jax.ShapeDtypeStruct((nd, 1, 1), jnp.float32),
        grid=(nd,),
        in_specs=[
            pl.BlockSpec((None, T, rows, F_p), lambda d: (d, 0, 0, 0)),     # x_seq
            pl.BlockSpec((None, F_p, P * rows), lambda d: (d, 0, 0)),       # gt
            pl.BlockSpec((None, 2 * F_p, 3 * F_p), lambda d: (d, 0, 0)),    # gru wxh
            pl.BlockSpec((None, F_p, F_p), lambda d: (d, 0, 0)),            # gru woh
            pl.BlockSpec((None, 1, 3 * F_p), lambda d: (d, 0, 0)),          # gru bias
            pl.BlockSpec((F_p, F_p), lambda d: (0, 0)),                     # pred w1
            pl.BlockSpec((1, F_p), lambda d: (0, 0)),                       # pred b1
            pl.BlockSpec((F_p, mem), lambda d: (0, 0)),                     # pred w2
            pl.BlockSpec((1, mem), lambda d: (0, 0)),                       # pred b2
            pl.BlockSpec((mem, F_p), lambda d: (0, 0)),                     # mem bank
        ],
        out_specs=pl.BlockSpec((1, 1, 1), lambda d: (d, 0, 0)),
        compiler_params=pltpu.CompilerParams(
            dimension_semantics=dim_sem,
            vmem_limit_bytes=32 * 1024 * 1024),
    )(x_seq, gt_mat,
      params["gru_wxh"], params["gru_woh"], params["gru_b3"],
      params["pred_w1"], params["pred_b1"], params["pred_w2"],
      params["pred_b2"], params["mb"])


# --------------------------------------------------------------------------
# Parameter init (deterministic, synthetic).  Feature/hidden dims are zero-
# padded to 128 lanes -> identical math (padded lanes stay exactly zero).
# --------------------------------------------------------------------------

def init_params(key, cfg, C):
    F_log = cfg["feature_size"]
    Hd_log = cfg["hidden_size"]
    mem = cfg["mem_size"]
    kt = cfg["temporal_stride"]
    ks = cfg["spatial_stride"]
    F_p = _round_up(F_log, 128)
    Hd_p = _round_up(Hd_log, 128)

    keys = jax.random.split(key, 8)

    def w(k, shape, scale=0.1):
        return (scale * jax.random.normal(k, shape)).astype(jnp.float32)

    def pad2(a, r, c):
        return jnp.pad(a, ((0, r - a.shape[0]), (0, c - a.shape[1])))

    def gru_packed(k):
        kk = jax.random.split(k, 6)
        wu_x = w(kk[0], (F_log, F_log))
        wr_x = w(kk[1], (F_log, F_log))
        wo_x = w(kk[2], (F_log, F_log))
        wu_h = w(kk[3], (F_log, F_log))
        wr_h = w(kk[4], (F_log, F_log))
        wo_h = w(kk[5], (F_log, F_log))
        # Fused [x | h] @ [update | reset | out] weight.  The out-gate h part
        # is the separate woh applied to (reset * h) -> that block stays zero.
        wxh = jnp.zeros((2 * F_p, 3 * F_p), jnp.float32)
        wxh = wxh.at[:F_log, 0 * F_p:0 * F_p + F_log].set(wu_x)
        wxh = wxh.at[:F_log, 1 * F_p:1 * F_p + F_log].set(wr_x)
        wxh = wxh.at[:F_log, 2 * F_p:2 * F_p + F_log].set(wo_x)
        wxh = wxh.at[F_p:F_p + F_log, 0 * F_p:0 * F_p + F_log].set(wu_h)
        wxh = wxh.at[F_p:F_p + F_log, 1 * F_p:1 * F_p + F_log].set(wr_h)
        woh = pad2(wo_h, F_p, F_p)
        b3 = jnp.zeros((1, 3 * F_p), jnp.float32)      # [bu | br | bo] = 0
        return wxh.astype(jnp.bfloat16), woh.astype(jnp.bfloat16), b3

    fwxh, fwoh, fb3 = gru_packed(keys[3])
    bwxh, bwoh, bb3 = gru_packed(keys[4])

    kin = C * kt * ks * ks
    backbone_w = pad2(w(keys[0], (kin, Hd_log), scale=0.02), kin, Hd_p)
    proj_w = pad2(w(keys[1], (Hd_log, F_log)), Hd_p, F_p)
    mb = pad2(jax.random.normal(keys[2], (mem, F_log), dtype=jnp.float32),
              mem, F_p)
    pred_w1 = pad2(w(keys[5], (F_log, F_log)), F_p, F_p)
    pred_w2 = pad2(w(keys[6], (F_log, mem)), F_p, mem)

    return dict(
        backbone_w=backbone_w.astype(jnp.bfloat16),
        backbone_b=jnp.zeros((1, Hd_p), jnp.float32),
        proj_w=proj_w.astype(jnp.bfloat16),
        proj_b=jnp.zeros((1, F_p), jnp.float32),
        mb=mb.astype(jnp.bfloat16),
        gru_wxh=jnp.stack([fwxh, bwxh]),     # (2, 2F, 3F) bf16 [agg_f, agg_b]
        gru_woh=jnp.stack([fwoh, bwoh]),     # (2, F, F)   bf16
        gru_b3=jnp.stack([fb3, bb3]),        # (2, 1, 3F)  f32
        pred_w1=pred_w1.astype(jnp.bfloat16),
        pred_b1=jnp.zeros((1, F_p), jnp.float32),
        pred_w2=pred_w2.astype(jnp.bfloat16),
        pred_b2=jnp.zeros((1, mem), jnp.float32),
    )


# --------------------------------------------------------------------------
# Forward pass (layout glue in JAX, compute in 2 Pallas kernels)
# --------------------------------------------------------------------------

def memdpc_bd_forward(imgs, params, cfg, core_parallel=False):
    B, N, C, SL, H, W = imgs.shape
    F_p = params["proj_w"].shape[1]     # lane-padded feature size
    P = cfg["pred_step"]
    kt = cfg["temporal_stride"]
    ks = cfg["spatial_stride"]

    T_out = SL // kt
    hh = H // ks
    ww = W // ks
    hw = hh * ww
    assert T_out == int(math.ceil(SL / kt))   # last_duration
    assert N > P

    # ---- backbone patch rearrangement (contraction axis lane-contiguous)
    #      + fused backbone/proj kernel ----
    x = imgs.astype(jnp.bfloat16).reshape(B * N, C, T_out, kt, hh, ks, ww, ks)
    x = jnp.transpose(x, (0, 2, 4, 6, 1, 3, 5, 7))
    x = x.reshape(B * N * T_out * hh * ww, C * kt * ks * ks)
    feat = backbone_proj(x, params["backbone_w"], params["backbone_b"],
                         params["proj_w"], params["proj_b"])        # (rows, F_p)

    # ---- avg_pool3d over the temporal window (last_duration, 1, 1) ----
    feat = feat.reshape(B, N, T_out, hh, ww, F_p)
    feat = jnp.mean(feat, axis=2)                                   # (B,N,h,w,F)

    # gt matches gt = feat3d.permute(2,0,1,3,4).view(F, B, N, hw)
    gt = jnp.transpose(feat, (4, 0, 1, 2, 3)).reshape(F_p, B, N, hw)
    feat_b = jnp.flip(feat, axis=1)
    gt_b = jnp.flip(gt, axis=2)

    T = N - P
    rows = B * hw

    def seq_of(fd):                       # (B, N, h, w, F) -> (T, B*hw, F)
        return jnp.transpose(fd[:, :T], (1, 0, 2, 3, 4)).reshape(T, rows, F_p)

    def gt_of(gd):                        # (F, B, N, hw) -> (F, P*B*hw)
        g = gd[:, :, N - P:, :]                                     # (F,B,P,hw)
        return jnp.transpose(g, (0, 2, 1, 3)).reshape(F_p, P * rows)

    # Both directions stacked along a leading axis.  Pred and gt sides use the
    # same (j, b, hw) ordering; the CE loss is invariant to this shared
    # permutation of the reference's (b, j, hw) ordering (diagonal stays
    # aligned, logsumexp/mean are permutation-invariant).
    x_seq = jnp.stack([seq_of(feat), seq_of(feat_b)], axis=0)       # (2,T,rows,F)
    gt_mat = jnp.stack([gt_of(gt), gt_of(gt_b)], axis=0)            # (2,F,P*rows)

    losses = bidir_recurrent_loss(x_seq, gt_mat, params, cfg,
                                  core_parallel)                    # (2, 1, 1)
    return {"loss_ce": jnp.sum(losses)}


# --------------------------------------------------------------------------

if __name__ == "__main__":
    # Small shapes consistent with the module:
    #   sample_size=32, spatial_downsample_stride=16 -> last_size=2
    #   seq_len=4, temporal_downsample_stride=4      -> last_duration=1
    #   num_seq=8, pred_step=3, feature=hidden=32, mem=128
    B, N, C, SL, H, W = 2, 8, 3, 4, 32, 32
    cfg = dict(feature_size=32, hidden_size=32, mem_size=128, pred_step=3,
               temporal_stride=4, spatial_stride=16)

    key = jax.random.PRNGKey(0)
    k_img, k_par = jax.random.split(key)
    imgs = jax.random.normal(k_img, (B, N, C, SL, H, W), dtype=jnp.float32)
    params = init_params(k_par, cfg, C)

    def run(core_parallel):
        fwd = jax.jit(lambda im, p: memdpc_bd_forward(im, p, cfg,
                                                      core_parallel))
        out = fwd(imgs, params)
        jax.block_until_ready(out)
        if not bool(jnp.isfinite(out["loss_ce"])):
            raise FloatingPointError("non-finite loss")
        return out

    try:
        # Prefer CORE_PARALLEL so the two directions split across v7x's 2 TCs.
        out = run(True)
    except Exception:
        # Single-TC parts / older jax: plain "parallel" direction axis.
        out = run(False)

    print("KERNEL_OK")
</pallas_src>

<mosaic_0001>
module attributes {stable_mosaic.version = 11 : i64} {
  func.func @_backbone_proj_kernel(%arg0: i32, %arg1: memref<64x3072xbf16, #tpu.memory_space<vmem>>, %arg2: memref<3072x128xbf16, #tpu.memory_space<vmem>>, %arg3: memref<1x128xf32, #tpu.memory_space<vmem>>, %arg4: memref<128x128xbf16, #tpu.memory_space<vmem>>, %arg5: memref<1x128xf32, #tpu.memory_space<vmem>>, %arg6: memref<64x128xf32, #tpu.memory_space<vmem>>) attributes {dimension_semantics = [#tpu.dimension_semantics<parallel>], iteration_bounds = array<i64: 1>, scalar_prefetch = 0 : i64, scratch_operands = 0 : i64, tpu.core_type = #tpu.core_type<tc>, window_params = [{transform_indices = @transform_0, window_bounds = array<i64: 64, 3072>}, {pipeline_mode = #tpu.pipeline_mode<synchronous>, transform_indices = @transform_1, window_bounds = array<i64: 3072, 128>}, {pipeline_mode = #tpu.pipeline_mode<synchronous>, transform_indices = @transform_2, window_bounds = array<i64: 1, 128>}, {pipeline_mode = #tpu.pipeline_mode<synchronous>, transform_indices = @transform_3, window_bounds = array<i64: 128, 128>}, {pipeline_mode = #tpu.pipeline_mode<synchronous>, transform_indices = @transform_4, window_bounds = array<i64: 1, 128>}, {transform_indices = @transform_5, window_bounds = array<i64: 64, 128>}]} {
    %c0 = arith.constant 0 : index
    %c0_0 = arith.constant 0 : index
    %0 = vector.load %arg1[%c0, %c0_0] : memref<64x3072xbf16, #tpu.memory_space<vmem>>, vector<64x3072xbf16>
    %c0_1 = arith.constant 0 : index
    %c0_2 = arith.constant 0 : index
    %1 = vector.load %arg2[%c0_1, %c0_2] : memref<3072x128xbf16, #tpu.memory_space<vmem>>, vector<3072x128xbf16>
    %cst = arith.constant dense<0.000000e+00> : vector<64x128xf32>
    %2 = tpu.matmul %0, %1, %cst {dimension_numbers = #tpu.dot_dimension_numbers<[1], [0], [0], [1], [0, 0, 1, 1], [], []>} : vector<64x3072xbf16>, vector<3072x128xbf16>, vector<64x128xf32> -> vector<64x128xf32>
    %c0_3 = arith.constant 0 : index
    %c0_4 = arith.constant 0 : index
    %3 = vector.load %arg3[%c0_3, %c0_4] : memref<1x128xf32, #tpu.memory_space<vmem>>, vector<1x128xf32>
    %4 = vector.broadcast %3 : vector<1x128xf32> to vector<64x128xf32>
    %5 = arith.addf %2, %4 : vector<64x128xf32>
    %cst_5 = arith.constant 0.000000e+00 : f32
    %6 = vector.broadcast %cst_5 : f32 to vector<64x128xf32>
    %7 = arith.maximumf %5, %6 : vector<64x128xf32>
    %8 = arith.truncf %7 : vector<64x128xf32> to vector<64x128xbf16>
    %c0_6 = arith.constant 0 : index
    %c0_7 = arith.constant 0 : index
    %9 = vector.load %arg4[%c0_6, %c0_7] : memref<128x128xbf16, #tpu.memory_space<vmem>>, vector<128x128xbf16>
    %cst_8 = arith.constant dense<0.000000e+00> : vector<64x128xf32>
    %10 = tpu.matmul %8, %9, %cst_8 {dimension_numbers = #tpu.dot_dimension_numbers<[1], [0], [0], [1], [0, 0, 1, 1], [], []>} : vector<64x128xbf16>, vector<128x128xbf16>, vector<64x128xf32> -> vector<64x128xf32>
    %c0_9 = arith.constant 0 : index
    %c0_10 = arith.constant 0 : index
    %11 = vector.load %arg5[%c0_9, %c0_10] : memref<1x128xf32, #tpu.memory_space<vmem>>, vector<1x128xf32>
    %12 = vector.broadcast %11 : vector<1x128xf32> to vector<64x128xf32>
    %13 = arith.addf %10, %12 : vector<64x128xf32>
    %c0_11 = arith.constant 0 : index
    %c0_12 = arith.constant 0 : index
    %14 = vector.load %arg6[%c0_11, %c0_12] : memref<64x128xf32, #tpu.memory_space<vmem>>, vector<64x128xf32>
    tpu.vector_store %arg6[%c0_11, %c0_12], %13 {strides = array<i32>} : memref<64x128xf32, #tpu.memory_space<vmem>>, vector<64x128xf32>,
    return
  }
  func.func @transform_0(%arg0: i32) -> (i32, i32) {
    %c0_i32 = arith.constant 0 : i32
    %c0_i32_0 = arith.constant 0 : i32
    return %arg0, %c0_i32 : i32, i32
  }
  func.func @transform_1(%arg0: i32) -> (i32, i32) {
    %c0_i32 = arith.constant 0 : i32
    %c0_i32_0 = arith.constant 0 : i32
    %c0_i32_1 = arith.constant 0 : i32
    return %c0_i32, %c0_i32_0 : i32, i32
  }
  func.func @transform_2(%arg0: i32) -> (i32, i32) {
    %c0_i32 = arith.constant 0 : i32
    %c0_i32_0 = arith.constant 0 : i32
    %c0_i32_1 = arith.constant 0 : i32
    return %c0_i32, %c0_i32_0 : i32, i32
  }
  func.func @transform_3(%arg0: i32) -> (i32, i32) {
    %c0_i32 = arith.constant 0 : i32
    %c0_i32_0 = arith.constant 0 : i32
    %c0_i32_1 = arith.constant 0 : i32
    return %c0_i32, %c0_i32_0 : i32, i32
  }
  func.func @transform_4(%arg0: i32) -> (i32, i32) {
    %c0_i32 = arith.constant 0 : i32
    %c0_i32_0 = arith.constant 0 : i32
    %c0_i32_1 = arith.constant 0 : i32
    return %c0_i32, %c0_i32_0 : i32, i32
  }
  func.func @transform_5(%arg0: i32) -> (i32, i32) {
    %c0_i32 = arith.constant 0 : i32
    %c0_i32_0 = arith.constant 0 : i32
    return %arg0, %c0_i32 : i32, i32
  }
}

module attributes {stable_mosaic.version = 11 : i64} {
  func.func @_bidir_kernel(%arg0: i32, %arg1: memref<1x5x8x128xf32, #tpu.memory_space<vmem>>, %arg2: memref<1x128x24xf32, #tpu.memory_space<vmem>>, %arg3: memref<1x256x384xbf16, #tpu.memory_space<vmem>>, %arg4: memref<1x128x128xbf16, #tpu.memory_space<vmem>>, %arg5: memref<1x1x384xf32, #tpu.memory_space<vmem>>, %arg6: memref<128x128xbf16, #tpu.memory_space<vmem>>, %arg7: memref<1x128xf32, #tpu.memory_space<vmem>>, %arg8: memref<128x128xbf16, #tpu.memory_space<vmem>>, %arg9: memref<1x128xf32, #tpu.memory_space<vmem>>, %arg10: memref<128x128xbf16, #tpu.memory_space<vmem>>, %arg11: memref<1x1x1xf32, #tpu.memory_space<vmem>>) attributes {dimension_semantics = [#tpu.dimension_semantics<core_parallel>], iteration_bounds = array<i64: 2>, scalar_prefetch = 0 : i64, scratch_operands = 0 : i64, tpu.core_type = #tpu.core_type<tc>, window_params = [{transform_indices = @transform_0, window_bounds = array<i64: 1, 5, 8, 128>}, {transform_indices = @transform_1, window_bounds = array<i64: 1, 128, 24>}, {transform_indices = @transform_2, window_bounds = array<i64: 1, 256, 384>}, {transform_indices = @transform_3, window_bounds = array<i64: 1, 128, 128>}, {transform_indices = @transform_4, window_bounds = array<i64: 1, 1, 384>}, {pipeline_mode = #tpu.pipeline_mode<synchronous>, transform_indices = @transform_5, window_bounds = array<i64: 128, 128>}, {pipeline_mode = #tpu.pipeline_mode<synchronous>, transform_indices = @transform_6, window_bounds = array<i64: 1, 128>}, {pipeline_mode = #tpu.pipeline_mode<synchronous>, transform_indices = @transform_7, window_bounds = array<i64: 128, 128>}, {pipeline_mode = #tpu.pipeline_mode<synchronous>, transform_indices = @transform_8, window_bounds = array<i64: 1, 128>}, {pipeline_mode = #tpu.pipeline_mode<synchronous>, transform_indices = @transform_9, window_bounds = array<i64: 128, 128>}, {transform_indices = @transform_10, window_bounds = array<i64: 1, 1, 1>}]} {
    %c0 = arith.constant 0 : index
    %c0_0 = arith.constant 0 : index
    %c0_1 = arith.constant 0 : index
    %0 = vector.load %arg3[%c0, %c0_0, %c0_1] : memref<1x256x384xbf16, #tpu.memory_space<vmem>>, vector<1x256x384xbf16>
    %1 = vector.shape_cast %0 : vector<1x256x384xbf16> to vector<256x384xbf16>
    %c0_2 = arith.constant 0 : index
    %c0_3 = arith.constant 0 : index
    %c0_4 = arith.constant 0 : index
    %2 = vector.load %arg4[%c0_2, %c0_3, %c0_4] : memref<1x128x128xbf16, #tpu.memory_space<vmem>>, vector<1x128x128xbf16>
    %3 = vector.shape_cast %2 : vector<1x128x128xbf16> to vector<128x128xbf16>
    %c0_5 = arith.constant 0 : index
    %c0_6 = arith.constant 0 : index
    %c0_7 = arith.constant 0 : index
    %4 = vector.load %arg5[%c0_5, %c0_6, %c0_7] : memref<1x1x384xf32, #tpu.memory_space<vmem>>, vector<1x1x128xf32>
    %5 = vector.shape_cast %4 : vector<1x1x128xf32> to vector<1x128xf32>
    %c0_8 = arith.constant 0 : index
    %c0_9 = arith.constant 0 : index
    %c128 = arith.constant 128 : index
    %6 = vector.load %arg5[%c0_8, %c0_9, %c128] : memref<1x1x384xf32, #tpu.memory_space<vmem>>, vector<1x1x128xf32>
    %7 = vector.shape_cast %6 : vector<1x1x128xf32> to vector<1x128xf32>
    %c0_10 = arith.constant 0 : index
    %c0_11 = arith.constant 0 : index
    %c256 = arith.constant 256 : index
    %8 = vector.load %arg5[%c0_10, %c0_11, %c256] : memref<1x1x384xf32, #tpu.memory_space<vmem>>, vector<1x1x128xf32>
    %9 = vector.shape_cast %8 : vector<1x1x128xf32> to vector<1x128xf32>
    %c0_12 = arith.constant 0 : index
    %c0_13 = arith.constant 0 : index
    %10 = vector.load %arg6[%c0_12, %c0_13] : memref<128x128xbf16, #tpu.memory_space<vmem>>, vector<128x128xbf16>
    %c0_14 = arith.constant 0 : index
    %c0_15 = arith.constant 0 : index
    %11 = vector.load %arg7[%c0_14, %c0_15] : memref<1x128xf32, #tpu.memory_space<vmem>>, vector<1x128xf32>
    %c0_16 = arith.constant 0 : index
    %c0_17 = arith.constant 0 : index
    %12 = vector.load %arg8[%c0_16, %c0_17] : memref<128x128xbf16, #tpu.memory_space<vmem>>, vector<128x128xbf16>
    %c0_18 = arith.constant 0 : index
    %c0_19 = arith.constant 0 : index
    %13 = vector.load %arg9[%c0_18, %c0_19] : memref<1x128xf32, #tpu.memory_space<vmem>>, vector<1x128xf32>
    %c0_20 = arith.constant 0 : index
    %c0_21 = arith.constant 0 : index
    %14 = vector.load %arg10[%c0_20, %c0_21] : memref<128x128xbf16, #tpu.memory_space<vmem>>, vector<128x128xbf16>
    %c0_22 = arith.constant 0 : index
    %c0_23 = arith.constant 0 : index
    %c0_24 = arith.constant 0 : index
    %15 = vector.load %arg2[%c0_22, %c0_23, %c0_24] : memref<1x128x24xf32, #tpu.memory_space<vmem>>, vector<1x128x24xf32>
    %16 = vector.shape_cast %15 : vector<1x128x24xf32> to vector<128x24xf32>
    %cst = arith.constant 0.000000e+00 : f32
    %17 = vector.broadcast %cst : f32 to vector<8x128xf32>
    %c0_25 = arith.constant 0 : index
    %c0_26 = arith.constant 0 : index
    %c0_27 = arith.constant 0 : index
    %c0_28 = arith.constant 0 : index
    %18 = vector.load %arg1[%c0_25, %c0_26, %c0_27, %c0_28] : memref<1x5x8x128xf32, #tpu.memory_space<vmem>>, vector<1x1x8x128xf32>
    %19 = vector.shape_cast %18 : vector<1x1x8x128xf32> to vector<8x128xf32>
    %cst_29 = arith.constant 0.000000e+00 : f32
    %20 = vector.broadcast %cst_29 : f32 to vector<8x128xf32>
    %21 = arith.maximumf %19, %20 : vector<8x128xf32>
    %22 = arith.truncf %21 : vector<8x128xf32> to vector<8x128xbf16>
    %23 = arith.truncf %17 : vector<8x128xf32> to vector<8x128xbf16>
    %24 = tpu.concatenate %22, %23 in 1 : vector<8x128xbf16>, vector<8x128xbf16> -> vector<8x256xbf16>
    %cst_30 = arith.constant dense<0.000000e+00> : vector<8x384xf32>
    %25 = tpu.matmul %24, %1, %cst_30 {dimension_numbers = #tpu.dot_dimension_numbers<[1], [0], [0], [1], [0, 0, 1, 1], [], []>} : vector<8x256xbf16>, vector<256x384xbf16>, vector<8x384xf32> -> vector<8x384xf32>
    %26 = vector.extract_strided_slice %25 {offsets = [0, 0], sizes = [8, 128], strides = [1, 1]} : vector<8x384xf32> to vector<8x128xf32>
    %27 = vector.broadcast %5 : vector<1x128xf32> to vector<8x128xf32>
    %28 = arith.addf %26, %27 : vector<8x128xf32>
    %29 = arith.negf %28 : vector<8x128xf32>
    %30 = math.exp %29 : vector<8x128xf32>
    %cst_31 = arith.constant 1.000000e+00 : f32
    %31 = vector.broadcast %cst_31 : f32 to vector<8x128xf32>
    %32 = arith.addf %31, %30 : vector<8x128xf32>
    %33 = arith.divf %31, %32 : vector<8x128xf32>
    %34 = vector.extract_strided_slice %25 {offsets = [0, 128], sizes = [8, 128], strides = [1, 1]} : vector<8x384xf32> to vector<8x128xf32>
    %35 = vector.broadcast %7 : vector<1x128xf32> to vector<8x128xf32>
    %36 = arith.addf %34, %35 : vector<8x128xf32>
    %37 = arith.negf %36 : vector<8x128xf32>
    %38 = math.exp %37 : vector<8x128xf32>
    %cst_32 = arith.constant 1.000000e+00 : f32
    %39 = vector.broadcast %cst_32 : f32 to vector<8x128xf32>
    %40 = arith.addf %39, %38 : vector<8x128xf32>
    %41 = arith.divf %39, %40 : vector<8x128xf32>
    %42 = vector.extract_strided_slice %25 {offsets = [0, 256], sizes = [8, 128], strides = [1, 1]} : vector<8x384xf32> to vector<8x128xf32>
    %43 = arith.mulf %17, %41 : vector<8x128xf32>
    %44 = arith.truncf %43 : vector<8x128xf32> to vector<8x128xbf16>
    %cst_33 = arith.constant dense<0.000000e+00> : vector<8x128xf32>
    %45 = tpu.matmul %44, %3, %cst_33 {dimension_numbers = #tpu.dot_dimension_numbers<[1], [0], [0], [1], [0, 0, 1, 1], [], []>} : vector<8x128xbf16>, vector<128x128xbf16>, vector<8x128xf32> -> vector<8x128xf32>
    %46 = arith.addf %42, %45 : vector<8x128xf32>
    %47 = vector.broadcast %9 : vector<1x128xf32> to vector<8x128xf32>
    %48 = arith.addf %46, %47 : vector<8x128xf32>
    %49 = math.tanh %48 : vector<8x128xf32>
    %cst_34 = arith.constant 1.000000e+00 : f32
    %50 = vector.broadcast %cst_34 : f32 to vector<8x128xf32>
    %51 = arith.subf %50, %33 : vector<8x128xf32>
    %52 = arith.mulf %17, %51 : vector<8x128xf32>
    %53 = arith.mulf %49, %33 : vector<8x128xf32>
    %54 = arith.addf %52, %53 : vector<8x128xf32>
    %c0_35 = arith.constant 0 : index
    %c1 = arith.constant 1 : index
    %c0_36 = arith.constant 0 : index
    %c0_37 = arith.constant 0 : index
    %55 = vector.load %arg1[%c0_35, %c1, %c0_36, %c0_37] : memref<1x5x8x128xf32, #tpu.memory_space<vmem>>, vector<1x1x8x128xf32>
    %56 = vector.shape_cast %55 : vector<1x1x8x128xf32> to vector<8x128xf32>
    %cst_38 = arith.constant 0.000000e+00 : f32
    %57 = vector.broadcast %cst_38 : f32 to vector<8x128xf32>
    %58 = arith.maximumf %56, %57 : vector<8x128xf32>
    %59 = arith.truncf %58 : vector<8x128xf32> to vector<8x128xbf16>
    %60 = arith.truncf %54 : vector<8x128xf32> to vector<8x128xbf16>
    %61 = tpu.concatenate %59, %60 in 1 : vector<8x128xbf16>, vector<8x128xbf16> -> vector<8x256xbf16>
    %cst_39 = arith.constant dense<0.000000e+00> : vector<8x384xf32>
    %62 = tpu.matmul %61, %1, %cst_39 {dimension_numbers = #tpu.dot_dimension_numbers<[1], [0], [0], [1], [0, 0, 1, 1], [], []>} : vector<8x256xbf16>, vector<256x384xbf16>, vector<8x384xf32> -> vector<8x384xf32>
    %63 = vector.extract_strided_slice %62 {offsets = [0, 0], sizes = [8, 128], strides = [1, 1]} : vector<8x384xf32> to vector<8x128xf32>
    %64 = vector.broadcast %5 : vector<1x128xf32> to vector<8x128xf32>
    %65 = arith.addf %63, %64 : vector<8x128xf32>
    %66 = arith.negf %65 : vector<8x128xf32>
    %67 = math.exp %66 : vector<8x128xf32>
    %cst_40 = arith.constant 1.000000e+00 : f32
    %68 = vector.broadcast %cst_40 : f32 to vector<8x128xf32>
    %69 = arith.addf %68, %67 : vector<8x128xf32>
    %70 = arith.divf %68, %69 : vector<8x128xf32>
    %71 = vector.extract_strided_slice %62 {offsets = [0, 128], sizes = [8, 128], strides = [1, 1]} : vector<8x384xf32> to vector<8x128xf32>
    %72 = vector.broadcast %7 : vector<1x128xf32> to vector<8x128xf32>
    %73 = arith.addf %71, %72 : vector<8x128xf32>
    %74 = arith.negf %73 : vector<8x128xf32>
    %75 = math.exp %74 : vector<8x128xf32>
    %cst_41 = arith.constant 1.000000e+00 : f32
    %76 = vector.broadcast %cst_41 : f32 to vector<8x128xf32>
    %77 = arith.addf %76, %75 : vector<8x128xf32>
    %78 = arith.divf %76, %77 : vector<8x128xf32>
    %79 = vector.extract_strided_slice %62 {offsets = [0, 256], sizes = [8, 128], strides = [1, 1]} : vector<8x384xf32> to vector<8x128xf32>
    %80 = arith.mulf %54, %78 : vector<8x128xf32>
    %81 = arith.truncf %80 : vector<8x128xf32> to vector<8x128xbf16>
    %cst_42 = arith.constant dense<0.000000e+00> : vector<8x128xf32>
    %82 = tpu.matmul %81, %3, %cst_42 {dimension_numbers = #tpu.dot_dimension_numbers<[1], [0], [0], [1], [0, 0, 1, 1], [], []>} : vector<8x128xbf16>, vector<128x128xbf16>, vector<8x128xf32> -> vector<8x128xf32>
    %83 = arith.addf %79, %82 : vector<8x128xf32>
    %84 = vector.broadcast %9 : vector<1x128xf32> to vector<8x128xf32>
    %85 = arith.addf %83, %84 : vector<8x128xf32>
    %86 = math.tanh %85 : vector<8x128xf32>
    %cst_43 = arith.constant 1.000000e+00 : f32
    %87 = vector.broadcast %cst_43 : f32 to vector<8x128xf32>
    %88 = arith.subf %87, %70 : vector<8x128xf32>
    %89 = arith.mulf %54, %88 : vector<8x128xf32>
    %90 = arith.mulf %86, %70 : vector<8x128xf32>
    %91 = arith.addf %89, %90 : vector<8x128xf32>
    %c0_44 = arith.constant 0 : index
    %c2 = arith.constant 2 : index
    %c0_45 = arith.constant 0 : index
    %c0_46 = arith.constant 0 : index
    %92 = vector.load %arg1[%c0_44, %c2, %c0_45, %c0_46] : memref<1x5x8x128xf32, #tpu.memory_space<vmem>>, vector<1x1x8x128xf32>
    %93 = vector.shape_cast %92 : vector<1x1x8x128xf32> to vector<8x128xf32>
    %cst_47 = arith.constant 0.000000e+00 : f32
    %94 = vector.broadcast %cst_47 : f32 to vector<8x128xf32>
    %95 = arith.maximumf %93, %94 : vector<8x128xf32>
    %96 = arith.truncf %95 : vector<8x128xf32> to vector<8x128xbf16>
    %97 = arith.truncf %91 : vector<8x128xf32> to vector<8x128xbf16>
    %98 = tpu.concatenate %96, %97 in 1 : vector<8x128xbf16>, vector<8x128xbf16> -> vector<8x256xbf16>
    %cst_48 = arith.constant dense<0.000000e+00> : vector<8x384xf32>
    %99 = tpu.matmul %98, %1, %cst_48 {dimension_numbers = #tpu.dot_dimension_numbers<[1], [0], [0], [1], [0, 0, 1, 1], [], []>} : vector<8x256xbf16>, vector<256x384xbf16>, vector<8x384xf32> -> vector<8x384xf32>
    %100 = vector.extract_strided_slice %99 {offsets = [0, 0], sizes = [8, 128], strides = [1, 1]} : vector<8x384xf32> to vector<8x128xf32>
    %101 = vector.broadcast %5 : vector<1x128xf32> to vector<8x128xf32>
    %102 = arith.addf %100, %101 : vector<8x128xf32>
    %103 = arith.negf %102 : vector<8x128xf32>
    %104 = math.exp %103 : vector<8x128xf32>
    %cst_49 = arith.constant 1.000000e+00 : f32
    %105 = vector.broadcast %cst_49 : f32 to vector<8x128xf32>
    %106 = arith.addf %105, %104 : vector<8x128xf32>
    %107 = arith.divf %105, %106 : vector<8x128xf32>
    %108 = vector.extract_strided_slice %99 {offsets = [0, 128], sizes = [8, 128], strides = [1, 1]} : vector<8x384xf32> to vector<8x128xf32>
    %109 = vector.broadcast %7 : vector<1x128xf32> to vector<8x128xf32>
    %110 = arith.addf %108, %109 : vector<8x128xf32>
    %111 = arith.negf %110 : vector<8x128xf32>
    %112 = math.exp %111 : vector<8x128xf32>
    %cst_50 = arith.constant 1.000000e+00 : f32
    %113 = vector.broadcast %cst_50 : f32 to vector<8x128xf32>
    %114 = arith.addf %113, %112 : vector<8x128xf32>
    %115 = arith.divf %113, %114 : vector<8x128xf32>
    %116 = vector.extract_strided_slice %99 {offsets = [0, 256], sizes = [8, 128], strides = [1, 1]} : vector<8x384xf32> to vector<8x128xf32>
    %117 = arith.mulf %91, %115 : vector<8x128xf32>
    %118 = arith.truncf %117 : vector<8x128xf32> to vector<8x128xbf16>
    %cst_51 = arith.constant dense<0.000000e+00> : vector<8x128xf32>
    %119 = tpu.matmul %118, %3, %cst_51 {dimension_numbers = #tpu.dot_dimension_numbers<[1], [0], [0], [1], [0, 0, 1, 1], [], []>} : vector<8x128xbf16>, vector<128x128xbf16>, vector<8x128xf32> -> vector<8x128xf32>
    %120 = arith.addf %116, %119 : vector<8x128xf32>
    %121 = vector.broadcast %9 : vector<1x128xf32> to vector<8x128xf32>
    %122 = arith.addf %120, %121 : vector<8x128xf32>
    %123 = math.tanh %122 : vector<8x128xf32>
    %cst_52 = arith.constant 1.000000e+00 : f32
    %124 = vector.broadcast %cst_52 : f32 to vector<8x128xf32>
    %125 = arith.subf %124, %107 : vector<8x128xf32>
    %126 = arith.mulf %91, %125 : vector<8x128xf32>
    %127 = arith.mulf %123, %107 : vector<8x128xf32>
    %128 = arith.addf %126, %127 : vector<8x128xf32>
    %c0_53 = arith.constant 0 : index
    %c3 = arith.constant 3 : index
    %c0_54 = arith.constant 0 : index
    %c0_55 = arith.constant 0 : index
    %129 = vector.load %arg1[%c0_53, %c3, %c0_54, %c0_55] : memref<1x5x8x128xf32, #tpu.memory_space<vmem>>, vector<1x1x8x128xf32>
    %130 = vector.shape_cast %129 : vector<1x1x8x128xf32> to vector<8x128xf32>
    %cst_56 = arith.constant 0.000000e+00 : f32
    %131 = vector.broadcast %cst_56 : f32 to vector<8x128xf32>
    %132 = arith.maximumf %130, %131 : vector<8x128xf32>
    %133 = arith.truncf %132 : vector<8x128xf32> to vector<8x128xbf16>
    %134 = arith.truncf %128 : vector<8x128xf32> to vector<8x128xbf16>
    %135 = tpu.concatenate %133, %134 in 1 : vector<8x128xbf16>, vector<8x128xbf16> -> vector<8x256xbf16>
    %cst_57 = arith.constant dense<0.000000e+00> : vector<8x384xf32>
    %136 = tpu.matmul %135, %1, %cst_57 {dimension_numbers = #tpu.dot_dimension_numbers<[1], [0], [0], [1], [0, 0, 1, 1], [], []>} : vector<8x256xbf16>, vector<256x384xbf16>, vector<8x384xf32> -> vector<8x384xf32>
    %137 = vector.extract_strided_slice %136 {offsets = [0, 0], sizes = [8, 128], strides = [1, 1]} : vector<8x384xf32> to vector<8x128xf32>
    %138 = vector.broadcast %5 : vector<1x128xf32> to vector<8x128xf32>
    %139 = arith.addf %137, %138 : vector<8x128xf32>
    %140 = arith.negf %139 : vector<8x128xf32>
    %141 = math.exp %140 : vector<8x128xf32>
    %cst_58 = arith.constant 1.000000e+00 : f32
    %142 = vector.broadcast %cst_58 : f32 to vector<8x128xf32>
    %143 = arith.addf %142, %141 : vector<8x128xf32>
    %144 = arith.divf %142, %143 : vector<8x128xf32>
    %145 = vector.extract_strided_slice %136 {offsets = [0, 128], sizes = [8, 128], strides = [1, 1]} : vector<8x384xf32> to vector<8x128xf32>
    %146 = vector.broadcast %7 : vector<1x128xf32> to vector<8x128xf32>
    %147 = arith.addf %145, %146 : vector<8x128xf32>
    %148 = arith.negf %147 : vector<8x128xf32>
    %149 = math.exp %148 : vector<8x128xf32>
    %cst_59 = arith.constant 1.000000e+00 : f32
    %150 = vector.broadcast %cst_59 : f32 to vector<8x128xf32>
    %151 = arith.addf %150, %149 : vector<8x128xf32>
    %152 = arith.divf %150, %151 : vector<8x128xf32>
    %153 = vector.extract_strided_slice %136 {offsets = [0, 256], sizes = [8, 128], strides = [1, 1]} : vector<8x384xf32> to vector<8x128xf32>
    %154 = arith.mulf %128, %152 : vector<8x128xf32>
    %155 = arith.truncf %154 : vector<8x128xf32> to vector<8x128xbf16>
    %cst_60 = arith.constant dense<0.000000e+00> : vector<8x128xf32>
    %156 = tpu.matmul %155, %3, %cst_60 {dimension_numbers = #tpu.dot_dimension_numbers<[1], [0], [0], [1], [0, 0, 1, 1], [], []>} : vector<8x128xbf16>, vector<128x128xbf16>, vector<8x128xf32> -> vector<8x128xf32>
    %157 = arith.addf %153, %156 : vector<8x128xf32>
    %158 = vector.broadcast %9 : vector<1x128xf32> to vector<8x128xf32>
    %159 = arith.addf %157, %158 : vector<8x128xf32>
    %160 = math.tanh %159 : vector<8x128xf32>
    %cst_61 = arith.constant 1.000000e+00 : f32
    %161 = vector.broadcast %cst_61 : f32 to vector<8x128xf32>
    %162 = arith.subf %161, %144 : vector<8x128xf32>
    %163 = arith.mulf %128, %162 : vector<8x128xf32>
    %164 = arith.mulf %160, %144 : vector<8x128xf32>
    %165 = arith.addf %163, %164 : vector<8x128xf32>
    %c0_62 = arith.constant 0 : index
    %c4 = arith.constant 4 : index
    %c0_63 = arith.constant 0 : index
    %c0_64 = arith.constant 0 : index
    %166 = vector.load %arg1[%c0_62, %c4, %c0_63, %c0_64] : memref<1x5x8x128xf32, #tpu.memory_space<vmem>>, vector<1x1x8x128xf32>
    %167 = vector.shape_cast %166 : vector<1x1x8x128xf32> to vector<8x128xf32>
    %cst_65 = arith.constant 0.000000e+00 : f32
    %168 = vector.broadcast %cst_65 : f32 to vector<8x128xf32>
    %169 = arith.maximumf %167, %168 : vector<8x128xf32>
    %170 = arith.truncf %169 : vector<8x128xf32> to vector<8x128xbf16>
    %171 = arith.truncf %165 : vector<8x128xf32> to vector<8x128xbf16>
    %172 = tpu.concatenate %170, %171 in 1 : vector<8x128xbf16>, vector<8x128xbf16> -> vector<8x256xbf16>
    %cst_66 = arith.constant dense<0.000000e+00> : vector<8x384xf32>
    %173 = tpu.matmul %172, %1, %cst_66 {dimension_numbers = #tpu.dot_dimension_numbers<[1], [0], [0], [1], [0, 0, 1, 1], [], []>} : vector<8x256xbf16>, vector<256x384xbf16>, vector<8x384xf32> -> vector<8x384xf32>
    %174 = vector.extract_strided_slice %173 {offsets = [0, 0], sizes = [8, 128], strides = [1, 1]} : vector<8x384xf32> to vector<8x128xf32>
    %175 = vector.broadcast %5 : vector<1x128xf32> to vector<8x128xf32>
    %176 = arith.addf %174, %175 : vector<8x128xf32>
    %177 = arith.negf %176 : vector<8x128xf32>
    %178 = math.exp %177 : vector<8x128xf32>
    %cst_67 = arith.constant 1.000000e+00 : f32
    %179 = vector.broadcast %cst_67 : f32 to vector<8x128xf32>
    %180 = arith.addf %179, %178 : vector<8x128xf32>
    %181 = arith.divf %179, %180 : vector<8x128xf32>
    %182 = vector.extract_strided_slice %173 {offsets = [0, 128], sizes = [8, 128], strides = [1, 1]} : vector<8x384xf32> to vector<8x128xf32>
    %183 = vector.broadcast %7 : vector<1x128xf32> to vector<8x128xf32>
    %184 = arith.addf %182, %183 : vector<8x128xf32>
    %185 = arith.negf %184 : vector<8x128xf32>
    %186 = math.exp %185 : vector<8x128xf32>
    %cst_68 = arith.constant 1.000000e+00 : f32
    %187 = vector.broadcast %cst_68 : f32 to vector<8x128xf32>
    %188 = arith.addf %187, %186 : vector<8x128xf32>
    %189 = arith.divf %187, %188 : vector<8x128xf32>
    %190 = vector.extract_strided_slice %173 {offsets = [0, 256], sizes = [8, 128], strides = [1, 1]} : vector<8x384xf32> to vector<8x128xf32>
    %191 = arith.mulf %165, %189 : vector<8x128xf32>
    %192 = arith.truncf %191 : vector<8x128xf32> to vector<8x128xbf16>
    %cst_69 = arith.constant dense<0.000000e+00> : vector<8x128xf32>
    %193 = tpu.matmul %192, %3, %cst_69 {dimension_numbers = #tpu.dot_dimension_numbers<[1], [0], [0], [1], [0, 0, 1, 1], [], []>} : vector<8x128xbf16>, vector<128x128xbf16>, vector<8x128xf32> -> vector<8x128xf32>
    %194 = arith.addf %190, %193 : vector<8x128xf32>
    %195 = vector.broadcast %9 : vector<1x128xf32> to vector<8x128xf32>
    %196 = arith.addf %194, %195 : vector<8x128xf32>
    %197 = math.tanh %196 : vector<8x128xf32>
    %cst_70 = arith.constant 1.000000e+00 : f32
    %198 = vector.broadcast %cst_70 : f32 to vector<8x128xf32>
    %199 = arith.subf %198, %181 : vector<8x128xf32>
    %200 = arith.mulf %165, %199 : vector<8x128xf32>
    %201 = arith.mulf %197, %181 : vector<8x128xf32>
    %202 = arith.addf %200, %201 : vector<8x128xf32>
    %cst_71 = arith.constant 0.000000e+00 : f32
    %203 = vector.broadcast %cst_71 : f32 to vector<1x1xf32>
    %204 = arith.truncf %202 : vector<8x128xf32> to vector<8x128xbf16>
    %cst_72 = arith.constant dense<0.000000e+00> : vector<8x128xf32>
    %205 = tpu.matmul %204, %10, %cst_72 {dimension_numbers = #tpu.dot_dimension_numbers<[1], [0], [0], [1], [0, 0, 1, 1], [], []>} : vector<8x128xbf16>, vector<128x128xbf16>, vector<8x128xf32> -> vector<8x128xf32>
    %206 = vector.broadcast %11 : vector<1x128xf32> to vector<8x128xf32>
    %207 = arith.addf %205, %206 : vector<8x128xf32>
    %cst_73 = arith.constant 0.000000e+00 : f32
    %208 = vector.broadcast %cst_73 : f32 to vector<8x128xf32>
    %209 = arith.maximumf %207, %208 : vector<8x128xf32>
    %210 = arith.truncf %209 : vector<8x128xf32> to vector<8x128xbf16>
    %cst_74 = arith.constant dense<0.000000e+00> : vector<8x128xf32>
    %211 = tpu.matmul %210, %12, %cst_74 {dimension_numbers = #tpu.dot_dimension_numbers<[1], [0], [0], [1], [0, 0, 1, 1], [], []>} : vector<8x128xbf16>, vector<128x128xbf16>, vector<8x128xf32> -> vector<8x128xf32>
    %212 = vector.broadcast %13 : vector<1x128xf32> to vector<8x128xf32>
    %213 = arith.addf %211, %212 : vector<8x128xf32>
    %cst_75 = arith.constant dense<0xFF800000> : vector<8xf32>
    %214 = vector.multi_reduction <maximumf>, %213, %cst_75 [1] : vector<8x128xf32> to vector<8xf32>
    %215 = vector.shape_cast %214 : vector<8xf32> to vector<8x1xf32>
    %216 = vector.broadcast %215 : vector<8x1xf32> to vector<8x128xf32>
    %217 = arith.subf %213, %216 : vector<8x128xf32>
    %218 = math.exp %217 : vector<8x128xf32>
    %cst_76 = arith.constant dense<0.000000e+00> : vector<8xf32>
    %219 = vector.multi_reduction <add>, %218, %cst_76 [1] : vector<8x128xf32> to vector<8xf32>
    %220 = vector.shape_cast %219 : vector<8xf32> to vector<8x1xf32>
    %221 = arith.truncf %218 : vector<8x128xf32> to vector<8x128xbf16>
    %cst_77 = arith.constant dense<0.000000e+00> : vector<8x128xf32>
    %222 = tpu.matmul %221, %14, %cst_77 {dimension_numbers = #tpu.dot_dimension_numbers<[1], [0], [0], [1], [0, 0, 1, 1], [], []>} : vector<8x128xbf16>, vector<128x128xbf16>, vector<8x128xf32> -> vector<8x128xf32>
    %223 = tpu.reciprocal %220 {approx = true} : vector<8x1xf32> -> vector<8x1xf32>
    %224 = vector.broadcast %223 : vector<8x1xf32> to vector<8x128xf32>
    %225 = arith.mulf %222, %224 : vector<8x128xf32>
    %cst_78 = arith.constant dense<0.000000e+00> : vector<8x24xf32>
    %226 = tpu.matmul %225, %16, %cst_78 {dimension_numbers = #tpu.dot_dimension_numbers<[1], [0], [0], [1], [0, 0, 1, 1], [], []>} : vector<8x128xf32>, vector<128x24xf32>, vector<8x24xf32> -> vector<8x24xf32>
    %cst_79 = arith.constant dense<0xFF800000> : vector<8xf32>
    %227 = vector.multi_reduction <maximumf>, %226, %cst_79 [1] : vector<8x24xf32> to vector<8xf32>
    %228 = vector.shape_cast %227 : vector<8xf32> to vector<8x1xf32>
    %229 = vector.broadcast %228 : vector<8x1xf32> to vector<8x24xf32>
    %230 = arith.subf %226, %229 : vector<8x24xf32>
    %231 = math.exp %230 : vector<8x24xf32>
    %cst_80 = arith.constant dense<0.000000e+00> : vector<8xf32>
    %232 = vector.multi_reduction <add>, %231, %cst_80 [1] : vector<8x24xf32> to vector<8xf32>
    %233 = vector.shape_cast %232 : vector<8xf32> to vector<8x1xf32>
    %234 = math.log %233 : vector<8x1xf32>
    %235 = arith.addf %234, %228 : vector<8x1xf32>
    %236 = tpu.iota {dimensions = array<i32: 1>} : vector<8x24xi32>
    %237 = tpu.iota {dimensions = array<i32: 0>} : vector<8x24xi32>
    %c0_i32 = arith.constant 0 : i32
    %238 = vector.broadcast %c0_i32 : i32 to vector<8x24xi32>
    %239 = arith.addi %237, %238 : vector<8x24xi32>
    %240 = arith.cmpi eq, %236, %239 : vector<8x24xi32>
    %cst_81 = arith.constant 0.000000e+00 : f32
    %241 = vector.broadcast %cst_81 : f32 to vector<8x24xf32>
    %242 = arith.select %240, %226, %241 : vector<8x24xi1>, vector<8x24xf32>
    %cst_82 = arith.constant dense<0.000000e+00> : vector<8xf32>
    %243 = vector.multi_reduction <add>, %242, %cst_82 [1] : vector<8x24xf32> to vector<8xf32>
    %244 = vector.shape_cast %243 : vector<8xf32> to vector<8x1xf32>
    %245 = arith.subf %235, %244 : vector<8x1xf32>
    %cst_83 = arith.constant dense<0.000000e+00> : vector<1xf32>
    %246 = vector.multi_reduction <add>, %245, %cst_83 [0] : vector<8x1xf32> to vector<1xf32>
    %247 = vector.shape_cast %246 : vector<1xf32> to vector<1x1xf32>
    %248 = arith.addf %203, %247 : vector<1x1xf32>
    %cst_84 = arith.constant 0.000000e+00 : f32
    %249 = vector.broadcast %cst_84 : f32 to vector<8x128xf32>
    %250 = arith.maximumf %225, %249 : vector<8x128xf32>
    %251 = arith.truncf %250 : vector<8x128xf32> to vector<8x128xbf16>
    %252 = arith.truncf %202 : vector<8x128xf32> to vector<8x128xbf16>
    %253 = tpu.concatenate %251, %252 in 1 : vector<8x128xbf16>, vector<8x128xbf16> -> vector<8x256xbf16>
    %cst_85 = arith.constant dense<0.000000e+00> : vector<8x384xf32>
    %254 = tpu.matmul %253, %1, %cst_85 {dimension_numbers = #tpu.dot_dimension_numbers<[1], [0], [0], [1], [0, 0, 1, 1], [], []>} : vector<8x256xbf16>, vector<256x384xbf16>, vector<8x384xf32> -> vector<8x384xf32>
    %255 = vector.extract_strided_slice %254 {offsets = [0, 0], sizes = [8, 128], strides = [1, 1]} : vector<8x384xf32> to vector<8x128xf32>
    %256 = vector.broadcast %5 : vector<1x128xf32> to vector<8x128xf32>
    %257 = arith.addf %255, %256 : vector<8x128xf32>
    %258 = arith.negf %257 : vector<8x128xf32>
    %259 = math.exp %258 : vector<8x128xf32>
    %cst_86 = arith.constant 1.000000e+00 : f32
    %260 = vector.broadcast %cst_86 : f32 to vector<8x128xf32>
    %261 = arith.addf %260, %259 : vector<8x128xf32>
    %262 = arith.divf %260, %261 : vector<8x128xf32>
    %263 = vector.extract_strided_slice %254 {offsets = [0, 128], sizes = [8, 128], strides = [1, 1]} : vector<8x384xf32> to vector<8x128xf32>
    %264 = vector.broadcast %7 : vector<1x128xf32> to vector<8x128xf32>
    %265 = arith.addf %263, %264 : vector<8x128xf32>
    %266 = arith.negf %265 : vector<8x128xf32>
    %267 = math.exp %266 : vector<8x128xf32>
    %cst_87 = arith.constant 1.000000e+00 : f32
    %268 = vector.broadcast %cst_87 : f32 to vector<8x128xf32>
    %269 = arith.addf %268, %267 : vector<8x128xf32>
    %270 = arith.divf %268, %269 : vector<8x128xf32>
    %271 = vector.extract_strided_slice %254 {offsets = [0, 256], sizes = [8, 128], strides = [1, 1]} : vector<8x384xf32> to vector<8x128xf32>
    %272 = arith.mulf %202, %270 : vector<8x128xf32>
    %273 = arith.truncf %272 : vector<8x128xf32> to vector<8x128xbf16>
    %cst_88 = arith.constant dense<0.000000e+00> : vector<8x128xf32>
    %274 = tpu.matmul %273, %3, %cst_88 {dimension_numbers = #tpu.dot_dimension_numbers<[1], [0], [0], [1], [0, 0, 1, 1], [], []>} : vector<8x128xbf16>, vector<128x128xbf16>, vector<8x128xf32> -> vector<8x128xf32>
    %275 = arith.addf %271, %274 : vector<8x128xf32>
    %276 = vector.broadcast %9 : vector<1x128xf32> to vector<8x128xf32>
    %277 = arith.addf %275, %276 : vector<8x128xf32>
    %278 = math.tanh %277 : vector<8x128xf32>
    %cst_89 = arith.constant 1.000000e+00 : f32
    %279 = vector.broadcast %cst_89 : f32 to vector<8x128xf32>
    %280 = arith.subf %279, %262 : vector<8x128xf32>
    %281 = arith.mulf %202, %280 : vector<8x128xf32>
    %282 = arith.mulf %278, %262 : vector<8x128xf32>
    %283 = arith.addf %281, %282 : vector<8x128xf32>
    %284 = arith.truncf %283 : vector<8x128xf32> to vector<8x128xbf16>
    %cst_90 = arith.constant dense<0.000000e+00> : vector<8x128xf32>
    %285 = tpu.matmul %284, %10, %cst_90 {dimension_numbers = #tpu.dot_dimension_numbers<[1], [0], [0], [1], [0, 0, 1, 1], [], []>} : vector<8x128xbf16>, vector<128x128xbf16>, vector<8x128xf32> -> vector<8x128xf32>
    %286 = vector.broadcast %11 : vector<1x128xf32> to vector<8x128xf32>
    %287 = arith.addf %285, %286 : vector<8x128xf32>
    %cst_91 = arith.constant 0.000000e+00 : f32
    %288 = vector.broadcast %cst_91 : f32 to vector<8x128xf32>
    %289 = arith.maximumf %287, %288 : vector<8x128xf32>
    %290 = arith.truncf %289 : vector<8x128xf32> to vector<8x128xbf16>
    %cst_92 = arith.constant dense<0.000000e+00> : vector<8x128xf32>
    %291 = tpu.matmul %290, %12, %cst_92 {dimension_numbers = #tpu.dot_dimension_numbers<[1], [0], [0], [1], [0, 0, 1, 1], [], []>} : vector<8x128xbf16>, vector<128x128xbf16>, vector<8x128xf32> -> vector<8x128xf32>
    %292 = vector.broadcast %13 : vector<1x128xf32> to vector<8x128xf32>
    %293 = arith.addf %291, %292 : vector<8x128xf32>
    %cst_93 = arith.constant dense<0xFF800000> : vector<8xf32>
    %294 = vector.multi_reduction <maximumf>, %293, %cst_93 [1] : vector<8x128xf32> to vector<8xf32>
    %295 = vector.shape_cast %294 : vector<8xf32> to vector<8x1xf32>
    %296 = vector.broadcast %295 : vector<8x1xf32> to vector<8x128xf32>
    %297 = arith.subf %293, %296 : vector<8x128xf32>
    %298 = math.exp %297 : vector<8x128xf32>
    %cst_94 = arith.constant dense<0.000000e+00> : vector<8xf32>
    %299 = vector.multi_reduction <add>, %298, %cst_94 [1] : vector<8x128xf32> to vector<8xf32>
    %300 = vector.shape_cast %299 : vector<8xf32> to vector<8x1xf32>
    %301 = arith.truncf %298 : vector<8x128xf32> to vector<8x128xbf16>
    %cst_95 = arith.constant dense<0.000000e+00> : vector<8x128xf32>
    %302 = tpu.matmul %301, %14, %cst_95 {dimension_numbers = #tpu.dot_dimension_numbers<[1], [0], [0], [1], [0, 0, 1, 1], [], []>} : vector<8x128xbf16>, vector<128x128xbf16>, vector<8x128xf32> -> vector<8x128xf32>
    %303 = tpu.reciprocal %300 {approx = true} : vector<8x1xf32> -> vector<8x1xf32>
    %304 = vector.broadcast %303 : vector<8x1xf32> to vector<8x128xf32>
    %305 = arith.mulf %302, %304 : vector<8x128xf32>
    %cst_96 = arith.constant dense<0.000000e+00> : vector<8x24xf32>
    %306 = tpu.matmul %305, %16, %cst_96 {dimension_numbers = #tpu.dot_dimension_numbers<[1], [0], [0], [1], [0, 0, 1, 1], [], []>} : vector<8x128xf32>, vector<128x24xf32>, vector<8x24xf32> -> vector<8x24xf32>
    %cst_97 = arith.constant dense<0xFF800000> : vector<8xf32>
    %307 = vector.multi_reduction <maximumf>, %306, %cst_97 [1] : vector<8x24xf32> to vector<8xf32>
    %308 = vector.shape_cast %307 : vector<8xf32> to vector<8x1xf32>
    %309 = vector.broadcast %308 : vector<8x1xf32> to vector<8x24xf32>
    %310 = arith.subf %306, %309 : vector<8x24xf32>
    %311 = math.exp %310 : vector<8x24xf32>
    %cst_98 = arith.constant dense<0.000000e+00> : vector<8xf32>
    %312 = vector.multi_reduction <add>, %311, %cst_98 [1] : vector<8x24xf32> to vector<8xf32>
    %313 = vector.shape_cast %312 : vector<8xf32> to vector<8x1xf32>
    %314 = math.log %313 : vector<8x1xf32>
    %315 = arith.addf %314, %308 : vector<8x1xf32>
    %316 = tpu.iota {dimensions = array<i32: 1>} : vector<8x24xi32>
    %317 = tpu.iota {dimensions = array<i32: 0>} : vector<8x24xi32>
    %c8_i32 = arith.constant 8 : i32
    %318 = vector.broadcast %c8_i32 : i32 to vector<8x24xi32>
    %319 = arith.addi %317, %318 : vector<8x24xi32>
    %320 = arith.cmpi eq, %316, %319 : vector<8x24xi32>
    %cst_99 = arith.constant 0.000000e+00 : f32
    %321 = vector.broadcast %cst_99 : f32 to vector<8x24xf32>
    %322 = arith.select %320, %306, %321 : vector<8x24xi1>, vector<8x24xf32>
    %cst_100 = arith.constant dense<0.000000e+00> : vector<8xf32>
    %323 = vector.multi_reduction <add>, %322, %cst_100 [1] : vector<8x24xf32> to vector<8xf32>
    %324 = vector.shape_cast %323 : vector<8xf32> to vector<8x1xf32>
    %325 = arith.subf %315, %324 : vector<8x1xf32>
    %cst_101 = arith.constant dense<0.000000e+00> : vector<1xf32>
    %326 = vector.multi_reduction <add>, %325, %cst_101 [0] : vector<8x1xf32> to vector<1xf32>
    %327 = vector.shape_cast %326 : vector<1xf32> to vector<1x1xf32>
    %328 = arith.addf %248, %327 : vector<1x1xf32>
    %cst_102 = arith.constant 0.000000e+00 : f32
    %329 = vector.broadcast %cst_102 : f32 to vector<8x128xf32>
    %330 = arith.maximumf %305, %329 : vector<8x128xf32>
    %331 = arith.truncf %330 : vector<8x128xf32> to vector<8x128xbf16>
    %332 = arith.truncf %283 : vector<8x128xf32> to vector<8x128xbf16>
    %333 = tpu.concatenate %331, %332 in 1 : vector<8x128xbf16>, vector<8x128xbf16> -> vector<8x256xbf16>
    %cst_103 = arith.constant dense<0.000000e+00> : vector<8x384xf32>
    %334 = tpu.matmul %333, %1, %cst_103 {dimension_numbers = #tpu.dot_dimension_numbers<[1], [0], [0], [1], [0, 0, 1, 1], [], []>} : vector<8x256xbf16>, vector<256x384xbf16>, vector<8x384xf32> -> vector<8x384xf32>
    %335 = vector.extract_strided_slice %334 {offsets = [0, 0], sizes = [8, 128], strides = [1, 1]} : vector<8x384xf32> to vector<8x128xf32>
    %336 = vector.broadcast %5 : vector<1x128xf32> to vector<8x128xf32>
    %337 = arith.addf %335, %336 : vector<8x128xf32>
    %338 = arith.negf %337 : vector<8x128xf32>
    %339 = math.exp %338 : vector<8x128xf32>
    %cst_104 = arith.constant 1.000000e+00 : f32
    %340 = vector.broadcast %cst_104 : f32 to vector<8x128xf32>
    %341 = arith.addf %340, %339 : vector<8x128xf32>
    %342 = arith.divf %340, %341 : vector<8x128xf32>
    %343 = vector.extract_strided_slice %334 {offsets = [0, 128], sizes = [8, 128], strides = [1, 1]} : vector<8x384xf32> to vector<8x128xf32>
    %344 = vector.broadcast %7 : vector<1x128xf32> to vector<8x128xf32>
    %345 = arith.addf %343, %344 : vector<8x128xf32>
    %346 = arith.negf %345 : vector<8x128xf32>
    %347 = math.exp %346 : vector<8x128xf32>
    %cst_105 = arith.constant 1.000000e+00 : f32
    %348 = vector.broadcast %cst_105 : f32 to vector<8x128xf32>
    %349 = arith.addf %348, %347 : vector<8x128xf32>
    %350 = arith.divf %348, %349 : vector<8x128xf32>
    %351 = vector.extract_strided_slice %334 {offsets = [0, 256], sizes = [8, 128], strides = [1, 1]} : vector<8x384xf32> to vector<8x128xf32>
    %352 = arith.mulf %283, %350 : vector<8x128xf32>
    %353 = arith.truncf %352 : vector<8x128xf32> to vector<8x128xbf16>
    %cst_106 = arith.constant dense<0.000000e+00> : vector<8x128xf32>
    %354 = tpu.matmul %353, %3, %cst_106 {dimension_numbers = #tpu.dot_dimension_numbers<[1], [0], [0], [1], [0, 0, 1, 1], [], []>} : vector<8x128xbf16>, vector<128x128xbf16>, vector<8x128xf32> -> vector<8x128xf32>
    %355 = arith.addf %351, %354 : vector<8x128xf32>
    %356 = vector.broadcast %9 : vector<1x128xf32> to vector<8x128xf32>
    %357 = arith.addf %355, %356 : vector<8x128xf32>
    %358 = math.tanh %357 : vector<8x128xf32>
    %cst_107 = arith.constant 1.000000e+00 : f32
    %359 = vector.broadcast %cst_107 : f32 to vector<8x128xf32>
    %360 = arith.subf %359, %342 : vector<8x128xf32>
    %361 = arith.mulf %283, %360 : vector<8x128xf32>
    %362 = arith.mulf %358, %342 : vector<8x128xf32>
    %363 = arith.addf %361, %362 : vector<8x128xf32>
    %364 = arith.truncf %363 : vector<8x128xf32> to vector<8x128xbf16>
    %cst_108 = arith.constant dense<0.000000e+00> : vector<8x128xf32>
    %365 = tpu.matmul %364, %10, %cst_108 {dimension_numbers = #tpu.dot_dimension_numbers<[1], [0], [0], [1], [0, 0, 1, 1], [], []>} : vector<8x128xbf16>, vector<128x128xbf16>, vector<8x128xf32> -> vector<8x128xf32>
    %366 = vector.broadcast %11 : vector<1x128xf32> to vector<8x128xf32>
    %367 = arith.addf %365, %366 : vector<8x128xf32>
    %cst_109 = arith.constant 0.000000e+00 : f32
    %368 = vector.broadcast %cst_109 : f32 to vector<8x128xf32>
    %369 = arith.maximumf %367, %368 : vector<8x128xf32>
    %370 = arith.truncf %369 : vector<8x128xf32> to vector<8x128xbf16>
    %cst_110 = arith.constant dense<0.000000e+00> : vector<8x128xf32>
    %371 = tpu.matmul %370, %12, %cst_110 {dimension_numbers = #tpu.dot_dimension_numbers<[1], [0], [0], [1], [0, 0, 1, 1], [], []>} : vector<8x128xbf16>, vector<128x128xbf16>, vector<8x128xf32> -> vector<8x128xf32>
    %372 = vector.broadcast %13 : vector<1x128xf32> to vector<8x128xf32>
    %373 = arith.addf %371, %372 : vector<8x128xf32>
    %cst_111 = arith.constant dense<0xFF800000> : vector<8xf32>
    %374 = vector.multi_reduction <maximumf>, %373, %cst_111 [1] : vector<8x128xf32> to vector<8xf32>
    %375 = vector.shape_cast %374 : vector<8xf32> to vector<8x1xf32>
    %376 = vector.broadcast %375 : vector<8x1xf32> to vector<8x128xf32>
    %377 = arith.subf %373, %376 : vector<8x128xf32>
    %378 = math.exp %377 : vector<8x128xf32>
    %cst_112 = arith.constant dense<0.000000e+00> : vector<8xf32>
    %379 = vector.multi_reduction <add>, %378, %cst_112 [1] : vector<8x128xf32> to vector<8xf32>
    %380 = vector.shape_cast %379 : vector<8xf32> to vector<8x1xf32>
    %381 = arith.truncf %378 : vector<8x128xf32> to vector<8x128xbf16>
    %cst_113 = arith.constant dense<0.000000e+00> : vector<8x128xf32>
    %382 = tpu.matmul %381, %14, %cst_113 {dimension_numbers = #tpu.dot_dimension_numbers<[1], [0], [0], [1], [0, 0, 1, 1], [], []>} : vector<8x128xbf16>, vector<128x128xbf16>, vector<8x128xf32> -> vector<8x128xf32>
    %383 = tpu.reciprocal %380 {approx = true} : vector<8x1xf32> -> vector<8x1xf32>
    %384 = vector.broadcast %383 : vector<8x1xf32> to vector<8x128xf32>
    %385 = arith.mulf %382, %384 : vector<8x128xf32>
    %cst_114 = arith.constant dense<0.000000e+00> : vector<8x24xf32>
    %386 = tpu.matmul %385, %16, %cst_114 {dimension_numbers = #tpu.dot_dimension_numbers<[1], [0], [0], [1], [0, 0, 1, 1], [], []>} : vector<8x128xf32>, vector<128x24xf32>, vector<8x24xf32> -> vector<8x24xf32>
    %cst_115 = arith.constant dense<0xFF800000> : vector<8xf32>
    %387 = vector.multi_reduction <maximumf>, %386, %cst_115 [1] : vector<8x24xf32> to vector<8xf32>
    %388 = vector.shape_cast %387 : vector<8xf32> to vector<8x1xf32>
    %389 = vector.broadcast %388 : vector<8x1xf32> to vector<8x24xf32>
    %390 = arith.subf %386, %389 : vector<8x24xf32>
    %391 = math.exp %390 : vector<8x24xf32>
    %cst_116 = arith.constant dense<0.000000e+00> : vector<8xf32>
    %392 = vector.multi_reduction <add>, %391, %cst_116 [1] : vector<8x24xf32> to vector<8xf32>
    %393 = vector.shape_cast %392 : vector<8xf32> to vector<8x1xf32>
    %394 = math.log %393 : vector<8x1xf32>
    %395 = arith.addf %394, %388 : vector<8x1xf32>
    %396 = tpu.iota {dimensions = array<i32: 1>} : vector<8x24xi32>
    %397 = tpu.iota {dimensions = array<i32: 0>} : vector<8x24xi32>
    %c16_i32 = arith.constant 16 : i32
    %398 = vector.broadcast %c16_i32 : i32 to vector<8x24xi32>
    %399 = arith.addi %397, %398 : vector<8x24xi32>
    %400 = arith.cmpi eq, %396, %399 : vector<8x24xi32>
    %cst_117 = arith.constant 0.000000e+00 : f32
    %401 = vector.broadcast %cst_117 : f32 to vector<8x24xf32>
    %402 = arith.select %400, %386, %401 : vector<8x24xi1>, vector<8x24xf32>
    %cst_118 = arith.constant dense<0.000000e+00> : vector<8xf32>
    %403 = vector.multi_reduction <add>, %402, %cst_118 [1] : vector<8x24xf32> to vector<8xf32>
    %404 = vector.shape_cast %403 : vector<8xf32> to vector<8x1xf32>
    %405 = arith.subf %395, %404 : vector<8x1xf32>
    %cst_119 = arith.constant dense<0.000000e+00> : vector<1xf32>
    %406 = vector.multi_reduction <add>, %405, %cst_119 [0] : vector<8x1xf32> to vector<1xf32>
    %407 = vector.shape_cast %406 : vector<1xf32> to vector<1x1xf32>
    %408 = arith.addf %328, %407 : vector<1x1xf32>
    %cst_120 = arith.constant 2.400000e+01 : f32
    %409 = vector.broadcast %cst_120 : f32 to vector<1x1xf32>
    %410 = arith.divf %408, %409 : vector<1x1xf32>
    %411 = vector.shape_cast %410 : vector<1x1xf32> to vector<1x1x1xf32>
    %c0_121 = arith.constant 0 : index
    %c0_122 = arith.constant 0 : index
    %c0_123 = arith.constant 0 : index
    %412 = vector.load %arg11[%c0_121, %c0_122, %c0_123] : memref<1x1x1xf32, #tpu.memory_space<vmem>>, vector<1x1x1xf32>
    tpu.vector_store %arg11[%c0_121, %c0_122, %c0_123], %411 {strides = array<i32>} : memref<1x1x1xf32, #tpu.memory_space<vmem>>, vector<1x1x1xf32>,
    return
  }
  func.func @transform_0(%arg0: i32) -> (i32, i32, i32, i32) {
    %c0_i32 = arith.constant 0 : i32
    %c0_i32_0 = arith.constant 0 : i32
    %c0_i32_1 = arith.constant 0 : i32
    %c0_i32_2 = arith.constant 0 : i32
    return %arg0, %c0_i32, %c0_i32_0, %c0_i32_1 : i32, i32, i32, i32
  }
  func.func @transform_1(%arg0: i32) -> (i32, i32, i32) {
    %c0_i32 = arith.constant 0 : i32
    %c0_i32_0 = arith.constant 0 : i32
    %c0_i32_1 = arith.constant 0 : i32
    return %arg0, %c0_i32, %c0_i32_0 : i32, i32, i32
  }
  func.func @transform_2(%arg0: i32) -> (i32, i32, i32) {
    %c0_i32 = arith.constant 0 : i32
    %c0_i32_0 = arith.constant 0 : i32
    %c0_i32_1 = arith.constant 0 : i32
    return %arg0, %c0_i32, %c0_i32_0 : i32, i32, i32
  }
  func.func @transform_3(%arg0: i32) -> (i32, i32, i32) {
    %c0_i32 = arith.constant 0 : i32
    %c0_i32_0 = arith.constant 0 : i32
    %c0_i32_1 = arith.constant 0 : i32
    return %arg0, %c0_i32, %c0_i32_0 : i32, i32, i32
  }
  func.func @transform_4(%arg0: i32) -> (i32, i32, i32) {
    %c0_i32 = arith.constant 0 : i32
    %c0_i32_0 = arith.constant 0 : i32
    %c0_i32_1 = arith.constant 0 : i32
    return %arg0, %c0_i32, %c0_i32_0 : i32, i32, i32
  }
  func.func @transform_5(%arg0: i32) -> (i32, i32) {
    %c0_i32 = arith.constant 0 : i32
    %c0_i32_0 = arith.constant 0 : i32
    %c0_i32_1 = arith.constant 0 : i32
    return %c0_i32, %c0_i32_0 : i32, i32
  }
  func.func @transform_6(%arg0: i32) -> (i32, i32) {
    %c0_i32 = arith.constant 0 : i32
    %c0_i32_0 = arith.constant 0 : i32
    %c0_i32_1 = arith.constant 0 : i32
    return %c0_i32, %c0_i32_0 : i32, i32
  }
  func.func @transform_7(%arg0: i32) -> (i32, i32) {
    %c0_i32 = arith.constant 0 : i32
    %c0_i32_0 = arith.constant 0 : i32
    %c0_i32_1 = arith.constant 0 : i32
    return %c0_i32, %c0_i32_0 : i32, i32
  }
  func.func @transform_8(%arg0: i32) -> (i32, i32) {
    %c0_i32 = arith.constant 0 : i32
    %c0_i32_0 = arith.constant 0 : i32
    %c0_i32_1 = arith.constant 0 : i32
    return %c0_i32, %c0_i32_0 : i32, i32
  }
  func.func @transform_9(%arg0: i32) -> (i32, i32) {
    %c0_i32 = arith.constant 0 : i32
    %c0_i32_0 = arith.constant 0 : i32
    %c0_i32_1 = arith.constant 0 : i32
    return %c0_i32, %c0_i32_0 : i32, i32
  }
  func.func @transform_10(%arg0: i32) -> (i32, i32, i32) {
    %c0_i32 = arith.constant 0 : i32
    %c0_i32_0 = arith.constant 0 : i32
    %c0_i32_1 = arith.constant 0 : i32
    return %arg0, %c0_i32, %c0_i32_0 : i32, i32, i32
  }
}

module attributes {stable_mosaic.version = 11 : i64} {
  func.func @_backbone_proj_kernel(%arg0: i32, %arg1: memref<64x3072xbf16, #tpu.memory_space<vmem>>, %arg2: memref<3072x128xbf16, #tpu.memory_space<vmem>>, %arg3: memref<1x128xf32, #tpu.memory_space<vmem>>, %arg4: memref<128x128xbf16, #tpu.memory_space<vmem>>, %arg5: memref<1x128xf32, #tpu.memory_space<vmem>>, %arg6: memref<64x128xf32, #tpu.memory_space<vmem>>) attributes {dimension_semantics = [#tpu.dimension_semantics<parallel>], iteration_bounds = array<i64: 1>, scalar_prefetch = 0 : i64, scratch_operands = 0 : i64, tpu.core_type = #tpu.core_type<tc>, window_params = [{transform_indices = @transform_0, window_bounds = array<i64: 64, 3072>}, {pipeline_mode = #tpu.pipeline_mode<synchronous>, transform_indices = @transform_1, window_bounds = array<i64: 3072, 128>}, {pipeline_mode = #tpu.pipeline_mode<synchronous>, transform_indices = @transform_2, window_bounds = array<i64: 1, 128>}, {pipeline_mode = #tpu.pipeline_mode<synchronous>, transform_indices = @transform_3, window_bounds = array<i64: 128, 128>}, {pipeline_mode = #tpu.pipeline_mode<synchronous>, transform_indices = @transform_4, window_bounds = array<i64: 1, 128>}, {transform_indices = @transform_5, window_bounds = array<i64: 64, 128>}]} {
    %c0 = arith.constant 0 : index
    %c0_0 = arith.constant 0 : index
    %0 = vector.load %arg1[%c0, %c0_0] : memref<64x3072xbf16, #tpu.memory_space<vmem>>, vector<64x3072xbf16>
    %c0_1 = arith.constant 0 : index
    %c0_2 = arith.constant 0 : index
    %1 = vector.load %arg2[%c0_1, %c0_2] : memref<3072x128xbf16, #tpu.memory_space<vmem>>, vector<3072x128xbf16>
    %cst = arith.constant dense<0.000000e+00> : vector<64x128xf32>
    %2 = tpu.matmul %0, %1, %cst {dimension_numbers = #tpu.dot_dimension_numbers<[1], [0], [0], [1], [0, 0, 1, 1], [], []>} : vector<64x3072xbf16>, vector<3072x128xbf16>, vector<64x128xf32> -> vector<64x128xf32>
    %c0_3 = arith.constant 0 : index
    %c0_4 = arith.constant 0 : index
    %3 = vector.load %arg3[%c0_3, %c0_4] : memref<1x128xf32, #tpu.memory_space<vmem>>, vector<1x128xf32>
    %4 = vector.broadcast %3 : vector<1x128xf32> to vector<64x128xf32>
    %5 = arith.addf %2, %4 : vector<64x128xf32>
    %cst_5 = arith.constant 0.000000e+00 : f32
    %6 = vector.broadcast %cst_5 : f32 to vector<64x128xf32>
    %7 = arith.maximumf %5, %6 : vector<64x128xf32>
    %8 = arith.truncf %7 : vector<64x128xf32> to vector<64x128xbf16>
    %c0_6 = arith.constant 0 : index
    %c0_7 = arith.constant 0 : index
    %9 = vector.load %arg4[%c0_6, %c0_7] : memref<128x128xbf16, #tpu.memory_space<vmem>>, vector<128x128xbf16>
    %cst_8 = arith.constant dense<0.000000e+00> : vector<64x128xf32>
    %10 = tpu.matmul %8, %9, %cst_8 {dimension_numbers = #tpu.dot_dimension_numbers<[1], [0], [0], [1], [0, 0, 1, 1], [], []>} : vector<64x128xbf16>, vector<128x128xbf16>, vector<64x128xf32> -> vector<64x128xf32>
    %c0_9 = arith.constant 0 : index
    %c0_10 = arith.constant 0 : index
    %11 = vector.load %arg5[%c0_9, %c0_10] : memref<1x128xf32, #tpu.memory_space<vmem>>, vector<1x128xf32>
    %12 = vector.broadcast %11 : vector<1x128xf32> to vector<64x128xf32>
    %13 = arith.addf %10, %12 : vector<64x128xf32>
    %c0_11 = arith.constant 0 : index
    %c0_12 = arith.constant 0 : index
    %14 = vector.load %arg6[%c0_11, %c0_12] : memref<64x128xf32, #tpu.memory_space<vmem>>, vector<64x128xf32>
    tpu.vector_store %arg6[%c0_11, %c0_12], %13 {strides = array<i32>} : memref<64x128xf32, #tpu.memory_space<vmem>>, vector<64x128xf32>,
    return
  }
  func.func @transform_0(%arg0: i32) -> (i32, i32) {
    %c0_i32 = arith.constant 0 : i32
    %c0_i32_0 = arith.constant 0 : i32
    return %arg0, %c0_i32 : i32, i32
  }
  func.func @transform_1(%arg0: i32) -> (i32, i32) {
    %c0_i32 = arith.constant 0 : i32
    %c0_i32_0 = arith.constant 0 : i32
    %c0_i32_1 = arith.constant 0 : i32
    return %c0_i32, %c0_i32_0 : i32, i32
  }
  func.func @transform_2(%arg0: i32) -> (i32, i32) {
    %c0_i32 = arith.constant 0 : i32
    %c0_i32_0 = arith.constant 0 : i32
    %c0_i32_1 = arith.constant 0 : i32
    return %c0_i32, %c0_i32_0 : i32, i32
  }
  func.func @transform_3(%arg0: i32) -> (i32, i32) {
    %c0_i32 = arith.constant 0 : i32
    %c0_i32_0 = arith.constant 0 : i32
    %c0_i32_1 = arith.constant 0 : i32
    return %c0_i32, %c0_i32_0 : i32, i32
  }
  func.func @transform_4(%arg0: i32) -> (i32, i32) {
    %c0_i32 = arith.constant 0 : i32
    %c0_i32_0 = arith.constant 0 : i32
    %c0_i32_1 = arith.constant 0 : i32
    return %c0_i32, %c0_i32_0 : i32, i32
  }
  func.func @transform_5(%arg0: i32) -> (i32, i32) {
    %c0_i32 = arith.constant 0 : i32
    %c0_i32_0 = arith.constant 0 : i32
    return %arg0, %c0_i32 : i32, i32
  }
}

module attributes {stable_mosaic.version = 11 : i64} {
  func.func @_bidir_kernel(%arg0: i32, %arg1: memref<1x5x8x128xf32, #tpu.memory_space<vmem>>, %arg2: memref<1x128x24xf32, #tpu.memory_space<vmem>>, %arg3: memref<1x256x384xbf16, #tpu.memory_space<vmem>>, %arg4: memref<1x128x128xbf16, #tpu.memory_space<vmem>>, %arg5: memref<1x1x384xf32, #tpu.memory_space<vmem>>, %arg6: memref<128x128xbf16, #tpu.memory_space<vmem>>, %arg7: memref<1x128xf32, #tpu.memory_space<vmem>>, %arg8: memref<128x128xbf16, #tpu.memory_space<vmem>>, %arg9: memref<1x128xf32, #tpu.memory_space<vmem>>, %arg10: memref<128x128xbf16, #tpu.memory_space<vmem>>, %arg11: memref<1x1x1xf32, #tpu.memory_space<vmem>>) attributes {dimension_semantics = [#tpu.dimension_semantics<parallel>], iteration_bounds = array<i64: 2>, scalar_prefetch = 0 : i64, scratch_operands = 0 : i64, tpu.core_type = #tpu.core_type<tc>, window_params = [{transform_indices = @transform_0, window_bounds = array<i64: 1, 5, 8, 128>}, {transform_indices = @transform_1, window_bounds = array<i64: 1, 128, 24>}, {transform_indices = @transform_2, window_bounds = array<i64: 1, 256, 384>}, {transform_indices = @transform_3, window_bounds = array<i64: 1, 128, 128>}, {transform_indices = @transform_4, window_bounds = array<i64: 1, 1, 384>}, {pipeline_mode = #tpu.pipeline_mode<synchronous>, transform_indices = @transform_5, window_bounds = array<i64: 128, 128>}, {pipeline_mode = #tpu.pipeline_mode<synchronous>, transform_indices = @transform_6, window_bounds = array<i64: 1, 128>}, {pipeline_mode = #tpu.pipeline_mode<synchronous>, transform_indices = @transform_7, window_bounds = array<i64: 128, 128>}, {pipeline_mode = #tpu.pipeline_mode<synchronous>, transform_indices = @transform_8, window_bounds = array<i64: 1, 128>}, {pipeline_mode = #tpu.pipeline_mode<synchronous>, transform_indices = @transform_9, window_bounds = array<i64: 128, 128>}, {transform_indices = @transform_10, window_bounds = array<i64: 1, 1, 1>}]} {
    %c0 = arith.constant 0 : index
    %c0_0 = arith.constant 0 : index
    %c0_1 = arith.constant 0 : index
    %0 = vector.load %arg3[%c0, %c0_0, %c0_1] : memref<1x256x384xbf16, #tpu.memory_space<vmem>>, vector<1x256x384xbf16>
    %1 = vector.shape_cast %0 : vector<1x256x384xbf16> to vector<256x384xbf16>
    %c0_2 = arith.constant 0 : index
    %c0_3 = arith.constant 0 : index
    %c0_4 = arith.constant 0 : index
    %2 = vector.load %arg4[%c0_2, %c0_3, %c0_4] : memref<1x128x128xbf16, #tpu.memory_space<vmem>>, vector<1x128x128xbf16>
    %3 = vector.shape_cast %2 : vector<1x128x128xbf16> to vector<128x128xbf16>
    %c0_5 = arith.constant 0 : index
    %c0_6 = arith.constant 0 : index
    %c0_7 = arith.constant 0 : index
    %4 = vector.load %arg5[%c0_5, %c0_6, %c0_7] : memref<1x1x384xf32, #tpu.memory_space<vmem>>, vector<1x1x128xf32>
    %5 = vector.shape_cast %4 : vector<1x1x128xf32> to vector<1x128xf32>
    %c0_8 = arith.constant 0 : index
    %c0_9 = arith.constant 0 : index
    %c128 = arith.constant 128 : index
    %6 = vector.load %arg5[%c0_8, %c0_9, %c128] : memref<1x1x384xf32, #tpu.memory_space<vmem>>, vector<1x1x128xf32>
    %7 = vector.shape_cast %6 : vector<1x1x128xf32> to vector<1x128xf32>
    %c0_10 = arith.constant 0 : index
    %c0_11 = arith.constant 0 : index
    %c256 = arith.constant 256 : index
    %8 = vector.load %arg5[%c0_10, %c0_11, %c256] : memref<1x1x384xf32, #tpu.memory_space<vmem>>, vector<1x1x128xf32>
    %9 = vector.shape_cast %8 : vector<1x1x128xf32> to vector<1x128xf32>
    %c0_12 = arith.constant 0 : index
    %c0_13 = arith.constant 0 : index
    %10 = vector.load %arg6[%c0_12, %c0_13] : memref<128x128xbf16, #tpu.memory_space<vmem>>, vector<128x128xbf16>
    %c0_14 = arith.constant 0 : index
    %c0_15 = arith.constant 0 : index
    %11 = vector.load %arg7[%c0_14, %c0_15] : memref<1x128xf32, #tpu.memory_space<vmem>>, vector<1x128xf32>
    %c0_16 = arith.constant 0 : index
    %c0_17 = arith.constant 0 : index
    %12 = vector.load %arg8[%c0_16, %c0_17] : memref<128x128xbf16, #tpu.memory_space<vmem>>, vector<128x128xbf16>
    %c0_18 = arith.constant 0 : index
    %c0_19 = arith.constant 0 : index
    %13 = vector.load %arg9[%c0_18, %c0_19] : memref<1x128xf32, #tpu.memory_space<vmem>>, vector<1x128xf32>
    %c0_20 = arith.constant 0 : index
    %c0_21 = arith.constant 0 : index
    %14 = vector.load %arg10[%c0_20, %c0_21] : memref<128x128xbf16, #tpu.memory_space<vmem>>, vector<128x128xbf16>
    %c0_22 = arith.constant 0 : index
    %c0_23 = arith.constant 0 : index
    %c0_24 = arith.constant 0 : index
    %15 = vector.load %arg2[%c0_22, %c0_23, %c0_24] : memref<1x128x24xf32, #tpu.memory_space<vmem>>, vector<1x128x24xf32>
    %16 = vector.shape_cast %15 : vector<1x128x24xf32> to vector<128x24xf32>
    %cst = arith.constant 0.000000e+00 : f32
    %17 = vector.broadcast %cst : f32 to vector<8x128xf32>
    %c0_25 = arith.constant 0 : index
    %c0_26 = arith.constant 0 : index
    %c0_27 = arith.constant 0 : index
    %c0_28 = arith.constant 0 : index
    %18 = vector.load %arg1[%c0_25, %c0_26, %c0_27, %c0_28] : memref<1x5x8x128xf32, #tpu.memory_space<vmem>>, vector<1x1x8x128xf32>
    %19 = vector.shape_cast %18 : vector<1x1x8x128xf32> to vector<8x128xf32>
    %cst_29 = arith.constant 0.000000e+00 : f32
    %20 = vector.broadcast %cst_29 : f32 to vector<8x128xf32>
    %21 = arith.maximumf %19, %20 : vector<8x128xf32>
    %22 = arith.truncf %21 : vector<8x128xf32> to vector<8x128xbf16>
    %23 = arith.truncf %17 : vector<8x128xf32> to vector<8x128xbf16>
    %24 = tpu.concatenate %22, %23 in 1 : vector<8x128xbf16>, vector<8x128xbf16> -> vector<8x256xbf16>
    %cst_30 = arith.constant dense<0.000000e+00> : vector<8x384xf32>
    %25 = tpu.matmul %24, %1, %cst_30 {dimension_numbers = #tpu.dot_dimension_numbers<[1], [0], [0], [1], [0, 0, 1, 1], [], []>} : vector<8x256xbf16>, vector<256x384xbf16>, vector<8x384xf32> -> vector<8x384xf32>
    %26 = vector.extract_strided_slice %25 {offsets = [0, 0], sizes = [8, 128], strides = [1, 1]} : vector<8x384xf32> to vector<8x128xf32>
    %27 = vector.broadcast %5 : vector<1x128xf32> to vector<8x128xf32>
    %28 = arith.addf %26, %27 : vector<8x128xf32>
    %29 = arith.negf %28 : vector<8x128xf32>
    %30 = math.exp %29 : vector<8x128xf32>
    %cst_31 = arith.constant 1.000000e+00 : f32
    %31 = vector.broadcast %cst_31 : f32 to vector<8x128xf32>
    %32 = arith.addf %31, %30 : vector<8x128xf32>
    %33 = arith.divf %31, %32 : vector<8x128xf32>
    %34 = vector.extract_strided_slice %25 {offsets = [0, 128], sizes = [8, 128], strides = [1, 1]} : vector<8x384xf32> to vector<8x128xf32>
    %35 = vector.broadcast %7 : vector<1x128xf32> to vector<8x128xf32>
    %36 = arith.addf %34, %35 : vector<8x128xf32>
    %37 = arith.negf %36 : vector<8x128xf32>
    %38 = math.exp %37 : vector<8x128xf32>
    %cst_32 = arith.constant 1.000000e+00 : f32
    %39 = vector.broadcast %cst_32 : f32 to vector<8x128xf32>
    %40 = arith.addf %39, %38 : vector<8x128xf32>
    %41 = arith.divf %39, %40 : vector<8x128xf32>
    %42 = vector.extract_strided_slice %25 {offsets = [0, 256], sizes = [8, 128], strides = [1, 1]} : vector<8x384xf32> to vector<8x128xf32>
    %43 = arith.mulf %17, %41 : vector<8x128xf32>
    %44 = arith.truncf %43 : vector<8x128xf32> to vector<8x128xbf16>
    %cst_33 = arith.constant dense<0.000000e+00> : vector<8x128xf32>
    %45 = tpu.matmul %44, %3, %cst_33 {dimension_numbers = #tpu.dot_dimension_numbers<[1], [0], [0], [1], [0, 0, 1, 1], [], []>} : vector<8x128xbf16>, vector<128x128xbf16>, vector<8x128xf32> -> vector<8x128xf32>
    %46 = arith.addf %42, %45 : vector<8x128xf32>
    %47 = vector.broadcast %9 : vector<1x128xf32> to vector<8x128xf32>
    %48 = arith.addf %46, %47 : vector<8x128xf32>
    %49 = math.tanh %48 : vector<8x128xf32>
    %cst_34 = arith.constant 1.000000e+00 : f32
    %50 = vector.broadcast %cst_34 : f32 to vector<8x128xf32>
    %51 = arith.subf %50, %33 : vector<8x128xf32>
    %52 = arith.mulf %17, %51 : vector<8x128xf32>
    %53 = arith.mulf %49, %33 : vector<8x128xf32>
    %54 = arith.addf %52, %53 : vector<8x128xf32>
    %c0_35 = arith.constant 0 : index
    %c1 = arith.constant 1 : index
    %c0_36 = arith.constant 0 : index
    %c0_37 = arith.constant 0 : index
    %55 = vector.load %arg1[%c0_35, %c1, %c0_36, %c0_37] : memref<1x5x8x128xf32, #tpu.memory_space<vmem>>, vector<1x1x8x128xf32>
    %56 = vector.shape_cast %55 : vector<1x1x8x128xf32> to vector<8x128xf32>
    %cst_38 = arith.constant 0.000000e+00 : f32
    %57 = vector.broadcast %cst_38 : f32 to vector<8x128xf32>
    %58 = arith.maximumf %56, %57 : vector<8x128xf32>
    %59 = arith.truncf %58 : vector<8x128xf32> to vector<8x128xbf16>
    %60 = arith.truncf %54 : vector<8x128xf32> to vector<8x128xbf16>
    %61 = tpu.concatenate %59, %60 in 1 : vector<8x128xbf16>, vector<8x128xbf16> -> vector<8x256xbf16>
    %cst_39 = arith.constant dense<0.000000e+00> : vector<8x384xf32>
    %62 = tpu.matmul %61, %1, %cst_39 {dimension_numbers = #tpu.dot_dimension_numbers<[1], [0], [0], [1], [0, 0, 1, 1], [], []>} : vector<8x256xbf16>, vector<256x384xbf16>, vector<8x384xf32> -> vector<8x384xf32>
    %63 = vector.extract_strided_slice %62 {offsets = [0, 0], sizes = [8, 128], strides = [1, 1]} : vector<8x384xf32> to vector<8x128xf32>
    %64 = vector.broadcast %5 : vector<1x128xf32> to vector<8x128xf32>
    %65 = arith.addf %63, %64 : vector<8x128xf32>
    %66 = arith.negf %65 : vector<8x128xf32>
    %67 = math.exp %66 : vector<8x128xf32>
    %cst_40 = arith.constant 1.000000e+00 : f32
    %68 = vector.broadcast %cst_40 : f32 to vector<8x128xf32>
    %69 = arith.addf %68, %67 : vector<8x128xf32>
    %70 = arith.divf %68, %69 : vector<8x128xf32>
    %71 = vector.extract_strided_slice %62 {offsets = [0, 128], sizes = [8, 128], strides = [1, 1]} : vector<8x384xf32> to vector<8x128xf32>
    %72 = vector.broadcast %7 : vector<1x128xf32> to vector<8x128xf32>
    %73 = arith.addf %71, %72 : vector<8x128xf32>
    %74 = arith.negf %73 : vector<8x128xf32>
    %75 = math.exp %74 : vector<8x128xf32>
    %cst_41 = arith.constant 1.000000e+00 : f32
    %76 = vector.broadcast %cst_41 : f32 to vector<8x128xf32>
    %77 = arith.addf %76, %75 : vector<8x128xf32>
    %78 = arith.divf %76, %77 : vector<8x128xf32>
    %79 = vector.extract_strided_slice %62 {offsets = [0, 256], sizes = [8, 128], strides = [1, 1]} : vector<8x384xf32> to vector<8x128xf32>
    %80 = arith.mulf %54, %78 : vector<8x128xf32>
    %81 = arith.truncf %80 : vector<8x128xf32> to vector<8x128xbf16>
    %cst_42 = arith.constant dense<0.000000e+00> : vector<8x128xf32>
    %82 = tpu.matmul %81, %3, %cst_42 {dimension_numbers = #tpu.dot_dimension_numbers<[1], [0], [0], [1], [0, 0, 1, 1], [], []>} : vector<8x128xbf16>, vector<128x128xbf16>, vector<8x128xf32> -> vector<8x128xf32>
    %83 = arith.addf %79, %82 : vector<8x128xf32>
    %84 = vector.broadcast %9 : vector<1x128xf32> to vector<8x128xf32>
    %85 = arith.addf %83, %84 : vector<8x128xf32>
    %86 = math.tanh %85 : vector<8x128xf32>
    %cst_43 = arith.constant 1.000000e+00 : f32
    %87 = vector.broadcast %cst_43 : f32 to vector<8x128xf32>
    %88 = arith.subf %87, %70 : vector<8x128xf32>
    %89 = arith.mulf %54, %88 : vector<8x128xf32>
    %90 = arith.mulf %86, %70 : vector<8x128xf32>
    %91 = arith.addf %89, %90 : vector<8x128xf32>
    %c0_44 = arith.constant 0 : index
    %c2 = arith.constant 2 : index
    %c0_45 = arith.constant 0 : index
    %c0_46 = arith.constant 0 : index
    %92 = vector.load %arg1[%c0_44, %c2, %c0_45, %c0_46] : memref<1x5x8x128xf32, #tpu.memory_space<vmem>>, vector<1x1x8x128xf32>
    %93 = vector.shape_cast %92 : vector<1x1x8x128xf32> to vector<8x128xf32>
    %cst_47 = arith.constant 0.000000e+00 : f32
    %94 = vector.broadcast %cst_47 : f32 to vector<8x128xf32>
    %95 = arith.maximumf %93, %94 : vector<8x128xf32>
    %96 = arith.truncf %95 : vector<8x128xf32> to vector<8x128xbf16>
    %97 = arith.truncf %91 : vector<8x128xf32> to vector<8x128xbf16>
    %98 = tpu.concatenate %96, %97 in 1 : vector<8x128xbf16>, vector<8x128xbf16> -> vector<8x256xbf16>
    %cst_48 = arith.constant dense<0.000000e+00> : vector<8x384xf32>
    %99 = tpu.matmul %98, %1, %cst_48 {dimension_numbers = #tpu.dot_dimension_numbers<[1], [0], [0], [1], [0, 0, 1, 1], [], []>} : vector<8x256xbf16>, vector<256x384xbf16>, vector<8x384xf32> -> vector<8x384xf32>
    %100 = vector.extract_strided_slice %99 {offsets = [0, 0], sizes = [8, 128], strides = [1, 1]} : vector<8x384xf32> to vector<8x128xf32>
    %101 = vector.broadcast %5 : vector<1x128xf32> to vector<8x128xf32>
    %102 = arith.addf %100, %101 : vector<8x128xf32>
    %103 = arith.negf %102 : vector<8x128xf32>
    %104 = math.exp %103 : vector<8x128xf32>
    %cst_49 = arith.constant 1.000000e+00 : f32
    %105 = vector.broadcast %cst_49 : f32 to vector<8x128xf32>
    %106 = arith.addf %105, %104 : vector<8x128xf32>
    %107 = arith.divf %105, %106 : vector<8x128xf32>
    %108 = vector.extract_strided_slice %99 {offsets = [0, 128], sizes = [8, 128], strides = [1, 1]} : vector<8x384xf32> to vector<8x128xf32>
    %109 = vector.broadcast %7 : vector<1x128xf32> to vector<8x128xf32>
    %110 = arith.addf %108, %109 : vector<8x128xf32>
    %111 = arith.negf %110 : vector<8x128xf32>
    %112 = math.exp %111 : vector<8x128xf32>
    %cst_50 = arith.constant 1.000000e+00 : f32
    %113 = vector.broadcast %cst_50 : f32 to vector<8x128xf32>
    %114 = arith.addf %113, %112 : vector<8x128xf32>
    %115 = arith.divf %113, %114 : vector<8x128xf32>
    %116 = vector.extract_strided_slice %99 {offsets = [0, 256], sizes = [8, 128], strides = [1, 1]} : vector<8x384xf32> to vector<8x128xf32>
    %117 = arith.mulf %91, %115 : vector<8x128xf32>
    %118 = arith.truncf %117 : vector<8x128xf32> to vector<8x128xbf16>
    %cst_51 = arith.constant dense<0.000000e+00> : vector<8x128xf32>
    %119 = tpu.matmul %118, %3, %cst_51 {dimension_numbers = #tpu.dot_dimension_numbers<[1], [0], [0], [1], [0, 0, 1, 1], [], []>} : vector<8x128xbf16>, vector<128x128xbf16>, vector<8x128xf32> -> vector<8x128xf32>
    %120 = arith.addf %116, %119 : vector<8x128xf32>
    %121 = vector.broadcast %9 : vector<1x128xf32> to vector<8x128xf32>
    %122 = arith.addf %120, %121 : vector<8x128xf32>
    %123 = math.tanh %122 : vector<8x128xf32>
    %cst_52 = arith.constant 1.000000e+00 : f32
    %124 = vector.broadcast %cst_52 : f32 to vector<8x128xf32>
    %125 = arith.subf %124, %107 : vector<8x128xf32>
    %126 = arith.mulf %91, %125 : vector<8x128xf32>
    %127 = arith.mulf %123, %107 : vector<8x128xf32>
    %128 = arith.addf %126, %127 : vector<8x128xf32>
    %c0_53 = arith.constant 0 : index
    %c3 = arith.constant 3 : index
    %c0_54 = arith.constant 0 : index
    %c0_55 = arith.constant 0 : index
    %129 = vector.load %arg1[%c0_53, %c3, %c0_54, %c0_55] : memref<1x5x8x128xf32, #tpu.memory_space<vmem>>, vector<1x1x8x128xf32>
    %130 = vector.shape_cast %129 : vector<1x1x8x128xf32> to vector<8x128xf32>
    %cst_56 = arith.constant 0.000000e+00 : f32
    %131 = vector.broadcast %cst_56 : f32 to vector<8x128xf32>
    %132 = arith.maximumf %130, %131 : vector<8x128xf32>
    %133 = arith.truncf %132 : vector<8x128xf32> to vector<8x128xbf16>
    %134 = arith.truncf %128 : vector<8x128xf32> to vector<8x128xbf16>
    %135 = tpu.concatenate %133, %134 in 1 : vector<8x128xbf16>, vector<8x128xbf16> -> vector<8x256xbf16>
    %cst_57 = arith.constant dense<0.000000e+00> : vector<8x384xf32>
    %136 = tpu.matmul %135, %1, %cst_57 {dimension_numbers = #tpu.dot_dimension_numbers<[1], [0], [0], [1], [0, 0, 1, 1], [], []>} : vector<8x256xbf16>, vector<256x384xbf16>, vector<8x384xf32> -> vector<8x384xf32>
    %137 = vector.extract_strided_slice %136 {offsets = [0, 0], sizes = [8, 128], strides = [1, 1]} : vector<8x384xf32> to vector<8x128xf32>
    %138 = vector.broadcast %5 : vector<1x128xf32> to vector<8x128xf32>
    %139 = arith.addf %137, %138 : vector<8x128xf32>
    %140 = arith.negf %139 : vector<8x128xf32>
    %141 = math.exp %140 : vector<8x128xf32>
    %cst_58 = arith.constant 1.000000e+00 : f32
    %142 = vector.broadcast %cst_58 : f32 to vector<8x128xf32>
    %143 = arith.addf %142, %141 : vector<8x128xf32>
    %144 = arith.divf %142, %143 : vector<8x128xf32>
    %145 = vector.extract_strided_slice %136 {offsets = [0, 128], sizes = [8, 128], strides = [1, 1]} : vector<8x384xf32> to vector<8x128xf32>
    %146 = vector.broadcast %7 : vector<1x128xf32> to vector<8x128xf32>
    %147 = arith.addf %145, %146 : vector<8x128xf32>
    %148 = arith.negf %147 : vector<8x128xf32>
    %149 = math.exp %148 : vector<8x128xf32>
    %cst_59 = arith.constant 1.000000e+00 : f32
    %150 = vector.broadcast %cst_59 : f32 to vector<8x128xf32>
    %151 = arith.addf %150, %149 : vector<8x128xf32>
    %152 = arith.divf %150, %151 : vector<8x128xf32>
    %153 = vector.extract_strided_slice %136 {offsets = [0, 256], sizes = [8, 128], strides = [1, 1]} : vector<8x384xf32> to vector<8x128xf32>
    %154 = arith.mulf %128, %152 : vector<8x128xf32>
    %155 = arith.truncf %154 : vector<8x128xf32> to vector<8x128xbf16>
    %cst_60 = arith.constant dense<0.000000e+00> : vector<8x128xf32>
    %156 = tpu.matmul %155, %3, %cst_60 {dimension_numbers = #tpu.dot_dimension_numbers<[1], [0], [0], [1], [0, 0, 1, 1], [], []>} : vector<8x128xbf16>, vector<128x128xbf16>, vector<8x128xf32> -> vector<8x128xf32>
    %157 = arith.addf %153, %156 : vector<8x128xf32>
    %158 = vector.broadcast %9 : vector<1x128xf32> to vector<8x128xf32>
    %159 = arith.addf %157, %158 : vector<8x128xf32>
    %160 = math.tanh %159 : vector<8x128xf32>
    %cst_61 = arith.constant 1.000000e+00 : f32
    %161 = vector.broadcast %cst_61 : f32 to vector<8x128xf32>
    %162 = arith.subf %161, %144 : vector<8x128xf32>
    %163 = arith.mulf %128, %162 : vector<8x128xf32>
    %164 = arith.mulf %160, %144 : vector<8x128xf32>
    %165 = arith.addf %163, %164 : vector<8x128xf32>
    %c0_62 = arith.constant 0 : index
    %c4 = arith.constant 4 : index
    %c0_63 = arith.constant 0 : index
    %c0_64 = arith.constant 0 : index
    %166 = vector.load %arg1[%c0_62, %c4, %c0_63, %c0_64] : memref<1x5x8x128xf32, #tpu.memory_space<vmem>>, vector<1x1x8x128xf32>
    %167 = vector.shape_cast %166 : vector<1x1x8x128xf32> to vector<8x128xf32>
    %cst_65 = arith.constant 0.000000e+00 : f32
    %168 = vector.broadcast %cst_65 : f32 to vector<8x128xf32>
    %169 = arith.maximumf %167, %168 : vector<8x128xf32>
    %170 = arith.truncf %169 : vector<8x128xf32> to vector<8x128xbf16>
    %171 = arith.truncf %165 : vector<8x128xf32> to vector<8x128xbf16>
    %172 = tpu.concatenate %170, %171 in 1 : vector<8x128xbf16>, vector<8x128xbf16> -> vector<8x256xbf16>
    %cst_66 = arith.constant dense<0.000000e+00> : vector<8x384xf32>
    %173 = tpu.matmul %172, %1, %cst_66 {dimension_numbers = #tpu.dot_dimension_numbers<[1], [0], [0], [1], [0, 0, 1, 1], [], []>} : vector<8x256xbf16>, vector<256x384xbf16>, vector<8x384xf32> -> vector<8x384xf32>
    %174 = vector.extract_strided_slice %173 {offsets = [0, 0], sizes = [8, 128], strides = [1, 1]} : vector<8x384xf32> to vector<8x128xf32>
    %175 = vector.broadcast %5 : vector<1x128xf32> to vector<8x128xf32>
    %176 = arith.addf %174, %175 : vector<8x128xf32>
    %177 = arith.negf %176 : vector<8x128xf32>
    %178 = math.exp %177 : vector<8x128xf32>
    %cst_67 = arith.constant 1.000000e+00 : f32
    %179 = vector.broadcast %cst_67 : f32 to vector<8x128xf32>
    %180 = arith.addf %179, %178 : vector<8x128xf32>
    %181 = arith.divf %179, %180 : vector<8x128xf32>
    %182 = vector.extract_strided_slice %173 {offsets = [0, 128], sizes = [8, 128], strides = [1, 1]} : vector<8x384xf32> to vector<8x128xf32>
    %183 = vector.broadcast %7 : vector<1x128xf32> to vector<8x128xf32>
    %184 = arith.addf %182, %183 : vector<8x128xf32>
    %185 = arith.negf %184 : vector<8x128xf32>
    %186 = math.exp %185 : vector<8x128xf32>
    %cst_68 = arith.constant 1.000000e+00 : f32
    %187 = vector.broadcast %cst_68 : f32 to vector<8x128xf32>
    %188 = arith.addf %187, %186 : vector<8x128xf32>
    %189 = arith.divf %187, %188 : vector<8x128xf32>
    %190 = vector.extract_strided_slice %173 {offsets = [0, 256], sizes = [8, 128], strides = [1, 1]} : vector<8x384xf32> to vector<8x128xf32>
    %191 = arith.mulf %165, %189 : vector<8x128xf32>
    %192 = arith.truncf %191 : vector<8x128xf32> to vector<8x128xbf16>
    %cst_69 = arith.constant dense<0.000000e+00> : vector<8x128xf32>
    %193 = tpu.matmul %192, %3, %cst_69 {dimension_numbers = #tpu.dot_dimension_numbers<[1], [0], [0], [1], [0, 0, 1, 1], [], []>} : vector<8x128xbf16>, vector<128x128xbf16>, vector<8x128xf32> -> vector<8x128xf32>
    %194 = arith.addf %190, %193 : vector<8x128xf32>
    %195 = vector.broadcast %9 : vector<1x128xf32> to vector<8x128xf32>
    %196 = arith.addf %194, %195 : vector<8x128xf32>
    %197 = math.tanh %196 : vector<8x128xf32>
    %cst_70 = arith.constant 1.000000e+00 : f32
    %198 = vector.broadcast %cst_70 : f32 to vector<8x128xf32>
    %199 = arith.subf %198, %181 : vector<8x128xf32>
    %200 = arith.mulf %165, %199 : vector<8x128xf32>
    %201 = arith.mulf %197, %181 : vector<8x128xf32>
    %202 = arith.addf %200, %201 : vector<8x128xf32>
    %cst_71 = arith.constant 0.000000e+00 : f32
    %203 = vector.broadcast %cst_71 : f32 to vector<1x1xf32>
    %204 = arith.truncf %202 : vector<8x128xf32> to vector<8x128xbf16>
    %cst_72 = arith.constant dense<0.000000e+00> : vector<8x128xf32>
    %205 = tpu.matmul %204, %10, %cst_72 {dimension_numbers = #tpu.dot_dimension_numbers<[1], [0], [0], [1], [0, 0, 1, 1], [], []>} : vector<8x128xbf16>, vector<128x128xbf16>, vector<8x128xf32> -> vector<8x128xf32>
    %206 = vector.broadcast %11 : vector<1x128xf32> to vector<8x128xf32>
    %207 = arith.addf %205, %206 : vector<8x128xf32>
    %cst_73 = arith.constant 0.000000e+00 : f32
    %208 = vector.broadcast %cst_73 : f32 to vector<8x128xf32>
    %209 = arith.maximumf %207, %208 : vector<8x128xf32>
    %210 = arith.truncf %209 : vector<8x128xf32> to vector<8x128xbf16>
    %cst_74 = arith.constant dense<0.000000e+00> : vector<8x128xf32>
    %211 = tpu.matmul %210, %12, %cst_74 {dimension_numbers = #tpu.dot_dimension_numbers<[1], [0], [0], [1], [0, 0, 1, 1], [], []>} : vector<8x128xbf16>, vector<128x128xbf16>, vector<8x128xf32> -> vector<8x128xf32>
    %212 = vector.broadcast %13 : vector<1x128xf32> to vector<8x128xf32>
    %213 = arith.addf %211, %212 : vector<8x128xf32>
    %cst_75 = arith.constant dense<0xFF800000> : vector<8xf32>
    %214 = vector.multi_reduction <maximumf>, %213, %cst_75 [1] : vector<8x128xf32> to vector<8xf32>
    %215 = vector.shape_cast %214 : vector<8xf32> to vector<8x1xf32>
    %216 = vector.broadcast %215 : vector<8x1xf32> to vector<8x128xf32>
    %217 = arith.subf %213, %216 : vector<8x128xf32>
    %218 = math.exp %217 : vector<8x128xf32>
    %cst_76 = arith.constant dense<0.000000e+00> : vector<8xf32>
    %219 = vector.multi_reduction <add>, %218, %cst_76 [1] : vector<8x128xf32> to vector<8xf32>
    %220 = vector.shape_cast %219 : vector<8xf32> to vector<8x1xf32>
    %221 = arith.truncf %218 : vector<8x128xf32> to vector<8x128xbf16>
    %cst_77 = arith.constant dense<0.000000e+00> : vector<8x128xf32>
    %222 = tpu.matmul %221, %14, %cst_77 {dimension_numbers = #tpu.dot_dimension_numbers<[1], [0], [0], [1], [0, 0, 1, 1], [], []>} : vector<8x128xbf16>, vector<128x128xbf16>, vector<8x128xf32> -> vector<8x128xf32>
    %223 = tpu.reciprocal %220 {approx = true} : vector<8x1xf32> -> vector<8x1xf32>
    %224 = vector.broadcast %223 : vector<8x1xf32> to vector<8x128xf32>
    %225 = arith.mulf %222, %224 : vector<8x128xf32>
    %cst_78 = arith.constant dense<0.000000e+00> : vector<8x24xf32>
    %226 = tpu.matmul %225, %16, %cst_78 {dimension_numbers = #tpu.dot_dimension_numbers<[1], [0], [0], [1], [0, 0, 1, 1], [], []>} : vector<8x128xf32>, vector<128x24xf32>, vector<8x24xf32> -> vector<8x24xf32>
    %cst_79 = arith.constant dense<0xFF800000> : vector<8xf32>
    %227 = vector.multi_reduction <maximumf>, %226, %cst_79 [1] : vector<8x24xf32> to vector<8xf32>
    %228 = vector.shape_cast %227 : vector<8xf32> to vector<8x1xf32>
    %229 = vector.broadcast %228 : vector<8x1xf32> to vector<8x24xf32>
    %230 = arith.subf %226, %229 : vector<8x24xf32>
    %231 = math.exp %230 : vector<8x24xf32>
    %cst_80 = arith.constant dense<0.000000e+00> : vector<8xf32>
    %232 = vector.multi_reduction <add>, %231, %cst_80 [1] : vector<8x24xf32> to vector<8xf32>
    %233 = vector.shape_cast %232 : vector<8xf32> to vector<8x1xf32>
    %234 = math.log %233 : vector<8x1xf32>
    %235 = arith.addf %234, %228 : vector<8x1xf32>
    %236 = tpu.iota {dimensions = array<i32: 1>} : vector<8x24xi32>
    %237 = tpu.iota {dimensions = array<i32: 0>} : vector<8x24xi32>
    %c0_i32 = arith.constant 0 : i32
    %238 = vector.broadcast %c0_i32 : i32 to vector<8x24xi32>
    %239 = arith.addi %237, %238 : vector<8x24xi32>
    %240 = arith.cmpi eq, %236, %239 : vector<8x24xi32>
    %cst_81 = arith.constant 0.000000e+00 : f32
    %241 = vector.broadcast %cst_81 : f32 to vector<8x24xf32>
    %242 = arith.select %240, %226, %241 : vector<8x24xi1>, vector<8x24xf32>
    %cst_82 = arith.constant dense<0.000000e+00> : vector<8xf32>
    %243 = vector.multi_reduction <add>, %242, %cst_82 [1] : vector<8x24xf32> to vector<8xf32>
    %244 = vector.shape_cast %243 : vector<8xf32> to vector<8x1xf32>
    %245 = arith.subf %235, %244 : vector<8x1xf32>
    %cst_83 = arith.constant dense<0.000000e+00> : vector<1xf32>
    %246 = vector.multi_reduction <add>, %245, %cst_83 [0] : vector<8x1xf32> to vector<1xf32>
    %247 = vector.shape_cast %246 : vector<1xf32> to vector<1x1xf32>
    %248 = arith.addf %203, %247 : vector<1x1xf32>
    %cst_84 = arith.constant 0.000000e+00 : f32
    %249 = vector.broadcast %cst_84 : f32 to vector<8x128xf32>
    %250 = arith.maximumf %225, %249 : vector<8x128xf32>
    %251 = arith.truncf %250 : vector<8x128xf32> to vector<8x128xbf16>
    %252 = arith.truncf %202 : vector<8x128xf32> to vector<8x128xbf16>
    %253 = tpu.concatenate %251, %252 in 1 : vector<8x128xbf16>, vector<8x128xbf16> -> vector<8x256xbf16>
    %cst_85 = arith.constant dense<0.000000e+00> : vector<8x384xf32>
    %254 = tpu.matmul %253, %1, %cst_85 {dimension_numbers = #tpu.dot_dimension_numbers<[1], [0], [0], [1], [0, 0, 1, 1], [], []>} : vector<8x256xbf16>, vector<256x384xbf16>, vector<8x384xf32> -> vector<8x384xf32>
    %255 = vector.extract_strided_slice %254 {offsets = [0, 0], sizes = [8, 128], strides = [1, 1]} : vector<8x384xf32> to vector<8x128xf32>
    %256 = vector.broadcast %5 : vector<1x128xf32> to vector<8x128xf32>
    %257 = arith.addf %255, %256 : vector<8x128xf32>
    %258 = arith.negf %257 : vector<8x128xf32>
    %259 = math.exp %258 : vector<8x128xf32>
    %cst_86 = arith.constant 1.000000e+00 : f32
    %260 = vector.broadcast %cst_86 : f32 to vector<8x128xf32>
    %261 = arith.addf %260, %259 : vector<8x128xf32>
    %262 = arith.divf %260, %261 : vector<8x128xf32>
    %263 = vector.extract_strided_slice %254 {offsets = [0, 128], sizes = [8, 128], strides = [1, 1]} : vector<8x384xf32> to vector<8x128xf32>
    %264 = vector.broadcast %7 : vector<1x128xf32> to vector<8x128xf32>
    %265 = arith.addf %263, %264 : vector<8x128xf32>
    %266 = arith.negf %265 : vector<8x128xf32>
    %267 = math.exp %266 : vector<8x128xf32>
    %cst_87 = arith.constant 1.000000e+00 : f32
    %268 = vector.broadcast %cst_87 : f32 to vector<8x128xf32>
    %269 = arith.addf %268, %267 : vector<8x128xf32>
    %270 = arith.divf %268, %269 : vector<8x128xf32>
    %271 = vector.extract_strided_slice %254 {offsets = [0, 256], sizes = [8, 128], strides = [1, 1]} : vector<8x384xf32> to vector<8x128xf32>
    %272 = arith.mulf %202, %270 : vector<8x128xf32>
    %273 = arith.truncf %272 : vector<8x128xf32> to vector<8x128xbf16>
    %cst_88 = arith.constant dense<0.000000e+00> : vector<8x128xf32>
    %274 = tpu.matmul %273, %3, %cst_88 {dimension_numbers = #tpu.dot_dimension_numbers<[1], [0], [0], [1], [0, 0, 1, 1], [], []>} : vector<8x128xbf16>, vector<128x128xbf16>, vector<8x128xf32> -> vector<8x128xf32>
    %275 = arith.addf %271, %274 : vector<8x128xf32>
    %276 = vector.broadcast %9 : vector<1x128xf32> to vector<8x128xf32>
    %277 = arith.addf %275, %276 : vector<8x128xf32>
    %278 = math.tanh %277 : vector<8x128xf32>
    %cst_89 = arith.constant 1.000000e+00 : f32
    %279 = vector.broadcast %cst_89 : f32 to vector<8x128xf32>
    %280 = arith.subf %279, %262 : vector<8x128xf32>
    %281 = arith.mulf %202, %280 : vector<8x128xf32>
    %282 = arith.mulf %278, %262 : vector<8x128xf32>
    %283 = arith.addf %281, %282 : vector<8x128xf32>
    %284 = arith.truncf %283 : vector<8x128xf32> to vector<8x128xbf16>
    %cst_90 = arith.constant dense<0.000000e+00> : vector<8x128xf32>
    %285 = tpu.matmul %284, %10, %cst_90 {dimension_numbers = #tpu.dot_dimension_numbers<[1], [0], [0], [1], [0, 0, 1, 1], [], []>} : vector<8x128xbf16>, vector<128x128xbf16>, vector<8x128xf32> -> vector<8x128xf32>
    %286 = vector.broadcast %11 : vector<1x128xf32> to vector<8x128xf32>
    %287 = arith.addf %285, %286 : vector<8x128xf32>
    %cst_91 = arith.constant 0.000000e+00 : f32
    %288 = vector.broadcast %cst_91 : f32 to vector<8x128xf32>
    %289 = arith.maximumf %287, %288 : vector<8x128xf32>
    %290 = arith.truncf %289 : vector<8x128xf32> to vector<8x128xbf16>
    %cst_92 = arith.constant dense<0.000000e+00> : vector<8x128xf32>
    %291 = tpu.matmul %290, %12, %cst_92 {dimension_numbers = #tpu.dot_dimension_numbers<[1], [0], [0], [1], [0, 0, 1, 1], [], []>} : vector<8x128xbf16>, vector<128x128xbf16>, vector<8x128xf32> -> vector<8x128xf32>
    %292 = vector.broadcast %13 : vector<1x128xf32> to vector<8x128xf32>
    %293 = arith.addf %291, %292 : vector<8x128xf32>
    %cst_93 = arith.constant dense<0xFF800000> : vector<8xf32>
    %294 = vector.multi_reduction <maximumf>, %293, %cst_93 [1] : vector<8x128xf32> to vector<8xf32>
    %295 = vector.shape_cast %294 : vector<8xf32> to vector<8x1xf32>
    %296 = vector.broadcast %295 : vector<8x1xf32> to vector<8x128xf32>
    %297 = arith.subf %293, %296 : vector<8x128xf32>
    %298 = math.exp %297 : vector<8x128xf32>
    %cst_94 = arith.constant dense<0.000000e+00> : vector<8xf32>
    %299 = vector.multi_reduction <add>, %298, %cst_94 [1] : vector<8x128xf32> to vector<8xf32>
    %300 = vector.shape_cast %299 : vector<8xf32> to vector<8x1xf32>
    %301 = arith.truncf %298 : vector<8x128xf32> to vector<8x128xbf16>
    %cst_95 = arith.constant dense<0.000000e+00> : vector<8x128xf32>
    %302 = tpu.matmul %301, %14, %cst_95 {dimension_numbers = #tpu.dot_dimension_numbers<[1], [0], [0], [1], [0, 0, 1, 1], [], []>} : vector<8x128xbf16>, vector<128x128xbf16>, vector<8x128xf32> -> vector<8x128xf32>
    %303 = tpu.reciprocal %300 {approx = true} : vector<8x1xf32> -> vector<8x1xf32>
    %304 = vector.broadcast %303 : vector<8x1xf32> to vector<8x128xf32>
    %305 = arith.mulf %302, %304 : vector<8x128xf32>
    %cst_96 = arith.constant dense<0.000000e+00> : vector<8x24xf32>
    %306 = tpu.matmul %305, %16, %cst_96 {dimension_numbers = #tpu.dot_dimension_numbers<[1], [0], [0], [1], [0, 0, 1, 1], [], []>} : vector<8x128xf32>, vector<128x24xf32>, vector<8x24xf32> -> vector<8x24xf32>
    %cst_97 = arith.constant dense<0xFF800000> : vector<8xf32>
    %307 = vector.multi_reduction <maximumf>, %306, %cst_97 [1] : vector<8x24xf32> to vector<8xf32>
    %308 = vector.shape_cast %307 : vector<8xf32> to vector<8x1xf32>
    %309 = vector.broadcast %308 : vector<8x1xf32> to vector<8x24xf32>
    %310 = arith.subf %306, %309 : vector<8x24xf32>
    %311 = math.exp %310 : vector<8x24xf32>
    %cst_98 = arith.constant dense<0.000000e+00> : vector<8xf32>
    %312 = vector.multi_reduction <add>, %311, %cst_98 [1] : vector<8x24xf32> to vector<8xf32>
    %313 = vector.shape_cast %312 : vector<8xf32> to vector<8x1xf32>
    %314 = math.log %313 : vector<8x1xf32>
    %315 = arith.addf %314, %308 : vector<8x1xf32>
    %316 = tpu.iota {dimensions = array<i32: 1>} : vector<8x24xi32>
    %317 = tpu.iota {dimensions = array<i32: 0>} : vector<8x24xi32>
    %c8_i32 = arith.constant 8 : i32
    %318 = vector.broadcast %c8_i32 : i32 to vector<8x24xi32>
    %319 = arith.addi %317, %318 : vector<8x24xi32>
    %320 = arith.cmpi eq, %316, %319 : vector<8x24xi32>
    %cst_99 = arith.constant 0.000000e+00 : f32
    %321 = vector.broadcast %cst_99 : f32 to vector<8x24xf32>
    %322 = arith.select %320, %306, %321 : vector<8x24xi1>, vector<8x24xf32>
    %cst_100 = arith.constant dense<0.000000e+00> : vector<8xf32>
    %323 = vector.multi_reduction <add>, %322, %cst_100 [1] : vector<8x24xf32> to vector<8xf32>
    %324 = vector.shape_cast %323 : vector<8xf32> to vector<8x1xf32>
    %325 = arith.subf %315, %324 : vector<8x1xf32>
    %cst_101 = arith.constant dense<0.000000e+00> : vector<1xf32>
    %326 = vector.multi_reduction <add>, %325, %cst_101 [0] : vector<8x1xf32> to vector<1xf32>
    %327 = vector.shape_cast %326 : vector<1xf32> to vector<1x1xf32>
    %328 = arith.addf %248, %327 : vector<1x1xf32>
    %cst_102 = arith.constant 0.000000e+00 : f32
    %329 = vector.broadcast %cst_102 : f32 to vector<8x128xf32>
    %330 = arith.maximumf %305, %329 : vector<8x128xf32>
    %331 = arith.truncf %330 : vector<8x128xf32> to vector<8x128xbf16>
    %332 = arith.truncf %283 : vector<8x128xf32> to vector<8x128xbf16>
    %333 = tpu.concatenate %331, %332 in 1 : vector<8x128xbf16>, vector<8x128xbf16> -> vector<8x256xbf16>
    %cst_103 = arith.constant dense<0.000000e+00> : vector<8x384xf32>
    %334 = tpu.matmul %333, %1, %cst_103 {dimension_numbers = #tpu.dot_dimension_numbers<[1], [0], [0], [1], [0, 0, 1, 1], [], []>} : vector<8x256xbf16>, vector<256x384xbf16>, vector<8x384xf32> -> vector<8x384xf32>
    %335 = vector.extract_strided_slice %334 {offsets = [0, 0], sizes = [8, 128], strides = [1, 1]} : vector<8x384xf32> to vector<8x128xf32>
    %336 = vector.broadcast %5 : vector<1x128xf32> to vector<8x128xf32>
    %337 = arith.addf %335, %336 : vector<8x128xf32>
    %338 = arith.negf %337 : vector<8x128xf32>
    %339 = math.exp %338 : vector<8x128xf32>
    %cst_104 = arith.constant 1.000000e+00 : f32
    %340 = vector.broadcast %cst_104 : f32 to vector<8x128xf32>
    %341 = arith.addf %340, %339 : vector<8x128xf32>
    %342 = arith.divf %340, %341 : vector<8x128xf32>
    %343 = vector.extract_strided_slice %334 {offsets = [0, 128], sizes = [8, 128], strides = [1, 1]} : vector<8x384xf32> to vector<8x128xf32>
    %344 = vector.broadcast %7 : vector<1x128xf32> to vector<8x128xf32>
    %345 = arith.addf %343, %344 : vector<8x128xf32>
    %346 = arith.negf %345 : vector<8x128xf32>
    %347 = math.exp %346 : vector<8x128xf32>
    %cst_105 = arith.constant 1.000000e+00 : f32
    %348 = vector.broadcast %cst_105 : f32 to vector<8x128xf32>
    %349 = arith.addf %348, %347 : vector<8x128xf32>
    %350 = arith.divf %348, %349 : vector<8x128xf32>
    %351 = vector.extract_strided_slice %334 {offsets = [0, 256], sizes = [8, 128], strides = [1, 1]} : vector<8x384xf32> to vector<8x128xf32>
    %352 = arith.mulf %283, %350 : vector<8x128xf32>
    %353 = arith.truncf %352 : vector<8x128xf32> to vector<8x128xbf16>
    %cst_106 = arith.constant dense<0.000000e+00> : vector<8x128xf32>
    %354 = tpu.matmul %353, %3, %cst_106 {dimension_numbers = #tpu.dot_dimension_numbers<[1], [0], [0], [1], [0, 0, 1, 1], [], []>} : vector<8x128xbf16>, vector<128x128xbf16>, vector<8x128xf32> -> vector<8x128xf32>
    %355 = arith.addf %351, %354 : vector<8x128xf32>
    %356 = vector.broadcast %9 : vector<1x128xf32> to vector<8x128xf32>
    %357 = arith.addf %355, %356 : vector<8x128xf32>
    %358 = math.tanh %357 : vector<8x128xf32>
    %cst_107 = arith.constant 1.000000e+00 : f32
    %359 = vector.broadcast %cst_107 : f32 to vector<8x128xf32>
    %360 = arith.subf %359, %342 : vector<8x128xf32>
    %361 = arith.mulf %283, %360 : vector<8x128xf32>
    %362 = arith.mulf %358, %342 : vector<8x128xf32>
    %363 = arith.addf %361, %362 : vector<8x128xf32>
    %364 = arith.truncf %363 : vector<8x128xf32> to vector<8x128xbf16>
    %cst_108 = arith.constant dense<0.000000e+00> : vector<8x128xf32>
    %365 = tpu.matmul %364, %10, %cst_108 {dimension_numbers = #tpu.dot_dimension_numbers<[1], [0], [0], [1], [0, 0, 1, 1], [], []>} : vector<8x128xbf16>, vector<128x128xbf16>, vector<8x128xf32> -> vector<8x128xf32>
    %366 = vector.broadcast %11 : vector<1x128xf32> to vector<8x128xf32>
    %367 = arith.addf %365, %366 : vector<8x128xf32>
    %cst_109 = arith.constant 0.000000e+00 : f32
    %368 = vector.broadcast %cst_109 : f32 to vector<8x128xf32>
    %369 = arith.maximumf %367, %368 : vector<8x128xf32>
    %370 = arith.truncf %369 : vector<8x128xf32> to vector<8x128xbf16>
    %cst_110 = arith.constant dense<0.000000e+00> : vector<8x128xf32>
    %371 = tpu.matmul %370, %12, %cst_110 {dimension_numbers = #tpu.dot_dimension_numbers<[1], [0], [0], [1], [0, 0, 1, 1], [], []>} : vector<8x128xbf16>, vector<128x128xbf16>, vector<8x128xf32> -> vector<8x128xf32>
    %372 = vector.broadcast %13 : vector<1x128xf32> to vector<8x128xf32>
    %373 = arith.addf %371, %372 : vector<8x128xf32>
    %cst_111 = arith.constant dense<0xFF800000> : vector<8xf32>
    %374 = vector.multi_reduction <maximumf>, %373, %cst_111 [1] : vector<8x128xf32> to vector<8xf32>
    %375 = vector.shape_cast %374 : vector<8xf32> to vector<8x1xf32>
    %376 = vector.broadcast %375 : vector<8x1xf32> to vector<8x128xf32>
    %377 = arith.subf %373, %376 : vector<8x128xf32>
    %378 = math.exp %377 : vector<8x128xf32>
    %cst_112 = arith.constant dense<0.000000e+00> : vector<8xf32>
    %379 = vector.multi_reduction <add>, %378, %cst_112 [1] : vector<8x128xf32> to vector<8xf32>
    %380 = vector.shape_cast %379 : vector<8xf32> to vector<8x1xf32>
    %381 = arith.truncf %378 : vector<8x128xf32> to vector<8x128xbf16>
    %cst_113 = arith.constant dense<0.000000e+00> : vector<8x128xf32>
    %382 = tpu.matmul %381, %14, %cst_113 {dimension_numbers = #tpu.dot_dimension_numbers<[1], [0], [0], [1], [0, 0, 1, 1], [], []>} : vector<8x128xbf16>, vector<128x128xbf16>, vector<8x128xf32> -> vector<8x128xf32>
    %383 = tpu.reciprocal %380 {approx = true} : vector<8x1xf32> -> vector<8x1xf32>
    %384 = vector.broadcast %383 : vector<8x1xf32> to vector<8x128xf32>
    %385 = arith.mulf %382, %384 : vector<8x128xf32>
    %cst_114 = arith.constant dense<0.000000e+00> : vector<8x24xf32>
    %386 = tpu.matmul %385, %16, %cst_114 {dimension_numbers = #tpu.dot_dimension_numbers<[1], [0], [0], [1], [0, 0, 1, 1], [], []>} : vector<8x128xf32>, vector<128x24xf32>, vector<8x24xf32> -> vector<8x24xf32>
    %cst_115 = arith.constant dense<0xFF800000> : vector<8xf32>
    %387 = vector.multi_reduction <maximumf>, %386, %cst_115 [1] : vector<8x24xf32> to vector<8xf32>
    %388 = vector.shape_cast %387 : vector<8xf32> to vector<8x1xf32>
    %389 = vector.broadcast %388 : vector<8x1xf32> to vector<8x24xf32>
    %390 = arith.subf %386, %389 : vector<8x24xf32>
    %391 = math.exp %390 : vector<8x24xf32>
    %cst_116 = arith.constant dense<0.000000e+00> : vector<8xf32>
    %392 = vector.multi_reduction <add>, %391, %cst_116 [1] : vector<8x24xf32> to vector<8xf32>
    %393 = vector.shape_cast %392 : vector<8xf32> to vector<8x1xf32>
    %394 = math.log %393 : vector<8x1xf32>
    %395 = arith.addf %394, %388 : vector<8x1xf32>
    %396 = tpu.iota {dimensions = array<i32: 1>} : vector<8x24xi32>
    %397 = tpu.iota {dimensions = array<i32: 0>} : vector<8x24xi32>
    %c16_i32 = arith.constant 16 : i32
    %398 = vector.broadcast %c16_i32 : i32 to vector<8x24xi32>
    %399 = arith.addi %397, %398 : vector<8x24xi32>
    %400 = arith.cmpi eq, %396, %399 : vector<8x24xi32>
    %cst_117 = arith.constant 0.000000e+00 : f32
    %401 = vector.broadcast %cst_117 : f32 to vector<8x24xf32>
    %402 = arith.select %400, %386, %401 : vector<8x24xi1>, vector<8x24xf32>
    %cst_118 = arith.constant dense<0.000000e+00> : vector<8xf32>
    %403 = vector.multi_reduction <add>, %402, %cst_118 [1] : vector<8x24xf32> to vector<8xf32>
    %404 = vector.shape_cast %403 : vector<8xf32> to vector<8x1xf32>
    %405 = arith.subf %395, %404 : vector<8x1xf32>
    %cst_119 = arith.constant dense<0.000000e+00> : vector<1xf32>
    %406 = vector.multi_reduction <add>, %405, %cst_119 [0] : vector<8x1xf32> to vector<1xf32>
    %407 = vector.shape_cast %406 : vector<1xf32> to vector<1x1xf32>
    %408 = arith.addf %328, %407 : vector<1x1xf32>
    %cst_120 = arith.constant 2.400000e+01 : f32
    %409 = vector.broadcast %cst_120 : f32 to vector<1x1xf32>
    %410 = arith.divf %408, %409 : vector<1x1xf32>
    %411 = vector.shape_cast %410 : vector<1x1xf32> to vector<1x1x1xf32>
    %c0_121 = arith.constant 0 : index
    %c0_122 = arith.constant 0 : index
    %c0_123 = arith.constant 0 : index
    %412 = vector.load %arg11[%c0_121, %c0_122, %c0_123] : memref<1x1x1xf32, #tpu.memory_space<vmem>>, vector<1x1x1xf32>
    tpu.vector_store %arg11[%c0_121, %c0_122, %c0_123], %411 {strides = array<i32>} : memref<1x1x1xf32, #tpu.memory_space<vmem>>, vector<1x1x1xf32>,
    return
  }
  func.func @transform_0(%arg0: i32) -> (i32, i32, i32, i32) {
    %c0_i32 = arith.constant 0 : i32
    %c0_i32_0 = arith.constant 0 : i32
    %c0_i32_1 = arith.constant 0 : i32
    %c0_i32_2 = arith.constant 0 : i32
    return %arg0, %c0_i32, %c0_i32_0, %c0_i32_1 : i32, i32, i32, i32
  }
  func.func @transform_1(%arg0: i32) -> (i32, i32, i32) {
    %c0_i32 = arith.constant 0 : i32
    %c0_i32_0 = arith.constant 0 : i32
    %c0_i32_1 = arith.constant 0 : i32
    return %arg0, %c0_i32, %c0_i32_0 : i32, i32, i32
  }
  func.func @transform_2(%arg0: i32) -> (i32, i32, i32) {
    %c0_i32 = arith.constant 0 : i32
    %c0_i32_0 = arith.constant 0 : i32
    %c0_i32_1 = arith.constant 0 : i32
    return %arg0, %c0_i32, %c0_i32_0 : i32, i32, i32
  }
  func.func @transform_3(%arg0: i32) -> (i32, i32, i32) {
    %c0_i32 = arith.constant 0 : i32
    %c0_i32_0 = arith.constant 0 : i32
    %c0_i32_1 = arith.constant 0 : i32
    return %arg0, %c0_i32, %c0_i32_0 : i32, i32, i32
  }
  func.func @transform_4(%arg0: i32) -> (i32, i32, i32) {
    %c0_i32 = arith.constant 0 : i32
    %c0_i32_0 = arith.constant 0 : i32
    %c0_i32_1 = arith.constant 0 : i32
    return %arg0, %c0_i32, %c0_i32_0 : i32, i32, i32
  }
  func.func @transform_5(%arg0: i32) -> (i32, i32) {
    %c0_i32 = arith.constant 0 : i32
    %c0_i32_0 = arith.constant 0 : i32
    %c0_i32_1 = arith.constant 0 : i32
    return %c0_i32, %c0_i32_0 : i32, i32
  }
  func.func @transform_6(%arg0: i32) -> (i32, i32) {
    %c0_i32 = arith.constant 0 : i32
    %c0_i32_0 = arith.constant 0 : i32
    %c0_i32_1 = arith.constant 0 : i32
    return %c0_i32, %c0_i32_0 : i32, i32
  }
  func.func @transform_7(%arg0: i32) -> (i32, i32) {
    %c0_i32 = arith.constant 0 : i32
    %c0_i32_0 = arith.constant 0 : i32
    %c0_i32_1 = arith.constant 0 : i32
    return %c0_i32, %c0_i32_0 : i32, i32
  }
  func.func @transform_8(%arg0: i32) -> (i32, i32) {
    %c0_i32 = arith.constant 0 : i32
    %c0_i32_0 = arith.constant 0 : i32
    %c0_i32_1 = arith.constant 0 : i32
    return %c0_i32, %c0_i32_0 : i32, i32
  }
  func.func @transform_9(%arg0: i32) -> (i32, i32) {
    %c0_i32 = arith.constant 0 : i32
    %c0_i32_0 = arith.constant 0 : i32
    %c0_i32_1 = arith.constant 0 : i32
    return %c0_i32, %c0_i32_0 : i32, i32
  }
  func.func @transform_10(%arg0: i32) -> (i32, i32, i32) {
    %c0_i32 = arith.constant 0 : i32
    %c0_i32_0 = arith.constant 0 : i32
    %c0_i32_1 = arith.constant 0 : i32
    return %arg0, %c0_i32, %c0_i32_0 : i32, i32, i32
  }
}

</mosaic_0001>

<llo_original>
// kernel: reverse.1
$region0: #{reverse.1}
  %s0 = inlined_call_operand.vmem [shape: f32[128,2,3,4], index: 0, kind: input, shape index: {}]
  %s1 = inlined_call_operand.vmem [shape: f32[128,2,3,4], index: 1, kind: output, shape index: {}]
  $region1: #{reverse.1} parent=0
    #allocation0 [shape = 'u8[65536]{0}', space=vmem, size = 0x10000, scoped, tag = 'operand span for operand 0']
    #allocation1 [shape = 'u8[32768]{0}', space=vmem, size = 0x8000, scoped, tag = 'packed  for operand 0']
    #allocation2 [shape = 'u8[32768]{0}', space=vmem, size = 0x8000, scoped, tag = 'operand span for operand 1']
    #allocation3 [shape = 'u8[16384]{0}', space=vmem, size = 0x4000, scoped, tag = 'packed  for operand 1']
    %s2 = scalar_lea.vmem [#allocation1], 4
    // Predicated region
    $region2: #{reverse.1} parent=1 // pred_check
      _
    $region3: #{reverse.1} parent=1 // pred_check_branch
      %4 = sbr.rel (0) target = $region5
    $region4: #{reverse.1} parent=1 // pred_region
      // Predicated region
      $region6: #{reverse.1} parent=4 // pred_check
        _
      $region7: #{reverse.1} parent=4 // pred_check_branch
        %6 = sbr.rel target = $region9
      $region8: #{reverse.1} parent=4 // pred_region
        // Predicated region
        $region21: #{reverse.1} parent=8 // pred_check
          _
        $region22: #{reverse.1} parent=8 // pred_check_branch
          %36 = sbr.rel (0) target = $region24
        $region23: #{reverse.1} parent=8 // pred_region
          loop: start=0, step=1, limit=1
          $region25: #{reverse.1} parent=23 // loop_pre_header
            _
          $region26: #{reverse.1} parent=23 // loop_header
            %s38 = sphi 0, %s42
            %p39 = scmp.ge.s32.totalorder %s38, 1
            %s43 = sphi %s0, %s0
            %s44 = sphi %s2, %s2
          $region27: #{reverse.1} parent=23 // loop_header_branch
            %41 = sbr.rel (%p39) target = $region31
          $region28: #{reverse.1} parent=23 // loop_body
            _
          $region29: #{reverse.1} parent=23 // loop_footer
            %s42 = sadd.s32 1, %s38
          $region30: #{reverse.1} parent=23 // loop_footer_branch
            %37 = sbr.rel target = $region26
          $region31: #{reverse.1} parent=23 // loop_exit
            _
          %s46 = ssub.s32 16, 1
          loop: start=0, step=1, limit=1
          $region32: #{reverse.1} parent=23 // loop_pre_header
            _
          $region33: #{reverse.1} parent=23 // loop_header
            %s48 = sphi 0, %s52
            %p49 = scmp.ge.s32.totalorder %s48, 1
            %s53 = sphi %s0, %s0
            %s54 = sphi %s2, %s2
          $region34: #{reverse.1} parent=23 // loop_header_branch
            %51 = sbr.rel (%p49) target = $region38
          $region35: #{reverse.1} parent=23 // loop_body
            %v55 = vld [vmem:[%s53] sm:%s46]
            %56 = vst [vmem:[%s54] sm:%s46] %v55
            %v57 = vld [vmem:[%s53 + $0x4] sm:%s46]
            %58 = vst [vmem:[%s54 + $0x8] sm:%s46] %v57
            %v59 = vld [vmem:[%s53 + $0x8] sm:%s46]
            %60 = vst [vmem:[%s54 + $0x10] sm:%s46] %v59
            %v61 = vld [vmem:[%s53 + $0xc] sm:%s46]
            %62 = vst [vmem:[%s54 + $0x18] sm:%s46] %v61
            %v63 = vld [vmem:[%s53 + $0x10] sm:%s46]
            %64 = vst [vmem:[%s54 + $0x20] sm:%s46] %v63
            %v65 = vld [vmem:[%s53 + $0x14] sm:%s46]
            %66 = vst [vmem:[%s54 + $0x28] sm:%s46] %v65
            %v67 = vld [vmem:[%s53 + $0x18] sm:%s46]
            %68 = vst [vmem:[%s54 + $0x30] sm:%s46] %v67
            %v69 = vld [vmem:[%s53 + $0x1c] sm:%s46]
            %70 = vst [vmem:[%s54 + $0x38] sm:%s46] %v69
          $region36: #{reverse.1} parent=23 // loop_footer
            %s52 = sadd.s32 1, %s48
          $region37: #{reverse.1} parent=23 // loop_footer_branch
            %47 = sbr.rel target = $region33
          $region38: #{reverse.1} parent=23 // loop_exit
            _
        $region24: #{reverse.1} parent=8 // pred_fallthru
          _
      $region9: #{reverse.1} parent=4 // pred_fallthru
        _
      // Predicated region
      $region10: #{reverse.1} parent=4 // pred_check
        _
      $region11: #{reverse.1} parent=4 // pred_check_branch
        %8 = sbr.rel (0) target = $region13
      $region12: #{reverse.1} parent=4 // pred_region
        %s10 = ssub.s32 16, 1
        loop: start=0, step=1, limit=1
        $region14: #{reverse.1} parent=12 // loop_pre_header
          _
        $region15: #{reverse.1} parent=12 // loop_header
          %s12 = sphi 0, %s16
          %p13 = scmp.ge.s32.totalorder %s12, 1
          %s17 = sphi %s0, %s0
          %s18 = sphi %s2, %s2
        $region16: #{reverse.1} parent=12 // loop_header_branch
          %15 = sbr.rel (%p13) target = $region20
        $region17: #{reverse.1} parent=12 // loop_body
          %v19 = vld [vmem:[%s17] sm:%s10]
          %20 = vst [vmem:[%s18] sm:%s10] %v19
          %v21 = vld [vmem:[%s17 + $0x4] sm:%s10]
          %22 = vst [vmem:[%s18 + $0x8] sm:%s10] %v21
          %v23 = vld [vmem:[%s17 + $0x8] sm:%s10]
          %24 = vst [vmem:[%s18 + $0x10] sm:%s10] %v23
          %v25 = vld [vmem:[%s17 + $0xc] sm:%s10]
          %26 = vst [vmem:[%s18 + $0x18] sm:%s10] %v25
          %v27 = vld [vmem:[%s17 + $0x10] sm:%s10]
          %28 = vst [vmem:[%s18 + $0x20] sm:%s10] %v27
          %v29 = vld [vmem:[%s17 + $0x14] sm:%s10]
          %30 = vst [vmem:[%s18 + $0x28] sm:%s10] %v29
          %v31 = vld [vmem:[%s17 + $0x18] sm:%s10]
          %32 = vst [vmem:[%s18 + $0x30] sm:%s10] %v31
          %v33 = vld [vmem:[%s17 + $0x1c] sm:%s10]
          %34 = vst [vmem:[%s18 + $0x38] sm:%s10] %v33
        $region18: #{reverse.1} parent=12 // loop_footer
          %s16 = sadd.s32 1, %s12
        $region19: #{reverse.1} parent=12 // loop_footer_branch
          %11 = sbr.rel target = $region15
        $region20: #{reverse.1} parent=12 // loop_exit
          _
      $region13: #{reverse.1} parent=4 // pred_fallthru
        _
    $region5: #{reverse.1} parent=1 // pred_fallthru
      _
    %71 = vnop
    %s73 = ssub.s32 16, 1
    %s74 = scalar_lea.vmem [#allocation1], 60
    %v75 = vld [vmem:[%s74] sm:%s73]
    %s76 = scalar_lea.vmem [#allocation0], 120
    %77 = vst [vmem:[%s76] sm:%s73] %v75
    %s78 = scalar_lea.vmem [#allocation1], 56
    %v79 = vld [vmem:[%s78] sm:%s73]
    %s80 = scalar_lea.vmem [#allocation0], 112
    %81 = vst [vmem:[%s80] sm:%s73] %v79
    %s82 = scalar_lea.vmem [#allocation1], 52
    %v83 = vld [vmem:[%s82] sm:%s73]
    %s84 = scalar_lea.vmem [#allocation0], 104
    %85 = vst [vmem:[%s84] sm:%s73] %v83
    %s86 = scalar_lea.vmem [#allocation1], 48
    %v87 = vld [vmem:[%s86] sm:%s73]
    %s88 = scalar_lea.vmem [#allocation0], 96
    %89 = vst [vmem:[%s88] sm:%s73] %v87
    %s90 = scalar_lea.vmem [#allocation1], 44
    %v91 = vld [vmem:[%s90] sm:%s73]
    %s92 = scalar_lea.vmem [#allocation0], 88
    %93 = vst [vmem:[%s92] sm:%s73] %v91
    %s94 = scalar_lea.vmem [#allocation1], 40
    %v95 = vld [vmem:[%s94] sm:%s73]
    %s96 = scalar_lea.vmem [#allocation0], 80
    %97 = vst [vmem:[%s96] sm:%s73] %v95
    %s98 = scalar_lea.vmem [#allocation1], 36
    %v99 = vld [vmem:[%s98] sm:%s73]
    %s100 = scalar_lea.vmem [#allocation0], 72
    %101 = vst [vmem:[%s100] sm:%s73] %v99
    %s102 = scalar_lea.vmem [#allocation1], 32
    %v103 = vld [vmem:[%s102] sm:%s73]
    %s104 = scalar_lea.vmem [#allocation0], 64
    %105 = vst [vmem:[%s104] sm:%s73] %v103
    %s106 = scalar_lea.vmem [#allocation1], 28
    %v107 = vld [vmem:[%s106] sm:%s73]
    %s108 = scalar_lea.vmem [#allocation0], 56
    %109 = vst [vmem:[%s108] sm:%s73] %v107
    %s110 = scalar_lea.vmem [#allocation1], 24
    %v111 = vld [vmem:[%s110] sm:%s73]
    %s112 = scalar_lea.vmem [#allocation0], 48
    %113 = vst [vmem:[%s112] sm:%s73] %v111
    %s114 = scalar_lea.vmem [#allocation1], 20
    %v115 = vld [vmem:[%s114] sm:%s73]
    %s116 = scalar_lea.vmem [#allocation0], 40
    %117 = vst [vmem:[%s116] sm:%s73] %v115
    %s118 = scalar_lea.vmem [#allocation1], 16
    %v119 = vld [vmem:[%s118] sm:%s73]
    %s120 = scalar_lea.vmem [#allocation0], 32
    %121 = vst [vmem:[%s120] sm:%s73] %v119
    %s122 = scalar_lea.vmem [#allocation1], 12
    %v123 = vld [vmem:[%s122] sm:%s73]
    %s124 = scalar_lea.vmem [#allocation0], 24
    %125 = vst [vmem:[%s124] sm:%s73] %v123
    %s126 = scalar_lea.vmem [#allocation1], 8
    %v127 = vld [vmem:[%s126] sm:%s73]
    %s128 = scalar_lea.vmem [#allocation0], 16
    %129 = vst [vmem:[%s128] sm:%s73] %v127
    %s130 = scalar_lea.vmem [#allocation1], 4
    %v131 = vld [vmem:[%s130] sm:%s73]
    %s132 = scalar_lea.vmem [#allocation0], 8
    %133 = vst [vmem:[%s132] sm:%s73] %v131
    %v134 = vld [vmem:[#allocation1] sm:%s73]
    %135 = vst [vmem:[#allocation0] sm:%s73] %v134
    %s136 = scalar_lea.vmem [#allocation0], 7
    %v137 = vld [vmem:[%s136] ss:$-1 sm:$0xff]
    %v138 = vrot.slane %v137, 5
    %139 = vst [vmem:[#allocation2] sm:$0xff] %v138
    %s140 = scalar_lea.vmem [#allocation0], 8
    %s141 = scalar_lea.vmem %s140, 7 [#allocation0]
    %v142 = vld [vmem:[%s141] ss:$-1 sm:$0xff]
    %v143 = vrot.slane %v142, 5
    %v144 = vlaneseq
    %v145 = vshrl.u32 %v144, 7
    %vm146 = vcmp.lt.s32.totalorder %v145, 3
    %147 = vst.msk [vmem:[#allocation2] sm:$0xff] %vm146, %v143
    %s148 = scalar_lea.vmem [#allocation2], 8
    %s149 = scalar_lea.vmem [#allocation0], 16
    %s150 = scalar_lea.vmem %s149, 7 [#allocation0]
    %v151 = vld [vmem:[%s150] ss:$-1 sm:$0xff]
    %v152 = vrot.slane %v151, 5
    %153 = vst [vmem:[%s148] sm:$0xff] %v152
    %s154 = scalar_lea.vmem %s149, 8 [#allocation0]
    %s155 = scalar_lea.vmem %s154, 7 [#allocation0]
    %v156 = vld [vmem:[%s155] ss:$-1 sm:$0xff]
    %v157 = vrot.slane %v156, 5
    %v158 = vlaneseq
    %v159 = vshrl.u32 %v158, 7
    %vm160 = vcmp.lt.s32.totalorder %v159, 3
    %161 = vst.msk [vmem:[%s148] sm:$0xff] %vm160, %v157
    %s162 = scalar_lea.vmem [#allocation2], 16
    %s163 = scalar_lea.vmem [#allocation0], 32
    %s164 = scalar_lea.vmem %s163, 7 [#allocation0]
    %v165 = vld [vmem:[%s164] ss:$-1 sm:$0xff]
    %v166 = vrot.slane %v165, 5
    %167 = vst [vmem:[%s162] sm:$0xff] %v166
    %s168 = scalar_lea.vmem %s163, 8 [#allocation0]
    %s169 = scalar_lea.vmem %s168, 7 [#allocation0]
    %v170 = vld [vmem:[%s169] ss:$-1 sm:$0xff]
    %v171 = vrot.slane %v170, 5
    %v172 = vlaneseq
    %v173 = vshrl.u32 %v172, 7
    %vm174 = vcmp.lt.s32.totalorder %v173, 3
    %175 = vst.msk [vmem:[%s162] sm:$0xff] %vm174, %v171
    %s176 = scalar_lea.vmem [#allocation2], 24
    %s177 = scalar_lea.vmem [#allocation0], 48
    %s178 = scalar_lea.vmem %s177, 7 [#allocation0]
    %v179 = vld [vmem:[%s178] ss:$-1 sm:$0xff]
    %v180 = vrot.slane %v179, 5
    %181 = vst [vmem:[%s176] sm:$0xff] %v180
    %s182 = scalar_lea.vmem %s177, 8 [#allocation0]
    %s183 = scalar_lea.vmem %s182, 7 [#allocation0]
    %v184 = vld [vmem:[%s183] ss:$-1 sm:$0xff]
    %v185 = vrot.slane %v184, 5
    %v186 = vlaneseq
    %v187 = vshrl.u32 %v186, 7
    %vm188 = vcmp.lt.s32.totalorder %v187, 3
    %189 = vst.msk [vmem:[%s176] sm:$0xff] %vm188, %v185
    %s190 = scalar_lea.vmem [#allocation2], 32
    %s191 = scalar_lea.vmem [#allocation0], 64
    %s192 = scalar_lea.vmem %s191, 7 [#allocation0]
    %v193 = vld [vmem:[%s192] ss:$-1 sm:$0xff]
    %v194 = vrot.slane %v193, 5
    %195 = vst [vmem:[%s190] sm:$0xff] %v194
    %s196 = scalar_lea.vmem %s191, 8 [#allocation0]
    %s197 = scalar_lea.vmem %s196, 7 [#allocation0]
    %v198 = vld [vmem:[%s197] ss:$-1 sm:$0xff]
    %v199 = vrot.slane %v198, 5
    %v200 = vlaneseq
    %v201 = vshrl.u32 %v200, 7
    %vm202 = vcmp.lt.s32.totalorder %v201, 3
    %203 = vst.msk [vmem:[%s190] sm:$0xff] %vm202, %v199
    %s204 = scalar_lea.vmem [#allocation2], 40
    %s205 = scalar_lea.vmem [#allocation0], 80
    %s206 = scalar_lea.vmem %s205, 7 [#allocation0]
    %v207 = vld [vmem:[%s206] ss:$-1 sm:$0xff]
    %v208 = vrot.slane %v207, 5
    %209 = vst [vmem:[%s204] sm:$0xff] %v208
    %s210 = scalar_lea.vmem %s205, 8 [#allocation0]
    %s211 = scalar_lea.vmem %s210, 7 [#allocation0]
    %v212 = vld [vmem:[%s211] ss:$-1 sm:$0xff]
    %v213 = vrot.slane %v212, 5
    %v214 = vlaneseq
    %v215 = vshrl.u32 %v214, 7
    %vm216 = vcmp.lt.s32.totalorder %v215, 3
    %217 = vst.msk [vmem:[%s204] sm:$0xff] %vm216, %v213
    %s218 = scalar_lea.vmem [#allocation2], 48
    %s219 = scalar_lea.vmem [#allocation0], 96
    %s220 = scalar_lea.vmem %s219, 7 [#allocation0]
    %v221 = vld [vmem:[%s220] ss:$-1 sm:$0xff]
    %v222 = vrot.slane %v221, 5
    %223 = vst [vmem:[%s218] sm:$0xff] %v222
    %s224 = scalar_lea.vmem %s219, 8 [#allocation0]
    %s225 = scalar_lea.vmem %s224, 7 [#allocation0]
    %v226 = vld [vmem:[%s225] ss:$-1 sm:$0xff]
    %v227 = vrot.slane %v226, 5
    %v228 = vlaneseq
    %v229 = vshrl.u32 %v228, 7
    %vm230 = vcmp.lt.s32.totalorder %v229, 3
    %231 = vst.msk [vmem:[%s218] sm:$0xff] %vm230, %v227
    %s232 = scalar_lea.vmem [#allocation2], 56
    %s233 = scalar_lea.vmem [#allocation0], 112
    %s234 = scalar_lea.vmem %s233, 7 [#allocation0]
    %v235 = vld [vmem:[%s234] ss:$-1 sm:$0xff]
    %v236 = vrot.slane %v235, 5
    %237 = vst [vmem:[%s232] sm:$0xff] %v236
    %s238 = scalar_lea.vmem %s233, 8 [#allocation0]
    %s239 = scalar_lea.vmem %s238, 7 [#allocation0]
    %v240 = vld [vmem:[%s239] ss:$-1 sm:$0xff]
    %v241 = vrot.slane %v240, 5
    %v242 = vlaneseq
    %v243 = vshrl.u32 %v242, 7
    %vm244 = vcmp.lt.s32.totalorder %v243, 3
    %245 = vst.msk [vmem:[%s232] sm:$0xff] %vm244, %v241
    %s247 = ssub.s32 16, 1
    %v248 = vld [vmem:[#allocation2] sm:%s247]
    %s250 = ssub.s32 16, 1
    %251 = vst [vmem:[#allocation3] sm:%s250] %v248
    %s252 = scalar_lea.vmem [#allocation2], 8
    %v253 = vld [vmem:[%s252] sm:%s247]
    %s255 = ssub.s32 16, 1
    %s256 = scalar_lea.vmem [#allocation3], 4
    %257 = vst [vmem:[%s256] sm:%s255] %v253
    %s258 = scalar_lea.vmem [#allocation2], 16
    %v259 = vld [vmem:[%s258] sm:%s247]
    %s261 = ssub.s32 16, 1
    %s262 = scalar_lea.vmem [#allocation3], 8
    %263 = vst [vmem:[%s262] sm:%s261] %v259
    %s264 = scalar_lea.vmem [#allocation2], 24
    %v265 = vld [vmem:[%s264] sm:%s247]
    %s267 = ssub.s32 16, 1
    %s268 = scalar_lea.vmem [#allocation3], 12
    %269 = vst [vmem:[%s268] sm:%s267] %v265
    %s270 = scalar_lea.vmem [#allocation2], 32
    %v271 = vld [vmem:[%s270] sm:%s247]
    %s273 = ssub.s32 16, 1
    %s274 = scalar_lea.vmem [#allocation3], 16
    %275 = vst [vmem:[%s274] sm:%s273] %v271
    %s276 = scalar_lea.vmem [#allocation2], 40
    %v277 = vld [vmem:[%s276] sm:%s247]
    %s279 = ssub.s32 16, 1
    %s280 = scalar_lea.vmem [#allocation3], 20
    %281 = vst [vmem:[%s280] sm:%s279] %v277
    %s282 = scalar_lea.vmem [#allocation2], 48
    %v283 = vld [vmem:[%s282] sm:%s247]
    %s285 = ssub.s32 16, 1
    %s286 = scalar_lea.vmem [#allocation3], 24
    %287 = vst [vmem:[%s286] sm:%s285] %v283
    %s288 = scalar_lea.vmem [#allocation2], 56
    %v289 = vld [vmem:[%s288] sm:%s247]
    %s291 = ssub.s32 16, 1
    %s292 = scalar_lea.vmem [#allocation3], 28
    %293 = vst [vmem:[%s292] sm:%s291] %v289
    // Predicated region
    $region39: #{reverse.1} parent=1 // pred_check
      _
    $region40: #{reverse.1} parent=1 // pred_check_branch
      %295 = sbr.rel (0) target = $region42
    $region41: #{reverse.1} parent=1 // pred_region
      // Predicated region
      $region43: #{reverse.1} parent=41 // pred_check
        _
      $region44: #{reverse.1} parent=41 // pred_check_branch
        %297 = sbr.rel target = $region46
      $region45: #{reverse.1} parent=41 // pred_region
        // Predicated region
        $region58: #{reverse.1} parent=45 // pred_check
          _
        $region59: #{reverse.1} parent=45 // pred_check_branch
          %327 = sbr.rel (0) target = $region61
        $region60: #{reverse.1} parent=45 // pred_region
          loop: start=0, step=1, limit=1
          $region62: #{reverse.1} parent=60 // loop_pre_header
            _
          $region63: #{reverse.1} parent=60 // loop_header
            %s329 = sphi 0, %s333
            %p330 = scmp.ge.s32.totalorder %s329, 1
            %s334 = sphi [#allocation3], [#allocation3]
            %s335 = sphi %s1, %s1
          $region64: #{reverse.1} parent=60 // loop_header_branch
            %332 = sbr.rel (%p330) target = $region68
          $region65: #{reverse.1} parent=60 // loop_body
            _
          $region66: #{reverse.1} parent=60 // loop_footer
            %s333 = sadd.s32 1, %s329
          $region67: #{reverse.1} parent=60 // loop_footer_branch
            %328 = sbr.rel target = $region63
          $region68: #{reverse.1} parent=60 // loop_exit
            _
          %s337 = ssub.s32 16, 1
          loop: start=0, step=1, limit=1
          $region69: #{reverse.1} parent=60 // loop_pre_header
            _
          $region70: #{reverse.1} parent=60 // loop_header
            %s339 = sphi 0, %s343
            %p340 = scmp.ge.s32.totalorder %s339, 1
            %s344 = sphi [#allocation3], [#allocation3]
            %s345 = sphi %s1, %s1
          $region71: #{reverse.1} parent=60 // loop_header_branch
            %342 = sbr.rel (%p340) target = $region75
          $region72: #{reverse.1} parent=60 // loop_body
            %v346 = vld [vmem:[%s344] sm:%s337]
            %347 = vst [vmem:[%s345] sm:%s337] %v346
            %v348 = vld [vmem:[%s344 + $0x4] sm:%s337]
            %349 = vst [vmem:[%s345 + $0x4] sm:%s337] %v348
            %v350 = vld [vmem:[%s344 + $0x8] sm:%s337]
            %351 = vst [vmem:[%s345 + $0x8] sm:%s337] %v350
            %v352 = vld [vmem:[%s344 + $0xc] sm:%s337]
            %353 = vst [vmem:[%s345 + $0xc] sm:%s337] %v352
            %v354 = vld [vmem:[%s344 + $0x10] sm:%s337]
            %355 = vst [vmem:[%s345 + $0x10] sm:%s337] %v354
            %v356 = vld [vmem:[%s344 + $0x14] sm:%s337]
            %357 = vst [vmem:[%s345 + $0x14] sm:%s337] %v356
            %v358 = vld [vmem:[%s344 + $0x18] sm:%s337]
            %359 = vst [vmem:[%s345 + $0x18] sm:%s337] %v358
            %v360 = vld [vmem:[%s344 + $0x1c] sm:%s337]
            %361 = vst [vmem:[%s345 + $0x1c] sm:%s337] %v360
          $region73: #{reverse.1} parent=60 // loop_footer
            %s343 = sadd.s32 1, %s339
          $region74: #{reverse.1} parent=60 // loop_footer_branch
            %338 = sbr.rel target = $region70
          $region75: #{reverse.1} parent=60 // loop_exit
            _
        $region61: #{reverse.1} parent=45 // pred_fallthru
          _
      $region46: #{reverse.1} parent=41 // pred_fallthru
        _
      // Predicated region
      $region47: #{reverse.1} parent=41 // pred_check
        _
      $region48: #{reverse.1} parent=41 // pred_check_branch
        %299 = sbr.rel (0) target = $region50
      $region49: #{reverse.1} parent=41 // pred_region
        %s301 = ssub.s32 16, 1
        loop: start=0, step=1, limit=1
        $region51: #{reverse.1} parent=49 // loop_pre_header
          _
        $region52: #{reverse.1} parent=49 // loop_header
          %s303 = sphi 0, %s307
          %p304 = scmp.ge.s32.totalorder %s303, 1
          %s308 = sphi [#allocation3], [#allocation3]
          %s309 = sphi %s1, %s1
        $region53: #{reverse.1} parent=49 // loop_header_branch
          %306 = sbr.rel (%p304) target = $region57
        $region54: #{reverse.1} parent=49 // loop_body
          %v310 = vld [vmem:[%s308] sm:%s301]
          %311 = vst [vmem:[%s309] sm:%s301] %v310
          %v312 = vld [vmem:[%s308 + $0x4] sm:%s301]
          %313 = vst [vmem:[%s309 + $0x4] sm:%s301] %v312
          %v314 = vld [vmem:[%s308 + $0x8] sm:%s301]
          %315 = vst [vmem:[%s309 + $0x8] sm:%s301] %v314
          %v316 = vld [vmem:[%s308 + $0xc] sm:%s301]
          %317 = vst [vmem:[%s309 + $0xc] sm:%s301] %v316
          %v318 = vld [vmem:[%s308 + $0x10] sm:%s301]
          %319 = vst [vmem:[%s309 + $0x10] sm:%s301] %v318
          %v320 = vld [vmem:[%s308 + $0x14] sm:%s301]
          %321 = vst [vmem:[%s309 + $0x14] sm:%s301] %v320
          %v322 = vld [vmem:[%s308 + $0x18] sm:%s301]
          %323 = vst [vmem:[%s309 + $0x18] sm:%s301] %v322
          %v324 = vld [vmem:[%s308 + $0x1c] sm:%s301]
          %325 = vst [vmem:[%s309 + $0x1c] sm:%s301] %v324
        $region55: #{reverse.1} parent=49 // loop_footer
          %s307 = sadd.s32 1, %s303
        $region56: #{reverse.1} parent=49 // loop_footer_branch
          %302 = sbr.rel target = $region52
        $region57: #{reverse.1} parent=49 // loop_exit
          _
      $region50: #{reverse.1} parent=41 // pred_fallthru
        _
    $region42: #{reverse.1} parent=1 // pred_fallthru
      _
    %362 = vnop

// kernel: reverse
$region0: #{reverse}
  #allocation0 [shape = 's32[1]{0}', space=sflag, size = 0x4, scoped, tag = 'scoped memory for reverse']
  %s0 = inlined_call_operand.vmem [shape: f32[2,5,2,2,128], index: 0, kind: input, shape index: {}]
  %s1 = inlined_call_operand.vmem [shape: f32[2,5,2,2,128], index: 1, kind: output, shape index: {}]
  %s2 = scalar_lea.vmem %s0, 32
  %v3 = vld [vmem:[%s2] sm:$0x3]
  %4 = vst [vmem:[%s1] sm:$0x3] %v3
  %s5 = scalar_lea.vmem %s0, 24
  %v6 = vld [vmem:[%s5] sm:$0x3]
  %s7 = scalar_lea.vmem %s1, 8
  %8 = vst [vmem:[%s7] sm:$0x3] %v6
  %s9 = scalar_lea.vmem %s0, 16
  %v10 = vld [vmem:[%s9] sm:$0x3]
  %s11 = scalar_lea.vmem %s1, 16
  %12 = vst [vmem:[%s11] sm:$0x3] %v10
  %s13 = scalar_lea.vmem %s0, 8
  %v14 = vld [vmem:[%s13] sm:$0x3]
  %s15 = scalar_lea.vmem %s1, 24
  %16 = vst [vmem:[%s15] sm:$0x3] %v14
  %v17 = vld [vmem:[%s0] sm:$0x3]
  %s18 = scalar_lea.vmem %s1, 32
  %19 = vst [vmem:[%s18] sm:$0x3] %v17
  %s20 = scalar_lea.vmem %s0, 36
  %v21 = vld [vmem:[%s20] sm:$0x3]
  %s22 = scalar_lea.vmem %s1, 4
  %23 = vst [vmem:[%s22] sm:$0x3] %v21
  %s24 = scalar_lea.vmem %s0, 28
  %v25 = vld [vmem:[%s24] sm:$0x3]
  %s26 = scalar_lea.vmem %s1, 12
  %27 = vst [vmem:[%s26] sm:$0x3] %v25
  %s28 = scalar_lea.vmem %s0, 20
  %v29 = vld [vmem:[%s28] sm:$0x3]
  %s30 = scalar_lea.vmem %s1, 20
  %31 = vst [vmem:[%s30] sm:$0x3] %v29
  %s32 = scalar_lea.vmem %s0, 12
  %v33 = vld [vmem:[%s32] sm:$0x3]
  %s34 = scalar_lea.vmem %s1, 28
  %35 = vst [vmem:[%s34] sm:$0x3] %v33
  %s36 = scalar_lea.vmem %s0, 4
  %v37 = vld [vmem:[%s36] sm:$0x3]
  %s38 = scalar_lea.vmem %s1, 36
  %39 = vst [vmem:[%s38] sm:$0x3] %v37
  %s40 = scalar_lea.vmem %s0, 34
  %v41 = vld [vmem:[%s40] sm:$0x3]
  %s42 = scalar_lea.vmem %s1, 2
  %43 = vst [vmem:[%s42] sm:$0x3] %v41
  %s44 = scalar_lea.vmem %s0, 26
  %v45 = vld [vmem:[%s44] sm:$0x3]
  %s46 = scalar_lea.vmem %s1, 10
  %47 = vst [vmem:[%s46] sm:$0x3] %v45
  %s48 = scalar_lea.vmem %s0, 18
  %v49 = vld [vmem:[%s48] sm:$0x3]
  %s50 = scalar_lea.vmem %s1, 18
  %51 = vst [vmem:[%s50] sm:$0x3] %v49
  %s52 = scalar_lea.vmem %s0, 10
  %v53 = vld [vmem:[%s52] sm:$0x3]
  %s54 = scalar_lea.vmem %s1, 26
  %55 = vst [vmem:[%s54] sm:$0x3] %v53
  %s56 = scalar_lea.vmem %s0, 2
  %v57 = vld [vmem:[%s56] sm:$0x3]
  %s58 = scalar_lea.vmem %s1, 34
  %59 = vst [vmem:[%s58] sm:$0x3] %v57
  %s60 = scalar_lea.vmem %s0, 38
  %v61 = vld [vmem:[%s60] sm:$0x3]
  %s62 = scalar_lea.vmem %s1, 6
  %63 = vst [vmem:[%s62] sm:$0x3] %v61
  %s64 = scalar_lea.vmem %s0, 30
  %v65 = vld [vmem:[%s64] sm:$0x3]
  %s66 = scalar_lea.vmem %s1, 14
  %67 = vst [vmem:[%s66] sm:$0x3] %v65
  %s68 = scalar_lea.vmem %s0, 22
  %v69 = vld [vmem:[%s68] sm:$0x3]
  %s70 = scalar_lea.vmem %s1, 22
  %71 = vst [vmem:[%s70] sm:$0x3] %v69
  %s72 = scalar_lea.vmem %s0, 14
  %v73 = vld [vmem:[%s72] sm:$0x3]
  %s74 = scalar_lea.vmem %s1, 30
  %75 = vst [vmem:[%s74] sm:$0x3] %v73
  %s76 = scalar_lea.vmem %s0, 6
  %v77 = vld [vmem:[%s76] sm:$0x3]
  %s78 = scalar_lea.vmem %s1, 38
  %79 = vst [vmem:[%s78] sm:$0x3] %v77

// kernel: _lambda_.2
$region0: #{_lambda_.2}
  #allocation0 [shape = 'u32[]', space=smem, size = 0x4, offset = 0x4, fixed_abs, tag = 'smem constant byte address 0x4 - core index']
  #allocation1 [shape = 'u32[72,128]{1,0:T(1,128)}', space=vmem, size = 0x9000, scoped, tag = 'internal scratch']
  %s0 = inlined_call_operand.vmem [shape: bf16[64,3072], index: 0, kind: input, shape index: {}]
  %s1 = inlined_call_operand.vmem [shape: bf16[3072,128], index: 1, kind: input, shape index: {}]
  %s2 = inlined_call_operand.vmem [shape: f32[1,128], index: 2, kind: input, shape index: {}]
  %s3 = inlined_call_operand.vmem [shape: bf16[128,128], index: 3, kind: input, shape index: {}]
  %s4 = inlined_call_operand.vmem [shape: f32[1,128], index: 4, kind: input, shape index: {}]
  %s5 = inlined_call_operand.vmem [shape: f32[64,128], index: 5, kind: output, shape index: {}]
  %s6 = sld [smem:[#allocation0]]
  $region30: #{_lambda_.2} parent=0
    _
  %s8 = ssub.s32 1, %s6
  %s9 = scalar_select 0, %s8, %s6
  // Predicated region
  $region2: #{_lambda_.2} parent=0 // pred_check
    _
  $region3: #{_lambda_.2} parent=0 // pred_check_branch
    %11 = sbr.rel (0) target = $region5
  $region4: #{_lambda_.2} parent=0 // pred_region
    _
  $region5: #{_lambda_.2} parent=0 // pred_fallthru
    _
  // Predicated region
  $region6: #{_lambda_.2} parent=0 // pred_check
    _
  $region7: #{_lambda_.2} parent=0 // pred_check_branch
    %13 = sbr.rel (0) target = $region9
  $region8: #{_lambda_.2} parent=0 // pred_region
    _
  $region9: #{_lambda_.2} parent=0 // pred_fallthru
    _
  // Predicated region
  $region10: #{_lambda_.2} parent=0 // pred_check
    _
  $region11: #{_lambda_.2} parent=0 // pred_check_branch
    %15 = sbr.rel (0) target = $region13
  $region12: #{_lambda_.2} parent=0 // pred_region
    _
  $region13: #{_lambda_.2} parent=0 // pred_fallthru
    _
  // Predicated region
  $region14: #{_lambda_.2} parent=0 // pred_check
    _
  $region15: #{_lambda_.2} parent=0 // pred_check_branch
    %17 = sbr.rel (0) target = $region17
  $region16: #{_lambda_.2} parent=0 // pred_region
    _
  $region17: #{_lambda_.2} parent=0 // pred_fallthru
    _
  // Predicated region
  $region18: #{_lambda_.2} parent=0 // pred_check
    _
  $region19: #{_lambda_.2} parent=0 // pred_check_branch
    %19 = sbr.rel (0) target = $region21
  $region20: #{_lambda_.2} parent=0 // pred_region
    _
  $region21: #{_lambda_.2} parent=0 // pred_fallthru
    _
  %v20 = vld [vmem:[%s0] sm:$0xff]
  %v21 = vld [vmem:[%s0 + $0x8] sm:$0xff]
  %v22 = vld [vmem:[%s0 + $0x10] sm:$0xff]
  %v23 = vld [vmem:[%s0 + $0x18] sm:$0xff]
  %v24 = vld [vmem:[%s0 + $0x20] sm:$0xff]
  %v25 = vld [vmem:[%s0 + $0x28] sm:$0xff]
  %v26 = vld [vmem:[%s0 + $0x30] sm:$0xff]
  %v27 = vld [vmem:[%s0 + $0x38] sm:$0xff]
  %v28 = vld [vmem:[%s0 + $0x40] sm:$0xff]
  %v29 = vld [vmem:[%s0 + $0x48] sm:$0xff]
  %v30 = vld [vmem:[%s0 + $0x50] sm:$0xff]
  %v31 = vld [vmem:[%s0 + $0x58] sm:$0xff]
  %v32 = vld [vmem:[%s0 + $0x60] sm:$0xff]
  %v33 = vld [vmem:[%s0 + $0x68] sm:$0xff]
  %v34 = vld [vmem:[%s0 + $0x70] sm:$0xff]
  %v35 = vld [vmem:[%s0 + $0x78] sm:$0xff]
  %v36 = vld [vmem:[%s0 + $0x80] sm:$0xff]
  %v37 = vld [vmem:[%s0 + $0x88] sm:$0xff]
  %v38 = vld [vmem:[%s0 + $0x90] sm:$0xff]
  %v39 = vld [vmem:[%s0 + $0x98] sm:$0xff]
  %v40 = vld [vmem:[%s0 + $0xa0] sm:$0xff]
  %v41 = vld [vmem:[%s0 + $0xa8] sm:$0xff]
  %v42 = vld [vmem:[%s0 + $0xb0] sm:$0xff]
  %v43 = vld [vmem:[%s0 + $0xb8] sm:$0xff]
  %v44 = vld [vmem:[%s0 + $0xc0] sm:$0xff]
  %v45 = vld [vmem:[%s0 + $0xc8] sm:$0xff]
  %v46 = vld [vmem:[%s0 + $0xd0] sm:$0xff]
  %v47 = vld [vmem:[%s0 + $0xd8] sm:$0xff]
  %v48 = vld [vmem:[%s0 + $0xe0] sm:$0xff]
  %v49 = vld [vmem:[%s0 + $0xe8] sm:$0xff]
  %v50 = vld [vmem:[%s0 + $0xf0] sm:$0xff]
  %v51 = vld [vmem:[%s0 + $0xf8] sm:$0xff]
  %v52 = vld [vmem:[%s0 + $0x100] sm:$0xff]
  %v53 = vld [vmem:[%s0 + $0x108] sm:$0xff]
  %v54 = vld [vmem:[%s0 + $0x110] sm:$0xff]
  %v55 = vld [vmem:[%s0 + $0x118] sm:$0xff]
  %v56 = vld [vmem:[%s0 + $0x120] sm:$0xff]
  %v57 = vld [vmem:[%s0 + $0x128] sm:$0xff]
  %v58 = vld [vmem:[%s0 + $0x130] sm:$0xff]
  %v59 = vld [vmem:[%s0 + $0x138] sm:$0xff]
  %v60 = vld [vmem:[%s0 + $0x140] sm:$0xff]
  %v61 = vld [vmem:[%s0 + $0x148] sm:$0xff]
  %v62 = vld [vmem:[%s0 + $0x150] sm:$0xff]
  %v63 = vld [vmem:[%s0 + $0x158] sm:$0xff]
  %v64 = vld [vmem:[%s0 + $0x160] sm:$0xff]
  %v65 = vld [vmem:[%s0 + $0x168] sm:$0xff]
  %v66 = vld [vmem:[%s0 + $0x170] sm:$0xff]
  %v67 = vld [vmem:[%s0 + $0x178] sm:$0xff]
  %v68 = vld [vmem:[%s0 + $0x180] sm:$0xff]
  %v69 = vld [vmem:[%s0 + $0x188] sm:$0xff]
  %v70 = vld [vmem:[%s0 + $0x190] sm:$0xff]
  %v71 = vld [vmem:[%s0 + $0x198] sm:$0xff]
  %v72 = vld [vmem:[%s0 + $0x1a0] sm:$0xff]
  %v73 = vld [vmem:[%s0 + $0x1a8] sm:$0xff]
  %v74 = vld [vmem:[%s0 + $0x1b0] sm:$0xff]
  %v75 = vld [vmem:[%s0 + $0x1b8] sm:$0xff]
  %v76 = vld [vmem:[%s0 + $0x1c0] sm:$0xff]
  %v77 = vld [vmem:[%s0 + $0x1c8] sm:$0xff]
  %v78 = vld [vmem:[%s0 + $0x1d0] sm:$0xff]
  %v79 = vld [vmem:[%s0 + $0x1d8] sm:$0xff]
  %v80 = vld [vmem:[%s0 + $0x1e0] sm:$0xff]
  %v81 = vld [vmem:[%s0 + $0x1e8] sm:$0xff]
  %v82 = vld [vmem:[%s0 + $0x1f0] sm:$0xff]
  %v83 = vld [vmem:[%s0 + $0x1f8] sm:$0xff]
  %v84 = vld [vmem:[%s0 + $0x200] sm:$0xff]
  %v85 = vld [vmem:[%s0 + $0x208] sm:$0xff]
  %v86 = vld [vmem:[%s0 + $0x210] sm:$0xff]
  %v87 = vld [vmem:[%s0 + $0x218] sm:$0xff]
  %v88 = vld [vmem:[%s0 + $0x220] sm:$0xff]
  %v89 = vld [vmem:[%s0 + $0x228] sm:$0xff]
  %v90 = vld [vmem:[%s0 + $0x230] sm:$0xff]
  %v91 = vld [vmem:[%s0 + $0x238] sm:$0xff]
  %v92 = vld [vmem:[%s0 + $0x240] sm:$0xff]
  %v93 = vld [vmem:[%s0 + $0x248] sm:$0xff]
  %v94 = vld [vmem:[%s0 + $0x250] sm:$0xff]
  %v95 = vld [vmem:[%s0 + $0x258] sm:$0xff]
  %v96 = vld [vmem:[%s0 + $0x260] sm:$0xff]
  %v97 = vld [vmem:[%s0 + $0x268] sm:$0xff]
  %v98 = vld [vmem:[%s0 + $0x270] sm:$0xff]
  %v99 = vld [vmem:[%s0 + $0x278] sm:$0xff]
  %v100 = vld [vmem:[%s0 + $0x280] sm:$0xff]
  %v101 = vld [vmem:[%s0 + $0x288] sm:$0xff]
  %v102 = vld [vmem:[%s0 + $0x290] sm:$0xff]
  %v103 = vld [vmem:[%s0 + $0x298] sm:$0xff]
  %v104 = vld [vmem:[%s0 + $0x2a0] sm:$0xff]
  %v105 = vld [vmem:[%s0 + $0x2a8] sm:$0xff]
  %v106 = vld [vmem:[%s0 + $0x2b0] sm:$0xff]
  %v107 = vld [vmem:[%s0 + $0x2b8] sm:$0xff]
  %v108 = vld [vmem:[%s0 + $0x2c0] sm:$0xff]
  %v109 = vld [vmem:[%s0 + $0x2c8] sm:$0xff]
  %v110 = vld [vmem:[%s0 + $0x2d0] sm:$0xff]
  %v111 = vld [vmem:[%s0 + $0x2d8] sm:$0xff]
  %v112 = vld [vmem:[%s0 + $0x2e0] sm:$0xff]
  %v113 = vld [vmem:[%s0 + $0x2e8] sm:$0xff]
  %v114 = vld [vmem:[%s0 + $0x2f0] sm:$0xff]
  %v115 = vld [vmem:[%s0 + $0x2f8] sm:$0xff]
  %v116 = vld [vmem:[%s1] sm:$0xf]
  %v117 = vld [vmem:[%s1 + $0x4] sm:$0xf]
  %v118 = vld [vmem:[%s1 + $0x8] sm:$0xf]
  %v119 = vld [vmem:[%s1 + $0xc] sm:$0xf]
  %v120 = vld [vmem:[%s1 + $0x10] sm:$0xf]
  %v121 = vld [vmem:[%s1 + $0x14] sm:$0xf]
  %v122 = vld [vmem:[%s1 + $0x18] sm:$0xf]
  %v123 = vld [vmem:[%s1 + $0x1c] sm:$0xf]
  %v124 = vld [vmem:[%s1 + $0x20] sm:$0xf]
  %v125 = vld [vmem:[%s1 + $0x24] sm:$0xf]
  %v126 = vld [vmem:[%s1 + $0x28] sm:$0xf]
  %v127 = vld [vmem:[%s1 + $0x2c] sm:$0xf]
  %v128 = vld [vmem:[%s1 + $0x30] sm:$0xf]
  %v129 = vld [vmem:[%s1 + $0x34] sm:$0xf]
  %v130 = vld [vmem:[%s1 + $0x38] sm:$0xf]
  %v131 = vld [vmem:[%s1 + $0x3c] sm:$0xf]
  %v132 = vld [vmem:[%s1 + $0x40] sm:$0xf]
  %v133 = vld [vmem:[%s1 + $0x44] sm:$0xf]
  %v134 = vld [vmem:[%s1 + $0x48] sm:$0xf]
  %v135 = vld [vmem:[%s1 + $0x4c] sm:$0xf]
  %v136 = vld [vmem:[%s1 + $0x50] sm:$0xf]
  %v137 = vld [vmem:[%s1 + $0x54] sm:$0xf]
  %v138 = vld [vmem:[%s1 + $0x58] sm:$0xf]
  %v139 = vld [vmem:[%s1 + $0x5c] sm:$0xf]
  %v140 = vld [vmem:[%s1 + $0x60] sm:$0xf]
  %v141 = vld [vmem:[%s1 + $0x64] sm:$0xf]
  %v142 = vld [vmem:[%s1 + $0x68] sm:$0xf]
  %v143 = vld [vmem:[%s1 + $0x6c] sm:$0xf]
  %v144 = vld [vmem:[%s1 + $0x70] sm:$0xf]
  %v145 = vld [vmem:[%s1 + $0x74] sm:$0xf]
  %v146 = vld [vmem:[%s1 + $0x78] sm:$0xf]
  %v147 = vld [vmem:[%s1 + $0x7c] sm:$0xf]
  %v148 = vld [vmem:[%s1 + $0x80] sm:$0xf]
  %v149 = vld [vmem:[%s1 + $0x84] sm:$0xf]
  %v150 = vld [vmem:[%s1 + $0x88] sm:$0xf]
  %v151 = vld [vmem:[%s1 + $0x8c] sm:$0xf]
  %v152 = vld [vmem:[%s1 + $0x90] sm:$0xf]
  %v153 = vld [vmem:[%s1 + $0x94] sm:$0xf]
  %v154 = vld [vmem:[%s1 + $0x98] sm:$0xf]
  %v155 = vld [vmem:[%s1 + $0x9c] sm:$0xf]
  %v156 = vld [vmem:[%s1 + $0xa0] sm:$0xf]
  %v157 = vld [vmem:[%s1 + $0xa4] sm:$0xf]
  %v158 = vld [vmem:[%s1 + $0xa8] sm:$0xf]
  %v159 = vld [vmem:[%s1 + $0xac] sm:$0xf]
  %v160 = vld [vmem:[%s1 + $0xb0] sm:$0xf]
  %v161 = vld [vmem:[%s1 + $0xb4] sm:$0xf]
  %v162 = vld [vmem:[%s1 + $0xb8] sm:$0xf]
  %v163 = vld [vmem:[%s1 + $0xbc] sm:$0xf]
  %v164 = vld [vmem:[%s1 + $0xc0] sm:$0xf]
  %v165 = vld [vmem:[%s1 + $0xc4] sm:$0xf]
  %v166 = vld [vmem:[%s1 + $0xc8] sm:$0xf]
  %v167 = vld [vmem:[%s1 + $0xcc] sm:$0xf]
  %v168 = vld [vmem:[%s1 + $0xd0] sm:$0xf]
  %v169 = vld [vmem:[%s1 + $0xd4] sm:$0xf]
  %v170 = vld [vmem:[%s1 + $0xd8] sm:$0xf]
  %v171 = vld [vmem:[%s1 + $0xdc] sm:$0xf]
  %v172 = vld [vmem:[%s1 + $0xe0] sm:$0xf]
  %v173 = vld [vmem:[%s1 + $0xe4] sm:$0xf]
  %v174 = vld [vmem:[%s1 + $0xe8] sm:$0xf]
  %v175 = vld [vmem:[%s1 + $0xec] sm:$0xf]
  %v176 = vld [vmem:[%s1 + $0xf0] sm:$0xf]
  %v177 = vld [vmem:[%s1 + $0xf4] sm:$0xf]
  %v178 = vld [vmem:[%s1 + $0xf8] sm:$0xf]
  %v179 = vld [vmem:[%s1 + $0xfc] sm:$0xf]
  %v180 = vld [vmem:[%s1 + $0x100] sm:$0xf]
  %v181 = vld [vmem:[%s1 + $0x104] sm:$0xf]
  %v182 = vld [vmem:[%s1 + $0x108] sm:$0xf]
  %v183 = vld [vmem:[%s1 + $0x10c] sm:$0xf]
  %v184 = vld [vmem:[%s1 + $0x110] sm:$0xf]
  %v185 = vld [vmem:[%s1 + $0x114] sm:$0xf]
  %v186 = vld [vmem:[%s1 + $0x118] sm:$0xf]
  %v187 = vld [vmem:[%s1 + $0x11c] sm:$0xf]
  %v188 = vld [vmem:[%s1 + $0x120] sm:$0xf]
  %v189 = vld [vmem:[%s1 + $0x124] sm:$0xf]
  %v190 = vld [vmem:[%s1 + $0x128] sm:$0xf]
  %v191 = vld [vmem:[%s1 + $0x12c] sm:$0xf]
  %v192 = vld [vmem:[%s1 + $0x130] sm:$0xf]
  %v193 = vld [vmem:[%s1 + $0x134] sm:$0xf]
  %v194 = vld [vmem:[%s1 + $0x138] sm:$0xf]
  %v195 = vld [vmem:[%s1 + $0x13c] sm:$0xf]
  %v196 = vld [vmem:[%s1 + $0x140] sm:$0xf]
  %v197 = vld [vmem:[%s1 + $0x144] sm:$0xf]
  %v198 = vld [vmem:[%s1 + $0x148] sm:$0xf]
  %v199 = vld [vmem:[%s1 + $0x14c] sm:$0xf]
  %v200 = vld [vmem:[%s1 + $0x150] sm:$0xf]
  %v201 = vld [vmem:[%s1 + $0x154] sm:$0xf]
  %v202 = vld [vmem:[%s1 + $0x158] sm:$0xf]
  %v203 = vld [vmem:[%s1 + $0x15c] sm:$0xf]
  %v204 = vld [vmem:[%s1 + $0x160] sm:$0xf]
  %v205 = vld [vmem:[%s1 + $0x164] sm:$0xf]
  %v206 = vld [vmem:[%s1 + $0x168] sm:$0xf]
  %v207 = vld [vmem:[%s1 + $0x16c] sm:$0xf]
  %v208 = vld [vmem:[%s1 + $0x170] sm:$0xf]
  %v209 = vld [vmem:[%s1 + $0x174] sm:$0xf]
  %v210 = vld [vmem:[%s1 + $0x178] sm:$0xf]
  %v211 = vld [vmem:[%s1 + $0x17c] sm:$0xf]
  %v212 = vld [vmem:[%s1 + $0x180] sm:$0xf]
  %v213 = vld [vmem:[%s1 + $0x184] sm:$0xf]
  %v214 = vld [vmem:[%s1 + $0x188] sm:$0xf]
  %v215 = vld [vmem:[%s1 + $0x18c] sm:$0xf]
  %v216 = vld [vmem:[%s1 + $0x190] sm:$0xf]
  %v217 = vld [vmem:[%s1 + $0x194] sm:$0xf]
  %v218 = vld [vmem:[%s1 + $0x198] sm:$0xf]
  %v219 = vld [vmem:[%s1 + $0x19c] sm:$0xf]
  %v220 = vld [vmem:[%s1 + $0x1a0] sm:$0xf]
  %v221 = vld [vmem:[%s1 + $0x1a4] sm:$0xf]
  %v222 = vld [vmem:[%s1 + $0x1a8] sm:$0xf]
  %v223 = vld [vmem:[%s1 + $0x1ac] sm:$0xf]
  %v224 = vld [vmem:[%s1 + $0x1b0] sm:$0xf]
  %v225 = vld [vmem:[%s1 + $0x1b4] sm:$0xf]
  %v226 = vld [vmem:[%s1 + $0x1b8] sm:$0xf]
  %v227 = vld [vmem:[%s1 + $0x1bc] sm:$0xf]
  %v228 = vld [vmem:[%s1 + $0x1c0] sm:$0xf]
  %v229 = vld [vmem:[%s1 + $0x1c4] sm:$0xf]
  %v230 = vld [vmem:[%s1 + $0x1c8] sm:$0xf]
  %v231 = vld [vmem:[%s1 + $0x1cc] sm:$0xf]
  %v232 = vld [vmem:[%s1 + $0x1d0] sm:$0xf]
  %v233 = vld [vmem:[%s1 + $0x1d4] sm:$0xf]
  %v234 = vld [vmem:[%s1 + $0x1d8] sm:$0xf]
  %v235 = vld [vmem:[%s1 + $0x1dc] sm:$0xf]
  %v236 = vld [vmem:[%s1 + $0x1e0] sm:$0xf]
  %v237 = vld [vmem:[%s1 + $0x1e4] sm:$0xf]
  %v238 = vld [vmem:[%s1 + $0x1e8] sm:$0xf]
  %v239 = vld [vmem:[%s1 + $0x1ec] sm:$0xf]
  %v240 = vld [vmem:[%s1 + $0x1f0] sm:$0xf]
  %v241 = vld [vmem:[%s1 + $0x1f4] sm:$0xf]
  %v242 = vld [vmem:[%s1 + $0x1f8] sm:$0xf]
  %v243 = vld [vmem:[%s1 + $0x1fc] sm:$0xf]
  %v244 = vld [vmem:[%s1 + $0x200] sm:$0xf]
  %v245 = vld [vmem:[%s1 + $0x204] sm:$0xf]
  %v246 = vld [vmem:[%s1 + $0x208] sm:$0xf]
  %v247 = vld [vmem:[%s1 + $0x20c] sm:$0xf]
  %v248 = vld [vmem:[%s1 + $0x210] sm:$0xf]
  %v249 = vld [vmem:[%s1 + $0x214] sm:$0xf]
  %v250 = vld [vmem:[%s1 + $0x218] sm:$0xf]
  %v251 = vld [vmem:[%s1 + $0x21c] sm:$0xf]
  %v252 = vld [vmem:[%s1 + $0x220] sm:$0xf]
  %v253 = vld [vmem:[%s1 + $0x224] sm:$0xf]
  %v254 = vld [vmem:[%s1 + $0x228] sm:$0xf]
  %v255 = vld [vmem:[%s1 + $0x22c] sm:$0xf]
  %v256 = vld [vmem:[%s1 + $0x230] sm:$0xf]
  %v257 = vld [vmem:[%s1 + $0x234] sm:$0xf]
  %v258 = vld [vmem:[%s1 + $0x238] sm:$0xf]
  %v259 = vld [vmem:[%s1 + $0x23c] sm:$0xf]
  %v260 = vld [vmem:[%s1 + $0x240] sm:$0xf]
  %v261 = vld [vmem:[%s1 + $0x244] sm:$0xf]
  %v262 = vld [vmem:[%s1 + $0x248] sm:$0xf]
  %v263 = vld [vmem:[%s1 + $0x24c] sm:$0xf]
  %v264 = vld [vmem:[%s1 + $0x250] sm:$0xf]
  %v265 = vld [vmem:[%s1 + $0x254] sm:$0xf]
  %v266 = vld [vmem:[%s1 + $0x258] sm:$0xf]
  %v267 = vld [vmem:[%s1 + $0x25c] sm:$0xf]
  %v268 = vld [vmem:[%s1 + $0x260] sm:$0xf]
  %v269 = vld [vmem:[%s1 + $0x264] sm:$0xf]
  %v270 = vld [vmem:[%s1 + $0x268] sm:$0xf]
  %v271 = vld [vmem:[%s1 + $0x26c] sm:$0xf]
  %v272 = vld [vmem:[%s1 + $0x270] sm:$0xf]
  %v273 = vld [vmem:[%s1 + $0x274] sm:$0xf]
  %v274 = vld [vmem:[%s1 + $0x278] sm:$0xf]
  %v275 = vld [vmem:[%s1 + $0x27c] sm:$0xf]
  %v276 = vld [vmem:[%s1 + $0x280] sm:$0xf]
  %v277 = vld [vmem:[%s1 + $0x284] sm:$0xf]
  %v278 = vld [vmem:[%s1 + $0x288] sm:$0xf]
  %v279 = vld [vmem:[%s1 + $0x28c] sm:$0xf]
  %v280 = vld [vmem:[%s1 + $0x290] sm:$0xf]
  %v281 = vld [vmem:[%s1 + $0x294] sm:$0xf]
  %v282 = vld [vmem:[%s1 + $0x298] sm:$0xf]
  %v283 = vld [vmem:[%s1 + $0x29c] sm:$0xf]
  %v284 = vld [vmem:[%s1 + $0x2a0] sm:$0xf]
  %v285 = vld [vmem:[%s1 + $0x2a4] sm:$0xf]
  %v286 = vld [vmem:[%s1 + $0x2a8] sm:$0xf]
  %v287 = vld [vmem:[%s1 + $0x2ac] sm:$0xf]
  %v288 = vld [vmem:[%s1 + $0x2b0] sm:$0xf]
  %v289 = vld [vmem:[%s1 + $0x2b4] sm:$0xf]
  %v290 = vld [vmem:[%s1 + $0x2b8] sm:$0xf]
  %v291 = vld [vmem:[%s1 + $0x2bc] sm:$0xf]
  %v292 = vld [vmem:[%s1 + $0x2c0] sm:$0xf]
  %v293 = vld [vmem:[%s1 + $0x2c4] sm:$0xf]
  %v294 = vld [vmem:[%s1 + $0x2c8] sm:$0xf]
  %v295 = vld [vmem:[%s1 + $0x2cc] sm:$0xf]
  %v296 = vld [vmem:[%s1 + $0x2d0] sm:$0xf]
  %v297 = vld [vmem:[%s1 + $0x2d4] sm:$0xf]
  %v298 = vld [vmem:[%s1 + $0x2d8] sm:$0xf]
  %v299 = vld [vmem:[%s1 + $0x2dc] sm:$0xf]
  %v300 = vld [vmem:[%s1 + $0x2e0] sm:$0xf]
  %v301 = vld [vmem:[%s1 + $0x2e4] sm:$0xf]
  %v302 = vld [vmem:[%s1 + $0x2e8] sm:$0xf]
  %v303 = vld [vmem:[%s1 + $0x2ec] sm:$0xf]
  %v304 = vld [vmem:[%s1 + $0x2f0] sm:$0xf]
  %v305 = vld [vmem:[%s1 + $0x2f4] sm:$0xf]
  %v306 = vld [vmem:[%s1 + $0x2f8] sm:$0xf]
  %v307 = vld [vmem:[%s1 + $0x2fc] sm:$0xf]
  %v308 = vld [vmem:[%s1 + $0x300] sm:$0xf]
  %v309 = vld [vmem:[%s1 + $0x304] sm:$0xf]
  %v310 = vld [vmem:[%s1 + $0x308] sm:$0xf]
  %v311 = vld [vmem:[%s1 + $0x30c] sm:$0xf]
  %v312 = vld [vmem:[%s1 + $0x310] sm:$0xf]
  %v313 = vld [vmem:[%s1 + $0x314] sm:$0xf]
  %v314 = vld [vmem:[%s1 + $0x318] sm:$0xf]
  %v315 = vld [vmem:[%s1 + $0x31c] sm:$0xf]
  %v316 = vld [vmem:[%s1 + $0x320] sm:$0xf]
  %v317 = vld [vmem:[%s1 + $0x324] sm:$0xf]
  %v318 = vld [vmem:[%s1 + $0x328] sm:$0xf]
  %v319 = vld [vmem:[%s1 + $0x32c] sm:$0xf]
  %v320 = vld [vmem:[%s1 + $0x330] sm:$0xf]
  %v321 = vld [vmem:[%s1 + $0x334] sm:$0xf]
  %v322 = vld [vmem:[%s1 + $0x338] sm:$0xf]
  %v323 = vld [vmem:[%s1 + $0x33c] sm:$0xf]
  %v324 = vld [vmem:[%s1 + $0x340] sm:$0xf]
  %v325 = vld [vmem:[%s1 + $0x344] sm:$0xf]
  %v326 = vld [vmem:[%s1 + $0x348] sm:$0xf]
  %v327 = vld [vmem:[%s1 + $0x34c] sm:$0xf]
  %v328 = vld [vmem:[%s1 + $0x350] sm:$0xf]
  %v329 = vld [vmem:[%s1 + $0x354] sm:$0xf]
  %v330 = vld [vmem:[%s1 + $0x358] sm:$0xf]
  %v331 = vld [vmem:[%s1 + $0x35c] sm:$0xf]
  %v332 = vld [vmem:[%s1 + $0x360] sm:$0xf]
  %v333 = vld [vmem:[%s1 + $0x364] sm:$0xf]
  %v334 = vld [vmem:[%s1 + $0x368] sm:$0xf]
  %v335 = vld [vmem:[%s1 + $0x36c] sm:$0xf]
  %v336 = vld [vmem:[%s1 + $0x370] sm:$0xf]
  %v337 = vld [vmem:[%s1 + $0x374] sm:$0xf]
  %v338 = vld [vmem:[%s1 + $0x378] sm:$0xf]
  %v339 = vld [vmem:[%s1 + $0x37c] sm:$0xf]
  %v340 = vld [vmem:[%s1 + $0x380] sm:$0xf]
  %v341 = vld [vmem:[%s1 + $0x384] sm:$0xf]
  %v342 = vld [vmem:[%s1 + $0x388] sm:$0xf]
  %v343 = vld [vmem:[%s1 + $0x38c] sm:$0xf]
  %v344 = vld [vmem:[%s1 + $0x390] sm:$0xf]
  %v345 = vld [vmem:[%s1 + $0x394] sm:$0xf]
  %v346 = vld [vmem:[%s1 + $0x398] sm:$0xf]
  %v347 = vld [vmem:[%s1 + $0x39c] sm:$0xf]
  %v348 = vld [vmem:[%s1 + $0x3a0] sm:$0xf]
  %v349 = vld [vmem:[%s1 + $0x3a4] sm:$0xf]
  %v350 = vld [vmem:[%s1 + $0x3a8] sm:$0xf]
  %v351 = vld [vmem:[%s1 + $0x3ac] sm:$0xf]
  %v352 = vld [vmem:[%s1 + $0x3b0] sm:$0xf]
  %v353 = vld [vmem:[%s1 + $0x3b4] sm:$0xf]
  %v354 = vld [vmem:[%s1 + $0x3b8] sm:$0xf]
  %v355 = vld [vmem:[%s1 + $0x3bc] sm:$0xf]
  %v356 = vld [vmem:[%s1 + $0x3c0] sm:$0xf]
  %v357 = vld [vmem:[%s1 + $0x3c4] sm:$0xf]
  %v358 = vld [vmem:[%s1 + $0x3c8] sm:$0xf]
  %v359 = vld [vmem:[%s1 + $0x3cc] sm:$0xf]
  %v360 = vld [vmem:[%s1 + $0x3d0] sm:$0xf]
  %v361 = vld [vmem:[%s1 + $0x3d4] sm:$0xf]
  %v362 = vld [vmem:[%s1 + $0x3d8] sm:$0xf]
  %v363 = vld [vmem:[%s1 + $0x3dc] sm:$0xf]
  %v364 = vld [vmem:[%s1 + $0x3e0] sm:$0xf]
  %v365 = vld [vmem:[%s1 + $0x3e4] sm:$0xf]
  %v366 = vld [vmem:[%s1 + $0x3e8] sm:$0xf]
  %v367 = vld [vmem:[%s1 + $0x3ec] sm:$0xf]
  %v368 = vld [vmem:[%s1 + $0x3f0] sm:$0xf]
  %v369 = vld [vmem:[%s1 + $0x3f4] sm:$0xf]
  %v370 = vld [vmem:[%s1 + $0x3f8] sm:$0xf]
  %v371 = vld [vmem:[%s1 + $0x3fc] sm:$0xf]
  %v372 = vld [vmem:[%s1 + $0x400] sm:$0xf]
  %v373 = vld [vmem:[%s1 + $0x404] sm:$0xf]
  %v374 = vld [vmem:[%s1 + $0x408] sm:$0xf]
  %v375 = vld [vmem:[%s1 + $0x40c] sm:$0xf]
  %v376 = vld [vmem:[%s1 + $0x410] sm:$0xf]
  %v377 = vld [vmem:[%s1 + $0x414] sm:$0xf]
  %v378 = vld [vmem:[%s1 + $0x418] sm:$0xf]
  %v379 = vld [vmem:[%s1 + $0x41c] sm:$0xf]
  %v380 = vld [vmem:[%s1 + $0x420] sm:$0xf]
  %v381 = vld [vmem:[%s1 + $0x424] sm:$0xf]
  %v382 = vld [vmem:[%s1 + $0x428] sm:$0xf]
  %v383 = vld [vmem:[%s1 + $0x42c] sm:$0xf]
  %v384 = vld [vmem:[%s1 + $0x430] sm:$0xf]
  %v385 = vld [vmem:[%s1 + $0x434] sm:$0xf]
  %v386 = vld [vmem:[%s1 + $0x438] sm:$0xf]
  %v387 = vld [vmem:[%s1 + $0x43c] sm:$0xf]
  %v388 = vld [vmem:[%s1 + $0x440] sm:$0xf]
  %v389 = vld [vmem:[%s1 + $0x444] sm:$0xf]
  %v390 = vld [vmem:[%s1 + $0x448] sm:$0xf]
  %v391 = vld [vmem:[%s1 + $0x44c] sm:$0xf]
  %v392 = vld [vmem:[%s1 + $0x450] sm:$0xf]
  %v393 = vld [vmem:[%s1 + $0x454] sm:$0xf]
  %v394 = vld [vmem:[%s1 + $0x458] sm:$0xf]
  %v395 = vld [vmem:[%s1 + $0x45c] sm:$0xf]
  %v396 = vld [vmem:[%s1 + $0x460] sm:$0xf]
  %v397 = vld [vmem:[%s1 + $0x464] sm:$0xf]
  %v398 = vld [vmem:[%s1 + $0x468] sm:$0xf]
  %v399 = vld [vmem:[%s1 + $0x46c] sm:$0xf]
  %v400 = vld [vmem:[%s1 + $0x470] sm:$0xf]
  %v401 = vld [vmem:[%s1 + $0x474] sm:$0xf]
  %v402 = vld [vmem:[%s1 + $0x478] sm:$0xf]
  %v403 = vld [vmem:[%s1 + $0x47c] sm:$0xf]
  %v404 = vld [vmem:[%s1 + $0x480] sm:$0xf]
  %v405 = vld [vmem:[%s1 + $0x484] sm:$0xf]
  %v406 = vld [vmem:[%s1 + $0x488] sm:$0xf]
  %v407 = vld [vmem:[%s1 + $0x48c] sm:$0xf]
  %v408 = vld [vmem:[%s1 + $0x490] sm:$0xf]
  %v409 = vld [vmem:[%s1 + $0x494] sm:$0xf]
  %v410 = vld [vmem:[%s1 + $0x498] sm:$0xf]
  %v411 = vld [vmem:[%s1 + $0x49c] sm:$0xf]
  %v412 = vld [vmem:[%s1 + $0x4a0] sm:$0xf]
  %v413 = vld [vmem:[%s1 + $0x4a4] sm:$0xf]
  %v414 = vld [vmem:[%s1 + $0x4a8] sm:$0xf]
  %v415 = vld [vmem:[%s1 + $0x4ac] sm:$0xf]
  %v416 = vld [vmem:[%s1 + $0x4b0] sm:$0xf]
  %v417 = vld [vmem:[%s1 + $0x4b4] sm:$0xf]
  %v418 = vld [vmem:[%s1 + $0x4b8] sm:$0xf]
  %v419 = vld [vmem:[%s1 + $0x4bc] sm:$0xf]
  %v420 = vld [vmem:[%s1 + $0x4c0] sm:$0xf]
  %v421 = vld [vmem:[%s1 + $0x4c4] sm:$0xf]
  %v422 = vld [vmem:[%s1 + $0x4c8] sm:$0xf]
  %v423 = vld [vmem:[%s1 + $0x4cc] sm:$0xf]
  %v424 = vld [vmem:[%s1 + $0x4d0] sm:$0xf]
  %v425 = vld [vmem:[%s1 + $0x4d4] sm:$0xf]
  %v426 = vld [vmem:[%s1 + $0x4d8] sm:$0xf]
  %v427 = vld [vmem:[%s1 + $0x4dc] sm:$0xf]
  %v428 = vld [vmem:[%s1 + $0x4e0] sm:$0xf]
  %v429 = vld [vmem:[%s1 + $0x4e4] sm:$0xf]
  %v430 = vld [vmem:[%s1 + $0x4e8] sm:$0xf]
  %v431 = vld [vmem:[%s1 + $0x4ec] sm:$0xf]
  %v432 = vld [vmem:[%s1 + $0x4f0] sm:$0xf]
  %v433 = vld [vmem:[%s1 + $0x4f4] sm:$0xf]
  %v434 = vld [vmem:[%s1 + $0x4f8] sm:$0xf]
  %v435 = vld [vmem:[%s1 + $0x4fc] sm:$0xf]
  %v436 = vld [vmem:[%s1 + $0x500] sm:$0xf]
  %v437 = vld [vmem:[%s1 + $0x504] sm:$0xf]
  %v438 = vld [vmem:[%s1 + $0x508] sm:$0xf]
  %v439 = vld [vmem:[%s1 + $0x50c] sm:$0xf]
  %v440 = vld [vmem:[%s1 + $0x510] sm:$0xf]
  %v441 = vld [vmem:[%s1 + $0x514] sm:$0xf]
  %v442 = vld [vmem:[%s1 + $0x518] sm:$0xf]
  %v443 = vld [vmem:[%s1 + $0x51c] sm:$0xf]
  %v444 = vld [vmem:[%s1 + $0x520] sm:$0xf]
  %v445 = vld [vmem:[%s1 + $0x524] sm:$0xf]
  %v446 = vld [vmem:[%s1 + $0x528] sm:$0xf]
  %v447 = vld [vmem:[%s1 + $0x52c] sm:$0xf]
  %v448 = vld [vmem:[%s1 + $0x530] sm:$0xf]
  %v449 = vld [vmem:[%s1 + $0x534] sm:$0xf]
  %v450 = vld [vmem:[%s1 + $0x538] sm:$0xf]
  %v451 = vld [vmem:[%s1 + $0x53c] sm:$0xf]
  %v452 = vld [vmem:[%s1 + $0x540] sm:$0xf]
  %v453 = vld [vmem:[%s1 + $0x544] sm:$0xf]
  %v454 = vld [vmem:[%s1 + $0x548] sm:$0xf]
  %v455 = vld [vmem:[%s1 + $0x54c] sm:$0xf]
  %v456 = vld [vmem:[%s1 + $0x550] sm:$0xf]
  %v457 = vld [vmem:[%s1 + $0x554] sm:$0xf]
  %v458 = vld [vmem:[%s1 + $0x558] sm:$0xf]
  %v459 = vld [vmem:[%s1 + $0x55c] sm:$0xf]
  %v460 = vld [vmem:[%s1 + $0x560] sm:$0xf]
  %v461 = vld [vmem:[%s1 + $0x564] sm:$0xf]
  %v462 = vld [vmem:[%s1 + $0x568] sm:$0xf]
  %v463 = vld [vmem:[%s1 + $0x56c] sm:$0xf]
  %v464 = vld [vmem:[%s1 + $0x570] sm:$0xf]
  %v465 = vld [vmem:[%s1 + $0x574] sm:$0xf]
  %v466 = vld [vmem:[%s1 + $0x578] sm:$0xf]
  %v467 = vld [vmem:[%s1 + $0x57c] sm:$0xf]
  %v468 = vld [vmem:[%s1 + $0x580] sm:$0xf]
  %v469 = vld [vmem:[%s1 + $0x584] sm:$0xf]
  %v470 = vld [vmem:[%s1 + $0x588] sm:$0xf]
  %v471 = vld [vmem:[%s1 + $0x58c] sm:$0xf]
  %v472 = vld [vmem:[%s1 + $0x590] sm:$0xf]
  %v473 = vld [vmem:[%s1 + $0x594] sm:$0xf]
  %v474 = vld [vmem:[%s1 + $0x598] sm:$0xf]
  %v475 = vld [vmem:[%s1 + $0x59c] sm:$0xf]
  %v476 = vld [vmem:[%s1 + $0x5a0] sm:$0xf]
  %v477 = vld [vmem:[%s1 + $0x5a4] sm:$0xf]
  %v478 = vld [vmem:[%s1 + $0x5a8] sm:$0xf]
  %v479 = vld [vmem:[%s1 + $0x5ac] sm:$0xf]
  %v480 = vld [vmem:[%s1 + $0x5b0] sm:$0xf]
  %v481 = vld [vmem:[%s1 + $0x5b4] sm:$0xf]
  %v482 = vld [vmem:[%s1 + $0x5b8] sm:$0xf]
  %v483 = vld [vmem:[%s1 + $0x5bc] sm:$0xf]
  %v484 = vld [vmem:[%s1 + $0x5c0] sm:$0xf]
  %v485 = vld [vmem:[%s1 + $0x5c4] sm:$0xf]
  %v486 = vld [vmem:[%s1 + $0x5c8] sm:$0xf]
  %v487 = vld [vmem:[%s1 + $0x5cc] sm:$0xf]
  %v488 = vld [vmem:[%s1 + $0x5d0] sm:$0xf]
  %v489 = vld [vmem:[%s1 + $0x5d4] sm:$0xf]
  %v490 = vld [vmem:[%s1 + $0x5d8] sm:$0xf]
  %v491 = vld [vmem:[%s1 + $0x5dc] sm:$0xf]
  %v492 = vld [vmem:[%s1 + $0x5e0] sm:$0xf]
  %v493 = vld [vmem:[%s1 + $0x5e4] sm:$0xf]
  %v494 = vld [vmem:[%s1 + $0x5e8] sm:$0xf]
  %v495 = vld [vmem:[%s1 + $0x5ec] sm:$0xf]
  %v496 = vld [vmem:[%s1 + $0x5f0] sm:$0xf]
  %v497 = vld [vmem:[%s1 + $0x5f4] sm:$0xf]
  %v498 = vld [vmem:[%s1 + $0x5f8] sm:$0xf]
  %v499 = vld [vmem:[%s1 + $0x5fc] sm:$0xf]
  %v500 = vld [vmem:[%s2] sm:$0x1]
  %v502 = vperm.slane %v500, 0
  %v600 = vunpack.c.l.b16 %v20
  %v601 = vunpack.c.h.b16 %v20
  %v602 = vunpack.c.l.b16 %v21
  %v603 = vunpack.c.h.b16 %v21
  %v604 = vunpack.c.l.b16 %v22
  %v605 = vunpack.c.h.b16 %v22
  %v606 = vunpack.c.l.b16 %v23
  %v607 = vunpack.c.h.b16 %v23
  %v608 = vunpack.c.l.b16 %v24
  %v609 = vunpack.c.h.b16 %v24
  %v610 = vunpack.c.l.b16 %v25
  %v611 = vunpack.c.h.b16 %v25
  %v612 = vunpack.c.l.b16 %v26
  %v613 = vunpack.c.h.b16 %v26
  %v614 = vunpack.c.l.b16 %v27
  %v615 = vunpack.c.h.b16 %v27
  %v616 = vunpack.c.l.b16 %v28
  %v617 = vunpack.c.h.b16 %v28
  %v618 = vunpack.c.l.b16 %v29
  %v619 = vunpack.c.h.b16 %v29
  %v620 = vunpack.c.l.b16 %v30
  %v621 = vunpack.c.h.b16 %v30
  %v622 = vunpack.c.l.b16 %v31
  %v623 = vunpack.c.h.b16 %v31
  %v624 = vunpack.c.l.b16 %v32
  %v625 = vunpack.c.h.b16 %v32
  %v626 = vunpack.c.l.b16 %v33
  %v627 = vunpack.c.h.b16 %v33
  %v628 = vunpack.c.l.b16 %v34
  %v629 = vunpack.c.h.b16 %v34
  %v630 = vunpack.c.l.b16 %v35
  %v631 = vunpack.c.h.b16 %v35
  %v632 = vunpack.c.l.b16 %v36
  %v633 = vunpack.c.h.b16 %v36
  %v634 = vunpack.c.l.b16 %v37
  %v635 = vunpack.c.h.b16 %v37
  %v636 = vunpack.c.l.b16 %v38
  %v637 = vunpack.c.h.b16 %v38
  %v638 = vunpack.c.l.b16 %v39
  %v639 = vunpack.c.h.b16 %v39
  %v640 = vunpack.c.l.b16 %v40
  %v641 = vunpack.c.h.b16 %v40
  %v642 = vunpack.c.l.b16 %v41
  %v643 = vunpack.c.h.b16 %v41
  %v644 = vunpack.c.l.b16 %v42
  %v645 = vunpack.c.h.b16 %v42
  %v646 = vunpack.c.l.b16 %v43
  %v647 = vunpack.c.h.b16 %v43
  %v648 = vunpack.c.l.b16 %v44
  %v649 = vunpack.c.h.b16 %v44
  %v650 = vunpack.c.l.b16 %v45
  %v651 = vunpack.c.h.b16 %v45
  %v652 = vunpack.c.l.b16 %v46
  %v653 = vunpack.c.h.b16 %v46
  %v654 = vunpack.c.l.b16 %v47
  %v655 = vunpack.c.h.b16 %v47
  %v656 = vunpack.c.l.b16 %v48
  %v657 = vunpack.c.h.b16 %v48
  %v658 = vunpack.c.l.b16 %v49
  %v659 = vunpack.c.h.b16 %v49
  %v660 = vunpack.c.l.b16 %v50
  %v661 = vunpack.c.h.b16 %v50
  %v662 = vunpack.c.l.b16 %v51
  %v663 = vunpack.c.h.b16 %v51
  %v664 = vunpack.c.l.b16 %v52
  %v665 = vunpack.c.h.b16 %v52
  %v666 = vunpack.c.l.b16 %v53
  %v667 = vunpack.c.h.b16 %v53
  %v668 = vunpack.c.l.b16 %v54
  %v669 = vunpack.c.h.b16 %v54
  %v670 = vunpack.c.l.b16 %v55
  %v671 = vunpack.c.h.b16 %v55
  %v672 = vunpack.c.l.b16 %v56
  %v673 = vunpack.c.h.b16 %v56
  %v674 = vunpack.c.l.b16 %v57
  %v675 = vunpack.c.h.b16 %v57
  %v676 = vunpack.c.l.b16 %v58
  %v677 = vunpack.c.h.b16 %v58
  %v678 = vunpack.c.l.b16 %v59
  %v679 = vunpack.c.h.b16 %v59
  %v680 = vunpack.c.l.b16 %v60
  %v681 = vunpack.c.h.b16 %v60
  %v682 = vunpack.c.l.b16 %v61
  %v683 = vunpack.c.h.b16 %v61
  %v684 = vunpack.c.l.b16 %v62
  %v685 = vunpack.c.h.b16 %v62
  %v686 = vunpack.c.l.b16 %v63
  %v687 = vunpack.c.h.b16 %v63
  %v688 = vunpack.c.l.b16 %v64
  %v689 = vunpack.c.h.b16 %v64
  %v690 = vunpack.c.l.b16 %v65
  %v691 = vunpack.c.h.b16 %v65
  %v692 = vunpack.c.l.b16 %v66
  %v693 = vunpack.c.h.b16 %v66
  %v694 = vunpack.c.l.b16 %v67
  %v695 = vunpack.c.h.b16 %v67
  %v696 = vunpack.c.l.b16 %v68
  %v697 = vunpack.c.h.b16 %v68
  %v698 = vunpack.c.l.b16 %v69
  %v699 = vunpack.c.h.b16 %v69
  %v700 = vunpack.c.l.b16 %v70
  %v701 = vunpack.c.h.b16 %v70
  %v702 = vunpack.c.l.b16 %v71
  %v703 = vunpack.c.h.b16 %v71
  %v704 = vunpack.c.l.b16 %v72
  %v705 = vunpack.c.h.b16 %v72
  %v706 = vunpack.c.l.b16 %v73
  %v707 = vunpack.c.h.b16 %v73
  %v708 = vunpack.c.l.b16 %v74
  %v709 = vunpack.c.h.b16 %v74
  %v710 = vunpack.c.l.b16 %v75
  %v711 = vunpack.c.h.b16 %v75
  %v712 = vunpack.c.l.b16 %v76
  %v713 = vunpack.c.h.b16 %v76
  %v714 = vunpack.c.l.b16 %v77
  %v715 = vunpack.c.h.b16 %v77
  %v716 = vunpack.c.l.b16 %v78
  %v717 = vunpack.c.h.b16 %v78
  %v718 = vunpack.c.l.b16 %v79
  %v719 = vunpack.c.h.b16 %v79
  %v720 = vunpack.c.l.b16 %v80
  %v721 = vunpack.c.h.b16 %v80
  %v722 = vunpack.c.l.b16 %v81
  %v723 = vunpack.c.h.b16 %v81
  %v724 = vunpack.c.l.b16 %v82
  %v725 = vunpack.c.h.b16 %v82
  %v726 = vunpack.c.l.b16 %v83
  %v727 = vunpack.c.h.b16 %v83
  %v728 = vunpack.c.l.b16 %v84
  %v729 = vunpack.c.h.b16 %v84
  %v730 = vunpack.c.l.b16 %v85
  %v731 = vunpack.c.h.b16 %v85
  %v732 = vunpack.c.l.b16 %v86
  %v733 = vunpack.c.h.b16 %v86
  %v734 = vunpack.c.l.b16 %v87
  %v735 = vunpack.c.h.b16 %v87
  %v736 = vunpack.c.l.b16 %v88
  %v737 = vunpack.c.h.b16 %v88
  %v738 = vunpack.c.l.b16 %v89
  %v739 = vunpack.c.h.b16 %v89
  %v740 = vunpack.c.l.b16 %v90
  %v741 = vunpack.c.h.b16 %v90
  %v742 = vunpack.c.l.b16 %v91
  %v743 = vunpack.c.h.b16 %v91
  %v744 = vunpack.c.l.b16 %v92
  %v745 = vunpack.c.h.b16 %v92
  %v746 = vunpack.c.l.b16 %v93
  %v747 = vunpack.c.h.b16 %v93
  %v748 = vunpack.c.l.b16 %v94
  %v749 = vunpack.c.h.b16 %v94
  %v750 = vunpack.c.l.b16 %v95
  %v751 = vunpack.c.h.b16 %v95
  %v752 = vunpack.c.l.b16 %v96
  %v753 = vunpack.c.h.b16 %v96
  %v754 = vunpack.c.l.b16 %v97
  %v755 = vunpack.c.h.b16 %v97
  %v756 = vunpack.c.l.b16 %v98
  %v757 = vunpack.c.h.b16 %v98
  %v758 = vunpack.c.l.b16 %v99
  %v759 = vunpack.c.h.b16 %v99
  %v760 = vunpack.c.l.b16 %v100
  %v761 = vunpack.c.h.b16 %v100
  %v762 = vunpack.c.l.b16 %v101
  %v763 = vunpack.c.h.b16 %v101
  %v764 = vunpack.c.l.b16 %v102
  %v765 = vunpack.c.h.b16 %v102
  %v766 = vunpack.c.l.b16 %v103
  %v767 = vunpack.c.h.b16 %v103
  %v768 = vunpack.c.l.b16 %v104
  %v769 = vunpack.c.h.b16 %v104
  %v770 = vunpack.c.l.b16 %v105
  %v771 = vunpack.c.h.b16 %v105
  %v772 = vunpack.c.l.b16 %v106
  %v773 = vunpack.c.h.b16 %v106
  %v774 = vunpack.c.l.b16 %v107
  %v775 = vunpack.c.h.b16 %v107
  %v776 = vunpack.c.l.b16 %v108
  %v777 = vunpack.c.h.b16 %v108
  %v778 = vunpack.c.l.b16 %v109
  %v779 = vunpack.c.h.b16 %v109
  %v780 = vunpack.c.l.b16 %v110
  %v781 = vunpack.c.h.b16 %v110
  %v782 = vunpack.c.l.b16 %v111
  %v783 = vunpack.c.h.b16 %v111
  %v784 = vunpack.c.l.b16 %v112
  %v785 = vunpack.c.h.b16 %v112
  %v786 = vunpack.c.l.b16 %v113
  %v787 = vunpack.c.h.b16 %v113
  %v788 = vunpack.c.l.b16 %v114
  %v789 = vunpack.c.h.b16 %v114
  %v790 = vunpack.c.l.b16 %v115
  %v791 = vunpack.c.h.b16 %v115
  %v792 = vpack.c.b16 %v624, %v600
  %v793 = vpack.c.b16 %v625, %v601
  %v794 = vpack.c.b16 %v626, %v602
  %v795 = vpack.c.b16 %v627, %v603
  %v796 = vpack.c.b16 %v628, %v604
  %v797 = vpack.c.b16 %v629, %v605
  %v798 = vpack.c.b16 %v630, %v606
  %v799 = vpack.c.b16 %v631, %v607
  %v800 = vpack.c.b16 %v632, %v608
  %v801 = vpack.c.b16 %v633, %v609
  %v802 = vpack.c.b16 %v634, %v610
  %v803 = vpack.c.b16 %v635, %v611
  %v804 = vpack.c.b16 %v636, %v612
  %v805 = vpack.c.b16 %v637, %v613
  %v806 = vpack.c.b16 %v638, %v614
  %v807 = vpack.c.b16 %v639, %v615
  %v808 = vpack.c.b16 %v640, %v616
  %v809 = vpack.c.b16 %v641, %v617
  %v810 = vpack.c.b16 %v642, %v618
  %v811 = vpack.c.b16 %v643, %v619
  %v812 = vpack.c.b16 %v644, %v620
  %v813 = vpack.c.b16 %v645, %v621
  %v814 = vpack.c.b16 %v646, %v622
  %v815 = vpack.c.b16 %v647, %v623
  %v816 = vpack.c.b16 %v672, %v648
  %v817 = vpack.c.b16 %v673, %v649
  %v818 = vpack.c.b16 %v674, %v650
  %v819 = vpack.c.b16 %v675, %v651
  %v820 = vpack.c.b16 %v676, %v652
  %v821 = vpack.c.b16 %v677, %v653
  %v822 = vpack.c.b16 %v678, %v654
  %v823 = vpack.c.b16 %v679, %v655
  %v824 = vpack.c.b16 %v680, %v656
  %v825 = vpack.c.b16 %v681, %v657
  %v826 = vpack.c.b16 %v682, %v658
  %v827 = vpack.c.b16 %v683, %v659
  %v828 = vpack.c.b16 %v684, %v660
  %v829 = vpack.c.b16 %v685, %v661
  %v830 = vpack.c.b16 %v686, %v662
  %v831 = vpack.c.b16 %v687, %v663
  %v832 = vpack.c.b16 %v688, %v664
  %v833 = vpack.c.b16 %v689, %v665
  %v834 = vpack.c.b16 %v690, %v666
  %v835 = vpack.c.b16 %v691, %v667
  %v836 = vpack.c.b16 %v692, %v668
  %v837 = vpack.c.b16 %v693, %v669
  %v838 = vpack.c.b16 %v694, %v670
  %v839 = vpack.c.b16 %v695, %v671
  %v840 = vpack.c.b16 %v720, %v696
  %v841 = vpack.c.b16 %v721, %v697
  %v842 = vpack.c.b16 %v722, %v698
  %v843 = vpack.c.b16 %v723, %v699
  %v844 = vpack.c.b16 %v724, %v700
  %v845 = vpack.c.b16 %v725, %v701
  %v846 = vpack.c.b16 %v726, %v702
  %v847 = vpack.c.b16 %v727, %v703
  %v848 = vpack.c.b16 %v728, %v704
  %v849 = vpack.c.b16 %v729, %v705
  %v850 = vpack.c.b16 %v730, %v706
  %v851 = vpack.c.b16 %v731, %v707
  %v852 = vpack.c.b16 %v732, %v708
  %v853 = vpack.c.b16 %v733, %v709
  %v854 = vpack.c.b16 %v734, %v710
  %v855 = vpack.c.b16 %v735, %v711
  %v856 = vpack.c.b16 %v736, %v712
  %v857 = vpack.c.b16 %v737, %v713
  %v858 = vpack.c.b16 %v738, %v714
  %v859 = vpack.c.b16 %v739, %v715
  %v860 = vpack.c.b16 %v740, %v716
  %v861 = vpack.c.b16 %v741, %v717
  %v862 = vpack.c.b16 %v742, %v718
  %v863 = vpack.c.b16 %v743, %v719
  %v864 = vpack.c.b16 %v768, %v744
  %v865 = vpack.c.b16 %v769, %v745
  %v866 = vpack.c.b16 %v770, %v746
  %v867 = vpack.c.b16 %v771, %v747
  %v868 = vpack.c.b16 %v772, %v748
  %v869 = vpack.c.b16 %v773, %v749
  %v870 = vpack.c.b16 %v774, %v750
  %v871 = vpack.c.b16 %v775, %v751
  %v872 = vpack.c.b16 %v776, %v752
  %v873 = vpack.c.b16 %v777, %v753
  %v874 = vpack.c.b16 %v778, %v754
  %v875 = vpack.c.b16 %v779, %v755
  %v876 = vpack.c.b16 %v780, %v756
  %v877 = vpack.c.b16 %v781, %v757
  %v878 = vpack.c.b16 %v782, %v758
  %v879 = vpack.c.b16 %v783, %v759
  %v880 = vpack.c.b16 %v784, %v760
  %v881 = vpack.c.b16 %v785, %v761
  %v882 = vpack.c.b16 %v786, %v762
  %v883 = vpack.c.b16 %v787, %v763
  %v884 = vpack.c.b16 %v788, %v764
  %v885 = vpack.c.b16 %v789, %v765
  %v886 = vpack.c.b16 %v790, %v766
  %v887 = vpack.c.b16 %v791, %v767
  %v1368 = vunpack.c.l.b16 %v116
  %v1369 = vunpack.c.l.b16 %v117
  %v1370 = vunpack.c.l.b16 %v118
  %v1371 = vunpack.c.l.b16 %v119
  %v1372 = vunpack.c.l.b16 %v120
  %v1373 = vunpack.c.l.b16 %v121
  %v1374 = vunpack.c.l.b16 %v122
  %v1375 = vunpack.c.l.b16 %v123
  %v1376 = vunpack.c.l.b16 %v124
  %v1377 = vunpack.c.l.b16 %v125
  %v1378 = vunpack.c.l.b16 %v126
  %v1379 = vunpack.c.l.b16 %v127
  %v1380 = vunpack.c.l.b16 %v128
  %v1381 = vunpack.c.l.b16 %v129
  %v1382 = vunpack.c.l.b16 %v130
  %v1383 = vunpack.c.l.b16 %v131
  %v1384 = vunpack.c.l.b16 %v132
  %v1385 = vunpack.c.l.b16 %v133
  %v1386 = vunpack.c.l.b16 %v134
  %v1387 = vunpack.c.l.b16 %v135
  %v1388 = vunpack.c.l.b16 %v136
  %v1389 = vunpack.c.l.b16 %v137
  %v1390 = vunpack.c.l.b16 %v138
  %v1391 = vunpack.c.l.b16 %v139
  %v1392 = vunpack.c.l.b16 %v140
  %v1393 = vunpack.c.l.b16 %v141
  %v1394 = vunpack.c.l.b16 %v142
  %v1395 = vunpack.c.l.b16 %v143
  %v1396 = vunpack.c.l.b16 %v144
  %v1397 = vunpack.c.l.b16 %v145
  %v1398 = vunpack.c.l.b16 %v146
  %v1399 = vunpack.c.l.b16 %v147
  %v1400 = vunpack.c.l.b16 %v148
  %v1401 = vunpack.c.l.b16 %v149
  %v1402 = vunpack.c.l.b16 %v150
  %v1403 = vunpack.c.l.b16 %v151
  %v1404 = vunpack.c.l.b16 %v152
  %v1405 = vunpack.c.l.b16 %v153
  %v1406 = vunpack.c.l.b16 %v154
  %v1407 = vunpack.c.l.b16 %v155
  %v1408 = vunpack.c.l.b16 %v156
  %v1409 = vunpack.c.l.b16 %v157
  %v1410 = vunpack.c.l.b16 %v158
  %v1411 = vunpack.c.l.b16 %v159
  %v1412 = vunpack.c.l.b16 %v160
  %v1413 = vunpack.c.l.b16 %v161
  %v1414 = vunpack.c.l.b16 %v162
  %v1415 = vunpack.c.l.b16 %v163
  %v1416 = vunpack.c.l.b16 %v164
  %v1417 = vunpack.c.l.b16 %v165
  %v1418 = vunpack.c.l.b16 %v166
  %v1419 = vunpack.c.l.b16 %v167
  %v1420 = vunpack.c.l.b16 %v168
  %v1421 = vunpack.c.l.b16 %v169
  %v1422 = vunpack.c.l.b16 %v170
  %v1423 = vunpack.c.l.b16 %v171
  %v1424 = vunpack.c.l.b16 %v172
  %v1425 = vunpack.c.l.b16 %v173
  %v1426 = vunpack.c.l.b16 %v174
  %v1427 = vunpack.c.l.b16 %v175
  %v1428 = vunpack.c.l.b16 %v176
  %v1429 = vunpack.c.l.b16 %v177
  %v1430 = vunpack.c.l.b16 %v178
  %v1431 = vunpack.c.l.b16 %v179
  %v1432 = vunpack.c.l.b16 %v180
  %v1433 = vunpack.c.l.b16 %v181
  %v1434 = vunpack.c.l.b16 %v182
  %v1435 = vunpack.c.l.b16 %v183
  %v1436 = vunpack.c.l.b16 %v184
  %v1437 = vunpack.c.l.b16 %v185
  %v1438 = vunpack.c.l.b16 %v186
  %v1439 = vunpack.c.l.b16 %v187
  %v1440 = vunpack.c.l.b16 %v188
  %v1441 = vunpack.c.l.b16 %v189
  %v1442 = vunpack.c.l.b16 %v190
  %v1443 = vunpack.c.l.b16 %v191
  %v1444 = vunpack.c.l.b16 %v192
  %v1445 = vunpack.c.l.b16 %v193
  %v1446 = vunpack.c.l.b16 %v194
  %v1447 = vunpack.c.l.b16 %v195
  %v1448 = vunpack.c.l.b16 %v196
  %v1449 = vunpack.c.l.b16 %v197
  %v1450 = vunpack.c.l.b16 %v198
  %v1451 = vunpack.c.l.b16 %v199
  %v1452 = vunpack.c.l.b16 %v200
  %v1453 = vunpack.c.l.b16 %v201
  %v1454 = vunpack.c.l.b16 %v202
  %v1455 = vunpack.c.l.b16 %v203
  %v1456 = vunpack.c.l.b16 %v204
  %v1457 = vunpack.c.l.b16 %v205
  %v1458 = vunpack.c.l.b16 %v206
  %v1459 = vunpack.c.l.b16 %v207
  %v1460 = vunpack.c.l.b16 %v208
  %v1461 = vunpack.c.l.b16 %v209
  %v1462 = vunpack.c.l.b16 %v210
  %v1463 = vunpack.c.l.b16 %v211
  %v1464 = vunpack.c.l.b16 %v212
  %v1465 = vunpack.c.l.b16 %v213
  %v1466 = vunpack.c.l.b16 %v214
  %v1467 = vunpack.c.l.b16 %v215
  %v1468 = vunpack.c.l.b16 %v216
  %v1469 = vunpack.c.l.b16 %v217
  %v1470 = vunpack.c.l.b16 %v218
  %v1471 = vunpack.c.l.b16 %v219
  %v1472 = vunpack.c.l.b16 %v220
  %v1473 = vunpack.c.l.b16 %v221
  %v1474 = vunpack.c.l.b16 %v222
  %v1475 = vunpack.c.l.b16 %v223
  %v1476 = vunpack.c.l.b16 %v224
  %v1477 = vunpack.c.l.b16 %v225
  %v1478 = vunpack.c.l.b16 %v226
  %v1479 = vunpack.c.l.b16 %v227
  %v1480 = vunpack.c.l.b16 %v228
  %v1481 = vunpack.c.l.b16 %v229
  %v1482 = vunpack.c.l.b16 %v230
  %v1483 = vunpack.c.l.b16 %v231
  %v1484 = vunpack.c.l.b16 %v232
  %v1485 = vunpack.c.l.b16 %v233
  %v1486 = vunpack.c.l.b16 %v234
  %v1487 = vunpack.c.l.b16 %v235
  %v1488 = vunpack.c.l.b16 %v236
  %v1489 = vunpack.c.l.b16 %v237
  %v1490 = vunpack.c.l.b16 %v238
  %v1491 = vunpack.c.l.b16 %v239
  %v1492 = vunpack.c.l.b16 %v240
  %v1493 = vunpack.c.l.b16 %v241
  %v1494 = vunpack.c.l.b16 %v242
  %v1495 = vunpack.c.l.b16 %v243
  %v1496 = vunpack.c.l.b16 %v244
  %v1497 = vunpack.c.l.b16 %v245
  %v1498 = vunpack.c.l.b16 %v246
  %v1499 = vunpack.c.l.b16 %v247
  %v1500 = vunpack.c.l.b16 %v248
  %v1501 = vunpack.c.l.b16 %v249
  %v1502 = vunpack.c.l.b16 %v250
  %v1503 = vunpack.c.l.b16 %v251
  %v1504 = vunpack.c.l.b16 %v252
  %v1505 = vunpack.c.l.b16 %v253
  %v1506 = vunpack.c.l.b16 %v254
  %v1507 = vunpack.c.l.b16 %v255
  %v1508 = vunpack.c.l.b16 %v256
  %v1509 = vunpack.c.l.b16 %v257
  %v1510 = vunpack.c.l.b16 %v258
  %v1511 = vunpack.c.l.b16 %v259
  %v1512 = vunpack.c.l.b16 %v260
  %v1513 = vunpack.c.l.b16 %v261
  %v1514 = vunpack.c.l.b16 %v262
  %v1515 = vunpack.c.l.b16 %v263
  %v1516 = vunpack.c.l.b16 %v264
  %v1517 = vunpack.c.l.b16 %v265
  %v1518 = vunpack.c.l.b16 %v266
  %v1519 = vunpack.c.l.b16 %v267
  %v1520 = vunpack.c.l.b16 %v268
  %v1521 = vunpack.c.l.b16 %v269
  %v1522 = vunpack.c.l.b16 %v270
  %v1523 = vunpack.c.l.b16 %v271
  %v1524 = vunpack.c.l.b16 %v272
  %v1525 = vunpack.c.l.b16 %v273
  %v1526 = vunpack.c.l.b16 %v274
  %v1527 = vunpack.c.l.b16 %v275
  %v1528 = vunpack.c.l.b16 %v276
  %v1529 = vunpack.c.l.b16 %v277
  %v1530 = vunpack.c.l.b16 %v278
  %v1531 = vunpack.c.l.b16 %v279
  %v1532 = vunpack.c.l.b16 %v280
  %v1533 = vunpack.c.l.b16 %v281
  %v1534 = vunpack.c.l.b16 %v282
  %v1535 = vunpack.c.l.b16 %v283
  %v1536 = vunpack.c.l.b16 %v284
  %v1537 = vunpack.c.l.b16 %v285
  %v1538 = vunpack.c.l.b16 %v286
  %v1539 = vunpack.c.l.b16 %v287
  %v1540 = vunpack.c.l.b16 %v288
  %v1541 = vunpack.c.l.b16 %v289
  %v1542 = vunpack.c.l.b16 %v290
  %v1543 = vunpack.c.l.b16 %v291
  %v1544 = vunpack.c.l.b16 %v292
  %v1545 = vunpack.c.l.b16 %v293
  %v1546 = vunpack.c.l.b16 %v294
  %v1547 = vunpack.c.l.b16 %v295
  %v1548 = vunpack.c.l.b16 %v296
  %v1549 = vunpack.c.l.b16 %v297
  %v1550 = vunpack.c.l.b16 %v298
  %v1551 = vunpack.c.l.b16 %v299
  %v1552 = vunpack.c.l.b16 %v300
  %v1553 = vunpack.c.l.b16 %v301
  %v1554 = vunpack.c.l.b16 %v302
  %v1555 = vunpack.c.l.b16 %v303
  %v1556 = vunpack.c.l.b16 %v304
  %v1557 = vunpack.c.l.b16 %v305
  %v1558 = vunpack.c.l.b16 %v306
  %v1559 = vunpack.c.l.b16 %v307
  %v1560 = vunpack.c.l.b16 %v308
  %v1561 = vunpack.c.l.b16 %v309
  %v1562 = vunpack.c.l.b16 %v310
  %v1563 = vunpack.c.l.b16 %v311
  %v1564 = vunpack.c.l.b16 %v312
  %v1565 = vunpack.c.l.b16 %v313
  %v1566 = vunpack.c.l.b16 %v314
  %v1567 = vunpack.c.l.b16 %v315
  %v1568 = vunpack.c.l.b16 %v316
  %v1569 = vunpack.c.l.b16 %v317
  %v1570 = vunpack.c.l.b16 %v318
  %v1571 = vunpack.c.l.b16 %v319
  %v1572 = vunpack.c.l.b16 %v320
  %v1573 = vunpack.c.l.b16 %v321
  %v1574 = vunpack.c.l.b16 %v322
  %v1575 = vunpack.c.l.b16 %v323
  %v1576 = vunpack.c.l.b16 %v324
  %v1577 = vunpack.c.l.b16 %v325
  %v1578 = vunpack.c.l.b16 %v326
  %v1579 = vunpack.c.l.b16 %v327
  %v1580 = vunpack.c.l.b16 %v328
  %v1581 = vunpack.c.l.b16 %v329
  %v1582 = vunpack.c.l.b16 %v330
  %v1583 = vunpack.c.l.b16 %v331
  %v1584 = vunpack.c.l.b16 %v332
  %v1585 = vunpack.c.l.b16 %v333
  %v1586 = vunpack.c.l.b16 %v334
  %v1587 = vunpack.c.l.b16 %v335
  %v1588 = vunpack.c.l.b16 %v336
  %v1589 = vunpack.c.l.b16 %v337
  %v1590 = vunpack.c.l.b16 %v338
  %v1591 = vunpack.c.l.b16 %v339
  %v1592 = vunpack.c.l.b16 %v340
  %v1593 = vunpack.c.l.b16 %v341
  %v1594 = vunpack.c.l.b16 %v342
  %v1595 = vunpack.c.l.b16 %v343
  %v1596 = vunpack.c.l.b16 %v344
  %v1597 = vunpack.c.l.b16 %v345
  %v1598 = vunpack.c.l.b16 %v346
  %v1599 = vunpack.c.l.b16 %v347
  %v1600 = vunpack.c.l.b16 %v348
  %v1601 = vunpack.c.l.b16 %v349
  %v1602 = vunpack.c.l.b16 %v350
  %v1603 = vunpack.c.l.b16 %v351
  %v1604 = vunpack.c.l.b16 %v352
  %v1605 = vunpack.c.l.b16 %v353
  %v1606 = vunpack.c.l.b16 %v354
  %v1607 = vunpack.c.l.b16 %v355
  %v1608 = vunpack.c.l.b16 %v356
  %v1609 = vunpack.c.l.b16 %v357
  %v1610 = vunpack.c.l.b16 %v358
  %v1611 = vunpack.c.l.b16 %v359
  %v1612 = vunpack.c.l.b16 %v360
  %v1613 = vunpack.c.l.b16 %v361
  %v1614 = vunpack.c.l.b16 %v362
  %v1615 = vunpack.c.l.b16 %v363
  %v1616 = vunpack.c.l.b16 %v364
  %v1617 = vunpack.c.l.b16 %v365
  %v1618 = vunpack.c.l.b16 %v366
  %v1619 = vunpack.c.l.b16 %v367
  %v1620 = vunpack.c.l.b16 %v368
  %v1621 = vunpack.c.l.b16 %v369
  %v1622 = vunpack.c.l.b16 %v370
  %v1623 = vunpack.c.l.b16 %v371
  %v1624 = vunpack.c.l.b16 %v372
  %v1625 = vunpack.c.l.b16 %v373
  %v1626 = vunpack.c.l.b16 %v374
  %v1627 = vunpack.c.l.b16 %v375
  %v1628 = vunpack.c.l.b16 %v376
  %v1629 = vunpack.c.l.b16 %v377
  %v1630 = vunpack.c.l.b16 %v378
  %v1631 = vunpack.c.l.b16 %v379
  %v1632 = vunpack.c.l.b16 %v380
  %v1633 = vunpack.c.l.b16 %v381
  %v1634 = vunpack.c.l.b16 %v382
  %v1635 = vunpack.c.l.b16 %v383
  %v1636 = vunpack.c.l.b16 %v384
  %v1637 = vunpack.c.l.b16 %v385
  %v1638 = vunpack.c.l.b16 %v386
  %v1639 = vunpack.c.l.b16 %v387
  %v1640 = vunpack.c.l.b16 %v388
  %v1641 = vunpack.c.l.b16 %v389
  %v1642 = vunpack.c.l.b16 %v390
  %v1643 = vunpack.c.l.b16 %v391
  %v1644 = vunpack.c.l.b16 %v392
  %v1645 = vunpack.c.l.b16 %v393
  %v1646 = vunpack.c.l.b16 %v394
  %v1647 = vunpack.c.l.b16 %v395
  %v1648 = vunpack.c.l.b16 %v396
  %v1649 = vunpack.c.l.b16 %v397
  %v1650 = vunpack.c.l.b16 %v398
  %v1651 = vunpack.c.l.b16 %v399
  %v1652 = vunpack.c.l.b16 %v400
  %v1653 = vunpack.c.l.b16 %v401
  %v1654 = vunpack.c.l.b16 %v402
  %v1655 = vunpack.c.l.b16 %v403
  %v1656 = vunpack.c.l.b16 %v404
  %v1657 = vunpack.c.l.b16 %v405
  %v1658 = vunpack.c.l.b16 %v406
  %v1659 = vunpack.c.l.b16 %v407
  %v1660 = vunpack.c.l.b16 %v408
  %v1661 = vunpack.c.l.b16 %v409
  %v1662 = vunpack.c.l.b16 %v410
  %v1663 = vunpack.c.l.b16 %v411
  %v1664 = vunpack.c.l.b16 %v412
  %v1665 = vunpack.c.l.b16 %v413
  %v1666 = vunpack.c.l.b16 %v414
  %v1667 = vunpack.c.l.b16 %v415
  %v1668 = vunpack.c.l.b16 %v416
  %v1669 = vunpack.c.l.b16 %v417
  %v1670 = vunpack.c.l.b16 %v418
  %v1671 = vunpack.c.l.b16 %v419
  %v1672 = vunpack.c.l.b16 %v420
  %v1673 = vunpack.c.l.b16 %v421
  %v1674 = vunpack.c.l.b16 %v422
  %v1675 = vunpack.c.l.b16 %v423
  %v1676 = vunpack.c.l.b16 %v424
  %v1677 = vunpack.c.l.b16 %v425
  %v1678 = vunpack.c.l.b16 %v426
  %v1679 = vunpack.c.l.b16 %v427
  %v1680 = vunpack.c.l.b16 %v428
  %v1681 = vunpack.c.l.b16 %v429
  %v1682 = vunpack.c.l.b16 %v430
  %v1683 = vunpack.c.l.b16 %v431
  %v1684 = vunpack.c.l.b16 %v432
  %v1685 = vunpack.c.l.b16 %v433
  %v1686 = vunpack.c.l.b16 %v434
  %v1687 = vunpack.c.l.b16 %v435
  %v1688 = vunpack.c.l.b16 %v436
  %v1689 = vunpack.c.l.b16 %v437
  %v1690 = vunpack.c.l.b16 %v438
  %v1691 = vunpack.c.l.b16 %v439
  %v1692 = vunpack.c.l.b16 %v440
  %v1693 = vunpack.c.l.b16 %v441
  %v1694 = vunpack.c.l.b16 %v442
  %v1695 = vunpack.c.l.b16 %v443
  %v1696 = vunpack.c.l.b16 %v444
  %v1697 = vunpack.c.l.b16 %v445
  %v1698 = vunpack.c.l.b16 %v446
  %v1699 = vunpack.c.l.b16 %v447
  %v1700 = vunpack.c.l.b16 %v448
  %v1701 = vunpack.c.l.b16 %v449
  %v1702 = vunpack.c.l.b16 %v450
  %v1703 = vunpack.c.l.b16 %v451
  %v1704 = vunpack.c.l.b16 %v452
  %v1705 = vunpack.c.l.b16 %v453
  %v1706 = vunpack.c.l.b16 %v454
  %v1707 = vunpack.c.l.b16 %v455
  %v1708 = vunpack.c.l.b16 %v456
  %v1709 = vunpack.c.l.b16 %v457
  %v1710 = vunpack.c.l.b16 %v458
  %v1711 = vunpack.c.l.b16 %v459
  %v1712 = vunpack.c.l.b16 %v460
  %v1713 = vunpack.c.l.b16 %v461
  %v1714 = vunpack.c.l.b16 %v462
  %v1715 = vunpack.c.l.b16 %v463
  %v1716 = vunpack.c.l.b16 %v464
  %v1717 = vunpack.c.l.b16 %v465
  %v1718 = vunpack.c.l.b16 %v466
  %v1719 = vunpack.c.l.b16 %v467
  %v1720 = vunpack.c.l.b16 %v468
  %v1721 = vunpack.c.l.b16 %v469
  %v1722 = vunpack.c.l.b16 %v470
  %v1723 = vunpack.c.l.b16 %v471
  %v1724 = vunpack.c.l.b16 %v472
  %v1725 = vunpack.c.l.b16 %v473
  %v1726 = vunpack.c.l.b16 %v474
  %v1727 = vunpack.c.l.b16 %v475
  %v1728 = vunpack.c.l.b16 %v476
  %v1729 = vunpack.c.l.b16 %v477
  %v1730 = vunpack.c.l.b16 %v478
  %v1731 = vunpack.c.l.b16 %v479
  %v1732 = vunpack.c.l.b16 %v480
  %v1733 = vunpack.c.l.b16 %v481
  %v1734 = vunpack.c.l.b16 %v482
  %v1735 = vunpack.c.l.b16 %v483
  %v1736 = vunpack.c.l.b16 %v484
  %v1737 = vunpack.c.l.b16 %v485
  %v1738 = vunpack.c.l.b16 %v486
  %v1739 = vunpack.c.l.b16 %v487
  %v1740 = vunpack.c.l.b16 %v488
  %v1741 = vunpack.c.l.b16 %v489
  %v1742 = vunpack.c.l.b16 %v490
  %v1743 = vunpack.c.l.b16 %v491
  %v1744 = vunpack.c.l.b16 %v492
  %v1745 = vunpack.c.l.b16 %v493
  %v1746 = vunpack.c.l.b16 %v494
  %v1747 = vunpack.c.l.b16 %v495
  %v1748 = vunpack.c.l.b16 %v496
  %v1749 = vunpack.c.l.b16 %v497
  %v1750 = vunpack.c.l.b16 %v498
  %v1751 = vunpack.c.l.b16 %v499
  %v1752 = vpack.c.b16 %v1369, %v1368
  %v1753 = vpack.c.b16 %v1371, %v1370
  %v1754 = vpack.c.b16 %v1373, %v1372
  %v1755 = vpack.c.b16 %v1375, %v1374
  %v1756 = vpack.c.b16 %v1377, %v1376
  %v1757 = vpack.c.b16 %v1379, %v1378
  %v1758 = vpack.c.b16 %v1381, %v1380
  %v1759 = vpack.c.b16 %v1383, %v1382
  %v1760 = vpack.c.b16 %v1385, %v1384
  %v1761 = vpack.c.b16 %v1387, %v1386
  %v1762 = vpack.c.b16 %v1389, %v1388
  %v1763 = vpack.c.b16 %v1391, %v1390
  %v1764 = vpack.c.b16 %v1393, %v1392
  %v1765 = vpack.c.b16 %v1395, %v1394
  %v1766 = vpack.c.b16 %v1397, %v1396
  %v1767 = vpack.c.b16 %v1399, %v1398
  %v1768 = vpack.c.b16 %v1401, %v1400
  %v1769 = vpack.c.b16 %v1403, %v1402
  %v1770 = vpack.c.b16 %v1405, %v1404
  %v1771 = vpack.c.b16 %v1407, %v1406
  %v1772 = vpack.c.b16 %v1409, %v1408
  %v1773 = vpack.c.b16 %v1411, %v1410
  %v1774 = vpack.c.b16 %v1413, %v1412
  %v1775 = vpack.c.b16 %v1415, %v1414
  %v1776 = vpack.c.b16 %v1417, %v1416
  %v1777 = vpack.c.b16 %v1419, %v1418
  %v1778 = vpack.c.b16 %v1421, %v1420
  %v1779 = vpack.c.b16 %v1423, %v1422
  %v1780 = vpack.c.b16 %v1425, %v1424
  %v1781 = vpack.c.b16 %v1427, %v1426
  %v1782 = vpack.c.b16 %v1429, %v1428
  %v1783 = vpack.c.b16 %v1431, %v1430
  %v1784 = vpack.c.b16 %v1433, %v1432
  %v1785 = vpack.c.b16 %v1435, %v1434
  %v1786 = vpack.c.b16 %v1437, %v1436
  %v1787 = vpack.c.b16 %v1439, %v1438
  %v1788 = vpack.c.b16 %v1441, %v1440
  %v1789 = vpack.c.b16 %v1443, %v1442
  %v1790 = vpack.c.b16 %v1445, %v1444
  %v1791 = vpack.c.b16 %v1447, %v1446
  %v1792 = vpack.c.b16 %v1449, %v1448
  %v1793 = vpack.c.b16 %v1451, %v1450
  %v1794 = vpack.c.b16 %v1453, %v1452
  %v1795 = vpack.c.b16 %v1455, %v1454
  %v1796 = vpack.c.b16 %v1457, %v1456
  %v1797 = vpack.c.b16 %v1459, %v1458
  %v1798 = vpack.c.b16 %v1461, %v1460
  %v1799 = vpack.c.b16 %v1463, %v1462
  %v1800 = vpack.c.b16 %v1465, %v1464
  %v1801 = vpack.c.b16 %v1467, %v1466
  %v1802 = vpack.c.b16 %v1469, %v1468
  %v1803 = vpack.c.b16 %v1471, %v1470
  %v1804 = vpack.c.b16 %v1473, %v1472
  %v1805 = vpack.c.b16 %v1475, %v1474
  %v1806 = vpack.c.b16 %v1477, %v1476
  %v1807 = vpack.c.b16 %v1479, %v1478
  %v1808 = vpack.c.b16 %v1481, %v1480
  %v1809 = vpack.c.b16 %v1483, %v1482
  %v1810 = vpack.c.b16 %v1485, %v1484
  %v1811 = vpack.c.b16 %v1487, %v1486
  %v1812 = vpack.c.b16 %v1489, %v1488
  %v1813 = vpack.c.b16 %v1491, %v1490
  %v1814 = vpack.c.b16 %v1493, %v1492
  %v1815 = vpack.c.b16 %v1495, %v1494
  %v1816 = vpack.c.b16 %v1497, %v1496
  %v1817 = vpack.c.b16 %v1499, %v1498
  %v1818 = vpack.c.b16 %v1501, %v1500
  %v1819 = vpack.c.b16 %v1503, %v1502
  %v1820 = vpack.c.b16 %v1505, %v1504
  %v1821 = vpack.c.b16 %v1507, %v1506
  %v1822 = vpack.c.b16 %v1509, %v1508
  %v1823 = vpack.c.b16 %v1511, %v1510
  %v1824 = vpack.c.b16 %v1513, %v1512
  %v1825 = vpack.c.b16 %v1515, %v1514
  %v1826 = vpack.c.b16 %v1517, %v1516
  %v1827 = vpack.c.b16 %v1519, %v1518
  %v1828 = vpack.c.b16 %v1521, %v1520
  %v1829 = vpack.c.b16 %v1523, %v1522
  %v1830 = vpack.c.b16 %v1525, %v1524
  %v1831 = vpack.c.b16 %v1527, %v1526
  %v1832 = vpack.c.b16 %v1529, %v1528
  %v1833 = vpack.c.b16 %v1531, %v1530
  %v1834 = vpack.c.b16 %v1533, %v1532
  %v1835 = vpack.c.b16 %v1535, %v1534
  %v1836 = vpack.c.b16 %v1537, %v1536
  %v1837 = vpack.c.b16 %v1539, %v1538
  %v1838 = vpack.c.b16 %v1541, %v1540
  %v1839 = vpack.c.b16 %v1543, %v1542
  %v1840 = vpack.c.b16 %v1545, %v1544
  %v1841 = vpack.c.b16 %v1547, %v1546
  %v1842 = vpack.c.b16 %v1549, %v1548
  %v1843 = vpack.c.b16 %v1551, %v1550
  %v1844 = vpack.c.b16 %v1553, %v1552
  %v1845 = vpack.c.b16 %v1555, %v1554
  %v1846 = vpack.c.b16 %v1557, %v1556
  %v1847 = vpack.c.b16 %v1559, %v1558
  %v1848 = vpack.c.b16 %v1561, %v1560
  %v1849 = vpack.c.b16 %v1563, %v1562
  %v1850 = vpack.c.b16 %v1565, %v1564
  %v1851 = vpack.c.b16 %v1567, %v1566
  %v1852 = vpack.c.b16 %v1569, %v1568
  %v1853 = vpack.c.b16 %v1571, %v1570
  %v1854 = vpack.c.b16 %v1573, %v1572
  %v1855 = vpack.c.b16 %v1575, %v1574
  %v1856 = vpack.c.b16 %v1577, %v1576
  %v1857 = vpack.c.b16 %v1579, %v1578
  %v1858 = vpack.c.b16 %v1581, %v1580
  %v1859 = vpack.c.b16 %v1583, %v1582
  %v1860 = vpack.c.b16 %v1585, %v1584
  %v1861 = vpack.c.b16 %v1587, %v1586
  %v1862 = vpack.c.b16 %v1589, %v1588
  %v1863 = vpack.c.b16 %v1591, %v1590
  %v1864 = vpack.c.b16 %v1593, %v1592
  %v1865 = vpack.c.b16 %v1595, %v1594
  %v1866 = vpack.c.b16 %v1597, %v1596
  %v1867 = vpack.c.b16 %v1599, %v1598
  %v1868 = vpack.c.b16 %v1601, %v1600
  %v1869 = vpack.c.b16 %v1603, %v1602
  %v1870 = vpack.c.b16 %v1605, %v1604
  %v1871 = vpack.c.b16 %v1607, %v1606
  %v1872 = vpack.c.b16 %v1609, %v1608
  %v1873 = vpack.c.b16 %v1611, %v1610
  %v1874 = vpack.c.b16 %v1613, %v1612
  %v1875 = vpack.c.b16 %v1615, %v1614
  %v1876 = vpack.c.b16 %v1617, %v1616
  %v1877 = vpack.c.b16 %v1619, %v1618
  %v1878 = vpack.c.b16 %v1621, %v1620
  %v1879 = vpack.c.b16 %v1623, %v1622
  %v1880 = vpack.c.b16 %v1625, %v1624
  %v1881 = vpack.c.b16 %v1627, %v1626
  %v1882 = vpack.c.b16 %v1629, %v1628
  %v1883 = vpack.c.b16 %v1631, %v1630
  %v1884 = vpack.c.b16 %v1633, %v1632
  %v1885 = vpack.c.b16 %v1635, %v1634
  %v1886 = vpack.c.b16 %v1637, %v1636
  %v1887 = vpack.c.b16 %v1639, %v1638
  %v1888 = vpack.c.b16 %v1641, %v1640
  %v1889 = vpack.c.b16 %v1643, %v1642
  %v1890 = vpack.c.b16 %v1645, %v1644
  %v1891 = vpack.c.b16 %v1647, %v1646
  %v1892 = vpack.c.b16 %v1649, %v1648
  %v1893 = vpack.c.b16 %v1651, %v1650
  %v1894 = vpack.c.b16 %v1653, %v1652
  %v1895 = vpack.c.b16 %v1655, %v1654
  %v1896 = vpack.c.b16 %v1657, %v1656
  %v1897 = vpack.c.b16 %v1659, %v1658
  %v1898 = vpack.c.b16 %v1661, %v1660
  %v1899 = vpack.c.b16 %v1663, %v1662
  %v1900 = vpack.c.b16 %v1665, %v1664
  %v1901 = vpack.c.b16 %v1667, %v1666
  %v1902 = vpack.c.b16 %v1669, %v1668
  %v1903 = vpack.c.b16 %v1671, %v1670
  %v1904 = vpack.c.b16 %v1673, %v1672
  %v1905 = vpack.c.b16 %v1675, %v1674
  %v1906 = vpack.c.b16 %v1677, %v1676
  %v1907 = vpack.c.b16 %v1679, %v1678
  %v1908 = vpack.c.b16 %v1681, %v1680
  %v1909 = vpack.c.b16 %v1683, %v1682
  %v1910 = vpack.c.b16 %v1685, %v1684
  %v1911 = vpack.c.b16 %v1687, %v1686
  %v1912 = vpack.c.b16 %v1689, %v1688
  %v1913 = vpack.c.b16 %v1691, %v1690
  %v1914 = vpack.c.b16 %v1693, %v1692
  %v1915 = vpack.c.b16 %v1695, %v1694
  %v1916 = vpack.c.b16 %v1697, %v1696
  %v1917 = vpack.c.b16 %v1699, %v1698
  %v1918 = vpack.c.b16 %v1701, %v1700
  %v1919 = vpack.c.b16 %v1703, %v1702
  %v1920 = vpack.c.b16 %v1705, %v1704
  %v1921 = vpack.c.b16 %v1707, %v1706
  %v1922 = vpack.c.b16 %v1709, %v1708
  %v1923 = vpack.c.b16 %v1711, %v1710
  %v1924 = vpack.c.b16 %v1713, %v1712
  %v1925 = vpack.c.b16 %v1715, %v1714
  %v1926 = vpack.c.b16 %v1717, %v1716
  %v1927 = vpack.c.b16 %v1719, %v1718
  %v1928 = vpack.c.b16 %v1721, %v1720
  %v1929 = vpack.c.b16 %v1723, %v1722
  %v1930 = vpack.c.b16 %v1725, %v1724
  %v1931 = vpack.c.b16 %v1727, %v1726
  %v1932 = vpack.c.b16 %v1729, %v1728
  %v1933 = vpack.c.b16 %v1731, %v1730
  %v1934 = vpack.c.b16 %v1733, %v1732
  %v1935 = vpack.c.b16 %v1735, %v1734
  %v1936 = vpack.c.b16 %v1737, %v1736
  %v1937 = vpack.c.b16 %v1739, %v1738
  %v1938 = vpack.c.b16 %v1741, %v1740
  %v1939 = vpack.c.b16 %v1743, %v1742
  %v1940 = vpack.c.b16 %v1745, %v1744
  %v1941 = vpack.c.b16 %v1747, %v1746
  %v1942 = vpack.c.b16 %v1749, %v1748
  %v1943 = vpack.c.b16 %v1751, %v1750
  %2136 = vmatpush.bf16.msra.mxu0 %v1759
  %2137 = vmatpush.bf16.msra.mxu0 %v1758
  %2138 = vmatpush.bf16.msra.mxu0 %v1757
  %2139 = vmatpush.bf16.msra.mxu0 %v1756
  %2140 = vmatpush.bf16.msra.mxu0 %v1755
  %2141 = vmatpush.bf16.msra.mxu0 %v1754
  %2142 = vmatpush.bf16.msra.mxu0 %v1753
  %2143 = vmatpush.bf16.msra.mxu0 %v1752
  %2144 = vmatmul.bf16.gmra.mxu0 %v792
  %v2145 = vpop.f32.mrf.mxu0
  %v2146 = vadd.f32 %v502, %v2145
  %v2147 = vpop.f32.mrf.mxu0
  %v2148 = vadd.f32 %v502, %v2147
  %2149 = vmatmul.bf16.gmra.mxu0 %v816
  %v2150 = vpop.f32.mrf.mxu0
  %v2151 = vadd.f32 %v502, %v2150
  %v2152 = vpop.f32.mrf.mxu0
  %v2153 = vadd.f32 %v502, %v2152
  %2154 = vmatmul.bf16.gmra.mxu0 %v840
  %v2155 = vpop.f32.mrf.mxu0
  %v2156 = vadd.f32 %v502, %v2155
  %v2157 = vpop.f32.mrf.mxu0
  %v2158 = vadd.f32 %v502, %v2157
  %2159 = vmatmul.bf16.gmra.mxu0 %v864
  %v2160 = vpop.f32.mrf.mxu0
  %v2161 = vadd.f32 %v502, %v2160
  %v2162 = vpop.f32.mrf.mxu0
  %v2163 = vadd.f32 %v502, %v2162
  %2164 = vdwg.mxu0
  %2165 = vmatpush.bf16.msra.mxu0 %v1767
  %2166 = vmatpush.bf16.msra.mxu0 %v1766
  %2167 = vmatpush.bf16.msra.mxu0 %v1765
  %2168 = vmatpush.bf16.msra.mxu0 %v1764
  %2169 = vmatpush.bf16.msra.mxu0 %v1763
  %2170 = vmatpush.bf16.msra.mxu0 %v1762
  %2171 = vmatpush.bf16.msra.mxu0 %v1761
  %2172 = vmatpush.bf16.msra.mxu0 %v1760
  %2173 = vmatmul.bf16.gmra.mxu0 %v793
  %v2174 = vpop.f32.mrf.mxu0
  %v2175 = vadd.f32 %v2146, %v2174
  %v2176 = vpop.f32.mrf.mxu0
  %v2177 = vadd.f32 %v2148, %v2176
  %2178 = vmatmul.bf16.gmra.mxu0 %v817
  %v2179 = vpop.f32.mrf.mxu0
  %v2180 = vadd.f32 %v2151, %v2179
  %v2181 = vpop.f32.mrf.mxu0
  %v2182 = vadd.f32 %v2153, %v2181
  %2183 = vmatmul.bf16.gmra.mxu0 %v841
  %v2184 = vpop.f32.mrf.mxu0
  %v2185 = vadd.f32 %v2156, %v2184
  %v2186 = vpop.f32.mrf.mxu0
  %v2187 = vadd.f32 %v2158, %v2186
  %2188 = vmatmul.bf16.gmra.mxu0 %v865
  %v2189 = vpop.f32.mrf.mxu0
  %v2190 = vadd.f32 %v2161, %v2189
  %v2191 = vpop.f32.mrf.mxu0
  %v2192 = vadd.f32 %v2163, %v2191
  %2193 = vdwg.mxu0
  %2194 = vmatpush.bf16.msra.mxu0 %v1775
  %2195 = vmatpush.bf16.msra.mxu0 %v1774
  %2196 = vmatpush.bf16.msra.mxu0 %v1773
  %2197 = vmatpush.bf16.msra.mxu0 %v1772
  %2198 = vmatpush.bf16.msra.mxu0 %v1771
  %2199 = vmatpush.bf16.msra.mxu0 %v1770
  %2200 = vmatpush.bf16.msra.mxu0 %v1769
  %2201 = vmatpush.bf16.msra.mxu0 %v1768
  %2202 = vmatmul.bf16.gmra.mxu0 %v794
  %v2203 = vpop.f32.mrf.mxu0
  %v2204 = vadd.f32 %v2175, %v2203
  %v2205 = vpop.f32.mrf.mxu0
  %v2206 = vadd.f32 %v2177, %v2205
  %2207 = vmatmul.bf16.gmra.mxu0 %v818
  %v2208 = vpop.f32.mrf.mxu0
  %v2209 = vadd.f32 %v2180, %v2208
  %v2210 = vpop.f32.mrf.mxu0
  %v2211 = vadd.f32 %v2182, %v2210
  %2212 = vmatmul.bf16.gmra.mxu0 %v842
  %v2213 = vpop.f32.mrf.mxu0
  %v2214 = vadd.f32 %v2185, %v2213
  %v2215 = vpop.f32.mrf.mxu0
  %v2216 = vadd.f32 %v2187, %v2215
  %2217 = vmatmul.bf16.gmra.mxu0 %v866
  %v2218 = vpop.f32.mrf.mxu0
  %v2219 = vadd.f32 %v2190, %v2218
  %v2220 = vpop.f32.mrf.mxu0
  %v2221 = vadd.f32 %v2192, %v2220
  %2222 = vdwg.mxu0
  %2223 = vmatpush.bf16.msra.mxu0 %v1783
  %2224 = vmatpush.bf16.msra.mxu0 %v1782
  %2225 = vmatpush.bf16.msra.mxu0 %v1781
  %2226 = vmatpush.bf16.msra.mxu0 %v1780
  %2227 = vmatpush.bf16.msra.mxu0 %v1779
  %2228 = vmatpush.bf16.msra.mxu0 %v1778
  %2229 = vmatpush.bf16.msra.mxu0 %v1777
  %2230 = vmatpush.bf16.msra.mxu0 %v1776
  %2231 = vmatmul.bf16.gmra.mxu0 %v795
  %v2232 = vpop.f32.mrf.mxu0
  %v2233 = vadd.f32 %v2204, %v2232
  %v2234 = vpop.f32.mrf.mxu0
  %v2235 = vadd.f32 %v2206, %v2234
  %2236 = vmatmul.bf16.gmra.mxu0 %v819
  %v2237 = vpop.f32.mrf.mxu0
  %v2238 = vadd.f32 %v2209, %v2237
  %v2239 = vpop.f32.mrf.mxu0
  %v2240 = vadd.f32 %v2211, %v2239
  %2241 = vmatmul.bf16.gmra.mxu0 %v843
  %v2242 = vpop.f32.mrf.mxu0
  %v2243 = vadd.f32 %v2214, %v2242
  %v2244 = vpop.f32.mrf.mxu0
  %v2245 = vadd.f32 %v2216, %v2244
  %2246 = vmatmul.bf16.gmra.mxu0 %v867
  %v2247 = vpop.f32.mrf.mxu0
  %v2248 = vadd.f32 %v2219, %v2247
  %v2249 = vpop.f32.mrf.mxu0
  %v2250 = vadd.f32 %v2221, %v2249
  %2251 = vdwg.mxu0
  %2252 = vmatpush.bf16.msra.mxu0 %v1791
  %2253 = vmatpush.bf16.msra.mxu0 %v1790
  %2254 = vmatpush.bf16.msra.mxu0 %v1789
  %2255 = vmatpush.bf16.msra.mxu0 %v1788
  %2256 = vmatpush.bf16.msra.mxu0 %v1787
  %2257 = vmatpush.bf16.msra.mxu0 %v1786
  %2258 = vmatpush.bf16.msra.mxu0 %v1785
  %2259 = vmatpush.bf16.msra.mxu0 %v1784
  %2260 = vmatmul.bf16.gmra.mxu0 %v796
  %v2261 = vpop.f32.mrf.mxu0
  %v2262 = vadd.f32 %v2233, %v2261
  %v2263 = vpop.f32.mrf.mxu0
  %v2264 = vadd.f32 %v2235, %v2263
  %2265 = vmatmul.bf16.gmra.mxu0 %v820
  %v2266 = vpop.f32.mrf.mxu0
  %v2267 = vadd.f32 %v2238, %v2266
  %v2268 = vpop.f32.mrf.mxu0
  %v2269 = vadd.f32 %v2240, %v2268
  %2270 = vmatmul.bf16.gmra.mxu0 %v844
  %v2271 = vpop.f32.mrf.mxu0
  %v2272 = vadd.f32 %v2243, %v2271
  %v2273 = vpop.f32.mrf.mxu0
  %v2274 = vadd.f32 %v2245, %v2273
  %2275 = vmatmul.bf16.gmra.mxu0 %v868
  %v2276 = vpop.f32.mrf.mxu0
  %v2277 = vadd.f32 %v2248, %v2276
  %v2278 = vpop.f32.mrf.mxu0
  %v2279 = vadd.f32 %v2250, %v2278
  %2280 = vdwg.mxu0
  %2281 = vmatpush.bf16.msra.mxu0 %v1799
  %2282 = vmatpush.bf16.msra.mxu0 %v1798
  %2283 = vmatpush.bf16.msra.mxu0 %v1797
  %2284 = vmatpush.bf16.msra.mxu0 %v1796
  %2285 = vmatpush.bf16.msra.mxu0 %v1795
  %2286 = vmatpush.bf16.msra.mxu0 %v1794
  %2287 = vmatpush.bf16.msra.mxu0 %v1793
  %2288 = vmatpush.bf16.msra.mxu0 %v1792
  %2289 = vmatmul.bf16.gmra.mxu0 %v797
  %v2290 = vpop.f32.mrf.mxu0
  %v2291 = vadd.f32 %v2262, %v2290
  %v2292 = vpop.f32.mrf.mxu0
  %v2293 = vadd.f32 %v2264, %v2292
  %2294 = vmatmul.bf16.gmra.mxu0 %v821
  %v2295 = vpop.f32.mrf.mxu0
  %v2296 = vadd.f32 %v2267, %v2295
  %v2297 = vpop.f32.mrf.mxu0
  %v2298 = vadd.f32 %v2269, %v2297
  %2299 = vmatmul.bf16.gmra.mxu0 %v845
  %v2300 = vpop.f32.mrf.mxu0
  %v2301 = vadd.f32 %v2272, %v2300
  %v2302 = vpop.f32.mrf.mxu0
  %v2303 = vadd.f32 %v2274, %v2302
  %2304 = vmatmul.bf16.gmra.mxu0 %v869
  %v2305 = vpop.f32.mrf.mxu0
  %v2306 = vadd.f32 %v2277, %v2305
  %v2307 = vpop.f32.mrf.mxu0
  %v2308 = vadd.f32 %v2279, %v2307
  %2309 = vdwg.mxu0
  %2310 = vmatpush.bf16.msra.mxu0 %v1807
  %2311 = vmatpush.bf16.msra.mxu0 %v1806
  %2312 = vmatpush.bf16.msra.mxu0 %v1805
  %2313 = vmatpush.bf16.msra.mxu0 %v1804
  %2314 = vmatpush.bf16.msra.mxu0 %v1803
  %2315 = vmatpush.bf16.msra.mxu0 %v1802
  %2316 = vmatpush.bf16.msra.mxu0 %v1801
  %2317 = vmatpush.bf16.msra.mxu0 %v1800
  %2318 = vmatmul.bf16.gmra.mxu0 %v798
  %v2319 = vpop.f32.mrf.mxu0
  %v2320 = vadd.f32 %v2291, %v2319
  %v2321 = vpop.f32.mrf.mxu0
  %v2322 = vadd.f32 %v2293, %v2321
  %2323 = vmatmul.bf16.gmra.mxu0 %v822
  %v2324 = vpop.f32.mrf.mxu0
  %v2325 = vadd.f32 %v2296, %v2324
  %v2326 = vpop.f32.mrf.mxu0
  %v2327 = vadd.f32 %v2298, %v2326
  %2328 = vmatmul.bf16.gmra.mxu0 %v846
  %v2329 = vpop.f32.mrf.mxu0
  %v2330 = vadd.f32 %v2301, %v2329
  %v2331 = vpop.f32.mrf.mxu0
  %v2332 = vadd.f32 %v2303, %v2331
  %2333 = vmatmul.bf16.gmra.mxu0 %v870
  %v2334 = vpop.f32.mrf.mxu0
  %v2335 = vadd.f32 %v2306, %v2334
  %v2336 = vpop.f32.mrf.mxu0
  %v2337 = vadd.f32 %v2308, %v2336
  %2338 = vdwg.mxu0
  %2339 = vmatpush.bf16.msra.mxu0 %v1815
  %2340 = vmatpush.bf16.msra.mxu0 %v1814
  %2341 = vmatpush.bf16.msra.mxu0 %v1813
  %2342 = vmatpush.bf16.msra.mxu0 %v1812
  %2343 = vmatpush.bf16.msra.mxu0 %v1811
  %2344 = vmatpush.bf16.msra.mxu0 %v1810
  %2345 = vmatpush.bf16.msra.mxu0 %v1809
  %2346 = vmatpush.bf16.msra.mxu0 %v1808
  %2347 = vmatmul.bf16.gmra.mxu0 %v799
  %v2348 = vpop.f32.mrf.mxu0
  %v2349 = vadd.f32 %v2320, %v2348
  %v2350 = vpop.f32.mrf.mxu0
  %v2351 = vadd.f32 %v2322, %v2350
  %2352 = vmatmul.bf16.gmra.mxu0 %v823
  %v2353 = vpop.f32.mrf.mxu0
  %v2354 = vadd.f32 %v2325, %v2353
  %v2355 = vpop.f32.mrf.mxu0
  %v2356 = vadd.f32 %v2327, %v2355
  %2357 = vmatmul.bf16.gmra.mxu0 %v847
  %v2358 = vpop.f32.mrf.mxu0
  %v2359 = vadd.f32 %v2330, %v2358
  %v2360 = vpop.f32.mrf.mxu0
  %v2361 = vadd.f32 %v2332, %v2360
  %2362 = vmatmul.bf16.gmra.mxu0 %v871
  %v2363 = vpop.f32.mrf.mxu0
  %v2364 = vadd.f32 %v2335, %v2363
  %v2365 = vpop.f32.mrf.mxu0
  %v2366 = vadd.f32 %v2337, %v2365
  %2367 = vdwg.mxu0
  %2368 = vmatpush.bf16.msra.mxu0 %v1823
  %2369 = vmatpush.bf16.msra.mxu0 %v1822
  %2370 = vmatpush.bf16.msra.mxu0 %v1821
  %2371 = vmatpush.bf16.msra.mxu0 %v1820
  %2372 = vmatpush.bf16.msra.mxu0 %v1819
  %2373 = vmatpush.bf16.msra.mxu0 %v1818
  %2374 = vmatpush.bf16.msra.mxu0 %v1817
  %2375 = vmatpush.bf16.msra.mxu0 %v1816
  %2376 = vmatmul.bf16.gmra.mxu0 %v800
  %v2377 = vpop.f32.mrf.mxu0
  %v2378 = vadd.f32 %v2349, %v2377
  %v2379 = vpop.f32.mrf.mxu0
  %v2380 = vadd.f32 %v2351, %v2379
  %2381 = vmatmul.bf16.gmra.mxu0 %v824
  %v2382 = vpop.f32.mrf.mxu0
  %v2383 = vadd.f32 %v2354, %v2382
  %v2384 = vpop.f32.mrf.mxu0
  %v2385 = vadd.f32 %v2356, %v2384
  %2386 = vmatmul.bf16.gmra.mxu0 %v848
  %v2387 = vpop.f32.mrf.mxu0
  %v2388 = vadd.f32 %v2359, %v2387
  %v2389 = vpop.f32.mrf.mxu0
  %v2390 = vadd.f32 %v2361, %v2389
  %2391 = vmatmul.bf16.gmra.mxu0 %v872
  %v2392 = vpop.f32.mrf.mxu0
  %v2393 = vadd.f32 %v2364, %v2392
  %v2394 = vpop.f32.mrf.mxu0
  %v2395 = vadd.f32 %v2366, %v2394
  %2396 = vdwg.mxu0
  %2397 = vmatpush.bf16.msra.mxu0 %v1831
  %2398 = vmatpush.bf16.msra.mxu0 %v1830
  %2399 = vmatpush.bf16.msra.mxu0 %v1829
  %2400 = vmatpush.bf16.msra.mxu0 %v1828
  %2401 = vmatpush.bf16.msra.mxu0 %v1827
  %2402 = vmatpush.bf16.msra.mxu0 %v1826
  %2403 = vmatpush.bf16.msra.mxu0 %v1825
  %2404 = vmatpush.bf16.msra.mxu0 %v1824
  %2405 = vmatmul.bf16.gmra.mxu0 %v801
  %v2406 = vpop.f32.mrf.mxu0
  %v2407 = vadd.f32 %v2378, %v2406
  %v2408 = vpop.f32.mrf.mxu0
  %v2409 = vadd.f32 %v2380, %v2408
  %2410 = vmatmul.bf16.gmra.mxu0 %v825
  %v2411 = vpop.f32.mrf.mxu0
  %v2412 = vadd.f32 %v2383, %v2411
  %v2413 = vpop.f32.mrf.mxu0
  %v2414 = vadd.f32 %v2385, %v2413
  %2415 = vmatmul.bf16.gmra.mxu0 %v849
  %v2416 = vpop.f32.mrf.mxu0
  %v2417 = vadd.f32 %v2388, %v2416
  %v2418 = vpop.f32.mrf.mxu0
  %v2419 = vadd.f32 %v2390, %v2418
  %2420 = vmatmul.bf16.gmra.mxu0 %v873
  %v2421 = vpop.f32.mrf.mxu0
  %v2422 = vadd.f32 %v2393, %v2421
  %v2423 = vpop.f32.mrf.mxu0
  %v2424 = vadd.f32 %v2395, %v2423
  %2425 = vdwg.mxu0
  %2426 = vmatpush.bf16.msra.mxu0 %v1839
  %2427 = vmatpush.bf16.msra.mxu0 %v1838
  %2428 = vmatpush.bf16.msra.mxu0 %v1837
  %2429 = vmatpush.bf16.msra.mxu0 %v1836
  %2430 = vmatpush.bf16.msra.mxu0 %v1835
  %2431 = vmatpush.bf16.msra.mxu0 %v1834
  %2432 = vmatpush.bf16.msra.mxu0 %v1833
  %2433 = vmatpush.bf16.msra.mxu0 %v1832
  %2434 = vmatmul.bf16.gmra.mxu0 %v802
  %v2435 = vpop.f32.mrf.mxu0
  %v2436 = vadd.f32 %v2407, %v2435
  %v2437 = vpop.f32.mrf.mxu0
  %v2438 = vadd.f32 %v2409, %v2437
  %2439 = vmatmul.bf16.gmra.mxu0 %v826
  %v2440 = vpop.f32.mrf.mxu0
  %v2441 = vadd.f32 %v2412, %v2440
  %v2442 = vpop.f32.mrf.mxu0
  %v2443 = vadd.f32 %v2414, %v2442
  %2444 = vmatmul.bf16.gmra.mxu0 %v850
  %v2445 = vpop.f32.mrf.mxu0
  %v2446 = vadd.f32 %v2417, %v2445
  %v2447 = vpop.f32.mrf.mxu0
  %v2448 = vadd.f32 %v2419, %v2447
  %2449 = vmatmul.bf16.gmra.mxu0 %v874
  %v2450 = vpop.f32.mrf.mxu0
  %v2451 = vadd.f32 %v2422, %v2450
  %v2452 = vpop.f32.mrf.mxu0
  %v2453 = vadd.f32 %v2424, %v2452
  %2454 = vdwg.mxu0
  %2455 = vmatpush.bf16.msra.mxu0 %v1847
  %2456 = vmatpush.bf16.msra.mxu0 %v1846
  %2457 = vmatpush.bf16.msra.mxu0 %v1845
  %2458 = vmatpush.bf16.msra.mxu0 %v1844
  %2459 = vmatpush.bf16.msra.mxu0 %v1843
  %2460 = vmatpush.bf16.msra.mxu0 %v1842
  %2461 = vmatpush.bf16.msra.mxu0 %v1841
  %2462 = vmatpush.bf16.msra.mxu0 %v1840
  %2463 = vmatmul.bf16.gmra.mxu0 %v803
  %v2464 = vpop.f32.mrf.mxu0
  %v2465 = vadd.f32 %v2436, %v2464
  %v2466 = vpop.f32.mrf.mxu0
  %v2467 = vadd.f32 %v2438, %v2466
  %2468 = vmatmul.bf16.gmra.mxu0 %v827
  %v2469 = vpop.f32.mrf.mxu0
  %v2470 = vadd.f32 %v2441, %v2469
  %v2471 = vpop.f32.mrf.mxu0
  %v2472 = vadd.f32 %v2443, %v2471
  %2473 = vmatmul.bf16.gmra.mxu0 %v851
  %v2474 = vpop.f32.mrf.mxu0
  %v2475 = vadd.f32 %v2446, %v2474
  %v2476 = vpop.f32.mrf.mxu0
  %v2477 = vadd.f32 %v2448, %v2476
  %2478 = vmatmul.bf16.gmra.mxu0 %v875
  %v2479 = vpop.f32.mrf.mxu0
  %v2480 = vadd.f32 %v2451, %v2479
  %v2481 = vpop.f32.mrf.mxu0
  %v2482 = vadd.f32 %v2453, %v2481
  %2483 = vdwg.mxu0
  %2484 = vmatpush.bf16.msra.mxu0 %v1855
  %2485 = vmatpush.bf16.msra.mxu0 %v1854
  %2486 = vmatpush.bf16.msra.mxu0 %v1853
  %2487 = vmatpush.bf16.msra.mxu0 %v1852
  %2488 = vmatpush.bf16.msra.mxu0 %v1851
  %2489 = vmatpush.bf16.msra.mxu0 %v1850
  %2490 = vmatpush.bf16.msra.mxu0 %v1849
  %2491 = vmatpush.bf16.msra.mxu0 %v1848
  %2492 = vmatmul.bf16.gmra.mxu0 %v804
  %v2493 = vpop.f32.mrf.mxu0
  %v2494 = vadd.f32 %v2465, %v2493
  %v2495 = vpop.f32.mrf.mxu0
  %v2496 = vadd.f32 %v2467, %v2495
  %2497 = vmatmul.bf16.gmra.mxu0 %v828
  %v2498 = vpop.f32.mrf.mxu0
  %v2499 = vadd.f32 %v2470, %v2498
  %v2500 = vpop.f32.mrf.mxu0
  %v2501 = vadd.f32 %v2472, %v2500
  %2502 = vmatmul.bf16.gmra.mxu0 %v852
  %v2503 = vpop.f32.mrf.mxu0
  %v2504 = vadd.f32 %v2475, %v2503
  %v2505 = vpop.f32.mrf.mxu0
  %v2506 = vadd.f32 %v2477, %v2505
  %2507 = vmatmul.bf16.gmra.mxu0 %v876
  %v2508 = vpop.f32.mrf.mxu0
  %v2509 = vadd.f32 %v2480, %v2508
  %v2510 = vpop.f32.mrf.mxu0
  %v2511 = vadd.f32 %v2482, %v2510
  %2512 = vdwg.mxu0
  %2513 = vmatpush.bf16.msra.mxu0 %v1863
  %2514 = vmatpush.bf16.msra.mxu0 %v1862
  %2515 = vmatpush.bf16.msra.mxu0 %v1861
  %2516 = vmatpush.bf16.msra.mxu0 %v1860
  %2517 = vmatpush.bf16.msra.mxu0 %v1859
  %2518 = vmatpush.bf16.msra.mxu0 %v1858
  %2519 = vmatpush.bf16.msra.mxu0 %v1857
  %2520 = vmatpush.bf16.msra.mxu0 %v1856
  %2521 = vmatmul.bf16.gmra.mxu0 %v805
  %v2522 = vpop.f32.mrf.mxu0
  %v2523 = vadd.f32 %v2494, %v2522
  %v2524 = vpop.f32.mrf.mxu0
  %v2525 = vadd.f32 %v2496, %v2524
  %2526 = vmatmul.bf16.gmra.mxu0 %v829
  %v2527 = vpop.f32.mrf.mxu0
  %v2528 = vadd.f32 %v2499, %v2527
  %v2529 = vpop.f32.mrf.mxu0
  %v2530 = vadd.f32 %v2501, %v2529
  %2531 = vmatmul.bf16.gmra.mxu0 %v853
  %v2532 = vpop.f32.mrf.mxu0
  %v2533 = vadd.f32 %v2504, %v2532
  %v2534 = vpop.f32.mrf.mxu0
  %v2535 = vadd.f32 %v2506, %v2534
  %2536 = vmatmul.bf16.gmra.mxu0 %v877
  %v2537 = vpop.f32.mrf.mxu0
  %v2538 = vadd.f32 %v2509, %v2537
  %v2539 = vpop.f32.mrf.mxu0
  %v2540 = vadd.f32 %v2511, %v2539
  %2541 = vdwg.mxu0
  %2542 = vmatpush.bf16.msra.mxu0 %v1871
  %2543 = vmatpush.bf16.msra.mxu0 %v1870
  %2544 = vmatpush.bf16.msra.mxu0 %v1869
  %2545 = vmatpush.bf16.msra.mxu0 %v1868
  %2546 = vmatpush.bf16.msra.mxu0 %v1867
  %2547 = vmatpush.bf16.msra.mxu0 %v1866
  %2548 = vmatpush.bf16.msra.mxu0 %v1865
  %2549 = vmatpush.bf16.msra.mxu0 %v1864
  %2550 = vmatmul.bf16.gmra.mxu0 %v806
  %v2551 = vpop.f32.mrf.mxu0
  %v2552 = vadd.f32 %v2523, %v2551
  %v2553 = vpop.f32.mrf.mxu0
  %v2554 = vadd.f32 %v2525, %v2553
  %2555 = vmatmul.bf16.gmra.mxu0 %v830
  %v2556 = vpop.f32.mrf.mxu0
  %v2557 = vadd.f32 %v2528, %v2556
  %v2558 = vpop.f32.mrf.mxu0
  %v2559 = vadd.f32 %v2530, %v2558
  %2560 = vmatmul.bf16.gmra.mxu0 %v854
  %v2561 = vpop.f32.mrf.mxu0
  %v2562 = vadd.f32 %v2533, %v2561
  %v2563 = vpop.f32.mrf.mxu0
  %v2564 = vadd.f32 %v2535, %v2563
  %2565 = vmatmul.bf16.gmra.mxu0 %v878
  %v2566 = vpop.f32.mrf.mxu0
  %v2567 = vadd.f32 %v2538, %v2566
  %v2568 = vpop.f32.mrf.mxu0
  %v2569 = vadd.f32 %v2540, %v2568
  %2570 = vdwg.mxu0
  %2571 = vmatpush.bf16.msra.mxu0 %v1879
  %2572 = vmatpush.bf16.msra.mxu0 %v1878
  %2573 = vmatpush.bf16.msra.mxu0 %v1877
  %2574 = vmatpush.bf16.msra.mxu0 %v1876
  %2575 = vmatpush.bf16.msra.mxu0 %v1875
  %2576 = vmatpush.bf16.msra.mxu0 %v1874
  %2577 = vmatpush.bf16.msra.mxu0 %v1873
  %2578 = vmatpush.bf16.msra.mxu0 %v1872
  %2579 = vmatmul.bf16.gmra.mxu0 %v807
  %v2580 = vpop.f32.mrf.mxu0
  %v2581 = vadd.f32 %v2552, %v2580
  %v2582 = vpop.f32.mrf.mxu0
  %v2583 = vadd.f32 %v2554, %v2582
  %2584 = vmatmul.bf16.gmra.mxu0 %v831
  %v2585 = vpop.f32.mrf.mxu0
  %v2586 = vadd.f32 %v2557, %v2585
  %v2587 = vpop.f32.mrf.mxu0
  %v2588 = vadd.f32 %v2559, %v2587
  %2589 = vmatmul.bf16.gmra.mxu0 %v855
  %v2590 = vpop.f32.mrf.mxu0
  %v2591 = vadd.f32 %v2562, %v2590
  %v2592 = vpop.f32.mrf.mxu0
  %v2593 = vadd.f32 %v2564, %v2592
  %2594 = vmatmul.bf16.gmra.mxu0 %v879
  %v2595 = vpop.f32.mrf.mxu0
  %v2596 = vadd.f32 %v2567, %v2595
  %v2597 = vpop.f32.mrf.mxu0
  %v2598 = vadd.f32 %v2569, %v2597
  %2599 = vdwg.mxu0
  %2600 = vmatpush.bf16.msra.mxu0 %v1887
  %2601 = vmatpush.bf16.msra.mxu0 %v1886
  %2602 = vmatpush.bf16.msra.mxu0 %v1885
  %2603 = vmatpush.bf16.msra.mxu0 %v1884
  %2604 = vmatpush.bf16.msra.mxu0 %v1883
  %2605 = vmatpush.bf16.msra.mxu0 %v1882
  %2606 = vmatpush.bf16.msra.mxu0 %v1881
  %2607 = vmatpush.bf16.msra.mxu0 %v1880
  %2608 = vmatmul.bf16.gmra.mxu0 %v808
  %v2609 = vpop.f32.mrf.mxu0
  %v2610 = vadd.f32 %v2581, %v2609
  %v2611 = vpop.f32.mrf.mxu0
  %v2612 = vadd.f32 %v2583, %v2611
  %2613 = vmatmul.bf16.gmra.mxu0 %v832
  %v2614 = vpop.f32.mrf.mxu0
  %v2615 = vadd.f32 %v2586, %v2614
  %v2616 = vpop.f32.mrf.mxu0
  %v2617 = vadd.f32 %v2588, %v2616
  %2618 = vmatmul.bf16.gmra.mxu0 %v856
  %v2619 = vpop.f32.mrf.mxu0
  %v2620 = vadd.f32 %v2591, %v2619
  %v2621 = vpop.f32.mrf.mxu0
  %v2622 = vadd.f32 %v2593, %v2621
  %2623 = vmatmul.bf16.gmra.mxu0 %v880
  %v2624 = vpop.f32.mrf.mxu0
  %v2625 = vadd.f32 %v2596, %v2624
  %v2626 = vpop.f32.mrf.mxu0
  %v2627 = vadd.f32 %v2598, %v2626
  %2628 = vdwg.mxu0
  %2629 = vmatpush.bf16.msra.mxu0 %v1895
  %2630 = vmatpush.bf16.msra.mxu0 %v1894
  %2631 = vmatpush.bf16.msra.mxu0 %v1893
  %2632 = vmatpush.bf16.msra.mxu0 %v1892
  %2633 = vmatpush.bf16.msra.mxu0 %v1891
  %2634 = vmatpush.bf16.msra.mxu0 %v1890
  %2635 = vmatpush.bf16.msra.mxu0 %v1889
  %2636 = vmatpush.bf16.msra.mxu0 %v1888
  %2637 = vmatmul.bf16.gmra.mxu0 %v809
  %v2638 = vpop.f32.mrf.mxu0
  %v2639 = vadd.f32 %v2610, %v2638
  %v2640 = vpop.f32.mrf.mxu0
  %v2641 = vadd.f32 %v2612, %v2640
  %2642 = vmatmul.bf16.gmra.mxu0 %v833
  %v2643 = vpop.f32.mrf.mxu0
  %v2644 = vadd.f32 %v2615, %v2643
  %v2645 = vpop.f32.mrf.mxu0
  %v2646 = vadd.f32 %v2617, %v2645
  %2647 = vmatmul.bf16.gmra.mxu0 %v857
  %v2648 = vpop.f32.mrf.mxu0
  %v2649 = vadd.f32 %v2620, %v2648
  %v2650 = vpop.f32.mrf.mxu0
  %v2651 = vadd.f32 %v2622, %v2650
  %2652 = vmatmul.bf16.gmra.mxu0 %v881
  %v2653 = vpop.f32.mrf.mxu0
  %v2654 = vadd.f32 %v2625, %v2653
  %v2655 = vpop.f32.mrf.mxu0
  %v2656 = vadd.f32 %v2627, %v2655
  %2657 = vdwg.mxu0
  %2658 = vmatpush.bf16.msra.mxu0 %v1903
  %2659 = vmatpush.bf16.msra.mxu0 %v1902
  %2660 = vmatpush.bf16.msra.mxu0 %v1901
  %2661 = vmatpush.bf16.msra.mxu0 %v1900
  %2662 = vmatpush.bf16.msra.mxu0 %v1899
  %2663 = vmatpush.bf16.msra.mxu0 %v1898
  %2664 = vmatpush.bf16.msra.mxu0 %v1897
  %2665 = vmatpush.bf16.msra.mxu0 %v1896
  %2666 = vmatmul.bf16.gmra.mxu0 %v810
  %v2667 = vpop.f32.mrf.mxu0
  %v2668 = vadd.f32 %v2639, %v2667
  %v2669 = vpop.f32.mrf.mxu0
  %v2670 = vadd.f32 %v2641, %v2669
  %2671 = vmatmul.bf16.gmra.mxu0 %v834
  %v2672 = vpop.f32.mrf.mxu0
  %v2673 = vadd.f32 %v2644, %v2672
  %v2674 = vpop.f32.mrf.mxu0
  %v2675 = vadd.f32 %v2646, %v2674
  %2676 = vmatmul.bf16.gmra.mxu0 %v858
  %v2677 = vpop.f32.mrf.mxu0
  %v2678 = vadd.f32 %v2649, %v2677
  %v2679 = vpop.f32.mrf.mxu0
  %v2680 = vadd.f32 %v2651, %v2679
  %2681 = vmatmul.bf16.gmra.mxu0 %v882
  %v2682 = vpop.f32.mrf.mxu0
  %v2683 = vadd.f32 %v2654, %v2682
  %v2684 = vpop.f32.mrf.mxu0
  %v2685 = vadd.f32 %v2656, %v2684
  %2686 = vdwg.mxu0
  %2687 = vmatpush.bf16.msra.mxu0 %v1911
  %2688 = vmatpush.bf16.msra.mxu0 %v1910
  %2689 = vmatpush.bf16.msra.mxu0 %v1909
  %2690 = vmatpush.bf16.msra.mxu0 %v1908
  %2691 = vmatpush.bf16.msra.mxu0 %v1907
  %2692 = vmatpush.bf16.msra.mxu0 %v1906
  %2693 = vmatpush.bf16.msra.mxu0 %v1905
  %2694 = vmatpush.bf16.msra.mxu0 %v1904
  %2695 = vmatmul.bf16.gmra.mxu0 %v811
  %v2696 = vpop.f32.mrf.mxu0
  %v2697 = vadd.f32 %v2668, %v2696
  %v2698 = vpop.f32.mrf.mxu0
  %v2699 = vadd.f32 %v2670, %v2698
  %2700 = vmatmul.bf16.gmra.mxu0 %v835
  %v2701 = vpop.f32.mrf.mxu0
  %v2702 = vadd.f32 %v2673, %v2701
  %v2703 = vpop.f32.mrf.mxu0
  %v2704 = vadd.f32 %v2675, %v2703
  %2705 = vmatmul.bf16.gmra.mxu0 %v859
  %v2706 = vpop.f32.mrf.mxu0
  %v2707 = vadd.f32 %v2678, %v2706
  %v2708 = vpop.f32.mrf.mxu0
  %v2709 = vadd.f32 %v2680, %v2708
  %2710 = vmatmul.bf16.gmra.mxu0 %v883
  %v2711 = vpop.f32.mrf.mxu0
  %v2712 = vadd.f32 %v2683, %v2711
  %v2713 = vpop.f32.mrf.mxu0
  %v2714 = vadd.f32 %v2685, %v2713
  %2715 = vdwg.mxu0
  %2716 = vmatpush.bf16.msra.mxu0 %v1919
  %2717 = vmatpush.bf16.msra.mxu0 %v1918
  %2718 = vmatpush.bf16.msra.mxu0 %v1917
  %2719 = vmatpush.bf16.msra.mxu0 %v1916
  %2720 = vmatpush.bf16.msra.mxu0 %v1915
  %2721 = vmatpush.bf16.msra.mxu0 %v1914
  %2722 = vmatpush.bf16.msra.mxu0 %v1913
  %2723 = vmatpush.bf16.msra.mxu0 %v1912
  %2724 = vmatmul.bf16.gmra.mxu0 %v812
  %v2725 = vpop.f32.mrf.mxu0
  %v2726 = vadd.f32 %v2697, %v2725
  %v2727 = vpop.f32.mrf.mxu0
  %v2728 = vadd.f32 %v2699, %v2727
  %2729 = vmatmul.bf16.gmra.mxu0 %v836
  %v2730 = vpop.f32.mrf.mxu0
  %v2731 = vadd.f32 %v2702, %v2730
  %v2732 = vpop.f32.mrf.mxu0
  %v2733 = vadd.f32 %v2704, %v2732
  %2734 = vmatmul.bf16.gmra.mxu0 %v860
  %v2735 = vpop.f32.mrf.mxu0
  %v2736 = vadd.f32 %v2707, %v2735
  %v2737 = vpop.f32.mrf.mxu0
  %v2738 = vadd.f32 %v2709, %v2737
  %2739 = vmatmul.bf16.gmra.mxu0 %v884
  %v2740 = vpop.f32.mrf.mxu0
  %v2741 = vadd.f32 %v2712, %v2740
  %v2742 = vpop.f32.mrf.mxu0
  %v2743 = vadd.f32 %v2714, %v2742
  %2744 = vdwg.mxu0
  %2745 = vmatpush.bf16.msra.mxu0 %v1927
  %2746 = vmatpush.bf16.msra.mxu0 %v1926
  %2747 = vmatpush.bf16.msra.mxu0 %v1925
  %2748 = vmatpush.bf16.msra.mxu0 %v1924
  %2749 = vmatpush.bf16.msra.mxu0 %v1923
  %2750 = vmatpush.bf16.msra.mxu0 %v1922
  %2751 = vmatpush.bf16.msra.mxu0 %v1921
  %2752 = vmatpush.bf16.msra.mxu0 %v1920
  %2753 = vmatmul.bf16.gmra.mxu0 %v813
  %v2754 = vpop.f32.mrf.mxu0
  %v2755 = vadd.f32 %v2726, %v2754
  %v2756 = vpop.f32.mrf.mxu0
  %v2757 = vadd.f32 %v2728, %v2756
  %2758 = vmatmul.bf16.gmra.mxu0 %v837
  %v2759 = vpop.f32.mrf.mxu0
  %v2760 = vadd.f32 %v2731, %v2759
  %v2761 = vpop.f32.mrf.mxu0
  %v2762 = vadd.f32 %v2733, %v2761
  %2763 = vmatmul.bf16.gmra.mxu0 %v861
  %v2764 = vpop.f32.mrf.mxu0
  %v2765 = vadd.f32 %v2736, %v2764
  %v2766 = vpop.f32.mrf.mxu0
  %v2767 = vadd.f32 %v2738, %v2766
  %2768 = vmatmul.bf16.gmra.mxu0 %v885
  %v2769 = vpop.f32.mrf.mxu0
  %v2770 = vadd.f32 %v2741, %v2769
  %v2771 = vpop.f32.mrf.mxu0
  %v2772 = vadd.f32 %v2743, %v2771
  %2773 = vdwg.mxu0
  %2774 = vmatpush.bf16.msra.mxu0 %v1935
  %2775 = vmatpush.bf16.msra.mxu0 %v1934
  %2776 = vmatpush.bf16.msra.mxu0 %v1933
  %2777 = vmatpush.bf16.msra.mxu0 %v1932
  %2778 = vmatpush.bf16.msra.mxu0 %v1931
  %2779 = vmatpush.bf16.msra.mxu0 %v1930
  %2780 = vmatpush.bf16.msra.mxu0 %v1929
  %2781 = vmatpush.bf16.msra.mxu0 %v1928
  %2782 = vmatmul.bf16.gmra.mxu0 %v814
  %v2783 = vpop.f32.mrf.mxu0
  %v2784 = vadd.f32 %v2755, %v2783
  %v2785 = vpop.f32.mrf.mxu0
  %v2786 = vadd.f32 %v2757, %v2785
  %2787 = vmatmul.bf16.gmra.mxu0 %v838
  %v2788 = vpop.f32.mrf.mxu0
  %v2789 = vadd.f32 %v2760, %v2788
  %v2790 = vpop.f32.mrf.mxu0
  %v2791 = vadd.f32 %v2762, %v2790
  %2792 = vmatmul.bf16.gmra.mxu0 %v862
  %v2793 = vpop.f32.mrf.mxu0
  %v2794 = vadd.f32 %v2765, %v2793
  %v2795 = vpop.f32.mrf.mxu0
  %v2796 = vadd.f32 %v2767, %v2795
  %2797 = vmatmul.bf16.gmra.mxu0 %v886
  %v2798 = vpop.f32.mrf.mxu0
  %v2799 = vadd.f32 %v2770, %v2798
  %v2800 = vpop.f32.mrf.mxu0
  %v2801 = vadd.f32 %v2772, %v2800
  %2802 = vdwg.mxu0
  %2803 = vmatpush.bf16.msra.mxu0 %v1943
  %2804 = vmatpush.bf16.msra.mxu0 %v1942
  %2805 = vmatpush.bf16.msra.mxu0 %v1941
  %2806 = vmatpush.bf16.msra.mxu0 %v1940
  %2807 = vmatpush.bf16.msra.mxu0 %v1939
  %2808 = vmatpush.bf16.msra.mxu0 %v1938
  %2809 = vmatpush.bf16.msra.mxu0 %v1937
  %2810 = vmatpush.bf16.msra.mxu0 %v1936
  %2811 = vmatmul.bf16.gmra.mxu0 %v815
  %v2812 = vpop.f32.mrf.mxu0
  %v2813 = vadd.f32 %v2784, %v2812
  %v2814 = vpop.f32.mrf.mxu0
  %v2815 = vadd.f32 %v2786, %v2814
  %2816 = vmatmul.bf16.gmra.mxu0 %v839
  %v2817 = vpop.f32.mrf.mxu0
  %v2818 = vadd.f32 %v2789, %v2817
  %v2819 = vpop.f32.mrf.mxu0
  %v2820 = vadd.f32 %v2791, %v2819
  %2821 = vmatmul.bf16.gmra.mxu0 %v863
  %v2822 = vpop.f32.mrf.mxu0
  %v2823 = vadd.f32 %v2794, %v2822
  %v2824 = vpop.f32.mrf.mxu0
  %v2825 = vadd.f32 %v2796, %v2824
  %2826 = vmatmul.bf16.gmra.mxu0 %v887
  %v2827 = vpop.f32.mrf.mxu0
  %v2828 = vadd.f32 %v2799, %v2827
  %v2829 = vpop.f32.mrf.mxu0
  %v2830 = vadd.f32 %v2801, %v2829
  %2831 = vdwg.mxu0
  %v2832 = vmax.f32 %v2813, 0.0
  %v2833 = vmax.f32 %v2815, 0.0
  %v2834 = vmax.f32 %v2818, 0.0
  %v2835 = vmax.f32 %v2820, 0.0
  %v2836 = vmax.f32 %v2823, 0.0
  %v2837 = vmax.f32 %v2825, 0.0
  %v2838 = vmax.f32 %v2828, 0.0
  %v2839 = vmax.f32 %v2830, 0.0
  %v2840 = vpack.c.bf16 %v2833, %v2832
  %v2841 = vpack.c.bf16 %v2835, %v2834
  %v2842 = vpack.c.bf16 %v2837, %v2836
  %v2843 = vpack.c.bf16 %v2839, %v2838
  %v2844 = vld [vmem:[%s3] sm:$0xf]
  %v2845 = vld [vmem:[%s3 + $0x4] sm:$0xf]
  %v2846 = vld [vmem:[%s3 + $0x8] sm:$0xf]
  %v2847 = vld [vmem:[%s3 + $0xc] sm:$0xf]
  %v2848 = vld [vmem:[%s3 + $0x10] sm:$0xf]
  %v2849 = vld [vmem:[%s3 + $0x14] sm:$0xf]
  %v2850 = vld [vmem:[%s3 + $0x18] sm:$0xf]
  %v2851 = vld [vmem:[%s3 + $0x1c] sm:$0xf]
  %v2852 = vld [vmem:[%s3 + $0x20] sm:$0xf]
  %v2853 = vld [vmem:[%s3 + $0x24] sm:$0xf]
  %v2854 = vld [vmem:[%s3 + $0x28] sm:$0xf]
  %v2855 = vld [vmem:[%s3 + $0x2c] sm:$0xf]
  %v2856 = vld [vmem:[%s3 + $0x30] sm:$0xf]
  %v2857 = vld [vmem:[%s3 + $0x34] sm:$0xf]
  %v2858 = vld [vmem:[%s3 + $0x38] sm:$0xf]
  %v2859 = vld [vmem:[%s3 + $0x3c] sm:$0xf]
  %v2860 = vld [vmem:[%s4] sm:$0x1]
  %v2862 = vperm.slane %v2860, 0
  %v2880 = vunpack.c.l.b16 %v2844
  %v2881 = vunpack.c.l.b16 %v2845
  %v2882 = vunpack.c.l.b16 %v2846
  %v2883 = vunpack.c.l.b16 %v2847
  %v2884 = vunpack.c.l.b16 %v2848
  %v2885 = vunpack.c.l.b16 %v2849
  %v2886 = vunpack.c.l.b16 %v2850
  %v2887 = vunpack.c.l.b16 %v2851
  %v2888 = vunpack.c.l.b16 %v2852
  %v2889 = vunpack.c.l.b16 %v2853
  %v2890 = vunpack.c.l.b16 %v2854
  %v2891 = vunpack.c.l.b16 %v2855
  %v2892 = vunpack.c.l.b16 %v2856
  %v2893 = vunpack.c.l.b16 %v2857
  %v2894 = vunpack.c.l.b16 %v2858
  %v2895 = vunpack.c.l.b16 %v2859
  %v2896 = vpack.c.b16 %v2881, %v2880
  %v2897 = vpack.c.b16 %v2883, %v2882
  %v2898 = vpack.c.b16 %v2885, %v2884
  %v2899 = vpack.c.b16 %v2887, %v2886
  %v2900 = vpack.c.b16 %v2889, %v2888
  %v2901 = vpack.c.b16 %v2891, %v2890
  %v2902 = vpack.c.b16 %v2893, %v2892
  %v2903 = vpack.c.b16 %v2895, %v2894
  %2912 = vmatpush.bf16.msra.mxu0 %v2903
  %2913 = vmatpush.bf16.msra.mxu0 %v2902
  %2914 = vmatpush.bf16.msra.mxu0 %v2901
  %2915 = vmatpush.bf16.msra.mxu0 %v2900
  %2916 = vmatpush.bf16.msra.mxu0 %v2899
  %2917 = vmatpush.bf16.msra.mxu0 %v2898
  %2918 = vmatpush.bf16.msra.mxu0 %v2897
  %2919 = vmatpush.bf16.msra.mxu0 %v2896
  %2920 = vmatmul.bf16.gmra.mxu0 %v2840
  %v2921 = vpop.f32.mrf.mxu0
  %v2922 = vadd.f32 %v2862, %v2921
  %v2923 = vpop.f32.mrf.mxu0
  %v2924 = vadd.f32 %v2862, %v2923
  %2925 = vmatmul.bf16.gmra.mxu0 %v2841
  %v2926 = vpop.f32.mrf.mxu0
  %v2927 = vadd.f32 %v2862, %v2926
  %v2928 = vpop.f32.mrf.mxu0
  %v2929 = vadd.f32 %v2862, %v2928
  %2930 = vmatmul.bf16.gmra.mxu0 %v2842
  %v2931 = vpop.f32.mrf.mxu0
  %v2932 = vadd.f32 %v2862, %v2931
  %v2933 = vpop.f32.mrf.mxu0
  %v2934 = vadd.f32 %v2862, %v2933
  %2935 = vmatmul.bf16.gmra.mxu0 %v2843
  %v2936 = vpop.f32.mrf.mxu0
  %v2937 = vadd.f32 %v2862, %v2936
  %v2938 = vpop.f32.mrf.mxu0
  %v2939 = vadd.f32 %v2862, %v2938
  %2940 = vdwg.mxu0
  %2941 = vst [vmem:[%s5] sm:$0xff] %v2922
  %2942 = vst [vmem:[%s5 + $0x8] sm:$0xff] %v2924
  %2943 = vst [vmem:[%s5 + $0x10] sm:$0xff] %v2927
  %2944 = vst [vmem:[%s5 + $0x18] sm:$0xff] %v2929
  %2945 = vst [vmem:[%s5 + $0x20] sm:$0xff] %v2932
  %2946 = vst [vmem:[%s5 + $0x28] sm:$0xff] %v2934
  %2947 = vst [vmem:[%s5 + $0x30] sm:$0xff] %v2937
  %2948 = vst [vmem:[%s5 + $0x38] sm:$0xff] %v2939
  // Predicated region
  $region22: #{_lambda_.2} parent=0 // pred_check
    _
  $region23: #{_lambda_.2} parent=0 // pred_check_branch
    %2950 = sbr.rel (0) target = $region25
  $region24: #{_lambda_.2} parent=0 // pred_region
    _
  $region25: #{_lambda_.2} parent=0 // pred_fallthru
    _
  // Predicated region
  $region26: #{_lambda_.2} parent=0 // pred_check
    _
  $region27: #{_lambda_.2} parent=0 // pred_check_branch
    %2952 = sbr.rel (0) target = $region29
  $region28: #{_lambda_.2} parent=0 // pred_region
    _
  $region29: #{_lambda_.2} parent=0 // pred_fallthru
    _

// kernel: reverse.1
$region0: #{reverse.1}
  %s0 = inlined_call_operand.vmem [shape: f32[128,2,3,4], index: 0, kind: input, shape index: {}]
  %s1 = inlined_call_operand.vmem [shape: f32[128,2,3,4], index: 1, kind: output, shape index: {}]
  $region1: #{reverse.1} parent=0
    #allocation0 [shape = 'u8[65536]{0}', space=vmem, size = 0x10000, scoped, tag = 'operand span for operand 0']
    #allocation1 [shape = 'u8[32768]{0}', space=vmem, size = 0x8000, scoped, tag = 'packed  for operand 0']
    #allocation2 [shape = 'u8[32768]{0}', space=vmem, size = 0x8000, scoped, tag = 'operand span for operand 1']
    #allocation3 [shape = 'u8[16384]{0}', space=vmem, size = 0x4000, scoped, tag = 'packed  for operand 1']
    %s2 = scalar_lea.vmem [#allocation1], 4
    // Predicated region
    $region2: #{reverse.1} parent=1 // pred_check
      _
    $region3: #{reverse.1} parent=1 // pred_check_branch
      %4 = sbr.rel (0) target = $region5
    $region4: #{reverse.1} parent=1 // pred_region
      // Predicated region
      $region6: #{reverse.1} parent=4 // pred_check
        _
      $region7: #{reverse.1} parent=4 // pred_check_branch
        %6 = sbr.rel target = $region9
      $region8: #{reverse.1} parent=4 // pred_region
        // Predicated region
        $region21: #{reverse.1} parent=8 // pred_check
          _
        $region22: #{reverse.1} parent=8 // pred_check_branch
          %36 = sbr.rel (0) target = $region24
        $region23: #{reverse.1} parent=8 // pred_region
          loop: start=0, step=1, limit=1
          $region25: #{reverse.1} parent=23 // loop_pre_header
            _
          $region26: #{reverse.1} parent=23 // loop_header
            %s38 = sphi 0, %s42
            %p39 = scmp.ge.s32.totalorder %s38, 1
            %s43 = sphi %s0, %s0
            %s44 = sphi %s2, %s2
          $region27: #{reverse.1} parent=23 // loop_header_branch
            %41 = sbr.rel (%p39) target = $region31
          $region28: #{reverse.1} parent=23 // loop_body
            _
          $region29: #{reverse.1} parent=23 // loop_footer
            %s42 = sadd.s32 1, %s38
          $region30: #{reverse.1} parent=23 // loop_footer_branch
            %37 = sbr.rel target = $region26
          $region31: #{reverse.1} parent=23 // loop_exit
            _
          %s46 = ssub.s32 16, 1
          loop: start=0, step=1, limit=1
          $region32: #{reverse.1} parent=23 // loop_pre_header
            _
          $region33: #{reverse.1} parent=23 // loop_header
            %s48 = sphi 0, %s52
            %p49 = scmp.ge.s32.totalorder %s48, 1
            %s53 = sphi %s0, %s0
            %s54 = sphi %s2, %s2
          $region34: #{reverse.1} parent=23 // loop_header_branch
            %51 = sbr.rel (%p49) target = $region38
          $region35: #{reverse.1} parent=23 // loop_body
            %v55 = vld [vmem:[%s53] sm:%s46]
            %56 = vst [vmem:[%s54] sm:%s46] %v55
            %v57 = vld [vmem:[%s53 + $0x4] sm:%s46]
            %58 = vst [vmem:[%s54 + $0x8] sm:%s46] %v57
            %v59 = vld [vmem:[%s53 + $0x8] sm:%s46]
            %60 = vst [vmem:[%s54 + $0x10] sm:%s46] %v59
            %v61 = vld [vmem:[%s53 + $0xc] sm:%s46]
            %62 = vst [vmem:[%s54 + $0x18] sm:%s46] %v61
            %v63 = vld [vmem:[%s53 + $0x10] sm:%s46]
            %64 = vst [vmem:[%s54 + $0x20] sm:%s46] %v63
            %v65 = vld [vmem:[%s53 + $0x14] sm:%s46]
            %66 = vst [vmem:[%s54 + $0x28] sm:%s46] %v65
            %v67 = vld [vmem:[%s53 + $0x18] sm:%s46]
            %68 = vst [vmem:[%s54 + $0x30] sm:%s46] %v67
            %v69 = vld [vmem:[%s53 + $0x1c] sm:%s46]
            %70 = vst [vmem:[%s54 + $0x38] sm:%s46] %v69
          $region36: #{reverse.1} parent=23 // loop_footer
            %s52 = sadd.s32 1, %s48
          $region37: #{reverse.1} parent=23 // loop_footer_branch
            %47 = sbr.rel target = $region33
          $region38: #{reverse.1} parent=23 // loop_exit
            _
        $region24: #{reverse.1} parent=8 // pred_fallthru
          _
      $region9: #{reverse.1} parent=4 // pred_fallthru
        _
      // Predicated region
      $region10: #{reverse.1} parent=4 // pred_check
        _
      $region11: #{reverse.1} parent=4 // pred_check_branch
        %8 = sbr.rel (0) target = $region13
      $region12: #{reverse.1} parent=4 // pred_region
        %s10 = ssub.s32 16, 1
        loop: start=0, step=1, limit=1
        $region14: #{reverse.1} parent=12 // loop_pre_header
          _
        $region15: #{reverse.1} parent=12 // loop_header
          %s12 = sphi 0, %s16
          %p13 = scmp.ge.s32.totalorder %s12, 1
          %s17 = sphi %s0, %s0
          %s18 = sphi %s2, %s2
        $region16: #{reverse.1} parent=12 // loop_header_branch
          %15 = sbr.rel (%p13) target = $region20
        $region17: #{reverse.1} parent=12 // loop_body
          %v19 = vld [vmem:[%s17] sm:%s10]
          %20 = vst [vmem:[%s18] sm:%s10] %v19
          %v21 = vld [vmem:[%s17 + $0x4] sm:%s10]
          %22 = vst [vmem:[%s18 + $0x8] sm:%s10] %v21
          %v23 = vld [vmem:[%s17 + $0x8] sm:%s10]
          %24 = vst [vmem:[%s18 + $0x10] sm:%s10] %v23
          %v25 = vld [vmem:[%s17 + $0xc] sm:%s10]
          %26 = vst [vmem:[%s18 + $0x18] sm:%s10] %v25
          %v27 = vld [vmem:[%s17 + $0x10] sm:%s10]
          %28 = vst [vmem:[%s18 + $0x20] sm:%s10] %v27
          %v29 = vld [vmem:[%s17 + $0x14] sm:%s10]
          %30 = vst [vmem:[%s18 + $0x28] sm:%s10] %v29
          %v31 = vld [vmem:[%s17 + $0x18] sm:%s10]
          %32 = vst [vmem:[%s18 + $0x30] sm:%s10] %v31
          %v33 = vld [vmem:[%s17 + $0x1c] sm:%s10]
          %34 = vst [vmem:[%s18 + $0x38] sm:%s10] %v33
        $region18: #{reverse.1} parent=12 // loop_footer
          %s16 = sadd.s32 1, %s12
        $region19: #{reverse.1} parent=12 // loop_footer_branch
          %11 = sbr.rel target = $region15
        $region20: #{reverse.1} parent=12 // loop_exit
          _
      $region13: #{reverse.1} parent=4 // pred_fallthru
        _
    $region5: #{reverse.1} parent=1 // pred_fallthru
      _
    %71 = vnop
    %s73 = ssub.s32 16, 1
    %s74 = scalar_lea.vmem [#allocation1], 60
    %v75 = vld [vmem:[%s74] sm:%s73]
    %s76 = scalar_lea.vmem [#allocation0], 120
    %77 = vst [vmem:[%s76] sm:%s73] %v75
    %s78 = scalar_lea.vmem [#allocation1], 56
    %v79 = vld [vmem:[%s78] sm:%s73]
    %s80 = scalar_lea.vmem [#allocation0], 112
    %81 = vst [vmem:[%s80] sm:%s73] %v79
    %s82 = scalar_lea.vmem [#allocation1], 52
    %v83 = vld [vmem:[%s82] sm:%s73]
    %s84 = scalar_lea.vmem [#allocation0], 104
    %85 = vst [vmem:[%s84] sm:%s73] %v83
    %s86 = scalar_lea.vmem [#allocation1], 48
    %v87 = vld [vmem:[%s86] sm:%s73]
    %s88 = scalar_lea.vmem [#allocation0], 96
    %89 = vst [vmem:[%s88] sm:%s73] %v87
    %s90 = scalar_lea.vmem [#allocation1], 44
    %v91 = vld [vmem:[%s90] sm:%s73]
    %s92 = scalar_lea.vmem [#allocation0], 88
    %93 = vst [vmem:[%s92] sm:%s73] %v91
    %s94 = scalar_lea.vmem [#allocation1], 40
    %v95 = vld [vmem:[%s94] sm:%s73]
    %s96 = scalar_lea.vmem [#allocation0], 80
    %97 = vst [vmem:[%s96] sm:%s73] %v95
    %s98 = scalar_lea.vmem [#allocation1], 36
    %v99 = vld [vmem:[%s98] sm:%s73]
    %s100 = scalar_lea.vmem [#allocation0], 72
    %101 = vst [vmem:[%s100] sm:%s73] %v99
    %s102 = scalar_lea.vmem [#allocation1], 32
    %v103 = vld [vmem:[%s102] sm:%s73]
    %s104 = scalar_lea.vmem [#allocation0], 64
    %105 = vst [vmem:[%s104] sm:%s73] %v103
    %s106 = scalar_lea.vmem [#allocation1], 28
    %v107 = vld [vmem:[%s106] sm:%s73]
    %s108 = scalar_lea.vmem [#allocation0], 56
    %109 = vst [vmem:[%s108] sm:%s73] %v107
    %s110 = scalar_lea.vmem [#allocation1], 24
    %v111 = vld [vmem:[%s110] sm:%s73]
    %s112 = scalar_lea.vmem [#allocation0], 48
    %113 = vst [vmem:[%s112] sm:%s73] %v111
    %s114 = scalar_lea.vmem [#allocation1], 20
    %v115 = vld [vmem:[%s114] sm:%s73]
    %s116 = scalar_lea.vmem [#allocation0], 40
    %117 = vst [vmem:[%s116] sm:%s73] %v115
    %s118 = scalar_lea.vmem [#allocation1], 16
    %v119 = vld [vmem:[%s118] sm:%s73]
    %s120 = scalar_lea.vmem [#allocation0], 32
    %121 = vst [vmem:[%s120] sm:%s73] %v119
    %s122 = scalar_lea.vmem [#allocation1], 12
    %v123 = vld [vmem:[%s122] sm:%s73]
    %s124 = scalar_lea.vmem [#allocation0], 24
    %125 = vst [vmem:[%s124] sm:%s73] %v123
    %s126 = scalar_lea.vmem [#allocation1], 8
    %v127 = vld [vmem:[%s126] sm:%s73]
    %s128 = scalar_lea.vmem [#allocation0], 16
    %129 = vst [vmem:[%s128] sm:%s73] %v127
    %s130 = scalar_lea.vmem [#allocation1], 4
    %v131 = vld [vmem:[%s130] sm:%s73]
    %s132 = scalar_lea.vmem [#allocation0], 8
    %133 = vst [vmem:[%s132] sm:%s73] %v131
    %v134 = vld [vmem:[#allocation1] sm:%s73]
    %135 = vst [vmem:[#allocation0] sm:%s73] %v134
    %s136 = scalar_lea.vmem [#allocation0], 7
    %v137 = vld [vmem:[%s136] ss:$-1 sm:$0xff]
    %v138 = vrot.slane %v137, 5
    %139 = vst [vmem:[#allocation2] sm:$0xff] %v138
    %s140 = scalar_lea.vmem [#allocation0], 8
    %s141 = scalar_lea.vmem %s140, 7 [#allocation0]
    %v142 = vld [vmem:[%s141] ss:$-1 sm:$0xff]
    %v143 = vrot.slane %v142, 5
    %v144 = vlaneseq
    %v145 = vshrl.u32 %v144, 7
    %vm146 = vcmp.lt.s32.totalorder %v145, 3
    %147 = vst.msk [vmem:[#allocation2] sm:$0xff] %vm146, %v143
    %s148 = scalar_lea.vmem [#allocation2], 8
    %s149 = scalar_lea.vmem [#allocation0], 16
    %s150 = scalar_lea.vmem %s149, 7 [#allocation0]
    %v151 = vld [vmem:[%s150] ss:$-1 sm:$0xff]
    %v152 = vrot.slane %v151, 5
    %153 = vst [vmem:[%s148] sm:$0xff] %v152
    %s154 = scalar_lea.vmem %s149, 8 [#allocation0]
    %s155 = scalar_lea.vmem %s154, 7 [#allocation0]
    %v156 = vld [vmem:[%s155] ss:$-1 sm:$0xff]
    %v157 = vrot.slane %v156, 5
    %v158 = vlaneseq
    %v159 = vshrl.u32 %v158, 7
    %vm160 = vcmp.lt.s32.totalorder %v159, 3
    %161 = vst.msk [vmem:[%s148] sm:$0xff] %vm160, %v157
    %s162 = scalar_lea.vmem [#allocation2], 16
    %s163 = scalar_lea.vmem [#allocation0], 32
    %s164 = scalar_lea.vmem %s163, 7 [#allocation0]
    %v165 = vld [vmem:[%s164] ss:$-1 sm:$0xff]
    %v166 = vrot.slane %v165, 5
    %167 = vst [vmem:[%s162] sm:$0xff] %v166
    %s168 = scalar_lea.vmem %s163, 8 [#allocation0]
    %s169 = scalar_lea.vmem %s168, 7 [#allocation0]
    %v170 = vld [vmem:[%s169] ss:$-1 sm:$0xff]
    %v171 = vrot.slane %v170, 5
    %v172 = vlaneseq
    %v173 = vshrl.u32 %v172, 7
    %vm174 = vcmp.lt.s32.totalorder %v173, 3
    %175 = vst.msk [vmem:[%s162] sm:$0xff] %vm174, %v171
    %s176 = scalar_lea.vmem [#allocation2], 24
    %s177 = scalar_lea.vmem [#allocation0], 48
    %s178 = scalar_lea.vmem %s177, 7 [#allocation0]
    %v179 = vld [vmem:[%s178] ss:$-1 sm:$0xff]
    %v180 = vrot.slane %v179, 5
    %181 = vst [vmem:[%s176] sm:$0xff] %v180
    %s182 = scalar_lea.vmem %s177, 8 [#allocation0]
    %s183 = scalar_lea.vmem %s182, 7 [#allocation0]
    %v184 = vld [vmem:[%s183] ss:$-1 sm:$0xff]
    %v185 = vrot.slane %v184, 5
    %v186 = vlaneseq
    %v187 = vshrl.u32 %v186, 7
    %vm188 = vcmp.lt.s32.totalorder %v187, 3
    %189 = vst.msk [vmem:[%s176] sm:$0xff] %vm188, %v185
    %s190 = scalar_lea.vmem [#allocation2], 32
    %s191 = scalar_lea.vmem [#allocation0], 64
    %s192 = scalar_lea.vmem %s191, 7 [#allocation0]
    %v193 = vld [vmem:[%s192] ss:$-1 sm:$0xff]
    %v194 = vrot.slane %v193, 5
    %195 = vst [vmem:[%s190] sm:$0xff] %v194
    %s196 = scalar_lea.vmem %s191, 8 [#allocation0]
    %s197 = scalar_lea.vmem %s196, 7 [#allocation0]
    %v198 = vld [vmem:[%s197] ss:$-1 sm:$0xff]
    %v199 = vrot.slane %v198, 5
    %v200 = vlaneseq
    %v201 = vshrl.u32 %v200, 7
    %vm202 = vcmp.lt.s32.totalorder %v201, 3
    %203 = vst.msk [vmem:[%s190] sm:$0xff] %vm202, %v199
    %s204 = scalar_lea.vmem [#allocation2], 40
    %s205 = scalar_lea.vmem [#allocation0], 80
    %s206 = scalar_lea.vmem %s205, 7 [#allocation0]
    %v207 = vld [vmem:[%s206] ss:$-1 sm:$0xff]
    %v208 = vrot.slane %v207, 5
    %209 = vst [vmem:[%s204] sm:$0xff] %v208
    %s210 = scalar_lea.vmem %s205, 8 [#allocation0]
    %s211 = scalar_lea.vmem %s210, 7 [#allocation0]
    %v212 = vld [vmem:[%s211] ss:$-1 sm:$0xff]
    %v213 = vrot.slane %v212, 5
    %v214 = vlaneseq
    %v215 = vshrl.u32 %v214, 7
    %vm216 = vcmp.lt.s32.totalorder %v215, 3
    %217 = vst.msk [vmem:[%s204] sm:$0xff] %vm216, %v213
    %s218 = scalar_lea.vmem [#allocation2], 48
    %s219 = scalar_lea.vmem [#allocation0], 96
    %s220 = scalar_lea.vmem %s219, 7 [#allocation0]
    %v221 = vld [vmem:[%s220] ss:$-1 sm:$0xff]
    %v222 = vrot.slane %v221, 5
    %223 = vst [vmem:[%s218] sm:$0xff] %v222
    %s224 = scalar_lea.vmem %s219, 8 [#allocation0]
    %s225 = scalar_lea.vmem %s224, 7 [#allocation0]
    %v226 = vld [vmem:[%s225] ss:$-1 sm:$0xff]
    %v227 = vrot.slane %v226, 5
    %v228 = vlaneseq
    %v229 = vshrl.u32 %v228, 7
    %vm230 = vcmp.lt.s32.totalorder %v229, 3
    %231 = vst.msk [vmem:[%s218] sm:$0xff] %vm230, %v227
    %s232 = scalar_lea.vmem [#allocation2], 56
    %s233 = scalar_lea.vmem [#allocation0], 112
    %s234 = scalar_lea.vmem %s233, 7 [#allocation0]
    %v235 = vld [vmem:[%s234] ss:$-1 sm:$0xff]
    %v236 = vrot.slane %v235, 5
    %237 = vst [vmem:[%s232] sm:$0xff] %v236
    %s238 = scalar_lea.vmem %s233, 8 [#allocation0]
    %s239 = scalar_lea.vmem %s238, 7 [#allocation0]
    %v240 = vld [vmem:[%s239] ss:$-1 sm:$0xff]
    %v241 = vrot.slane %v240, 5
    %v242 = vlaneseq
    %v243 = vshrl.u32 %v242, 7
    %vm244 = vcmp.lt.s32.totalorder %v243, 3
    %245 = vst.msk [vmem:[%s232] sm:$0xff] %vm244, %v241
    %s247 = ssub.s32 16, 1
    %v248 = vld [vmem:[#allocation2] sm:%s247]
    %s250 = ssub.s32 16, 1
    %251 = vst [vmem:[#allocation3] sm:%s250] %v248
    %s252 = scalar_lea.vmem [#allocation2], 8
    %v253 = vld [vmem:[%s252] sm:%s247]
    %s255 = ssub.s32 16, 1
    %s256 = scalar_lea.vmem [#allocation3], 4
    %257 = vst [vmem:[%s256] sm:%s255] %v253
    %s258 = scalar_lea.vmem [#allocation2], 16
    %v259 = vld [vmem:[%s258] sm:%s247]
    %s261 = ssub.s32 16, 1
    %s262 = scalar_lea.vmem [#allocation3], 8
    %263 = vst [vmem:[%s262] sm:%s261] %v259
    %s264 = scalar_lea.vmem [#allocation2], 24
    %v265 = vld [vmem:[%s264] sm:%s247]
    %s267 = ssub.s32 16, 1
    %s268 = scalar_lea.vmem [#allocation3], 12
    %269 = vst [vmem:[%s268] sm:%s267] %v265
    %s270 = scalar_lea.vmem [#allocation2], 32
    %v271 = vld [vmem:[%s270] sm:%s247]
    %s273 = ssub.s32 16, 1
    %s274 = scalar_lea.vmem [#allocation3], 16
    %275 = vst [vmem:[%s274] sm:%s273] %v271
    %s276 = scalar_lea.vmem [#allocation2], 40
    %v277 = vld [vmem:[%s276] sm:%s247]
    %s279 = ssub.s32 16, 1
    %s280 = scalar_lea.vmem [#allocation3], 20
    %281 = vst [vmem:[%s280] sm:%s279] %v277
    %s282 = scalar_lea.vmem [#allocation2], 48
    %v283 = vld [vmem:[%s282] sm:%s247]
    %s285 = ssub.s32 16, 1
    %s286 = scalar_lea.vmem [#allocation3], 24
    %287 = vst [vmem:[%s286] sm:%s285] %v283
    %s288 = scalar_lea.vmem [#allocation2], 56
    %v289 = vld [vmem:[%s288] sm:%s247]
    %s291 = ssub.s32 16, 1
    %s292 = scalar_lea.vmem [#allocation3], 28
    %293 = vst [vmem:[%s292] sm:%s291] %v289
    // Predicated region
    $region39: #{reverse.1} parent=1 // pred_check
      _
    $region40: #{reverse.1} parent=1 // pred_check_branch
      %295 = sbr.rel (0) target = $region42
    $region41: #{reverse.1} parent=1 // pred_region
      // Predicated region
      $region43: #{reverse.1} parent=41 // pred_check
        _
      $region44: #{reverse.1} parent=41 // pred_check_branch
        %297 = sbr.rel target = $region46
      $region45: #{reverse.1} parent=41 // pred_region
        // Predicated region
        $region58: #{reverse.1} parent=45 // pred_check
          _
        $region59: #{reverse.1} parent=45 // pred_check_branch
          %327 = sbr.rel (0) target = $region61
        $region60: #{reverse.1} parent=45 // pred_region
          loop: start=0, step=1, limit=1
          $region62: #{reverse.1} parent=60 // loop_pre_header
            _
          $region63: #{reverse.1} parent=60 // loop_header
            %s329 = sphi 0, %s333
            %p330 = scmp.ge.s32.totalorder %s329, 1
            %s334 = sphi [#allocation3], [#allocation3]
            %s335 = sphi %s1, %s1
          $region64: #{reverse.1} parent=60 // loop_header_branch
            %332 = sbr.rel (%p330) target = $region68
          $region65: #{reverse.1} parent=60 // loop_body
            _
          $region66: #{reverse.1} parent=60 // loop_footer
            %s333 = sadd.s32 1, %s329
          $region67: #{reverse.1} parent=60 // loop_footer_branch
            %328 = sbr.rel target = $region63
          $region68: #{reverse.1} parent=60 // loop_exit
            _
          %s337 = ssub.s32 16, 1
          loop: start=0, step=1, limit=1
          $region69: #{reverse.1} parent=60 // loop_pre_header
            _
          $region70: #{reverse.1} parent=60 // loop_header
            %s339 = sphi 0, %s343
            %p340 = scmp.ge.s32.totalorder %s339, 1
            %s344 = sphi [#allocation3], [#allocation3]
            %s345 = sphi %s1, %s1
          $region71: #{reverse.1} parent=60 // loop_header_branch
            %342 = sbr.rel (%p340) target = $region75
          $region72: #{reverse.1} parent=60 // loop_body
            %v346 = vld [vmem:[%s344] sm:%s337]
            %347 = vst [vmem:[%s345] sm:%s337] %v346
            %v348 = vld [vmem:[%s344 + $0x4] sm:%s337]
            %349 = vst [vmem:[%s345 + $0x4] sm:%s337] %v348
            %v350 = vld [vmem:[%s344 + $0x8] sm:%s337]
            %351 = vst [vmem:[%s345 + $0x8] sm:%s337] %v350
            %v352 = vld [vmem:[%s344 + $0xc] sm:%s337]
            %353 = vst [vmem:[%s345 + $0xc] sm:%s337] %v352
            %v354 = vld [vmem:[%s344 + $0x10] sm:%s337]
            %355 = vst [vmem:[%s345 + $0x10] sm:%s337] %v354
            %v356 = vld [vmem:[%s344 + $0x14] sm:%s337]
            %357 = vst [vmem:[%s345 + $0x14] sm:%s337] %v356
            %v358 = vld [vmem:[%s344 + $0x18] sm:%s337]
            %359 = vst [vmem:[%s345 + $0x18] sm:%s337] %v358
            %v360 = vld [vmem:[%s344 + $0x1c] sm:%s337]
            %361 = vst [vmem:[%s345 + $0x1c] sm:%s337] %v360
          $region73: #{reverse.1} parent=60 // loop_footer
            %s343 = sadd.s32 1, %s339
          $region74: #{reverse.1} parent=60 // loop_footer_branch
            %338 = sbr.rel target = $region70
          $region75: #{reverse.1} parent=60 // loop_exit
            _
        $region61: #{reverse.1} parent=45 // pred_fallthru
          _
      $region46: #{reverse.1} parent=41 // pred_fallthru
        _
      // Predicated region
      $region47: #{reverse.1} parent=41 // pred_check
        _
      $region48: #{reverse.1} parent=41 // pred_check_branch
        %299 = sbr.rel (0) target = $region50
      $region49: #{reverse.1} parent=41 // pred_region
        %s301 = ssub.s32 16, 1
        loop: start=0, step=1, limit=1
        $region51: #{reverse.1} parent=49 // loop_pre_header
          _
        $region52: #{reverse.1} parent=49 // loop_header
          %s303 = sphi 0, %s307
          %p304 = scmp.ge.s32.totalorder %s303, 1
          %s308 = sphi [#allocation3], [#allocation3]
          %s309 = sphi %s1, %s1
        $region53: #{reverse.1} parent=49 // loop_header_branch
          %306 = sbr.rel (%p304) target = $region57
        $region54: #{reverse.1} parent=49 // loop_body
          %v310 = vld [vmem:[%s308] sm:%s301]
          %311 = vst [vmem:[%s309] sm:%s301] %v310
          %v312 = vld [vmem:[%s308 + $0x4] sm:%s301]
          %313 = vst [vmem:[%s309 + $0x4] sm:%s301] %v312
          %v314 = vld [vmem:[%s308 + $0x8] sm:%s301]
          %315 = vst [vmem:[%s309 + $0x8] sm:%s301] %v314
          %v316 = vld [vmem:[%s308 + $0xc] sm:%s301]
          %317 = vst [vmem:[%s309 + $0xc] sm:%s301] %v316
          %v318 = vld [vmem:[%s308 + $0x10] sm:%s301]
          %319 = vst [vmem:[%s309 + $0x10] sm:%s301] %v318
          %v320 = vld [vmem:[%s308 + $0x14] sm:%s301]
          %321 = vst [vmem:[%s309 + $0x14] sm:%s301] %v320
          %v322 = vld [vmem:[%s308 + $0x18] sm:%s301]
          %323 = vst [vmem:[%s309 + $0x18] sm:%s301] %v322
          %v324 = vld [vmem:[%s308 + $0x1c] sm:%s301]
          %325 = vst [vmem:[%s309 + $0x1c] sm:%s301] %v324
        $region55: #{reverse.1} parent=49 // loop_footer
          %s307 = sadd.s32 1, %s303
        $region56: #{reverse.1} parent=49 // loop_footer_branch
          %302 = sbr.rel target = $region52
        $region57: #{reverse.1} parent=49 // loop_exit
          _
      $region50: #{reverse.1} parent=41 // pred_fallthru
        _
    $region42: #{reverse.1} parent=1 // pred_fallthru
      _
    %362 = vnop

// kernel: reverse
$region0: #{reverse}
  #allocation0 [shape = 's32[1]{0}', space=sflag, size = 0x4, scoped, tag = 'scoped memory for reverse']
  %s0 = inlined_call_operand.vmem [shape: f32[2,5,2,2,128], index: 0, kind: input, shape index: {}]
  %s1 = inlined_call_operand.vmem [shape: f32[2,5,2,2,128], index: 1, kind: output, shape index: {}]
  %s2 = scalar_lea.vmem %s0, 32
  %v3 = vld [vmem:[%s2] sm:$0x3]
  %4 = vst [vmem:[%s1] sm:$0x3] %v3
  %s5 = scalar_lea.vmem %s0, 24
  %v6 = vld [vmem:[%s5] sm:$0x3]
  %s7 = scalar_lea.vmem %s1, 8
  %8 = vst [vmem:[%s7] sm:$0x3] %v6
  %s9 = scalar_lea.vmem %s0, 16
  %v10 = vld [vmem:[%s9] sm:$0x3]
  %s11 = scalar_lea.vmem %s1, 16
  %12 = vst [vmem:[%s11] sm:$0x3] %v10
  %s13 = scalar_lea.vmem %s0, 8
  %v14 = vld [vmem:[%s13] sm:$0x3]
  %s15 = scalar_lea.vmem %s1, 24
  %16 = vst [vmem:[%s15] sm:$0x3] %v14
  %v17 = vld [vmem:[%s0] sm:$0x3]
  %s18 = scalar_lea.vmem %s1, 32
  %19 = vst [vmem:[%s18] sm:$0x3] %v17
  %s20 = scalar_lea.vmem %s0, 36
  %v21 = vld [vmem:[%s20] sm:$0x3]
  %s22 = scalar_lea.vmem %s1, 4
  %23 = vst [vmem:[%s22] sm:$0x3] %v21
  %s24 = scalar_lea.vmem %s0, 28
  %v25 = vld [vmem:[%s24] sm:$0x3]
  %s26 = scalar_lea.vmem %s1, 12
  %27 = vst [vmem:[%s26] sm:$0x3] %v25
  %s28 = scalar_lea.vmem %s0, 20
  %v29 = vld [vmem:[%s28] sm:$0x3]
  %s30 = scalar_lea.vmem %s1, 20
  %31 = vst [vmem:[%s30] sm:$0x3] %v29
  %s32 = scalar_lea.vmem %s0, 12
  %v33 = vld [vmem:[%s32] sm:$0x3]
  %s34 = scalar_lea.vmem %s1, 28
  %35 = vst [vmem:[%s34] sm:$0x3] %v33
  %s36 = scalar_lea.vmem %s0, 4
  %v37 = vld [vmem:[%s36] sm:$0x3]
  %s38 = scalar_lea.vmem %s1, 36
  %39 = vst [vmem:[%s38] sm:$0x3] %v37
  %s40 = scalar_lea.vmem %s0, 34
  %v41 = vld [vmem:[%s40] sm:$0x3]
  %s42 = scalar_lea.vmem %s1, 2
  %43 = vst [vmem:[%s42] sm:$0x3] %v41
  %s44 = scalar_lea.vmem %s0, 26
  %v45 = vld [vmem:[%s44] sm:$0x3]
  %s46 = scalar_lea.vmem %s1, 10
  %47 = vst [vmem:[%s46] sm:$0x3] %v45
  %s48 = scalar_lea.vmem %s0, 18
  %v49 = vld [vmem:[%s48] sm:$0x3]
  %s50 = scalar_lea.vmem %s1, 18
  %51 = vst [vmem:[%s50] sm:$0x3] %v49
  %s52 = scalar_lea.vmem %s0, 10
  %v53 = vld [vmem:[%s52] sm:$0x3]
  %s54 = scalar_lea.vmem %s1, 26
  %55 = vst [vmem:[%s54] sm:$0x3] %v53
  %s56 = scalar_lea.vmem %s0, 2
  %v57 = vld [vmem:[%s56] sm:$0x3]
  %s58 = scalar_lea.vmem %s1, 34
  %59 = vst [vmem:[%s58] sm:$0x3] %v57
  %s60 = scalar_lea.vmem %s0, 38
  %v61 = vld [vmem:[%s60] sm:$0x3]
  %s62 = scalar_lea.vmem %s1, 6
  %63 = vst [vmem:[%s62] sm:$0x3] %v61
  %s64 = scalar_lea.vmem %s0, 30
  %v65 = vld [vmem:[%s64] sm:$0x3]
  %s66 = scalar_lea.vmem %s1, 14
  %67 = vst [vmem:[%s66] sm:$0x3] %v65
  %s68 = scalar_lea.vmem %s0, 22
  %v69 = vld [vmem:[%s68] sm:$0x3]
  %s70 = scalar_lea.vmem %s1, 22
  %71 = vst [vmem:[%s70] sm:$0x3] %v69
  %s72 = scalar_lea.vmem %s0, 14
  %v73 = vld [vmem:[%s72] sm:$0x3]
  %s74 = scalar_lea.vmem %s1, 30
  %75 = vst [vmem:[%s74] sm:$0x3] %v73
  %s76 = scalar_lea.vmem %s0, 6
  %v77 = vld [vmem:[%s76] sm:$0x3]
  %s78 = scalar_lea.vmem %s1, 38
  %79 = vst [vmem:[%s78] sm:$0x3] %v77

// kernel: _lambda_.2
$region0: #{_lambda_.2}
  #allocation0 [shape = 'u32[]', space=smem, size = 0x4, offset = 0x4, fixed_abs, tag = 'smem constant byte address 0x4 - core index']
  #allocation1 [shape = 'u32[72,128]{1,0:T(1,128)}', space=vmem, size = 0x9000, scoped, tag = 'internal scratch']
  %s0 = inlined_call_operand.vmem [shape: bf16[64,3072], index: 0, kind: input, shape index: {}]
  %s1 = inlined_call_operand.vmem [shape: bf16[3072,128], index: 1, kind: input, shape index: {}]
  %s2 = inlined_call_operand.vmem [shape: f32[1,128], index: 2, kind: input, shape index: {}]
  %s3 = inlined_call_operand.vmem [shape: bf16[128,128], index: 3, kind: input, shape index: {}]
  %s4 = inlined_call_operand.vmem [shape: f32[1,128], index: 4, kind: input, shape index: {}]
  %s5 = inlined_call_operand.vmem [shape: f32[64,128], index: 5, kind: output, shape index: {}]
  %s6 = sld [smem:[#allocation0]]
  $region30: #{_lambda_.2} parent=0
    _
  %s8 = ssub.s32 1, %s6
  %s9 = scalar_select 0, %s8, %s6
  // Predicated region
  $region2: #{_lambda_.2} parent=0 // pred_check
    _
  $region3: #{_lambda_.2} parent=0 // pred_check_branch
    %11 = sbr.rel (0) target = $region5
  $region4: #{_lambda_.2} parent=0 // pred_region
    _
  $region5: #{_lambda_.2} parent=0 // pred_fallthru
    _
  // Predicated region
  $region6: #{_lambda_.2} parent=0 // pred_check
    _
  $region7: #{_lambda_.2} parent=0 // pred_check_branch
    %13 = sbr.rel (0) target = $region9
  $region8: #{_lambda_.2} parent=0 // pred_region
    _
  $region9: #{_lambda_.2} parent=0 // pred_fallthru
    _
  // Predicated region
  $region10: #{_lambda_.2} parent=0 // pred_check
    _
  $region11: #{_lambda_.2} parent=0 // pred_check_branch
    %15 = sbr.rel (0) target = $region13
  $region12: #{_lambda_.2} parent=0 // pred_region
    _
  $region13: #{_lambda_.2} parent=0 // pred_fallthru
    _
  // Predicated region
  $region14: #{_lambda_.2} parent=0 // pred_check
    _
  $region15: #{_lambda_.2} parent=0 // pred_check_branch
    %17 = sbr.rel (0) target = $region17
  $region16: #{_lambda_.2} parent=0 // pred_region
    _
  $region17: #{_lambda_.2} parent=0 // pred_fallthru
    _
  // Predicated region
  $region18: #{_lambda_.2} parent=0 // pred_check
    _
  $region19: #{_lambda_.2} parent=0 // pred_check_branch
    %19 = sbr.rel (0) target = $region21
  $region20: #{_lambda_.2} parent=0 // pred_region
    _
  $region21: #{_lambda_.2} parent=0 // pred_fallthru
    _
  %v20 = vld [vmem:[%s0] sm:$0xff]
  %v21 = vld [vmem:[%s0 + $0x8] sm:$0xff]
  %v22 = vld [vmem:[%s0 + $0x10] sm:$0xff]
  %v23 = vld [vmem:[%s0 + $0x18] sm:$0xff]
  %v24 = vld [vmem:[%s0 + $0x20] sm:$0xff]
  %v25 = vld [vmem:[%s0 + $0x28] sm:$0xff]
  %v26 = vld [vmem:[%s0 + $0x30] sm:$0xff]
  %v27 = vld [vmem:[%s0 + $0x38] sm:$0xff]
  %v28 = vld [vmem:[%s0 + $0x40] sm:$0xff]
  %v29 = vld [vmem:[%s0 + $0x48] sm:$0xff]
  %v30 = vld [vmem:[%s0 + $0x50] sm:$0xff]
  %v31 = vld [vmem:[%s0 + $0x58] sm:$0xff]
  %v32 = vld [vmem:[%s0 + $0x60] sm:$0xff]
  %v33 = vld [vmem:[%s0 + $0x68] sm:$0xff]
  %v34 = vld [vmem:[%s0 + $0x70] sm:$0xff]
  %v35 = vld [vmem:[%s0 + $0x78] sm:$0xff]
  %v36 = vld [vmem:[%s0 + $0x80] sm:$0xff]
  %v37 = vld [vmem:[%s0 + $0x88] sm:$0xff]
  %v38 = vld [vmem:[%s0 + $0x90] sm:$0xff]
  %v39 = vld [vmem:[%s0 + $0x98] sm:$0xff]
  %v40 = vld [vmem:[%s0 + $0xa0] sm:$0xff]
  %v41 = vld [vmem:[%s0 + $0xa8] sm:$0xff]
  %v42 = vld [vmem:[%s0 + $0xb0] sm:$0xff]
  %v43 = vld [vmem:[%s0 + $0xb8] sm:$0xff]
  %v44 = vld [vmem:[%s0 + $0xc0] sm:$0xff]
  %v45 = vld [vmem:[%s0 + $0xc8] sm:$0xff]
  %v46 = vld [vmem:[%s0 + $0xd0] sm:$0xff]
  %v47 = vld [vmem:[%s0 + $0xd8] sm:$0xff]
  %v48 = vld [vmem:[%s0 + $0xe0] sm:$0xff]
  %v49 = vld [vmem:[%s0 + $0xe8] sm:$0xff]
  %v50 = vld [vmem:[%s0 + $0xf0] sm:$0xff]
  %v51 = vld [vmem:[%s0 + $0xf8] sm:$0xff]
  %v52 = vld [vmem:[%s0 + $0x100] sm:$0xff]
  %v53 = vld [vmem:[%s0 + $0x108] sm:$0xff]
  %v54 = vld [vmem:[%s0 + $0x110] sm:$0xff]
  %v55 = vld [vmem:[%s0 + $0x118] sm:$0xff]
  %v56 = vld [vmem:[%s0 + $0x120] sm:$0xff]
  %v57 = vld [vmem:[%s0 + $0x128] sm:$0xff]
  %v58 = vld [vmem:[%s0 + $0x130] sm:$0xff]
  %v59 = vld [vmem:[%s0 + $0x138] sm:$0xff]
  %v60 = vld [vmem:[%s0 + $0x140] sm:$0xff]
  %v61 = vld [vmem:[%s0 + $0x148] sm:$0xff]
  %v62 = vld [vmem:[%s0 + $0x150] sm:$0xff]
  %v63 = vld [vmem:[%s0 + $0x158] sm:$0xff]
  %v64 = vld [vmem:[%s0 + $0x160] sm:$0xff]
  %v65 = vld [vmem:[%s0 + $0x168] sm:$0xff]
  %v66 = vld [vmem:[%s0 + $0x170] sm:$0xff]
  %v67 = vld [vmem:[%s0 + $0x178] sm:$0xff]
  %v68 = vld [vmem:[%s0 + $0x180] sm:$0xff]
  %v69 = vld [vmem:[%s0 + $0x188] sm:$0xff]
  %v70 = vld [vmem:[%s0 + $0x190] sm:$0xff]
  %v71 = vld [vmem:[%s0 + $0x198] sm:$0xff]
  %v72 = vld [vmem:[%s0 + $0x1a0] sm:$0xff]
  %v73 = vld [vmem:[%s0 + $0x1a8] sm:$0xff]
  %v74 = vld [vmem:[%s0 + $0x1b0] sm:$0xff]
  %v75 = vld [vmem:[%s0 + $0x1b8] sm:$0xff]
  %v76 = vld [vmem:[%s0 + $0x1c0] sm:$0xff]
  %v77 = vld [vmem:[%s0 + $0x1c8] sm:$0xff]
  %v78 = vld [vmem:[%s0 + $0x1d0] sm:$0xff]
  %v79 = vld [vmem:[%s0 + $0x1d8] sm:$0xff]
  %v80 = vld [vmem:[%s0 + $0x1e0] sm:$0xff]
  %v81 = vld [vmem:[%s0 + $0x1e8] sm:$0xff]
  %v82 = vld [vmem:[%s0 + $0x1f0] sm:$0xff]
  %v83 = vld [vmem:[%s0 + $0x1f8] sm:$0xff]
  %v84 = vld [vmem:[%s0 + $0x200] sm:$0xff]
  %v85 = vld [vmem:[%s0 + $0x208] sm:$0xff]
  %v86 = vld [vmem:[%s0 + $0x210] sm:$0xff]
  %v87 = vld [vmem:[%s0 + $0x218] sm:$0xff]
  %v88 = vld [vmem:[%s0 + $0x220] sm:$0xff]
  %v89 = vld [vmem:[%s0 + $0x228] sm:$0xff]
  %v90 = vld [vmem:[%s0 + $0x230] sm:$0xff]
  %v91 = vld [vmem:[%s0 + $0x238] sm:$0xff]
  %v92 = vld [vmem:[%s0 + $0x240] sm:$0xff]
  %v93 = vld [vmem:[%s0 + $0x248] sm:$0xff]
  %v94 = vld [vmem:[%s0 + $0x250] sm:$0xff]
  %v95 = vld [vmem:[%s0 + $0x258] sm:$0xff]
  %v96 = vld [vmem:[%s0 + $0x260] sm:$0xff]
  %v97 = vld [vmem:[%s0 + $0x268] sm:$0xff]
  %v98 = vld [vmem:[%s0 + $0x270] sm:$0xff]
  %v99 = vld [vmem:[%s0 + $0x278] sm:$0xff]
  %v100 = vld [vmem:[%s0 + $0x280] sm:$0xff]
  %v101 = vld [vmem:[%s0 + $0x288] sm:$0xff]
  %v102 = vld [vmem:[%s0 + $0x290] sm:$0xff]
  %v103 = vld [vmem:[%s0 + $0x298] sm:$0xff]
  %v104 = vld [vmem:[%s0 + $0x2a0] sm:$0xff]
  %v105 = vld [vmem:[%s0 + $0x2a8] sm:$0xff]
  %v106 = vld [vmem:[%s0 + $0x2b0] sm:$0xff]
  %v107 = vld [vmem:[%s0 + $0x2b8] sm:$0xff]
  %v108 = vld [vmem:[%s0 + $0x2c0] sm:$0xff]
  %v109 = vld [vmem:[%s0 + $0x2c8] sm:$0xff]
  %v110 = vld [vmem:[%s0 + $0x2d0] sm:$0xff]
  %v111 = vld [vmem:[%s0 + $0x2d8] sm:$0xff]
  %v112 = vld [vmem:[%s0 + $0x2e0] sm:$0xff]
  %v113 = vld [vmem:[%s0 + $0x2e8] sm:$0xff]
  %v114 = vld [vmem:[%s0 + $0x2f0] sm:$0xff]
  %v115 = vld [vmem:[%s0 + $0x2f8] sm:$0xff]
  %v116 = vld [vmem:[%s1] sm:$0xf]
  %v117 = vld [vmem:[%s1 + $0x4] sm:$0xf]
  %v118 = vld [vmem:[%s1 + $0x8] sm:$0xf]
  %v119 = vld [vmem:[%s1 + $0xc] sm:$0xf]
  %v120 = vld [vmem:[%s1 + $0x10] sm:$0xf]
  %v121 = vld [vmem:[%s1 + $0x14] sm:$0xf]
  %v122 = vld [vmem:[%s1 + $0x18] sm:$0xf]
  %v123 = vld [vmem:[%s1 + $0x1c] sm:$0xf]
  %v124 = vld [vmem:[%s1 + $0x20] sm:$0xf]
  %v125 = vld [vmem:[%s1 + $0x24] sm:$0xf]
  %v126 = vld [vmem:[%s1 + $0x28] sm:$0xf]
  %v127 = vld [vmem:[%s1 + $0x2c] sm:$0xf]
  %v128 = vld [vmem:[%s1 + $0x30] sm:$0xf]
  %v129 = vld [vmem:[%s1 + $0x34] sm:$0xf]
  %v130 = vld [vmem:[%s1 + $0x38] sm:$0xf]
  %v131 = vld [vmem:[%s1 + $0x3c] sm:$0xf]
  %v132 = vld [vmem:[%s1 + $0x40] sm:$0xf]
  %v133 = vld [vmem:[%s1 + $0x44] sm:$0xf]
  %v134 = vld [vmem:[%s1 + $0x48] sm:$0xf]
  %v135 = vld [vmem:[%s1 + $0x4c] sm:$0xf]
  %v136 = vld [vmem:[%s1 + $0x50] sm:$0xf]
  %v137 = vld [vmem:[%s1 + $0x54] sm:$0xf]
  %v138 = vld [vmem:[%s1 + $0x58] sm:$0xf]
  %v139 = vld [vmem:[%s1 + $0x5c] sm:$0xf]
  %v140 = vld [vmem:[%s1 + $0x60] sm:$0xf]
  %v141 = vld [vmem:[%s1 + $0x64] sm:$0xf]
  %v142 = vld [vmem:[%s1 + $0x68] sm:$0xf]
  %v143 = vld [vmem:[%s1 + $0x6c] sm:$0xf]
  %v144 = vld [vmem:[%s1 + $0x70] sm:$0xf]
  %v145 = vld [vmem:[%s1 + $0x74] sm:$0xf]
  %v146 = vld [vmem:[%s1 + $0x78] sm:$0xf]
  %v147 = vld [vmem:[%s1 + $0x7c] sm:$0xf]
  %v148 = vld [vmem:[%s1 + $0x80] sm:$0xf]
  %v149 = vld [vmem:[%s1 + $0x84] sm:$0xf]
  %v150 = vld [vmem:[%s1 + $0x88] sm:$0xf]
  %v151 = vld [vmem:[%s1 + $0x8c] sm:$0xf]
  %v152 = vld [vmem:[%s1 + $0x90] sm:$0xf]
  %v153 = vld [vmem:[%s1 + $0x94] sm:$0xf]
  %v154 = vld [vmem:[%s1 + $0x98] sm:$0xf]
  %v155 = vld [vmem:[%s1 + $0x9c] sm:$0xf]
  %v156 = vld [vmem:[%s1 + $0xa0] sm:$0xf]
  %v157 = vld [vmem:[%s1 + $0xa4] sm:$0xf]
  %v158 = vld [vmem:[%s1 + $0xa8] sm:$0xf]
  %v159 = vld [vmem:[%s1 + $0xac] sm:$0xf]
  %v160 = vld [vmem:[%s1 + $0xb0] sm:$0xf]
  %v161 = vld [vmem:[%s1 + $0xb4] sm:$0xf]
  %v162 = vld [vmem:[%s1 + $0xb8] sm:$0xf]
  %v163 = vld [vmem:[%s1 + $0xbc] sm:$0xf]
  %v164 = vld [vmem:[%s1 + $0xc0] sm:$0xf]
  %v165 = vld [vmem:[%s1 + $0xc4] sm:$0xf]
  %v166 = vld [vmem:[%s1 + $0xc8] sm:$0xf]
  %v167 = vld [vmem:[%s1 + $0xcc] sm:$0xf]
  %v168 = vld [vmem:[%s1 + $0xd0] sm:$0xf]
  %v169 = vld [vmem:[%s1 + $0xd4] sm:$0xf]
  %v170 = vld [vmem:[%s1 + $0xd8] sm:$0xf]
  %v171 = vld [vmem:[%s1 + $0xdc] sm:$0xf]
  %v172 = vld [vmem:[%s1 + $0xe0] sm:$0xf]
  %v173 = vld [vmem:[%s1 + $0xe4] sm:$0xf]
  %v174 = vld [vmem:[%s1 + $0xe8] sm:$0xf]
  %v175 = vld [vmem:[%s1 + $0xec] sm:$0xf]
  %v176 = vld [vmem:[%s1 + $0xf0] sm:$0xf]
  %v177 = vld [vmem:[%s1 + $0xf4] sm:$0xf]
  %v178 = vld [vmem:[%s1 + $0xf8] sm:$0xf]
  %v179 = vld [vmem:[%s1 + $0xfc] sm:$0xf]
  %v180 = vld [vmem:[%s1 + $0x100] sm:$0xf]
  %v181 = vld [vmem:[%s1 + $0x104] sm:$0xf]
  %v182 = vld [vmem:[%s1 + $0x108] sm:$0xf]
  %v183 = vld [vmem:[%s1 + $0x10c] sm:$0xf]
  %v184 = vld [vmem:[%s1 + $0x110] sm:$0xf]
  %v185 = vld [vmem:[%s1 + $0x114] sm:$0xf]
  %v186 = vld [vmem:[%s1 + $0x118] sm:$0xf]
  %v187 = vld [vmem:[%s1 + $0x11c] sm:$0xf]
  %v188 = vld [vmem:[%s1 + $0x120] sm:$0xf]
  %v189 = vld [vmem:[%s1 + $0x124] sm:$0xf]
  %v190 = vld [vmem:[%s1 + $0x128] sm:$0xf]
  %v191 = vld [vmem:[%s1 + $0x12c] sm:$0xf]
  %v192 = vld [vmem:[%s1 + $0x130] sm:$0xf]
  %v193 = vld [vmem:[%s1 + $0x134] sm:$0xf]
  %v194 = vld [vmem:[%s1 + $0x138] sm:$0xf]
  %v195 = vld [vmem:[%s1 + $0x13c] sm:$0xf]
  %v196 = vld [vmem:[%s1 + $0x140] sm:$0xf]
  %v197 = vld [vmem:[%s1 + $0x144] sm:$0xf]
  %v198 = vld [vmem:[%s1 + $0x148] sm:$0xf]
  %v199 = vld [vmem:[%s1 + $0x14c] sm:$0xf]
  %v200 = vld [vmem:[%s1 + $0x150] sm:$0xf]
  %v201 = vld [vmem:[%s1 + $0x154] sm:$0xf]
  %v202 = vld [vmem:[%s1 + $0x158] sm:$0xf]
  %v203 = vld [vmem:[%s1 + $0x15c] sm:$0xf]
  %v204 = vld [vmem:[%s1 + $0x160] sm:$0xf]
  %v205 = vld [vmem:[%s1 + $0x164] sm:$0xf]
  %v206 = vld [vmem:[%s1 + $0x168] sm:$0xf]
  %v207 = vld [vmem:[%s1 + $0x16c] sm:$0xf]
  %v208 = vld [vmem:[%s1 + $0x170] sm:$0xf]
  %v209 = vld [vmem:[%s1 + $0x174] sm:$0xf]
  %v210 = vld [vmem:[%s1 + $0x178] sm:$0xf]
  %v211 = vld [vmem:[%s1 + $0x17c] sm:$0xf]
  %v212 = vld [vmem:[%s1 + $0x180] sm:$0xf]
  %v213 = vld [vmem:[%s1 + $0x184] sm:$0xf]
  %v214 = vld [vmem:[%s1 + $0x188] sm:$0xf]
  %v215 = vld [vmem:[%s1 + $0x18c] sm:$0xf]
  %v216 = vld [vmem:[%s1 + $0x190] sm:$0xf]
  %v217 = vld [vmem:[%s1 + $0x194] sm:$0xf]
  %v218 = vld [vmem:[%s1 + $0x198] sm:$0xf]
  %v219 = vld [vmem:[%s1 + $0x19c] sm:$0xf]
  %v220 = vld [vmem:[%s1 + $0x1a0] sm:$0xf]
  %v221 = vld [vmem:[%s1 + $0x1a4] sm:$0xf]
  %v222 = vld [vmem:[%s1 + $0x1a8] sm:$0xf]
  %v223 = vld [vmem:[%s1 + $0x1ac] sm:$0xf]
  %v224 = vld [vmem:[%s1 + $0x1b0] sm:$0xf]
  %v225 = vld [vmem:[%s1 + $0x1b4] sm:$0xf]
  %v226 = vld [vmem:[%s1 + $0x1b8] sm:$0xf]
  %v227 = vld [vmem:[%s1 + $0x1bc] sm:$0xf]
  %v228 = vld [vmem:[%s1 + $0x1c0] sm:$0xf]
  %v229 = vld [vmem:[%s1 + $0x1c4] sm:$0xf]
  %v230 = vld [vmem:[%s1 + $0x1c8] sm:$0xf]
  %v231 = vld [vmem:[%s1 + $0x1cc] sm:$0xf]
  %v232 = vld [vmem:[%s1 + $0x1d0] sm:$0xf]
  %v233 = vld [vmem:[%s1 + $0x1d4] sm:$0xf]
  %v234 = vld [vmem:[%s1 + $0x1d8] sm:$0xf]
  %v235 = vld [vmem:[%s1 + $0x1dc] sm:$0xf]
  %v236 = vld [vmem:[%s1 + $0x1e0] sm:$0xf]
  %v237 = vld [vmem:[%s1 + $0x1e4] sm:$0xf]
  %v238 = vld [vmem:[%s1 + $0x1e8] sm:$0xf]
  %v239 = vld [vmem:[%s1 + $0x1ec] sm:$0xf]
  %v240 = vld [vmem:[%s1 + $0x1f0] sm:$0xf]
  %v241 = vld [vmem:[%s1 + $0x1f4] sm:$0xf]
  %v242 = vld [vmem:[%s1 + $0x1f8] sm:$0xf]
  %v243 = vld [vmem:[%s1 + $0x1fc] sm:$0xf]
  %v244 = vld [vmem:[%s1 + $0x200] sm:$0xf]
  %v245 = vld [vmem:[%s1 + $0x204] sm:$0xf]
  %v246 = vld [vmem:[%s1 + $0x208] sm:$0xf]
  %v247 = vld [vmem:[%s1 + $0x20c] sm:$0xf]
  %v248 = vld [vmem:[%s1 + $0x210] sm:$0xf]
  %v249 = vld [vmem:[%s1 + $0x214] sm:$0xf]
  %v250 = vld [vmem:[%s1 + $0x218] sm:$0xf]
  %v251 = vld [vmem:[%s1 + $0x21c] sm:$0xf]
  %v252 = vld [vmem:[%s1 + $0x220] sm:$0xf]
  %v253 = vld [vmem:[%s1 + $0x224] sm:$0xf]
  %v254 = vld [vmem:[%s1 + $0x228] sm:$0xf]
  %v255 = vld [vmem:[%s1 + $0x22c] sm:$0xf]
  %v256 = vld [vmem:[%s1 + $0x230] sm:$0xf]
  %v257 = vld [vmem:[%s1 + $0x234] sm:$0xf]
  %v258 = vld [vmem:[%s1 + $0x238] sm:$0xf]
  %v259 = vld [vmem:[%s1 + $0x23c] sm:$0xf]
  %v260 = vld [vmem:[%s1 + $0x240] sm:$0xf]
  %v261 = vld [vmem:[%s1 + $0x244] sm:$0xf]
  %v262 = vld [vmem:[%s1 + $0x248] sm:$0xf]
  %v263 = vld [vmem:[%s1 + $0x24c] sm:$0xf]
  %v264 = vld [vmem:[%s1 + $0x250] sm:$0xf]
  %v265 = vld [vmem:[%s1 + $0x254] sm:$0xf]
  %v266 = vld [vmem:[%s1 + $0x258] sm:$0xf]
  %v267 = vld [vmem:[%s1 + $0x25c] sm:$0xf]
  %v268 = vld [vmem:[%s1 + $0x260] sm:$0xf]
  %v269 = vld [vmem:[%s1 + $0x264] sm:$0xf]
  %v270 = vld [vmem:[%s1 + $0x268] sm:$0xf]
  %v271 = vld [vmem:[%s1 + $0x26c] sm:$0xf]
  %v272 = vld [vmem:[%s1 + $0x270] sm:$0xf]
  %v273 = vld [vmem:[%s1 + $0x274] sm:$0xf]
  %v274 = vld [vmem:[%s1 + $0x278] sm:$0xf]
  %v275 = vld [vmem:[%s1 + $0x27c] sm:$0xf]
  %v276 = vld [vmem:[%s1 + $0x280] sm:$0xf]
  %v277 = vld [vmem:[%s1 + $0x284] sm:$0xf]
  %v278 = vld [vmem:[%s1 + $0x288] sm:$0xf]
  %v279 = vld [vmem:[%s1 + $0x28c] sm:$0xf]
  %v280 = vld [vmem:[%s1 + $0x290] sm:$0xf]
  %v281 = vld [vmem:[%s1 + $0x294] sm:$0xf]
  %v282 = vld [vmem:[%s1 + $0x298] sm:$0xf]
  %v283 = vld [vmem:[%s1 + $0x29c] sm:$0xf]
  %v284 = vld [vmem:[%s1 + $0x2a0] sm:$0xf]
  %v285 = vld [vmem:[%s1 + $0x2a4] sm:$0xf]
  %v286 = vld [vmem:[%s1 + $0x2a8] sm:$0xf]
  %v287 = vld [vmem:[%s1 + $0x2ac] sm:$0xf]
  %v288 = vld [vmem:[%s1 + $0x2b0] sm:$0xf]
  %v289 = vld [vmem:[%s1 + $0x2b4] sm:$0xf]
  %v290 = vld [vmem:[%s1 + $0x2b8] sm:$0xf]
  %v291 = vld [vmem:[%s1 + $0x2bc] sm:$0xf]
  %v292 = vld [vmem:[%s1 + $0x2c0] sm:$0xf]
  %v293 = vld [vmem:[%s1 + $0x2c4] sm:$0xf]
  %v294 = vld [vmem:[%s1 + $0x2c8] sm:$0xf]
  %v295 = vld [vmem:[%s1 + $0x2cc] sm:$0xf]
  %v296 = vld [vmem:[%s1 + $0x2d0] sm:$0xf]
  %v297 = vld [vmem:[%s1 + $0x2d4] sm:$0xf]
  %v298 = vld [vmem:[%s1 + $0x2d8] sm:$0xf]
  %v299 = vld [vmem:[%s1 + $0x2dc] sm:$0xf]
  %v300 = vld [vmem:[%s1 + $0x2e0] sm:$0xf]
  %v301 = vld [vmem:[%s1 + $0x2e4] sm:$0xf]
  %v302 = vld [vmem:[%s1 + $0x2e8] sm:$0xf]
  %v303 = vld [vmem:[%s1 + $0x2ec] sm:$0xf]
  %v304 = vld [vmem:[%s1 + $0x2f0] sm:$0xf]
  %v305 = vld [vmem:[%s1 + $0x2f4] sm:$0xf]
  %v306 = vld [vmem:[%s1 + $0x2f8] sm:$0xf]
  %v307 = vld [vmem:[%s1 + $0x2fc] sm:$0xf]
  %v308 = vld [vmem:[%s1 + $0x300] sm:$0xf]
  %v309 = vld [vmem:[%s1 + $0x304] sm:$0xf]
  %v310 = vld [vmem:[%s1 + $0x308] sm:$0xf]
  %v311 = vld [vmem:[%s1 + $0x30c] sm:$0xf]
  %v312 = vld [vmem:[%s1 + $0x310] sm:$0xf]
  %v313 = vld [vmem:[%s1 + $0x314] sm:$0xf]
  %v314 = vld [vmem:[%s1 + $0x318] sm:$0xf]
  %v315 = vld [vmem:[%s1 + $0x31c] sm:$0xf]
  %v316 = vld [vmem:[%s1 + $0x320] sm:$0xf]
  %v317 = vld [vmem:[%s1 + $0x324] sm:$0xf]
  %v318 = vld [vmem:[%s1 + $0x328] sm:$0xf]
  %v319 = vld [vmem:[%s1 + $0x32c] sm:$0xf]
  %v320 = vld [vmem:[%s1 + $0x330] sm:$0xf]
  %v321 = vld [vmem:[%s1 + $0x334] sm:$0xf]
  %v322 = vld [vmem:[%s1 + $0x338] sm:$0xf]
  %v323 = vld [vmem:[%s1 + $0x33c] sm:$0xf]
  %v324 = vld [vmem:[%s1 + $0x340] sm:$0xf]
  %v325 = vld [vmem:[%s1 + $0x344] sm:$0xf]
  %v326 = vld [vmem:[%s1 + $0x348] sm:$0xf]
  %v327 = vld [vmem:[%s1 + $0x34c] sm:$0xf]
  %v328 = vld [vmem:[%s1 + $0x350] sm:$0xf]
  %v329 = vld [vmem:[%s1 + $0x354] sm:$0xf]
  %v330 = vld [vmem:[%s1 + $0x358] sm:$0xf]
  %v331 = vld [vmem:[%s1 + $0x35c] sm:$0xf]
  %v332 = vld [vmem:[%s1 + $0x360] sm:$0xf]
  %v333 = vld [vmem:[%s1 + $0x364] sm:$0xf]
  %v334 = vld [vmem:[%s1 + $0x368] sm:$0xf]
  %v335 = vld [vmem:[%s1 + $0x36c] sm:$0xf]
  %v336 = vld [vmem:[%s1 + $0x370] sm:$0xf]
  %v337 = vld [vmem:[%s1 + $0x374] sm:$0xf]
  %v338 = vld [vmem:[%s1 + $0x378] sm:$0xf]
  %v339 = vld [vmem:[%s1 + $0x37c] sm:$0xf]
  %v340 = vld [vmem:[%s1 + $0x380] sm:$0xf]
  %v341 = vld [vmem:[%s1 + $0x384] sm:$0xf]
  %v342 = vld [vmem:[%s1 + $0x388] sm:$0xf]
  %v343 = vld [vmem:[%s1 + $0x38c] sm:$0xf]
  %v344 = vld [vmem:[%s1 + $0x390] sm:$0xf]
  %v345 = vld [vmem:[%s1 + $0x394] sm:$0xf]
  %v346 = vld [vmem:[%s1 + $0x398] sm:$0xf]
  %v347 = vld [vmem:[%s1 + $0x39c] sm:$0xf]
  %v348 = vld [vmem:[%s1 + $0x3a0] sm:$0xf]
  %v349 = vld [vmem:[%s1 + $0x3a4] sm:$0xf]
  %v350 = vld [vmem:[%s1 + $0x3a8] sm:$0xf]
  %v351 = vld [vmem:[%s1 + $0x3ac] sm:$0xf]
  %v352 = vld [vmem:[%s1 + $0x3b0] sm:$0xf]
  %v353 = vld [vmem:[%s1 + $0x3b4] sm:$0xf]
  %v354 = vld [vmem:[%s1 + $0x3b8] sm:$0xf]
  %v355 = vld [vmem:[%s1 + $0x3bc] sm:$0xf]
  %v356 = vld [vmem:[%s1 + $0x3c0] sm:$0xf]
  %v357 = vld [vmem:[%s1 + $0x3c4] sm:$0xf]
  %v358 = vld [vmem:[%s1 + $0x3c8] sm:$0xf]
  %v359 = vld [vmem:[%s1 + $0x3cc] sm:$0xf]
  %v360 = vld [vmem:[%s1 + $0x3d0] sm:$0xf]
  %v361 = vld [vmem:[%s1 + $0x3d4] sm:$0xf]
  %v362 = vld [vmem:[%s1 + $0x3d8] sm:$0xf]
  %v363 = vld [vmem:[%s1 + $0x3dc] sm:$0xf]
  %v364 = vld [vmem:[%s1 + $0x3e0] sm:$0xf]
  %v365 = vld [vmem:[%s1 + $0x3e4] sm:$0xf]
  %v366 = vld [vmem:[%s1 + $0x3e8] sm:$0xf]
  %v367 = vld [vmem:[%s1 + $0x3ec] sm:$0xf]
  %v368 = vld [vmem:[%s1 + $0x3f0] sm:$0xf]
  %v369 = vld [vmem:[%s1 + $0x3f4] sm:$0xf]
  %v370 = vld [vmem:[%s1 + $0x3f8] sm:$0xf]
  %v371 = vld [vmem:[%s1 + $0x3fc] sm:$0xf]
  %v372 = vld [vmem:[%s1 + $0x400] sm:$0xf]
  %v373 = vld [vmem:[%s1 + $0x404] sm:$0xf]
  %v374 = vld [vmem:[%s1 + $0x408] sm:$0xf]
  %v375 = vld [vmem:[%s1 + $0x40c] sm:$0xf]
  %v376 = vld [vmem:[%s1 + $0x410] sm:$0xf]
  %v377 = vld [vmem:[%s1 + $0x414] sm:$0xf]
  %v378 = vld [vmem:[%s1 + $0x418] sm:$0xf]
  %v379 = vld [vmem:[%s1 + $0x41c] sm:$0xf]
  %v380 = vld [vmem:[%s1 + $0x420] sm:$0xf]
  %v381 = vld [vmem:[%s1 + $0x424] sm:$0xf]
  %v382 = vld [vmem:[%s1 + $0x428] sm:$0xf]
  %v383 = vld [vmem:[%s1 + $0x42c] sm:$0xf]
  %v384 = vld [vmem:[%s1 + $0x430] sm:$0xf]
  %v385 = vld [vmem:[%s1 + $0x434] sm:$0xf]
  %v386 = vld [vmem:[%s1 + $0x438] sm:$0xf]
  %v387 = vld [vmem:[%s1 + $0x43c] sm:$0xf]
  %v388 = vld [vmem:[%s1 + $0x440] sm:$0xf]
  %v389 = vld [vmem:[%s1 + $0x444] sm:$0xf]
  %v390 = vld [vmem:[%s1 + $0x448] sm:$0xf]
  %v391 = vld [vmem:[%s1 + $0x44c] sm:$0xf]
  %v392 = vld [vmem:[%s1 + $0x450] sm:$0xf]
  %v393 = vld [vmem:[%s1 + $0x454] sm:$0xf]
  %v394 = vld [vmem:[%s1 + $0x458] sm:$0xf]
  %v395 = vld [vmem:[%s1 + $0x45c] sm:$0xf]
  %v396 = vld [vmem:[%s1 + $0x460] sm:$0xf]
  %v397 = vld [vmem:[%s1 + $0x464] sm:$0xf]
  %v398 = vld [vmem:[%s1 + $0x468] sm:$0xf]
  %v399 = vld [vmem:[%s1 + $0x46c] sm:$0xf]
  %v400 = vld [vmem:[%s1 + $0x470] sm:$0xf]
  %v401 = vld [vmem:[%s1 + $0x474] sm:$0xf]
  %v402 = vld [vmem:[%s1 + $0x478] sm:$0xf]
  %v403 = vld [vmem:[%s1 + $0x47c] sm:$0xf]
  %v404 = vld [vmem:[%s1 + $0x480] sm:$0xf]
  %v405 = vld [vmem:[%s1 + $0x484] sm:$0xf]
  %v406 = vld [vmem:[%s1 + $0x488] sm:$0xf]
  %v407 = vld [vmem:[%s1 + $0x48c] sm:$0xf]
  %v408 = vld [vmem:[%s1 + $0x490] sm:$0xf]
  %v409 = vld [vmem:[%s1 + $0x494] sm:$0xf]
  %v410 = vld [vmem:[%s1 + $0x498] sm:$0xf]
  %v411 = vld [vmem:[%s1 + $0x49c] sm:$0xf]
  %v412 = vld [vmem:[%s1 + $0x4a0] sm:$0xf]
  %v413 = vld [vmem:[%s1 + $0x4a4] sm:$0xf]
  %v414 = vld [vmem:[%s1 + $0x4a8] sm:$0xf]
  %v415 = vld [vmem:[%s1 + $0x4ac] sm:$0xf]
  %v416 = vld [vmem:[%s1 + $0x4b0] sm:$0xf]
  %v417 = vld [vmem:[%s1 + $0x4b4] sm:$0xf]
  %v418 = vld [vmem:[%s1 + $0x4b8] sm:$0xf]
  %v419 = vld [vmem:[%s1 + $0x4bc] sm:$0xf]
  %v420 = vld [vmem:[%s1 + $0x4c0] sm:$0xf]
  %v421 = vld [vmem:[%s1 + $0x4c4] sm:$0xf]
  %v422 = vld [vmem:[%s1 + $0x4c8] sm:$0xf]
  %v423 = vld [vmem:[%s1 + $0x4cc] sm:$0xf]
  %v424 = vld [vmem:[%s1 + $0x4d0] sm:$0xf]
  %v425 = vld [vmem:[%s1 + $0x4d4] sm:$0xf]
  %v426 = vld [vmem:[%s1 + $0x4d8] sm:$0xf]
  %v427 = vld [vmem:[%s1 + $0x4dc] sm:$0xf]
  %v428 = vld [vmem:[%s1 + $0x4e0] sm:$0xf]
  %v429 = vld [vmem:[%s1 + $0x4e4] sm:$0xf]
  %v430 = vld [vmem:[%s1 + $0x4e8] sm:$0xf]
  %v431 = vld [vmem:[%s1 + $0x4ec] sm:$0xf]
  %v432 = vld [vmem:[%s1 + $0x4f0] sm:$0xf]
  %v433 = vld [vmem:[%s1 + $0x4f4] sm:$0xf]
  %v434 = vld [vmem:[%s1 + $0x4f8] sm:$0xf]
  %v435 = vld [vmem:[%s1 + $0x4fc] sm:$0xf]
  %v436 = vld [vmem:[%s1 + $0x500] sm:$0xf]
  %v437 = vld [vmem:[%s1 + $0x504] sm:$0xf]
  %v438 = vld [vmem:[%s1 + $0x508] sm:$0xf]
  %v439 = vld [vmem:[%s1 + $0x50c] sm:$0xf]
  %v440 = vld [vmem:[%s1 + $0x510] sm:$0xf]
  %v441 = vld [vmem:[%s1 + $0x514] sm:$0xf]
  %v442 = vld [vmem:[%s1 + $0x518] sm:$0xf]
  %v443 = vld [vmem:[%s1 + $0x51c] sm:$0xf]
  %v444 = vld [vmem:[%s1 + $0x520] sm:$0xf]
  %v445 = vld [vmem:[%s1 + $0x524] sm:$0xf]
  %v446 = vld [vmem:[%s1 + $0x528] sm:$0xf]
  %v447 = vld [vmem:[%s1 + $0x52c] sm:$0xf]
  %v448 = vld [vmem:[%s1 + $0x530] sm:$0xf]
  %v449 = vld [vmem:[%s1 + $0x534] sm:$0xf]
  %v450 = vld [vmem:[%s1 + $0x538] sm:$0xf]
  %v451 = vld [vmem:[%s1 + $0x53c] sm:$0xf]
  %v452 = vld [vmem:[%s1 + $0x540] sm:$0xf]
  %v453 = vld [vmem:[%s1 + $0x544] sm:$0xf]
  %v454 = vld [vmem:[%s1 + $0x548] sm:$0xf]
  %v455 = vld [vmem:[%s1 + $0x54c] sm:$0xf]
  %v456 = vld [vmem:[%s1 + $0x550] sm:$0xf]
  %v457 = vld [vmem:[%s1 + $0x554] sm:$0xf]
  %v458 = vld [vmem:[%s1 + $0x558] sm:$0xf]
  %v459 = vld [vmem:[%s1 + $0x55c] sm:$0xf]
  %v460 = vld [vmem:[%s1 + $0x560] sm:$0xf]
  %v461 = vld [vmem:[%s1 + $0x564] sm:$0xf]
  %v462 = vld [vmem:[%s1 + $0x568] sm:$0xf]
  %v463 = vld [vmem:[%s1 + $0x56c] sm:$0xf]
  %v464 = vld [vmem:[%s1 + $0x570] sm:$0xf]
  %v465 = vld [vmem:[%s1 + $0x574] sm:$0xf]
  %v466 = vld [vmem:[%s1 + $0x578] sm:$0xf]
  %v467 = vld [vmem:[%s1 + $0x57c] sm:$0xf]
  %v468 = vld [vmem:[%s1 + $0x580] sm:$0xf]
  %v469 = vld [vmem:[%s1 + $0x584] sm:$0xf]
  %v470 = vld [vmem:[%s1 + $0x588] sm:$0xf]
  %v471 = vld [vmem:[%s1 + $0x58c] sm:$0xf]
  %v472 = vld [vmem:[%s1 + $0x590] sm:$0xf]
  %v473 = vld [vmem:[%s1 + $0x594] sm:$0xf]
  %v474 = vld [vmem:[%s1 + $0x598] sm:$0xf]
  %v475 = vld [vmem:[%s1 + $0x59c] sm:$0xf]
  %v476 = vld [vmem:[%s1 + $0x5a0] sm:$0xf]
  %v477 = vld [vmem:[%s1 + $0x5a4] sm:$0xf]
  %v478 = vld [vmem:[%s1 + $0x5a8] sm:$0xf]
  %v479 = vld [vmem:[%s1 + $0x5ac] sm:$0xf]
  %v480 = vld [vmem:[%s1 + $0x5b0] sm:$0xf]
  %v481 = vld [vmem:[%s1 + $0x5b4] sm:$0xf]
  %v482 = vld [vmem:[%s1 + $0x5b8] sm:$0xf]
  %v483 = vld [vmem:[%s1 + $0x5bc] sm:$0xf]
  %v484 = vld [vmem:[%s1 + $0x5c0] sm:$0xf]
  %v485 = vld [vmem:[%s1 + $0x5c4] sm:$0xf]
  %v486 = vld [vmem:[%s1 + $0x5c8] sm:$0xf]
  %v487 = vld [vmem:[%s1 + $0x5cc] sm:$0xf]
  %v488 = vld [vmem:[%s1 + $0x5d0] sm:$0xf]
  %v489 = vld [vmem:[%s1 + $0x5d4] sm:$0xf]
  %v490 = vld [vmem:[%s1 + $0x5d8] sm:$0xf]
  %v491 = vld [vmem:[%s1 + $0x5dc] sm:$0xf]
  %v492 = vld [vmem:[%s1 + $0x5e0] sm:$0xf]
  %v493 = vld [vmem:[%s1 + $0x5e4] sm:$0xf]
  %v494 = vld [vmem:[%s1 + $0x5e8] sm:$0xf]
  %v495 = vld [vmem:[%s1 + $0x5ec] sm:$0xf]
  %v496 = vld [vmem:[%s1 + $0x5f0] sm:$0xf]
  %v497 = vld [vmem:[%s1 + $0x5f4] sm:$0xf]
  %v498 = vld [vmem:[%s1 + $0x5f8] sm:$0xf]
  %v499 = vld [vmem:[%s1 + $0x5fc] sm:$0xf]
  %v500 = vld [vmem:[%s2] sm:$0x1]
  %v502 = vperm.slane %v500, 0
  %v600 = vunpack.c.l.b16 %v20
  %v601 = vunpack.c.h.b16 %v20
  %v602 = vunpack.c.l.b16 %v21
  %v603 = vunpack.c.h.b16 %v21
  %v604 = vunpack.c.l.b16 %v22
  %v605 = vunpack.c.h.b16 %v22
  %v606 = vunpack.c.l.b16 %v23
  %v607 = vunpack.c.h.b16 %v23
  %v608 = vunpack.c.l.b16 %v24
  %v609 = vunpack.c.h.b16 %v24
  %v610 = vunpack.c.l.b16 %v25
  %v611 = vunpack.c.h.b16 %v25
  %v612 = vunpack.c.l.b16 %v26
  %v613 = vunpack.c.h.b16 %v26
  %v614 = vunpack.c.l.b16 %v27
  %v615 = vunpack.c.h.b16 %v27
  %v616 = vunpack.c.l.b16 %v28
  %v617 = vunpack.c.h.b16 %v28
  %v618 = vunpack.c.l.b16 %v29
  %v619 = vunpack.c.h.b16 %v29
  %v620 = vunpack.c.l.b16 %v30
  %v621 = vunpack.c.h.b16 %v30
  %v622 = vunpack.c.l.b16 %v31
  %v623 = vunpack.c.h.b16 %v31
  %v624 = vunpack.c.l.b16 %v32
  %v625 = vunpack.c.h.b16 %v32
  %v626 = vunpack.c.l.b16 %v33
  %v627 = vunpack.c.h.b16 %v33
  %v628 = vunpack.c.l.b16 %v34
  %v629 = vunpack.c.h.b16 %v34
  %v630 = vunpack.c.l.b16 %v35
  %v631 = vunpack.c.h.b16 %v35
  %v632 = vunpack.c.l.b16 %v36
  %v633 = vunpack.c.h.b16 %v36
  %v634 = vunpack.c.l.b16 %v37
  %v635 = vunpack.c.h.b16 %v37
  %v636 = vunpack.c.l.b16 %v38
  %v637 = vunpack.c.h.b16 %v38
  %v638 = vunpack.c.l.b16 %v39
  %v639 = vunpack.c.h.b16 %v39
  %v640 = vunpack.c.l.b16 %v40
  %v641 = vunpack.c.h.b16 %v40
  %v642 = vunpack.c.l.b16 %v41
  %v643 = vunpack.c.h.b16 %v41
  %v644 = vunpack.c.l.b16 %v42
  %v645 = vunpack.c.h.b16 %v42
  %v646 = vunpack.c.l.b16 %v43
  %v647 = vunpack.c.h.b16 %v43
  %v648 = vunpack.c.l.b16 %v44
  %v649 = vunpack.c.h.b16 %v44
  %v650 = vunpack.c.l.b16 %v45
  %v651 = vunpack.c.h.b16 %v45
  %v652 = vunpack.c.l.b16 %v46
  %v653 = vunpack.c.h.b16 %v46
  %v654 = vunpack.c.l.b16 %v47
  %v655 = vunpack.c.h.b16 %v47
  %v656 = vunpack.c.l.b16 %v48
  %v657 = vunpack.c.h.b16 %v48
  %v658 = vunpack.c.l.b16 %v49
  %v659 = vunpack.c.h.b16 %v49
  %v660 = vunpack.c.l.b16 %v50
  %v661 = vunpack.c.h.b16 %v50
  %v662 = vunpack.c.l.b16 %v51
  %v663 = vunpack.c.h.b16 %v51
  %v664 = vunpack.c.l.b16 %v52
  %v665 = vunpack.c.h.b16 %v52
  %v666 = vunpack.c.l.b16 %v53
  %v667 = vunpack.c.h.b16 %v53
  %v668 = vunpack.c.l.b16 %v54
  %v669 = vunpack.c.h.b16 %v54
  %v670 = vunpack.c.l.b16 %v55
  %v671 = vunpack.c.h.b16 %v55
  %v672 = vunpack.c.l.b16 %v56
  %v673 = vunpack.c.h.b16 %v56
  %v674 = vunpack.c.l.b16 %v57
  %v675 = vunpack.c.h.b16 %v57
  %v676 = vunpack.c.l.b16 %v58
  %v677 = vunpack.c.h.b16 %v58
  %v678 = vunpack.c.l.b16 %v59
  %v679 = vunpack.c.h.b16 %v59
  %v680 = vunpack.c.l.b16 %v60
  %v681 = vunpack.c.h.b16 %v60
  %v682 = vunpack.c.l.b16 %v61
  %v683 = vunpack.c.h.b16 %v61
  %v684 = vunpack.c.l.b16 %v62
  %v685 = vunpack.c.h.b16 %v62
  %v686 = vunpack.c.l.b16 %v63
  %v687 = vunpack.c.h.b16 %v63
  %v688 = vunpack.c.l.b16 %v64
  %v689 = vunpack.c.h.b16 %v64
  %v690 = vunpack.c.l.b16 %v65
  %v691 = vunpack.c.h.b16 %v65
  %v692 = vunpack.c.l.b16 %v66
  %v693 = vunpack.c.h.b16 %v66
  %v694 = vunpack.c.l.b16 %v67
  %v695 = vunpack.c.h.b16 %v67
  %v696 = vunpack.c.l.b16 %v68
  %v697 = vunpack.c.h.b16 %v68
  %v698 = vunpack.c.l.b16 %v69
  %v699 = vunpack.c.h.b16 %v69
  %v700 = vunpack.c.l.b16 %v70
  %v701 = vunpack.c.h.b16 %v70
  %v702 = vunpack.c.l.b16 %v71
  %v703 = vunpack.c.h.b16 %v71
  %v704 = vunpack.c.l.b16 %v72
  %v705 = vunpack.c.h.b16 %v72
  %v706 = vunpack.c.l.b16 %v73
  %v707 = vunpack.c.h.b16 %v73
  %v708 = vunpack.c.l.b16 %v74
  %v709 = vunpack.c.h.b16 %v74
  %v710 = vunpack.c.l.b16 %v75
  %v711 = vunpack.c.h.b16 %v75
  %v712 = vunpack.c.l.b16 %v76
  %v713 = vunpack.c.h.b16 %v76
  %v714 = vunpack.c.l.b16 %v77
  %v715 = vunpack.c.h.b16 %v77
  %v716 = vunpack.c.l.b16 %v78
  %v717 = vunpack.c.h.b16 %v78
  %v718 = vunpack.c.l.b16 %v79
  %v719 = vunpack.c.h.b16 %v79
  %v720 = vunpack.c.l.b16 %v80
  %v721 = vunpack.c.h.b16 %v80
  %v722 = vunpack.c.l.b16 %v81
  %v723 = vunpack.c.h.b16 %v81
  %v724 = vunpack.c.l.b16 %v82
  %v725 = vunpack.c.h.b16 %v82
  %v726 = vunpack.c.l.b16 %v83
  %v727 = vunpack.c.h.b16 %v83
  %v728 = vunpack.c.l.b16 %v84
  %v729 = vunpack.c.h.b16 %v84
  %v730 = vunpack.c.l.b16 %v85
  %v731 = vunpack.c.h.b16 %v85
  %v732 = vunpack.c.l.b16 %v86
  %v733 = vunpack.c.h.b16 %v86
  %v734 = vunpack.c.l.b16 %v87
  %v735 = vunpack.c.h.b16 %v87
  %v736 = vunpack.c.l.b16 %v88
  %v737 = vunpack.c.h.b16 %v88
  %v738 = vunpack.c.l.b16 %v89
  %v739 = vunpack.c.h.b16 %v89
  %v740 = vunpack.c.l.b16 %v90
  %v741 = vunpack.c.h.b16 %v90
  %v742 = vunpack.c.l.b16 %v91
  %v743 = vunpack.c.h.b16 %v91
  %v744 = vunpack.c.l.b16 %v92
  %v745 = vunpack.c.h.b16 %v92
  %v746 = vunpack.c.l.b16 %v93
  %v747 = vunpack.c.h.b16 %v93
  %v748 = vunpack.c.l.b16 %v94
  %v749 = vunpack.c.h.b16 %v94
  %v750 = vunpack.c.l.b16 %v95
  %v751 = vunpack.c.h.b16 %v95
  %v752 = vunpack.c.l.b16 %v96
  %v753 = vunpack.c.h.b16 %v96
  %v754 = vunpack.c.l.b16 %v97
  %v755 = vunpack.c.h.b16 %v97
  %v756 = vunpack.c.l.b16 %v98
  %v757 = vunpack.c.h.b16 %v98
  %v758 = vunpack.c.l.b16 %v99
  %v759 = vunpack.c.h.b16 %v99
  %v760 = vunpack.c.l.b16 %v100
  %v761 = vunpack.c.h.b16 %v100
  %v762 = vunpack.c.l.b16 %v101
  %v763 = vunpack.c.h.b16 %v101
  %v764 = vunpack.c.l.b16 %v102
  %v765 = vunpack.c.h.b16 %v102
  %v766 = vunpack.c.l.b16 %v103
  %v767 = vunpack.c.h.b16 %v103
  %v768 = vunpack.c.l.b16 %v104
  %v769 = vunpack.c.h.b16 %v104
  %v770 = vunpack.c.l.b16 %v105
  %v771 = vunpack.c.h.b16 %v105
  %v772 = vunpack.c.l.b16 %v106
  %v773 = vunpack.c.h.b16 %v106
  %v774 = vunpack.c.l.b16 %v107
  %v775 = vunpack.c.h.b16 %v107
  %v776 = vunpack.c.l.b16 %v108
  %v777 = vunpack.c.h.b16 %v108
  %v778 = vunpack.c.l.b16 %v109
  %v779 = vunpack.c.h.b16 %v109
  %v780 = vunpack.c.l.b16 %v110
  %v781 = vunpack.c.h.b16 %v110
  %v782 = vunpack.c.l.b16 %v111
  %v783 = vunpack.c.h.b16 %v111
  %v784 = vunpack.c.l.b16 %v112
  %v785 = vunpack.c.h.b16 %v112
  %v786 = vunpack.c.l.b16 %v113
  %v787 = vunpack.c.h.b16 %v113
  %v788 = vunpack.c.l.b16 %v114
  %v789 = vunpack.c.h.b16 %v114
  %v790 = vunpack.c.l.b16 %v115
  %v791 = vunpack.c.h.b16 %v115
  %v792 = vpack.c.b16 %v624, %v600
  %v793 = vpack.c.b16 %v625, %v601
  %v794 = vpack.c.b16 %v626, %v602
  %v795 = vpack.c.b16 %v627, %v603
  %v796 = vpack.c.b16 %v628, %v604
  %v797 = vpack.c.b16 %v629, %v605
  %v798 = vpack.c.b16 %v630, %v606
  %v799 = vpack.c.b16 %v631, %v607
  %v800 = vpack.c.b16 %v632, %v608
  %v801 = vpack.c.b16 %v633, %v609
  %v802 = vpack.c.b16 %v634, %v610
  %v803 = vpack.c.b16 %v635, %v611
  %v804 = vpack.c.b16 %v636, %v612
  %v805 = vpack.c.b16 %v637, %v613
  %v806 = vpack.c.b16 %v638, %v614
  %v807 = vpack.c.b16 %v639, %v615
  %v808 = vpack.c.b16 %v640, %v616
  %v809 = vpack.c.b16 %v641, %v617
  %v810 = vpack.c.b16 %v642, %v618
  %v811 = vpack.c.b16 %v643, %v619
  %v812 = vpack.c.b16 %v644, %v620
  %v813 = vpack.c.b16 %v645, %v621
  %v814 = vpack.c.b16 %v646, %v622
  %v815 = vpack.c.b16 %v647, %v623
  %v816 = vpack.c.b16 %v672, %v648
  %v817 = vpack.c.b16 %v673, %v649
  %v818 = vpack.c.b16 %v674, %v650
  %v819 = vpack.c.b16 %v675, %v651
  %v820 = vpack.c.b16 %v676, %v652
  %v821 = vpack.c.b16 %v677, %v653
  %v822 = vpack.c.b16 %v678, %v654
  %v823 = vpack.c.b16 %v679, %v655
  %v824 = vpack.c.b16 %v680, %v656
  %v825 = vpack.c.b16 %v681, %v657
  %v826 = vpack.c.b16 %v682, %v658
  %v827 = vpack.c.b16 %v683, %v659
  %v828 = vpack.c.b16 %v684, %v660
  %v829 = vpack.c.b16 %v685, %v661
  %v830 = vpack.c.b16 %v686, %v662
  %v831 = vpack.c.b16 %v687, %v663
  %v832 = vpack.c.b16 %v688, %v664
  %v833 = vpack.c.b16 %v689, %v665
  %v834 = vpack.c.b16 %v690, %v666
  %v835 = vpack.c.b16 %v691, %v667
  %v836 = vpack.c.b16 %v692, %v668
  %v837 = vpack.c.b16 %v693, %v669
  %v838 = vpack.c.b16 %v694, %v670
  %v839 = vpack.c.b16 %v695, %v671
  %v840 = vpack.c.b16 %v720, %v696
  %v841 = vpack.c.b16 %v721, %v697
  %v842 = vpack.c.b16 %v722, %v698
  %v843 = vpack.c.b16 %v723, %v699
  %v844 = vpack.c.b16 %v724, %v700
  %v845 = vpack.c.b16 %v725, %v701
  %v846 = vpack.c.b16 %v726, %v702
  %v847 = vpack.c.b16 %v727, %v703
  %v848 = vpack.c.b16 %v728, %v704
  %v849 = vpack.c.b16 %v729, %v705
  %v850 = vpack.c.b16 %v730, %v706
  %v851 = vpack.c.b16 %v731, %v707
  %v852 = vpack.c.b16 %v732, %v708
  %v853 = vpack.c.b16 %v733, %v709
  %v854 = vpack.c.b16 %v734, %v710
  %v855 = vpack.c.b16 %v735, %v711
  %v856 = vpack.c.b16 %v736, %v712
  %v857 = vpack.c.b16 %v737, %v713
  %v858 = vpack.c.b16 %v738, %v714
  %v859 = vpack.c.b16 %v739, %v715
  %v860 = vpack.c.b16 %v740, %v716
  %v861 = vpack.c.b16 %v741, %v717
  %v862 = vpack.c.b16 %v742, %v718
  %v863 = vpack.c.b16 %v743, %v719
  %v864 = vpack.c.b16 %v768, %v744
  %v865 = vpack.c.b16 %v769, %v745
  %v866 = vpack.c.b16 %v770, %v746
  %v867 = vpack.c.b16 %v771, %v747
  %v868 = vpack.c.b16 %v772, %v748
  %v869 = vpack.c.b16 %v773, %v749
  %v870 = vpack.c.b16 %v774, %v750
  %v871 = vpack.c.b16 %v775, %v751
  %v872 = vpack.c.b16 %v776, %v752
  %v873 = vpack.c.b16 %v777, %v753
  %v874 = vpack.c.b16 %v778, %v754
  %v875 = vpack.c.b16 %v779, %v755
  %v876 = vpack.c.b16 %v780, %v756
  %v877 = vpack.c.b16 %v781, %v757
  %v878 = vpack.c.b16 %v782, %v758
  %v879 = vpack.c.b16 %v783, %v759
  %v880 = vpack.c.b16 %v784, %v760
  %v881 = vpack.c.b16 %v785, %v761
  %v882 = vpack.c.b16 %v786, %v762
  %v883 = vpack.c.b16 %v787, %v763
  %v884 = vpack.c.b16 %v788, %v764
  %v885 = vpack.c.b16 %v789, %v765
  %v886 = vpack.c.b16 %v790, %v766
  %v887 = vpack.c.b16 %v791, %v767
  %v1368 = vunpack.c.l.b16 %v116
  %v1369 = vunpack.c.l.b16 %v117
  %v1370 = vunpack.c.l.b16 %v118
  %v1371 = vunpack.c.l.b16 %v119
  %v1372 = vunpack.c.l.b16 %v120
  %v1373 = vunpack.c.l.b16 %v121
  %v1374 = vunpack.c.l.b16 %v122
  %v1375 = vunpack.c.l.b16 %v123
  %v1376 = vunpack.c.l.b16 %v124
  %v1377 = vunpack.c.l.b16 %v125
  %v1378 = vunpack.c.l.b16 %v126
  %v1379 = vunpack.c.l.b16 %v127
  %v1380 = vunpack.c.l.b16 %v128
  %v1381 = vunpack.c.l.b16 %v129
  %v1382 = vunpack.c.l.b16 %v130
  %v1383 = vunpack.c.l.b16 %v131
  %v1384 = vunpack.c.l.b16 %v132
  %v1385 = vunpack.c.l.b16 %v133
  %v1386 = vunpack.c.l.b16 %v134
  %v1387 = vunpack.c.l.b16 %v135
  %v1388 = vunpack.c.l.b16 %v136
  %v1389 = vunpack.c.l.b16 %v137
  %v1390 = vunpack.c.l.b16 %v138
  %v1391 = vunpack.c.l.b16 %v139
  %v1392 = vunpack.c.l.b16 %v140
  %v1393 = vunpack.c.l.b16 %v141
  %v1394 = vunpack.c.l.b16 %v142
  %v1395 = vunpack.c.l.b16 %v143
  %v1396 = vunpack.c.l.b16 %v144
  %v1397 = vunpack.c.l.b16 %v145
  %v1398 = vunpack.c.l.b16 %v146
  %v1399 = vunpack.c.l.b16 %v147
  %v1400 = vunpack.c.l.b16 %v148
  %v1401 = vunpack.c.l.b16 %v149
  %v1402 = vunpack.c.l.b16 %v150
  %v1403 = vunpack.c.l.b16 %v151
  %v1404 = vunpack.c.l.b16 %v152
  %v1405 = vunpack.c.l.b16 %v153
  %v1406 = vunpack.c.l.b16 %v154
  %v1407 = vunpack.c.l.b16 %v155
  %v1408 = vunpack.c.l.b16 %v156
  %v1409 = vunpack.c.l.b16 %v157
  %v1410 = vunpack.c.l.b16 %v158
  %v1411 = vunpack.c.l.b16 %v159
  %v1412 = vunpack.c.l.b16 %v160
  %v1413 = vunpack.c.l.b16 %v161
  %v1414 = vunpack.c.l.b16 %v162
  %v1415 = vunpack.c.l.b16 %v163
  %v1416 = vunpack.c.l.b16 %v164
  %v1417 = vunpack.c.l.b16 %v165
  %v1418 = vunpack.c.l.b16 %v166
  %v1419 = vunpack.c.l.b16 %v167
  %v1420 = vunpack.c.l.b16 %v168
  %v1421 = vunpack.c.l.b16 %v169
  %v1422 = vunpack.c.l.b16 %v170
  %v1423 = vunpack.c.l.b16 %v171
  %v1424 = vunpack.c.l.b16 %v172
  %v1425 = vunpack.c.l.b16 %v173
  %v1426 = vunpack.c.l.b16 %v174
  %v1427 = vunpack.c.l.b16 %v175
  %v1428 = vunpack.c.l.b16 %v176
  %v1429 = vunpack.c.l.b16 %v177
  %v1430 = vunpack.c.l.b16 %v178
  %v1431 = vunpack.c.l.b16 %v179
  %v1432 = vunpack.c.l.b16 %v180
  %v1433 = vunpack.c.l.b16 %v181
  %v1434 = vunpack.c.l.b16 %v182
  %v1435 = vunpack.c.l.b16 %v183
  %v1436 = vunpack.c.l.b16 %v184
  %v1437 = vunpack.c.l.b16 %v185
  %v1438 = vunpack.c.l.b16 %v186
  %v1439 = vunpack.c.l.b16 %v187
  %v1440 = vunpack.c.l.b16 %v188
  %v1441 = vunpack.c.l.b16 %v189
  %v1442 = vunpack.c.l.b16 %v190
  %v1443 = vunpack.c.l.b16 %v191
  %v1444 = vunpack.c.l.b16 %v192
  %v1445 = vunpack.c.l.b16 %v193
  %v1446 = vunpack.c.l.b16 %v194
  %v1447 = vunpack.c.l.b16 %v195
  %v1448 = vunpack.c.l.b16 %v196
  %v1449 = vunpack.c.l.b16 %v197
  %v1450 = vunpack.c.l.b16 %v198
  %v1451 = vunpack.c.l.b16 %v199
  %v1452 = vunpack.c.l.b16 %v200
  %v1453 = vunpack.c.l.b16 %v201
  %v1454 = vunpack.c.l.b16 %v202
  %v1455 = vunpack.c.l.b16 %v203
  %v1456 = vunpack.c.l.b16 %v204
  %v1457 = vunpack.c.l.b16 %v205
  %v1458 = vunpack.c.l.b16 %v206
  %v1459 = vunpack.c.l.b16 %v207
  %v1460 = vunpack.c.l.b16 %v208
  %v1461 = vunpack.c.l.b16 %v209
  %v1462 = vunpack.c.l.b16 %v210
  %v1463 = vunpack.c.l.b16 %v211
  %v1464 = vunpack.c.l.b16 %v212
  %v1465 = vunpack.c.l.b16 %v213
  %v1466 = vunpack.c.l.b16 %v214
  %v1467 = vunpack.c.l.b16 %v215
  %v1468 = vunpack.c.l.b16 %v216
  %v1469 = vunpack.c.l.b16 %v217
  %v1470 = vunpack.c.l.b16 %v218
  %v1471 = vunpack.c.l.b16 %v219
  %v1472 = vunpack.c.l.b16 %v220
  %v1473 = vunpack.c.l.b16 %v221
  %v1474 = vunpack.c.l.b16 %v222
  %v1475 = vunpack.c.l.b16 %v223
  %v1476 = vunpack.c.l.b16 %v224
  %v1477 = vunpack.c.l.b16 %v225
  %v1478 = vunpack.c.l.b16 %v226
  %v1479 = vunpack.c.l.b16 %v227
  %v1480 = vunpack.c.l.b16 %v228
  %v1481 = vunpack.c.l.b16 %v229
  %v1482 = vunpack.c.l.b16 %v230
  %v1483 = vunpack.c.l.b16 %v231
  %v1484 = vunpack.c.l.b16 %v232
  %v1485 = vunpack.c.l.b16 %v233
  %v1486 = vunpack.c.l.b16 %v234
  %v1487 = vunpack.c.l.b16 %v235
  %v1488 = vunpack.c.l.b16 %v236
  %v1489 = vunpack.c.l.b16 %v237
  %v1490 = vunpack.c.l.b16 %v238
  %v1491 = vunpack.c.l.b16 %v239
  %v1492 = vunpack.c.l.b16 %v240
  %v1493 = vunpack.c.l.b16 %v241
  %v1494 = vunpack.c.l.b16 %v242
  %v1495 = vunpack.c.l.b16 %v243
  %v1496 = vunpack.c.l.b16 %v244
  %v1497 = vunpack.c.l.b16 %v245
  %v1498 = vunpack.c.l.b16 %v246
  %v1499 = vunpack.c.l.b16 %v247
  %v1500 = vunpack.c.l.b16 %v248
  %v1501 = vunpack.c.l.b16 %v249
  %v1502 = vunpack.c.l.b16 %v250
  %v1503 = vunpack.c.l.b16 %v251
  %v1504 = vunpack.c.l.b16 %v252
  %v1505 = vunpack.c.l.b16 %v253
  %v1506 = vunpack.c.l.b16 %v254
  %v1507 = vunpack.c.l.b16 %v255
  %v1508 = vunpack.c.l.b16 %v256
  %v1509 = vunpack.c.l.b16 %v257
  %v1510 = vunpack.c.l.b16 %v258
  %v1511 = vunpack.c.l.b16 %v259
  %v1512 = vunpack.c.l.b16 %v260
  %v1513 = vunpack.c.l.b16 %v261
  %v1514 = vunpack.c.l.b16 %v262
  %v1515 = vunpack.c.l.b16 %v263
  %v1516 = vunpack.c.l.b16 %v264
  %v1517 = vunpack.c.l.b16 %v265
  %v1518 = vunpack.c.l.b16 %v266
  %v1519 = vunpack.c.l.b16 %v267
  %v1520 = vunpack.c.l.b16 %v268
  %v1521 = vunpack.c.l.b16 %v269
  %v1522 = vunpack.c.l.b16 %v270
  %v1523 = vunpack.c.l.b16 %v271
  %v1524 = vunpack.c.l.b16 %v272
  %v1525 = vunpack.c.l.b16 %v273
  %v1526 = vunpack.c.l.b16 %v274
  %v1527 = vunpack.c.l.b16 %v275
  %v1528 = vunpack.c.l.b16 %v276
  %v1529 = vunpack.c.l.b16 %v277
  %v1530 = vunpack.c.l.b16 %v278
  %v1531 = vunpack.c.l.b16 %v279
  %v1532 = vunpack.c.l.b16 %v280
  %v1533 = vunpack.c.l.b16 %v281
  %v1534 = vunpack.c.l.b16 %v282
  %v1535 = vunpack.c.l.b16 %v283
  %v1536 = vunpack.c.l.b16 %v284
  %v1537 = vunpack.c.l.b16 %v285
  %v1538 = vunpack.c.l.b16 %v286
  %v1539 = vunpack.c.l.b16 %v287
  %v1540 = vunpack.c.l.b16 %v288
  %v1541 = vunpack.c.l.b16 %v289
  %v1542 = vunpack.c.l.b16 %v290
  %v1543 = vunpack.c.l.b16 %v291
  %v1544 = vunpack.c.l.b16 %v292
  %v1545 = vunpack.c.l.b16 %v293
  %v1546 = vunpack.c.l.b16 %v294
  %v1547 = vunpack.c.l.b16 %v295
  %v1548 = vunpack.c.l.b16 %v296
  %v1549 = vunpack.c.l.b16 %v297
  %v1550 = vunpack.c.l.b16 %v298
  %v1551 = vunpack.c.l.b16 %v299
  %v1552 = vunpack.c.l.b16 %v300
  %v1553 = vunpack.c.l.b16 %v301
  %v1554 = vunpack.c.l.b16 %v302
  %v1555 = vunpack.c.l.b16 %v303
  %v1556 = vunpack.c.l.b16 %v304
  %v1557 = vunpack.c.l.b16 %v305
  %v1558 = vunpack.c.l.b16 %v306
  %v1559 = vunpack.c.l.b16 %v307
  %v1560 = vunpack.c.l.b16 %v308
  %v1561 = vunpack.c.l.b16 %v309
  %v1562 = vunpack.c.l.b16 %v310
  %v1563 = vunpack.c.l.b16 %v311
  %v1564 = vunpack.c.l.b16 %v312
  %v1565 = vunpack.c.l.b16 %v313
  %v1566 = vunpack.c.l.b16 %v314
  %v1567 = vunpack.c.l.b16 %v315
  %v1568 = vunpack.c.l.b16 %v316
  %v1569 = vunpack.c.l.b16 %v317
  %v1570 = vunpack.c.l.b16 %v318
  %v1571 = vunpack.c.l.b16 %v319
  %v1572 = vunpack.c.l.b16 %v320
  %v1573 = vunpack.c.l.b16 %v321
  %v1574 = vunpack.c.l.b16 %v322
  %v1575 = vunpack.c.l.b16 %v323
  %v1576 = vunpack.c.l.b16 %v324
  %v1577 = vunpack.c.l.b16 %v325
  %v1578 = vunpack.c.l.b16 %v326
  %v1579 = vunpack.c.l.b16 %v327
  %v1580 = vunpack.c.l.b16 %v328
  %v1581 = vunpack.c.l.b16 %v329
  %v1582 = vunpack.c.l.b16 %v330
  %v1583 = vunpack.c.l.b16 %v331
  %v1584 = vunpack.c.l.b16 %v332
  %v1585 = vunpack.c.l.b16 %v333
  %v1586 = vunpack.c.l.b16 %v334
  %v1587 = vunpack.c.l.b16 %v335
  %v1588 = vunpack.c.l.b16 %v336
  %v1589 = vunpack.c.l.b16 %v337
  %v1590 = vunpack.c.l.b16 %v338
  %v1591 = vunpack.c.l.b16 %v339
  %v1592 = vunpack.c.l.b16 %v340
  %v1593 = vunpack.c.l.b16 %v341
  %v1594 = vunpack.c.l.b16 %v342
  %v1595 = vunpack.c.l.b16 %v343
  %v1596 = vunpack.c.l.b16 %v344
  %v1597 = vunpack.c.l.b16 %v345
  %v1598 = vunpack.c.l.b16 %v346
  %v1599 = vunpack.c.l.b16 %v347
  %v1600 = vunpack.c.l.b16 %v348
  %v1601 = vunpack.c.l.b16 %v349
  %v1602 = vunpack.c.l.b16 %v350
  %v1603 = vunpack.c.l.b16 %v351
  %v1604 = vunpack.c.l.b16 %v352
  %v1605 = vunpack.c.l.b16 %v353
  %v1606 = vunpack.c.l.b16 %v354
  %v1607 = vunpack.c.l.b16 %v355
  %v1608 = vunpack.c.l.b16 %v356
  %v1609 = vunpack.c.l.b16 %v357
  %v1610 = vunpack.c.l.b16 %v358
  %v1611 = vunpack.c.l.b16 %v359
  %v1612 = vunpack.c.l.b16 %v360
  %v1613 = vunpack.c.l.b16 %v361
  %v1614 = vunpack.c.l.b16 %v362
  %v1615 = vunpack.c.l.b16 %v363
  %v1616 = vunpack.c.l.b16 %v364
  %v1617 = vunpack.c.l.b16 %v365
  %v1618 = vunpack.c.l.b16 %v366
  %v1619 = vunpack.c.l.b16 %v367
  %v1620 = vunpack.c.l.b16 %v368
  %v1621 = vunpack.c.l.b16 %v369
  %v1622 = vunpack.c.l.b16 %v370
  %v1623 = vunpack.c.l.b16 %v371
  %v1624 = vunpack.c.l.b16 %v372
  %v1625 = vunpack.c.l.b16 %v373
  %v1626 = vunpack.c.l.b16 %v374
  %v1627 = vunpack.c.l.b16 %v375
  %v1628 = vunpack.c.l.b16 %v376
  %v1629 = vunpack.c.l.b16 %v377
  %v1630 = vunpack.c.l.b16 %v378
  %v1631 = vunpack.c.l.b16 %v379
  %v1632 = vunpack.c.l.b16 %v380
  %v1633 = vunpack.c.l.b16 %v381
  %v1634 = vunpack.c.l.b16 %v382
  %v1635 = vunpack.c.l.b16 %v383
  %v1636 = vunpack.c.l.b16 %v384
  %v1637 = vunpack.c.l.b16 %v385
  %v1638 = vunpack.c.l.b16 %v386
  %v1639 = vunpack.c.l.b16 %v387
  %v1640 = vunpack.c.l.b16 %v388
  %v1641 = vunpack.c.l.b16 %v389
  %v1642 = vunpack.c.l.b16 %v390
  %v1643 = vunpack.c.l.b16 %v391
  %v1644 = vunpack.c.l.b16 %v392
  %v1645 = vunpack.c.l.b16 %v393
  %v1646 = vunpack.c.l.b16 %v394
  %v1647 = vunpack.c.l.b16 %v395
  %v1648 = vunpack.c.l.b16 %v396
  %v1649 = vunpack.c.l.b16 %v397
  %v1650 = vunpack.c.l.b16 %v398
  %v1651 = vunpack.c.l.b16 %v399
  %v1652 = vunpack.c.l.b16 %v400
  %v1653 = vunpack.c.l.b16 %v401
  %v1654 = vunpack.c.l.b16 %v402
  %v1655 = vunpack.c.l.b16 %v403
  %v1656 = vunpack.c.l.b16 %v404
  %v1657 = vunpack.c.l.b16 %v405
  %v1658 = vunpack.c.l.b16 %v406
  %v1659 = vunpack.c.l.b16 %v407
  %v1660 = vunpack.c.l.b16 %v408
  %v1661 = vunpack.c.l.b16 %v409
  %v1662 = vunpack.c.l.b16 %v410
  %v1663 = vunpack.c.l.b16 %v411
  %v1664 = vunpack.c.l.b16 %v412
  %v1665 = vunpack.c.l.b16 %v413
  %v1666 = vunpack.c.l.b16 %v414
  %v1667 = vunpack.c.l.b16 %v415
  %v1668 = vunpack.c.l.b16 %v416
  %v1669 = vunpack.c.l.b16 %v417
  %v1670 = vunpack.c.l.b16 %v418
  %v1671 = vunpack.c.l.b16 %v419
  %v1672 = vunpack.c.l.b16 %v420
  %v1673 = vunpack.c.l.b16 %v421
  %v1674 = vunpack.c.l.b16 %v422
  %v1675 = vunpack.c.l.b16 %v423
  %v1676 = vunpack.c.l.b16 %v424
  %v1677 = vunpack.c.l.b16 %v425
  %v1678 = vunpack.c.l.b16 %v426
  %v1679 = vunpack.c.l.b16 %v427
  %v1680 = vunpack.c.l.b16 %v428
  %v1681 = vunpack.c.l.b16 %v429
  %v1682 = vunpack.c.l.b16 %v430
  %v1683 = vunpack.c.l.b16 %v431
  %v1684 = vunpack.c.l.b16 %v432
  %v1685 = vunpack.c.l.b16 %v433
  %v1686 = vunpack.c.l.b16 %v434
  %v1687 = vunpack.c.l.b16 %v435
  %v1688 = vunpack.c.l.b16 %v436
  %v1689 = vunpack.c.l.b16 %v437
  %v1690 = vunpack.c.l.b16 %v438
  %v1691 = vunpack.c.l.b16 %v439
  %v1692 = vunpack.c.l.b16 %v440
  %v1693 = vunpack.c.l.b16 %v441
  %v1694 = vunpack.c.l.b16 %v442
  %v1695 = vunpack.c.l.b16 %v443
  %v1696 = vunpack.c.l.b16 %v444
  %v1697 = vunpack.c.l.b16 %v445
  %v1698 = vunpack.c.l.b16 %v446
  %v1699 = vunpack.c.l.b16 %v447
  %v1700 = vunpack.c.l.b16 %v448
  %v1701 = vunpack.c.l.b16 %v449
  %v1702 = vunpack.c.l.b16 %v450
  %v1703 = vunpack.c.l.b16 %v451
  %v1704 = vunpack.c.l.b16 %v452
  %v1705 = vunpack.c.l.b16 %v453
  %v1706 = vunpack.c.l.b16 %v454
  %v1707 = vunpack.c.l.b16 %v455
  %v1708 = vunpack.c.l.b16 %v456
  %v1709 = vunpack.c.l.b16 %v457
  %v1710 = vunpack.c.l.b16 %v458
  %v1711 = vunpack.c.l.b16 %v459
  %v1712 = vunpack.c.l.b16 %v460
  %v1713 = vunpack.c.l.b16 %v461
  %v1714 = vunpack.c.l.b16 %v462
  %v1715 = vunpack.c.l.b16 %v463
  %v1716 = vunpack.c.l.b16 %v464
  %v1717 = vunpack.c.l.b16 %v465
  %v1718 = vunpack.c.l.b16 %v466
  %v1719 = vunpack.c.l.b16 %v467
  %v1720 = vunpack.c.l.b16 %v468
  %v1721 = vunpack.c.l.b16 %v469
  %v1722 = vunpack.c.l.b16 %v470
  %v1723 = vunpack.c.l.b16 %v471
  %v1724 = vunpack.c.l.b16 %v472
  %v1725 = vunpack.c.l.b16 %v473
  %v1726 = vunpack.c.l.b16 %v474
  %v1727 = vunpack.c.l.b16 %v475
  %v1728 = vunpack.c.l.b16 %v476
  %v1729 = vunpack.c.l.b16 %v477
  %v1730 = vunpack.c.l.b16 %v478
  %v1731 = vunpack.c.l.b16 %v479
  %v1732 = vunpack.c.l.b16 %v480
  %v1733 = vunpack.c.l.b16 %v481
  %v1734 = vunpack.c.l.b16 %v482
  %v1735 = vunpack.c.l.b16 %v483
  %v1736 = vunpack.c.l.b16 %v484
  %v1737 = vunpack.c.l.b16 %v485
  %v1738 = vunpack.c.l.b16 %v486
  %v1739 = vunpack.c.l.b16 %v487
  %v1740 = vunpack.c.l.b16 %v488
  %v1741 = vunpack.c.l.b16 %v489
  %v1742 = vunpack.c.l.b16 %v490
  %v1743 = vunpack.c.l.b16 %v491
  %v1744 = vunpack.c.l.b16 %v492
  %v1745 = vunpack.c.l.b16 %v493
  %v1746 = vunpack.c.l.b16 %v494
  %v1747 = vunpack.c.l.b16 %v495
  %v1748 = vunpack.c.l.b16 %v496
  %v1749 = vunpack.c.l.b16 %v497
  %v1750 = vunpack.c.l.b16 %v498
  %v1751 = vunpack.c.l.b16 %v499
  %v1752 = vpack.c.b16 %v1369, %v1368
  %v1753 = vpack.c.b16 %v1371, %v1370
  %v1754 = vpack.c.b16 %v1373, %v1372
  %v1755 = vpack.c.b16 %v1375, %v1374
  %v1756 = vpack.c.b16 %v1377, %v1376
  %v1757 = vpack.c.b16 %v1379, %v1378
  %v1758 = vpack.c.b16 %v1381, %v1380
  %v1759 = vpack.c.b16 %v1383, %v1382
  %v1760 = vpack.c.b16 %v1385, %v1384
  %v1761 = vpack.c.b16 %v1387, %v1386
  %v1762 = vpack.c.b16 %v1389, %v1388
  %v1763 = vpack.c.b16 %v1391, %v1390
  %v1764 = vpack.c.b16 %v1393, %v1392
  %v1765 = vpack.c.b16 %v1395, %v1394
  %v1766 = vpack.c.b16 %v1397, %v1396
  %v1767 = vpack.c.b16 %v1399, %v1398
  %v1768 = vpack.c.b16 %v1401, %v1400
  %v1769 = vpack.c.b16 %v1403, %v1402
  %v1770 = vpack.c.b16 %v1405, %v1404
  %v1771 = vpack.c.b16 %v1407, %v1406
  %v1772 = vpack.c.b16 %v1409, %v1408
  %v1773 = vpack.c.b16 %v1411, %v1410
  %v1774 = vpack.c.b16 %v1413, %v1412
  %v1775 = vpack.c.b16 %v1415, %v1414
  %v1776 = vpack.c.b16 %v1417, %v1416
  %v1777 = vpack.c.b16 %v1419, %v1418
  %v1778 = vpack.c.b16 %v1421, %v1420
  %v1779 = vpack.c.b16 %v1423, %v1422
  %v1780 = vpack.c.b16 %v1425, %v1424
  %v1781 = vpack.c.b16 %v1427, %v1426
  %v1782 = vpack.c.b16 %v1429, %v1428
  %v1783 = vpack.c.b16 %v1431, %v1430
  %v1784 = vpack.c.b16 %v1433, %v1432
  %v1785 = vpack.c.b16 %v1435, %v1434
  %v1786 = vpack.c.b16 %v1437, %v1436
  %v1787 = vpack.c.b16 %v1439, %v1438
  %v1788 = vpack.c.b16 %v1441, %v1440
  %v1789 = vpack.c.b16 %v1443, %v1442
  %v1790 = vpack.c.b16 %v1445, %v1444
  %v1791 = vpack.c.b16 %v1447, %v1446
  %v1792 = vpack.c.b16 %v1449, %v1448
  %v1793 = vpack.c.b16 %v1451, %v1450
  %v1794 = vpack.c.b16 %v1453, %v1452
  %v1795 = vpack.c.b16 %v1455, %v1454
  %v1796 = vpack.c.b16 %v1457, %v1456
  %v1797 = vpack.c.b16 %v1459, %v1458
  %v1798 = vpack.c.b16 %v1461, %v1460
  %v1799 = vpack.c.b16 %v1463, %v1462
  %v1800 = vpack.c.b16 %v1465, %v1464
  %v1801 = vpack.c.b16 %v1467, %v1466
  %v1802 = vpack.c.b16 %v1469, %v1468
  %v1803 = vpack.c.b16 %v1471, %v1470
  %v1804 = vpack.c.b16 %v1473, %v1472
  %v1805 = vpack.c.b16 %v1475, %v1474
  %v1806 = vpack.c.b16 %v1477, %v1476
  %v1807 = vpack.c.b16 %v1479, %v1478
  %v1808 = vpack.c.b16 %v1481, %v1480
  %v1809 = vpack.c.b16 %v1483, %v1482
  %v1810 = vpack.c.b16 %v1485, %v1484
  %v1811 = vpack.c.b16 %v1487, %v1486
  %v1812 = vpack.c.b16 %v1489, %v1488
  %v1813 = vpack.c.b16 %v1491, %v1490
  %v1814 = vpack.c.b16 %v1493, %v1492
  %v1815 = vpack.c.b16 %v1495, %v1494
  %v1816 = vpack.c.b16 %v1497, %v1496
  %v1817 = vpack.c.b16 %v1499, %v1498
  %v1818 = vpack.c.b16 %v1501, %v1500
  %v1819 = vpack.c.b16 %v1503, %v1502
  %v1820 = vpack.c.b16 %v1505, %v1504
  %v1821 = vpack.c.b16 %v1507, %v1506
  %v1822 = vpack.c.b16 %v1509, %v1508
  %v1823 = vpack.c.b16 %v1511, %v1510
  %v1824 = vpack.c.b16 %v1513, %v1512
  %v1825 = vpack.c.b16 %v1515, %v1514
  %v1826 = vpack.c.b16 %v1517, %v1516
  %v1827 = vpack.c.b16 %v1519, %v1518
  %v1828 = vpack.c.b16 %v1521, %v1520
  %v1829 = vpack.c.b16 %v1523, %v1522
  %v1830 = vpack.c.b16 %v1525, %v1524
  %v1831 = vpack.c.b16 %v1527, %v1526
  %v1832 = vpack.c.b16 %v1529, %v1528
  %v1833 = vpack.c.b16 %v1531, %v1530
  %v1834 = vpack.c.b16 %v1533, %v1532
  %v1835 = vpack.c.b16 %v1535, %v1534
  %v1836 = vpack.c.b16 %v1537, %v1536
  %v1837 = vpack.c.b16 %v1539, %v1538
  %v1838 = vpack.c.b16 %v1541, %v1540
  %v1839 = vpack.c.b16 %v1543, %v1542
  %v1840 = vpack.c.b16 %v1545, %v1544
  %v1841 = vpack.c.b16 %v1547, %v1546
  %v1842 = vpack.c.b16 %v1549, %v1548
  %v1843 = vpack.c.b16 %v1551, %v1550
  %v1844 = vpack.c.b16 %v1553, %v1552
  %v1845 = vpack.c.b16 %v1555, %v1554
  %v1846 = vpack.c.b16 %v1557, %v1556
  %v1847 = vpack.c.b16 %v1559, %v1558
  %v1848 = vpack.c.b16 %v1561, %v1560
  %v1849 = vpack.c.b16 %v1563, %v1562
  %v1850 = vpack.c.b16 %v1565, %v1564
  %v1851 = vpack.c.b16 %v1567, %v1566
  %v1852 = vpack.c.b16 %v1569, %v1568
  %v1853 = vpack.c.b16 %v1571, %v1570
  %v1854 = vpack.c.b16 %v1573, %v1572
  %v1855 = vpack.c.b16 %v1575, %v1574
  %v1856 = vpack.c.b16 %v1577, %v1576
  %v1857 = vpack.c.b16 %v1579, %v1578
  %v1858 = vpack.c.b16 %v1581, %v1580
  %v1859 = vpack.c.b16 %v1583, %v1582
  %v1860 = vpack.c.b16 %v1585, %v1584
  %v1861 = vpack.c.b16 %v1587, %v1586
  %v1862 = vpack.c.b16 %v1589, %v1588
  %v1863 = vpack.c.b16 %v1591, %v1590
  %v1864 = vpack.c.b16 %v1593, %v1592
  %v1865 = vpack.c.b16 %v1595, %v1594
  %v1866 = vpack.c.b16 %v1597, %v1596
  %v1867 = vpack.c.b16 %v1599, %v1598
  %v1868 = vpack.c.b16 %v1601, %v1600
  %v1869 = vpack.c.b16 %v1603, %v1602
  %v1870 = vpack.c.b16 %v1605, %v1604
  %v1871 = vpack.c.b16 %v1607, %v1606
  %v1872 = vpack.c.b16 %v1609, %v1608
  %v1873 = vpack.c.b16 %v1611, %v1610
  %v1874 = vpack.c.b16 %v1613, %v1612
  %v1875 = vpack.c.b16 %v1615, %v1614
  %v1876 = vpack.c.b16 %v1617, %v1616
  %v1877 = vpack.c.b16 %v1619, %v1618
  %v1878 = vpack.c.b16 %v1621, %v1620
  %v1879 = vpack.c.b16 %v1623, %v1622
  %v1880 = vpack.c.b16 %v1625, %v1624
  %v1881 = vpack.c.b16 %v1627, %v1626
  %v1882 = vpack.c.b16 %v1629, %v1628
  %v1883 = vpack.c.b16 %v1631, %v1630
  %v1884 = vpack.c.b16 %v1633, %v1632
  %v1885 = vpack.c.b16 %v1635, %v1634
  %v1886 = vpack.c.b16 %v1637, %v1636
  %v1887 = vpack.c.b16 %v1639, %v1638
  %v1888 = vpack.c.b16 %v1641, %v1640
  %v1889 = vpack.c.b16 %v1643, %v1642
  %v1890 = vpack.c.b16 %v1645, %v1644
  %v1891 = vpack.c.b16 %v1647, %v1646
  %v1892 = vpack.c.b16 %v1649, %v1648
  %v1893 = vpack.c.b16 %v1651, %v1650
  %v1894 = vpack.c.b16 %v1653, %v1652
  %v1895 = vpack.c.b16 %v1655, %v1654
  %v1896 = vpack.c.b16 %v1657, %v1656
  %v1897 = vpack.c.b16 %v1659, %v1658
  %v1898 = vpack.c.b16 %v1661, %v1660
  %v1899 = vpack.c.b16 %v1663, %v1662
  %v1900 = vpack.c.b16 %v1665, %v1664
  %v1901 = vpack.c.b16 %v1667, %v1666
  %v1902 = vpack.c.b16 %v1669, %v1668
  %v1903 = vpack.c.b16 %v1671, %v1670
  %v1904 = vpack.c.b16 %v1673, %v1672
  %v1905 = vpack.c.b16 %v1675, %v1674
  %v1906 = vpack.c.b16 %v1677, %v1676
  %v1907 = vpack.c.b16 %v1679, %v1678
  %v1908 = vpack.c.b16 %v1681, %v1680
  %v1909 = vpack.c.b16 %v1683, %v1682
  %v1910 = vpack.c.b16 %v1685, %v1684
  %v1911 = vpack.c.b16 %v1687, %v1686
  %v1912 = vpack.c.b16 %v1689, %v1688
  %v1913 = vpack.c.b16 %v1691, %v1690
  %v1914 = vpack.c.b16 %v1693, %v1692
  %v1915 = vpack.c.b16 %v1695, %v1694
  %v1916 = vpack.c.b16 %v1697, %v1696
  %v1917 = vpack.c.b16 %v1699, %v1698
  %v1918 = vpack.c.b16 %v1701, %v1700
  %v1919 = vpack.c.b16 %v1703, %v1702
  %v1920 = vpack.c.b16 %v1705, %v1704
  %v1921 = vpack.c.b16 %v1707, %v1706
  %v1922 = vpack.c.b16 %v1709, %v1708
  %v1923 = vpack.c.b16 %v1711, %v1710
  %v1924 = vpack.c.b16 %v1713, %v1712
  %v1925 = vpack.c.b16 %v1715, %v1714
  %v1926 = vpack.c.b16 %v1717, %v1716
  %v1927 = vpack.c.b16 %v1719, %v1718
  %v1928 = vpack.c.b16 %v1721, %v1720
  %v1929 = vpack.c.b16 %v1723, %v1722
  %v1930 = vpack.c.b16 %v1725, %v1724
  %v1931 = vpack.c.b16 %v1727, %v1726
  %v1932 = vpack.c.b16 %v1729, %v1728
  %v1933 = vpack.c.b16 %v1731, %v1730
  %v1934 = vpack.c.b16 %v1733, %v1732
  %v1935 = vpack.c.b16 %v1735, %v1734
  %v1936 = vpack.c.b16 %v1737, %v1736
  %v1937 = vpack.c.b16 %v1739, %v1738
  %v1938 = vpack.c.b16 %v1741, %v1740
  %v1939 = vpack.c.b16 %v1743, %v1742
  %v1940 = vpack.c.b16 %v1745, %v1744
  %v1941 = vpack.c.b16 %v1747, %v1746
  %v1942 = vpack.c.b16 %v1749, %v1748
  %v1943 = vpack.c.b16 %v1751, %v1750
  %2136 = vmatpush.bf16.msra.mxu0 %v1759
  %2137 = vmatpush.bf16.msra.mxu0 %v1758
  %2138 = vmatpush.bf16.msra.mxu0 %v1757
  %2139 = vmatpush.bf16.msra.mxu0 %v1756
  %2140 = vmatpush.bf16.msra.mxu0 %v1755
  %2141 = vmatpush.bf16.msra.mxu0 %v1754
  %2142 = vmatpush.bf16.msra.mxu0 %v1753
  %2143 = vmatpush.bf16.msra.mxu0 %v1752
  %2144 = vmatmul.bf16.gmra.mxu0 %v792
  %v2145 = vpop.f32.mrf.mxu0
  %v2146 = vadd.f32 %v502, %v2145
  %v2147 = vpop.f32.mrf.mxu0
  %v2148 = vadd.f32 %v502, %v2147
  %2149 = vmatmul.bf16.gmra.mxu0 %v816
  %v2150 = vpop.f32.mrf.mxu0
  %v2151 = vadd.f32 %v502, %v2150
  %v2152 = vpop.f32.mrf.mxu0
  %v2153 = vadd.f32 %v502, %v2152
  %2154 = vmatmul.bf16.gmra.mxu0 %v840
  %v2155 = vpop.f32.mrf.mxu0
  %v2156 = vadd.f32 %v502, %v2155
  %v2157 = vpop.f32.mrf.mxu0
  %v2158 = vadd.f32 %v502, %v2157
  %2159 = vmatmul.bf16.gmra.mxu0 %v864
  %v2160 = vpop.f32.mrf.mxu0
  %v2161 = vadd.f32 %v502, %v2160
  %v2162 = vpop.f32.mrf.mxu0
  %v2163 = vadd.f32 %v502, %v2162
  %2164 = vdwg.mxu0
  %2165 = vmatpush.bf16.msra.mxu0 %v1767
  %2166 = vmatpush.bf16.msra.mxu0 %v1766
  %2167 = vmatpush.bf16.msra.mxu0 %v1765
  %2168 = vmatpush.bf16.msra.mxu0 %v1764
  %2169 = vmatpush.bf16.msra.mxu0 %v1763
  %2170 = vmatpush.bf16.msra.mxu0 %v1762
  %2171 = vmatpush.bf16.msra.mxu0 %v1761
  %2172 = vmatpush.bf16.msra.mxu0 %v1760
  %2173 = vmatmul.bf16.gmra.mxu0 %v793
  %v2174 = vpop.f32.mrf.mxu0
  %v2175 = vadd.f32 %v2146, %v2174
  %v2176 = vpop.f32.mrf.mxu0
  %v2177 = vadd.f32 %v2148, %v2176
  %2178 = vmatmul.bf16.gmra.mxu0 %v817
  %v2179 = vpop.f32.mrf.mxu0
  %v2180 = vadd.f32 %v2151, %v2179
  %v2181 = vpop.f32.mrf.mxu0
  %v2182 = vadd.f32 %v2153, %v2181
  %2183 = vmatmul.bf16.gmra.mxu0 %v841
  %v2184 = vpop.f32.mrf.mxu0
  %v2185 = vadd.f32 %v2156, %v2184
  %v2186 = vpop.f32.mrf.mxu0
  %v2187 = vadd.f32 %v2158, %v2186
  %2188 = vmatmul.bf16.gmra.mxu0 %v865
  %v2189 = vpop.f32.mrf.mxu0
  %v2190 = vadd.f32 %v2161, %v2189
  %v2191 = vpop.f32.mrf.mxu0
  %v2192 = vadd.f32 %v2163, %v2191
  %2193 = vdwg.mxu0
  %2194 = vmatpush.bf16.msra.mxu0 %v1775
  %2195 = vmatpush.bf16.msra.mxu0 %v1774
  %2196 = vmatpush.bf16.msra.mxu0 %v1773
  %2197 = vmatpush.bf16.msra.mxu0 %v1772
  %2198 = vmatpush.bf16.msra.mxu0 %v1771
  %2199 = vmatpush.bf16.msra.mxu0 %v1770
  %2200 = vmatpush.bf16.msra.mxu0 %v1769
  %2201 = vmatpush.bf16.msra.mxu0 %v1768
  %2202 = vmatmul.bf16.gmra.mxu0 %v794
  %v2203 = vpop.f32.mrf.mxu0
  %v2204 = vadd.f32 %v2175, %v2203
  %v2205 = vpop.f32.mrf.mxu0
  %v2206 = vadd.f32 %v2177, %v2205
  %2207 = vmatmul.bf16.gmra.mxu0 %v818
  %v2208 = vpop.f32.mrf.mxu0
  %v2209 = vadd.f32 %v2180, %v2208
  %v2210 = vpop.f32.mrf.mxu0
  %v2211 = vadd.f32 %v2182, %v2210
  %2212 = vmatmul.bf16.gmra.mxu0 %v842
  %v2213 = vpop.f32.mrf.mxu0
  %v2214 = vadd.f32 %v2185, %v2213
  %v2215 = vpop.f32.mrf.mxu0
  %v2216 = vadd.f32 %v2187, %v2215
  %2217 = vmatmul.bf16.gmra.mxu0 %v866
  %v2218 = vpop.f32.mrf.mxu0
  %v2219 = vadd.f32 %v2190, %v2218
  %v2220 = vpop.f32.mrf.mxu0
  %v2221 = vadd.f32 %v2192, %v2220
  %2222 = vdwg.mxu0
  %2223 = vmatpush.bf16.msra.mxu0 %v1783
  %2224 = vmatpush.bf16.msra.mxu0 %v1782
  %2225 = vmatpush.bf16.msra.mxu0 %v1781
  %2226 = vmatpush.bf16.msra.mxu0 %v1780
  %2227 = vmatpush.bf16.msra.mxu0 %v1779
  %2228 = vmatpush.bf16.msra.mxu0 %v1778
  %2229 = vmatpush.bf16.msra.mxu0 %v1777
  %2230 = vmatpush.bf16.msra.mxu0 %v1776
  %2231 = vmatmul.bf16.gmra.mxu0 %v795
  %v2232 = vpop.f32.mrf.mxu0
  %v2233 = vadd.f32 %v2204, %v2232
  %v2234 = vpop.f32.mrf.mxu0
  %v2235 = vadd.f32 %v2206, %v2234
  %2236 = vmatmul.bf16.gmra.mxu0 %v819
  %v2237 = vpop.f32.mrf.mxu0
  %v2238 = vadd.f32 %v2209, %v2237
  %v2239 = vpop.f32.mrf.mxu0
  %v2240 = vadd.f32 %v2211, %v2239
  %2241 = vmatmul.bf16.gmra.mxu0 %v843
  %v2242 = vpop.f32.mrf.mxu0
  %v2243 = vadd.f32 %v2214, %v2242
  %v2244 = vpop.f32.mrf.mxu0
  %v2245 = vadd.f32 %v2216, %v2244
  %2246 = vmatmul.bf16.gmra.mxu0 %v867
  %v2247 = vpop.f32.mrf.mxu0
  %v2248 = vadd.f32 %v2219, %v2247
  %v2249 = vpop.f32.mrf.mxu0
  %v2250 = vadd.f32 %v2221, %v2249
  %2251 = vdwg.mxu0
  %2252 = vmatpush.bf16.msra.mxu0 %v1791
  %2253 = vmatpush.bf16.msra.mxu0 %v1790
  %2254 = vmatpush.bf16.msra.mxu0 %v1789
  %2255 = vmatpush.bf16.msra.mxu0 %v1788
  %2256 = vmatpush.bf16.msra.mxu0 %v1787
  %2257 = vmatpush.bf16.msra.mxu0 %v1786
  %2258 = vmatpush.bf16.msra.mxu0 %v1785
  %2259 = vmatpush.bf16.msra.mxu0 %v1784
  %2260 = vmatmul.bf16.gmra.mxu0 %v796
  %v2261 = vpop.f32.mrf.mxu0
  %v2262 = vadd.f32 %v2233, %v2261
  %v2263 = vpop.f32.mrf.mxu0
  %v2264 = vadd.f32 %v2235, %v2263
  %2265 = vmatmul.bf16.gmra.mxu0 %v820
  %v2266 = vpop.f32.mrf.mxu0
  %v2267 = vadd.f32 %v2238, %v2266
  %v2268 = vpop.f32.mrf.mxu0
  %v2269 = vadd.f32 %v2240, %v2268
  %2270 = vmatmul.bf16.gmra.mxu0 %v844
  %v2271 = vpop.f32.mrf.mxu0
  %v2272 = vadd.f32 %v2243, %v2271
  %v2273 = vpop.f32.mrf.mxu0
  %v2274 = vadd.f32 %v2245, %v2273
  %2275 = vmatmul.bf16.gmra.mxu0 %v868
  %v2276 = vpop.f32.mrf.mxu0
  %v2277 = vadd.f32 %v2248, %v2276
  %v2278 = vpop.f32.mrf.mxu0
  %v2279 = vadd.f32 %v2250, %v2278
  %2280 = vdwg.mxu0
  %2281 = vmatpush.bf16.msra.mxu0 %v1799
  %2282 = vmatpush.bf16.msra.mxu0 %v1798
  %2283 = vmatpush.bf16.msra.mxu0 %v1797
  %2284 = vmatpush.bf16.msra.mxu0 %v1796
  %2285 = vmatpush.bf16.msra.mxu0 %v1795
  %2286 = vmatpush.bf16.msra.mxu0 %v1794
  %2287 = vmatpush.bf16.msra.mxu0 %v1793
  %2288 = vmatpush.bf16.msra.mxu0 %v1792
  %2289 = vmatmul.bf16.gmra.mxu0 %v797
  %v2290 = vpop.f32.mrf.mxu0
  %v2291 = vadd.f32 %v2262, %v2290
  %v2292 = vpop.f32.mrf.mxu0
  %v2293 = vadd.f32 %v2264, %v2292
  %2294 = vmatmul.bf16.gmra.mxu0 %v821
  %v2295 = vpop.f32.mrf.mxu0
  %v2296 = vadd.f32 %v2267, %v2295
  %v2297 = vpop.f32.mrf.mxu0
  %v2298 = vadd.f32 %v2269, %v2297
  %2299 = vmatmul.bf16.gmra.mxu0 %v845
  %v2300 = vpop.f32.mrf.mxu0
  %v2301 = vadd.f32 %v2272, %v2300
  %v2302 = vpop.f32.mrf.mxu0
  %v2303 = vadd.f32 %v2274, %v2302
  %2304 = vmatmul.bf16.gmra.mxu0 %v869
  %v2305 = vpop.f32.mrf.mxu0
  %v2306 = vadd.f32 %v2277, %v2305
  %v2307 = vpop.f32.mrf.mxu0
  %v2308 = vadd.f32 %v2279, %v2307
  %2309 = vdwg.mxu0
  %2310 = vmatpush.bf16.msra.mxu0 %v1807
  %2311 = vmatpush.bf16.msra.mxu0 %v1806
  %2312 = vmatpush.bf16.msra.mxu0 %v1805
  %2313 = vmatpush.bf16.msra.mxu0 %v1804
  %2314 = vmatpush.bf16.msra.mxu0 %v1803
  %2315 = vmatpush.bf16.msra.mxu0 %v1802
  %2316 = vmatpush.bf16.msra.mxu0 %v1801
  %2317 = vmatpush.bf16.msra.mxu0 %v1800
  %2318 = vmatmul.bf16.gmra.mxu0 %v798
  %v2319 = vpop.f32.mrf.mxu0
  %v2320 = vadd.f32 %v2291, %v2319
  %v2321 = vpop.f32.mrf.mxu0
  %v2322 = vadd.f32 %v2293, %v2321
  %2323 = vmatmul.bf16.gmra.mxu0 %v822
  %v2324 = vpop.f32.mrf.mxu0
  %v2325 = vadd.f32 %v2296, %v2324
  %v2326 = vpop.f32.mrf.mxu0
  %v2327 = vadd.f32 %v2298, %v2326
  %2328 = vmatmul.bf16.gmra.mxu0 %v846
  %v2329 = vpop.f32.mrf.mxu0
  %v2330 = vadd.f32 %v2301, %v2329
  %v2331 = vpop.f32.mrf.mxu0
  %v2332 = vadd.f32 %v2303, %v2331
  %2333 = vmatmul.bf16.gmra.mxu0 %v870
  %v2334 = vpop.f32.mrf.mxu0
  %v2335 = vadd.f32 %v2306, %v2334
  %v2336 = vpop.f32.mrf.mxu0
  %v2337 = vadd.f32 %v2308, %v2336
  %2338 = vdwg.mxu0
  %2339 = vmatpush.bf16.msra.mxu0 %v1815
  %2340 = vmatpush.bf16.msra.mxu0 %v1814
  %2341 = vmatpush.bf16.msra.mxu0 %v1813
  %2342 = vmatpush.bf16.msra.mxu0 %v1812
  %2343 = vmatpush.bf16.msra.mxu0 %v1811
  %2344 = vmatpush.bf16.msra.mxu0 %v1810
  %2345 = vmatpush.bf16.msra.mxu0 %v1809
  %2346 = vmatpush.bf16.msra.mxu0 %v1808
  %2347 = vmatmul.bf16.gmra.mxu0 %v799
  %v2348 = vpop.f32.mrf.mxu0
  %v2349 = vadd.f32 %v2320, %v2348
  %v2350 = vpop.f32.mrf.mxu0
  %v2351 = vadd.f32 %v2322, %v2350
  %2352 = vmatmul.bf16.gmra.mxu0 %v823
  %v2353 = vpop.f32.mrf.mxu0
  %v2354 = vadd.f32 %v2325, %v2353
  %v2355 = vpop.f32.mrf.mxu0
  %v2356 = vadd.f32 %v2327, %v2355
  %2357 = vmatmul.bf16.gmra.mxu0 %v847
  %v2358 = vpop.f32.mrf.mxu0
  %v2359 = vadd.f32 %v2330, %v2358
  %v2360 = vpop.f32.mrf.mxu0
  %v2361 = vadd.f32 %v2332, %v2360
  %2362 = vmatmul.bf16.gmra.mxu0 %v871
  %v2363 = vpop.f32.mrf.mxu0
  %v2364 = vadd.f32 %v2335, %v2363
  %v2365 = vpop.f32.mrf.mxu0
  %v2366 = vadd.f32 %v2337, %v2365
  %2367 = vdwg.mxu0
  %2368 = vmatpush.bf16.msra.mxu0 %v1823
  %2369 = vmatpush.bf16.msra.mxu0 %v1822
  %2370 = vmatpush.bf16.msra.mxu0 %v1821
  %2371 = vmatpush.bf16.msra.mxu0 %v1820
  %2372 = vmatpush.bf16.msra.mxu0 %v1819
  %2373 = vmatpush.bf16.msra.mxu0 %v1818
  %2374 = vmatpush.bf16.msra.mxu0 %v1817
  %2375 = vmatpush.bf16.msra.mxu0 %v1816
  %2376 = vmatmul.bf16.gmra.mxu0 %v800
  %v2377 = vpop.f32.mrf.mxu0
  %v2378 = vadd.f32 %v2349, %v2377
  %v2379 = vpop.f32.mrf.mxu0
  %v2380 = vadd.f32 %v2351, %v2379
  %2381 = vmatmul.bf16.gmra.mxu0 %v824
  %v2382 = vpop.f32.mrf.mxu0
  %v2383 = vadd.f32 %v2354, %v2382
  %v2384 = vpop.f32.mrf.mxu0
  %v2385 = vadd.f32 %v2356, %v2384
  %2386 = vmatmul.bf16.gmra.mxu0 %v848
  %v2387 = vpop.f32.mrf.mxu0
  %v2388 = vadd.f32 %v2359, %v2387
  %v2389 = vpop.f32.mrf.mxu0
  %v2390 = vadd.f32 %v2361, %v2389
  %2391 = vmatmul.bf16.gmra.mxu0 %v872
  %v2392 = vpop.f32.mrf.mxu0
  %v2393 = vadd.f32 %v2364, %v2392
  %v2394 = vpop.f32.mrf.mxu0
  %v2395 = vadd.f32 %v2366, %v2394
  %2396 = vdwg.mxu0
  %2397 = vmatpush.bf16.msra.mxu0 %v1831
  %2398 = vmatpush.bf16.msra.mxu0 %v1830
  %2399 = vmatpush.bf16.msra.mxu0 %v1829
  %2400 = vmatpush.bf16.msra.mxu0 %v1828
  %2401 = vmatpush.bf16.msra.mxu0 %v1827
  %2402 = vmatpush.bf16.msra.mxu0 %v1826
  %2403 = vmatpush.bf16.msra.mxu0 %v1825
  %2404 = vmatpush.bf16.msra.mxu0 %v1824
  %2405 = vmatmul.bf16.gmra.mxu0 %v801
  %v2406 = vpop.f32.mrf.mxu0
  %v2407 = vadd.f32 %v2378, %v2406
  %v2408 = vpop.f32.mrf.mxu0
  %v2409 = vadd.f32 %v2380, %v2408
  %2410 = vmatmul.bf16.gmra.mxu0 %v825
  %v2411 = vpop.f32.mrf.mxu0
  %v2412 = vadd.f32 %v2383, %v2411
  %v2413 = vpop.f32.mrf.mxu0
  %v2414 = vadd.f32 %v2385, %v2413
  %2415 = vmatmul.bf16.gmra.mxu0 %v849
  %v2416 = vpop.f32.mrf.mxu0
  %v2417 = vadd.f32 %v2388, %v2416
  %v2418 = vpop.f32.mrf.mxu0
  %v2419 = vadd.f32 %v2390, %v2418
  %2420 = vmatmul.bf16.gmra.mxu0 %v873
  %v2421 = vpop.f32.mrf.mxu0
  %v2422 = vadd.f32 %v2393, %v2421
  %v2423 = vpop.f32.mrf.mxu0
  %v2424 = vadd.f32 %v2395, %v2423
  %2425 = vdwg.mxu0
  %2426 = vmatpush.bf16.msra.mxu0 %v1839
  %2427 = vmatpush.bf16.msra.mxu0 %v1838
  %2428 = vmatpush.bf16.msra.mxu0 %v1837
  %2429 = vmatpush.bf16.msra.mxu0 %v1836
  %2430 = vmatpush.bf16.msra.mxu0 %v1835
  %2431 = vmatpush.bf16.msra.mxu0 %v1834
  %2432 = vmatpush.bf16.msra.mxu0 %v1833
  %2433 = vmatpush.bf16.msra.mxu0 %v1832
  %2434 = vmatmul.bf16.gmra.mxu0 %v802
  %v2435 = vpop.f32.mrf.mxu0
  %v2436 = vadd.f32 %v2407, %v2435
  %v2437 = vpop.f32.mrf.mxu0
  %v2438 = vadd.f32 %v2409, %v2437
  %2439 = vmatmul.bf16.gmra.mxu0 %v826
  %v2440 = vpop.f32.mrf.mxu0
  %v2441 = vadd.f32 %v2412, %v2440
  %v2442 = vpop.f32.mrf.mxu0
  %v2443 = vadd.f32 %v2414, %v2442
  %2444 = vmatmul.bf16.gmra.mxu0 %v850
  %v2445 = vpop.f32.mrf.mxu0
  %v2446 = vadd.f32 %v2417, %v2445
  %v2447 = vpop.f32.mrf.mxu0
  %v2448 = vadd.f32 %v2419, %v2447
  %2449 = vmatmul.bf16.gmra.mxu0 %v874
  %v2450 = vpop.f32.mrf.mxu0
  %v2451 = vadd.f32 %v2422, %v2450
  %v2452 = vpop.f32.mrf.mxu0
  %v2453 = vadd.f32 %v2424, %v2452
  %2454 = vdwg.mxu0
  %2455 = vmatpush.bf16.msra.mxu0 %v1847
  %2456 = vmatpush.bf16.msra.mxu0 %v1846
  %2457 = vmatpush.bf16.msra.mxu0 %v1845
  %2458 = vmatpush.bf16.msra.mxu0 %v1844
  %2459 = vmatpush.bf16.msra.mxu0 %v1843
  %2460 = vmatpush.bf16.msra.mxu0 %v1842
  %2461 = vmatpush.bf16.msra.mxu0 %v1841
  %2462 = vmatpush.bf16.msra.mxu0 %v1840
  %2463 = vmatmul.bf16.gmra.mxu0 %v803
  %v2464 = vpop.f32.mrf.mxu0
  %v2465 = vadd.f32 %v2436, %v2464
  %v2466 = vpop.f32.mrf.mxu0
  %v2467 = vadd.f32 %v2438, %v2466
  %2468 = vmatmul.bf16.gmra.mxu0 %v827
  %v2469 = vpop.f32.mrf.mxu0
  %v2470 = vadd.f32 %v2441, %v2469
  %v2471 = vpop.f32.mrf.mxu0
  %v2472 = vadd.f32 %v2443, %v2471
  %2473 = vmatmul.bf16.gmra.mxu0 %v851
  %v2474 = vpop.f32.mrf.mxu0
  %v2475 = vadd.f32 %v2446, %v2474
  %v2476 = vpop.f32.mrf.mxu0
  %v2477 = vadd.f32 %v2448, %v2476
  %2478 = vmatmul.bf16.gmra.mxu0 %v875
  %v2479 = vpop.f32.mrf.mxu0
  %v2480 = vadd.f32 %v2451, %v2479
  %v2481 = vpop.f32.mrf.mxu0
  %v2482 = vadd.f32 %v2453, %v2481
  %2483 = vdwg.mxu0
  %2484 = vmatpush.bf16.msra.mxu0 %v1855
  %2485 = vmatpush.bf16.msra.mxu0 %v1854
  %2486 = vmatpush.bf16.msra.mxu0 %v1853
  %2487 = vmatpush.bf16.msra.mxu0 %v1852
  %2488 = vmatpush.bf16.msra.mxu0 %v1851
  %2489 = vmatpush.bf16.msra.mxu0 %v1850
  %2490 = vmatpush.bf16.msra.mxu0 %v1849
  %2491 = vmatpush.bf16.msra.mxu0 %v1848
  %2492 = vmatmul.bf16.gmra.mxu0 %v804
  %v2493 = vpop.f32.mrf.mxu0
  %v2494 = vadd.f32 %v2465, %v2493
  %v2495 = vpop.f32.mrf.mxu0
  %v2496 = vadd.f32 %v2467, %v2495
  %2497 = vmatmul.bf16.gmra.mxu0 %v828
  %v2498 = vpop.f32.mrf.mxu0
  %v2499 = vadd.f32 %v2470, %v2498
  %v2500 = vpop.f32.mrf.mxu0
  %v2501 = vadd.f32 %v2472, %v2500
  %2502 = vmatmul.bf16.gmra.mxu0 %v852
  %v2503 = vpop.f32.mrf.mxu0
  %v2504 = vadd.f32 %v2475, %v2503
  %v2505 = vpop.f32.mrf.mxu0
  %v2506 = vadd.f32 %v2477, %v2505
  %2507 = vmatmul.bf16.gmra.mxu0 %v876
  %v2508 = vpop.f32.mrf.mxu0
  %v2509 = vadd.f32 %v2480, %v2508
  %v2510 = vpop.f32.mrf.mxu0
  %v2511 = vadd.f32 %v2482, %v2510
  %2512 = vdwg.mxu0
  %2513 = vmatpush.bf16.msra.mxu0 %v1863
  %2514 = vmatpush.bf16.msra.mxu0 %v1862
  %2515 = vmatpush.bf16.msra.mxu0 %v1861
  %2516 = vmatpush.bf16.msra.mxu0 %v1860
  %2517 = vmatpush.bf16.msra.mxu0 %v1859
  %2518 = vmatpush.bf16.msra.mxu0 %v1858
  %2519 = vmatpush.bf16.msra.mxu0 %v1857
  %2520 = vmatpush.bf16.msra.mxu0 %v1856
  %2521 = vmatmul.bf16.gmra.mxu0 %v805
  %v2522 = vpop.f32.mrf.mxu0
  %v2523 = vadd.f32 %v2494, %v2522
  %v2524 = vpop.f32.mrf.mxu0
  %v2525 = vadd.f32 %v2496, %v2524
  %2526 = vmatmul.bf16.gmra.mxu0 %v829
  %v2527 = vpop.f32.mrf.mxu0
  %v2528 = vadd.f32 %v2499, %v2527
  %v2529 = vpop.f32.mrf.mxu0
  %v2530 = vadd.f32 %v2501, %v2529
  %2531 = vmatmul.bf16.gmra.mxu0 %v853
  %v2532 = vpop.f32.mrf.mxu0
  %v2533 = vadd.f32 %v2504, %v2532
  %v2534 = vpop.f32.mrf.mxu0
  %v2535 = vadd.f32 %v2506, %v2534
  %2536 = vmatmul.bf16.gmra.mxu0 %v877
  %v2537 = vpop.f32.mrf.mxu0
  %v2538 = vadd.f32 %v2509, %v2537
  %v2539 = vpop.f32.mrf.mxu0
  %v2540 = vadd.f32 %v2511, %v2539
  %2541 = vdwg.mxu0
  %2542 = vmatpush.bf16.msra.mxu0 %v1871
  %2543 = vmatpush.bf16.msra.mxu0 %v1870
  %2544 = vmatpush.bf16.msra.mxu0 %v1869
  %2545 = vmatpush.bf16.msra.mxu0 %v1868
  %2546 = vmatpush.bf16.msra.mxu0 %v1867
  %2547 = vmatpush.bf16.msra.mxu0 %v1866
  %2548 = vmatpush.bf16.msra.mxu0 %v1865
  %2549 = vmatpush.bf16.msra.mxu0 %v1864
  %2550 = vmatmul.bf16.gmra.mxu0 %v806
  %v2551 = vpop.f32.mrf.mxu0
  %v2552 = vadd.f32 %v2523, %v2551
  %v2553 = vpop.f32.mrf.mxu0
  %v2554 = vadd.f32 %v2525, %v2553
  %2555 = vmatmul.bf16.gmra.mxu0 %v830
  %v2556 = vpop.f32.mrf.mxu0
  %v2557 = vadd.f32 %v2528, %v2556
  %v2558 = vpop.f32.mrf.mxu0
  %v2559 = vadd.f32 %v2530, %v2558
  %2560 = vmatmul.bf16.gmra.mxu0 %v854
  %v2561 = vpop.f32.mrf.mxu0
  %v2562 = vadd.f32 %v2533, %v2561
  %v2563 = vpop.f32.mrf.mxu0
  %v2564 = vadd.f32 %v2535, %v2563
  %2565 = vmatmul.bf16.gmra.mxu0 %v878
  %v2566 = vpop.f32.mrf.mxu0
  %v2567 = vadd.f32 %v2538, %v2566
  %v2568 = vpop.f32.mrf.mxu0
  %v2569 = vadd.f32 %v2540, %v2568
  %2570 = vdwg.mxu0
  %2571 = vmatpush.bf16.msra.mxu0 %v1879
  %2572 = vmatpush.bf16.msra.mxu0 %v1878
  %2573 = vmatpush.bf16.msra.mxu0 %v1877
  %2574 = vmatpush.bf16.msra.mxu0 %v1876
  %2575 = vmatpush.bf16.msra.mxu0 %v1875
  %2576 = vmatpush.bf16.msra.mxu0 %v1874
  %2577 = vmatpush.bf16.msra.mxu0 %v1873
  %2578 = vmatpush.bf16.msra.mxu0 %v1872
  %2579 = vmatmul.bf16.gmra.mxu0 %v807
  %v2580 = vpop.f32.mrf.mxu0
  %v2581 = vadd.f32 %v2552, %v2580
  %v2582 = vpop.f32.mrf.mxu0
  %v2583 = vadd.f32 %v2554, %v2582
  %2584 = vmatmul.bf16.gmra.mxu0 %v831
  %v2585 = vpop.f32.mrf.mxu0
  %v2586 = vadd.f32 %v2557, %v2585
  %v2587 = vpop.f32.mrf.mxu0
  %v2588 = vadd.f32 %v2559, %v2587
  %2589 = vmatmul.bf16.gmra.mxu0 %v855
  %v2590 = vpop.f32.mrf.mxu0
  %v2591 = vadd.f32 %v2562, %v2590
  %v2592 = vpop.f32.mrf.mxu0
  %v2593 = vadd.f32 %v2564, %v2592
  %2594 = vmatmul.bf16.gmra.mxu0 %v879
  %v2595 = vpop.f32.mrf.mxu0
  %v2596 = vadd.f32 %v2567, %v2595
  %v2597 = vpop.f32.mrf.mxu0
  %v2598 = vadd.f32 %v2569, %v2597
  %2599 = vdwg.mxu0
  %2600 = vmatpush.bf16.msra.mxu0 %v1887
  %2601 = vmatpush.bf16.msra.mxu0 %v1886
  %2602 = vmatpush.bf16.msra.mxu0 %v1885
  %2603 = vmatpush.bf16.msra.mxu0 %v1884
  %2604 = vmatpush.bf16.msra.mxu0 %v1883
  %2605 = vmatpush.bf16.msra.mxu0 %v1882
  %2606 = vmatpush.bf16.msra.mxu0 %v1881
  %2607 = vmatpush.bf16.msra.mxu0 %v1880
  %2608 = vmatmul.bf16.gmra.mxu0 %v808
  %v2609 = vpop.f32.mrf.mxu0
  %v2610 = vadd.f32 %v2581, %v2609
  %v2611 = vpop.f32.mrf.mxu0
  %v2612 = vadd.f32 %v2583, %v2611
  %2613 = vmatmul.bf16.gmra.mxu0 %v832
  %v2614 = vpop.f32.mrf.mxu0
  %v2615 = vadd.f32 %v2586, %v2614
  %v2616 = vpop.f32.mrf.mxu0
  %v2617 = vadd.f32 %v2588, %v2616
  %2618 = vmatmul.bf16.gmra.mxu0 %v856
  %v2619 = vpop.f32.mrf.mxu0
  %v2620 = vadd.f32 %v2591, %v2619
  %v2621 = vpop.f32.mrf.mxu0
  %v2622 = vadd.f32 %v2593, %v2621
  %2623 = vmatmul.bf16.gmra.mxu0 %v880
  %v2624 = vpop.f32.mrf.mxu0
  %v2625 = vadd.f32 %v2596, %v2624
  %v2626 = vpop.f32.mrf.mxu0
  %v2627 = vadd.f32 %v2598, %v2626
  %2628 = vdwg.mxu0
  %2629 = vmatpush.bf16.msra.mxu0 %v1895
  %2630 = vmatpush.bf16.msra.mxu0 %v1894
  %2631 = vmatpush.bf16.msra.mxu0 %v1893
  %2632 = vmatpush.bf16.msra.mxu0 %v1892
  %2633 = vmatpush.bf16.msra.mxu0 %v1891
  %2634 = vmatpush.bf16.msra.mxu0 %v1890
  %2635 = vmatpush.bf16.msra.mxu0 %v1889
  %2636 = vmatpush.bf16.msra.mxu0 %v1888
  %2637 = vmatmul.bf16.gmra.mxu0 %v809
  %v2638 = vpop.f32.mrf.mxu0
  %v2639 = vadd.f32 %v2610, %v2638
  %v2640 = vpop.f32.mrf.mxu0
  %v2641 = vadd.f32 %v2612, %v2640
  %2642 = vmatmul.bf16.gmra.mxu0 %v833
  %v2643 = vpop.f32.mrf.mxu0
  %v2644 = vadd.f32 %v2615, %v2643
  %v2645 = vpop.f32.mrf.mxu0
  %v2646 = vadd.f32 %v2617, %v2645
  %2647 = vmatmul.bf16.gmra.mxu0 %v857
  %v2648 = vpop.f32.mrf.mxu0
  %v2649 = vadd.f32 %v2620, %v2648
  %v2650 = vpop.f32.mrf.mxu0
  %v2651 = vadd.f32 %v2622, %v2650
  %2652 = vmatmul.bf16.gmra.mxu0 %v881
  %v2653 = vpop.f32.mrf.mxu0
  %v2654 = vadd.f32 %v2625, %v2653
  %v2655 = vpop.f32.mrf.mxu0
  %v2656 = vadd.f32 %v2627, %v2655
  %2657 = vdwg.mxu0
  %2658 = vmatpush.bf16.msra.mxu0 %v1903
  %2659 = vmatpush.bf16.msra.mxu0 %v1902
  %2660 = vmatpush.bf16.msra.mxu0 %v1901
  %2661 = vmatpush.bf16.msra.mxu0 %v1900
  %2662 = vmatpush.bf16.msra.mxu0 %v1899
  %2663 = vmatpush.bf16.msra.mxu0 %v1898
  %2664 = vmatpush.bf16.msra.mxu0 %v1897
  %2665 = vmatpush.bf16.msra.mxu0 %v1896
  %2666 = vmatmul.bf16.gmra.mxu0 %v810
  %v2667 = vpop.f32.mrf.mxu0
  %v2668 = vadd.f32 %v2639, %v2667
  %v2669 = vpop.f32.mrf.mxu0
  %v2670 = vadd.f32 %v2641, %v2669
  %2671 = vmatmul.bf16.gmra.mxu0 %v834
  %v2672 = vpop.f32.mrf.mxu0
  %v2673 = vadd.f32 %v2644, %v2672
  %v2674 = vpop.f32.mrf.mxu0
  %v2675 = vadd.f32 %v2646, %v2674
  %2676 = vmatmul.bf16.gmra.mxu0 %v858
  %v2677 = vpop.f32.mrf.mxu0
  %v2678 = vadd.f32 %v2649, %v2677
  %v2679 = vpop.f32.mrf.mxu0
  %v2680 = vadd.f32 %v2651, %v2679
  %2681 = vmatmul.bf16.gmra.mxu0 %v882
  %v2682 = vpop.f32.mrf.mxu0
  %v2683 = vadd.f32 %v2654, %v2682
  %v2684 = vpop.f32.mrf.mxu0
  %v2685 = vadd.f32 %v2656, %v2684
  %2686 = vdwg.mxu0
  %2687 = vmatpush.bf16.msra.mxu0 %v1911
  %2688 = vmatpush.bf16.msra.mxu0 %v1910
  %2689 = vmatpush.bf16.msra.mxu0 %v1909
  %2690 = vmatpush.bf16.msra.mxu0 %v1908
  %2691 = vmatpush.bf16.msra.mxu0 %v1907
  %2692 = vmatpush.bf16.msra.mxu0 %v1906
  %2693 = vmatpush.bf16.msra.mxu0 %v1905
  %2694 = vmatpush.bf16.msra.mxu0 %v1904
  %2695 = vmatmul.bf16.gmra.mxu0 %v811
  %v2696 = vpop.f32.mrf.mxu0
  %v2697 = vadd.f32 %v2668, %v2696
  %v2698 = vpop.f32.mrf.mxu0
  %v2699 = vadd.f32 %v2670, %v2698
  %2700 = vmatmul.bf16.gmra.mxu0 %v835
  %v2701 = vpop.f32.mrf.mxu0
  %v2702 = vadd.f32 %v2673, %v2701
  %v2703 = vpop.f32.mrf.mxu0
  %v2704 = vadd.f32 %v2675, %v2703
  %2705 = vmatmul.bf16.gmra.mxu0 %v859
  %v2706 = vpop.f32.mrf.mxu0
  %v2707 = vadd.f32 %v2678, %v2706
  %v2708 = vpop.f32.mrf.mxu0
  %v2709 = vadd.f32 %v2680, %v2708
  %2710 = vmatmul.bf16.gmra.mxu0 %v883
  %v2711 = vpop.f32.mrf.mxu0
  %v2712 = vadd.f32 %v2683, %v2711
  %v2713 = vpop.f32.mrf.mxu0
  %v2714 = vadd.f32 %v2685, %v2713
  %2715 = vdwg.mxu0
  %2716 = vmatpush.bf16.msra.mxu0 %v1919
  %2717 = vmatpush.bf16.msra.mxu0 %v1918
  %2718 = vmatpush.bf16.msra.mxu0 %v1917
  %2719 = vmatpush.bf16.msra.mxu0 %v1916
  %2720 = vmatpush.bf16.msra.mxu0 %v1915
  %2721 = vmatpush.bf16.msra.mxu0 %v1914
  %2722 = vmatpush.bf16.msra.mxu0 %v1913
  %2723 = vmatpush.bf16.msra.mxu0 %v1912
  %2724 = vmatmul.bf16.gmra.mxu0 %v812
  %v2725 = vpop.f32.mrf.mxu0
  %v2726 = vadd.f32 %v2697, %v2725
  %v2727 = vpop.f32.mrf.mxu0
  %v2728 = vadd.f32 %v2699, %v2727
  %2729 = vmatmul.bf16.gmra.mxu0 %v836
  %v2730 = vpop.f32.mrf.mxu0
  %v2731 = vadd.f32 %v2702, %v2730
  %v2732 = vpop.f32.mrf.mxu0
  %v2733 = vadd.f32 %v2704, %v2732
  %2734 = vmatmul.bf16.gmra.mxu0 %v860
  %v2735 = vpop.f32.mrf.mxu0
  %v2736 = vadd.f32 %v2707, %v2735
  %v2737 = vpop.f32.mrf.mxu0
  %v2738 = vadd.f32 %v2709, %v2737
  %2739 = vmatmul.bf16.gmra.mxu0 %v884
  %v2740 = vpop.f32.mrf.mxu0
  %v2741 = vadd.f32 %v2712, %v2740
  %v2742 = vpop.f32.mrf.mxu0
  %v2743 = vadd.f32 %v2714, %v2742
  %2744 = vdwg.mxu0
  %2745 = vmatpush.bf16.msra.mxu0 %v1927
  %2746 = vmatpush.bf16.msra.mxu0 %v1926
  %2747 = vmatpush.bf16.msra.mxu0 %v1925
  %2748 = vmatpush.bf16.msra.mxu0 %v1924
  %2749 = vmatpush.bf16.msra.mxu0 %v1923
  %2750 = vmatpush.bf16.msra.mxu0 %v1922
  %2751 = vmatpush.bf16.msra.mxu0 %v1921
  %2752 = vmatpush.bf16.msra.mxu0 %v1920
  %2753 = vmatmul.bf16.gmra.mxu0 %v813
  %v2754 = vpop.f32.mrf.mxu0
  %v2755 = vadd.f32 %v2726, %v2754
  %v2756 = vpop.f32.mrf.mxu0
  %v2757 = vadd.f32 %v2728, %v2756
  %2758 = vmatmul.bf16.gmra.mxu0 %v837
  %v2759 = vpop.f32.mrf.mxu0
  %v2760 = vadd.f32 %v2731, %v2759
  %v2761 = vpop.f32.mrf.mxu0
  %v2762 = vadd.f32 %v2733, %v2761
  %2763 = vmatmul.bf16.gmra.mxu0 %v861
  %v2764 = vpop.f32.mrf.mxu0
  %v2765 = vadd.f32 %v2736, %v2764
  %v2766 = vpop.f32.mrf.mxu0
  %v2767 = vadd.f32 %v2738, %v2766
  %2768 = vmatmul.bf16.gmra.mxu0 %v885
  %v2769 = vpop.f32.mrf.mxu0
  %v2770 = vadd.f32 %v2741, %v2769
  %v2771 = vpop.f32.mrf.mxu0
  %v2772 = vadd.f32 %v2743, %v2771
  %2773 = vdwg.mxu0
  %2774 = vmatpush.bf16.msra.mxu0 %v1935
  %2775 = vmatpush.bf16.msra.mxu0 %v1934
  %2776 = vmatpush.bf16.msra.mxu0 %v1933
  %2777 = vmatpush.bf16.msra.mxu0 %v1932
  %2778 = vmatpush.bf16.msra.mxu0 %v1931
  %2779 = vmatpush.bf16.msra.mxu0 %v1930
  %2780 = vmatpush.bf16.msra.mxu0 %v1929
  %2781 = vmatpush.bf16.msra.mxu0 %v1928
  %2782 = vmatmul.bf16.gmra.mxu0 %v814
  %v2783 = vpop.f32.mrf.mxu0
  %v2784 = vadd.f32 %v2755, %v2783
  %v2785 = vpop.f32.mrf.mxu0
  %v2786 = vadd.f32 %v2757, %v2785
  %2787 = vmatmul.bf16.gmra.mxu0 %v838
  %v2788 = vpop.f32.mrf.mxu0
  %v2789 = vadd.f32 %v2760, %v2788
  %v2790 = vpop.f32.mrf.mxu0
  %v2791 = vadd.f32 %v2762, %v2790
  %2792 = vmatmul.bf16.gmra.mxu0 %v862
  %v2793 = vpop.f32.mrf.mxu0
  %v2794 = vadd.f32 %v2765, %v2793
  %v2795 = vpop.f32.mrf.mxu0
  %v2796 = vadd.f32 %v2767, %v2795
  %2797 = vmatmul.bf16.gmra.mxu0 %v886
  %v2798 = vpop.f32.mrf.mxu0
  %v2799 = vadd.f32 %v2770, %v2798
  %v2800 = vpop.f32.mrf.mxu0
  %v2801 = vadd.f32 %v2772, %v2800
  %2802 = vdwg.mxu0
  %2803 = vmatpush.bf16.msra.mxu0 %v1943
  %2804 = vmatpush.bf16.msra.mxu0 %v1942
  %2805 = vmatpush.bf16.msra.mxu0 %v1941
  %2806 = vmatpush.bf16.msra.mxu0 %v1940
  %2807 = vmatpush.bf16.msra.mxu0 %v1939
  %2808 = vmatpush.bf16.msra.mxu0 %v1938
  %2809 = vmatpush.bf16.msra.mxu0 %v1937
  %2810 = vmatpush.bf16.msra.mxu0 %v1936
  %2811 = vmatmul.bf16.gmra.mxu0 %v815
  %v2812 = vpop.f32.mrf.mxu0
  %v2813 = vadd.f32 %v2784, %v2812
  %v2814 = vpop.f32.mrf.mxu0
  %v2815 = vadd.f32 %v2786, %v2814
  %2816 = vmatmul.bf16.gmra.mxu0 %v839
  %v2817 = vpop.f32.mrf.mxu0
  %v2818 = vadd.f32 %v2789, %v2817
  %v2819 = vpop.f32.mrf.mxu0
  %v2820 = vadd.f32 %v2791, %v2819
  %2821 = vmatmul.bf16.gmra.mxu0 %v863
  %v2822 = vpop.f32.mrf.mxu0
  %v2823 = vadd.f32 %v2794, %v2822
  %v2824 = vpop.f32.mrf.mxu0
  %v2825 = vadd.f32 %v2796, %v2824
  %2826 = vmatmul.bf16.gmra.mxu0 %v887
  %v2827 = vpop.f32.mrf.mxu0
  %v2828 = vadd.f32 %v2799, %v2827
  %v2829 = vpop.f32.mrf.mxu0
  %v2830 = vadd.f32 %v2801, %v2829
  %2831 = vdwg.mxu0
  %v2832 = vmax.f32 %v2813, 0.0
  %v2833 = vmax.f32 %v2815, 0.0
  %v2834 = vmax.f32 %v2818, 0.0
  %v2835 = vmax.f32 %v2820, 0.0
  %v2836 = vmax.f32 %v2823, 0.0
  %v2837 = vmax.f32 %v2825, 0.0
  %v2838 = vmax.f32 %v2828, 0.0
  %v2839 = vmax.f32 %v2830, 0.0
  %v2840 = vpack.c.bf16 %v2833, %v2832
  %v2841 = vpack.c.bf16 %v2835, %v2834
  %v2842 = vpack.c.bf16 %v2837, %v2836
  %v2843 = vpack.c.bf16 %v2839, %v2838
  %v2844 = vld [vmem:[%s3] sm:$0xf]
  %v2845 = vld [vmem:[%s3 + $0x4] sm:$0xf]
  %v2846 = vld [vmem:[%s3 + $0x8] sm:$0xf]
  %v2847 = vld [vmem:[%s3 + $0xc] sm:$0xf]
  %v2848 = vld [vmem:[%s3 + $0x10] sm:$0xf]
  %v2849 = vld [vmem:[%s3 + $0x14] sm:$0xf]
  %v2850 = vld [vmem:[%s3 + $0x18] sm:$0xf]
  %v2851 = vld [vmem:[%s3 + $0x1c] sm:$0xf]
  %v2852 = vld [vmem:[%s3 + $0x20] sm:$0xf]
  %v2853 = vld [vmem:[%s3 + $0x24] sm:$0xf]
  %v2854 = vld [vmem:[%s3 + $0x28] sm:$0xf]
  %v2855 = vld [vmem:[%s3 + $0x2c] sm:$0xf]
  %v2856 = vld [vmem:[%s3 + $0x30] sm:$0xf]
  %v2857 = vld [vmem:[%s3 + $0x34] sm:$0xf]
  %v2858 = vld [vmem:[%s3 + $0x38] sm:$0xf]
  %v2859 = vld [vmem:[%s3 + $0x3c] sm:$0xf]
  %v2860 = vld [vmem:[%s4] sm:$0x1]
  %v2862 = vperm.slane %v2860, 0
  %v2880 = vunpack.c.l.b16 %v2844
  %v2881 = vunpack.c.l.b16 %v2845
  %v2882 = vunpack.c.l.b16 %v2846
  %v2883 = vunpack.c.l.b16 %v2847
  %v2884 = vunpack.c.l.b16 %v2848
  %v2885 = vunpack.c.l.b16 %v2849
  %v2886 = vunpack.c.l.b16 %v2850
  %v2887 = vunpack.c.l.b16 %v2851
  %v2888 = vunpack.c.l.b16 %v2852
  %v2889 = vunpack.c.l.b16 %v2853
  %v2890 = vunpack.c.l.b16 %v2854
  %v2891 = vunpack.c.l.b16 %v2855
  %v2892 = vunpack.c.l.b16 %v2856
  %v2893 = vunpack.c.l.b16 %v2857
  %v2894 = vunpack.c.l.b16 %v2858
  %v2895 = vunpack.c.l.b16 %v2859
  %v2896 = vpack.c.b16 %v2881, %v2880
  %v2897 = vpack.c.b16 %v2883, %v2882
  %v2898 = vpack.c.b16 %v2885, %v2884
  %v2899 = vpack.c.b16 %v2887, %v2886
  %v2900 = vpack.c.b16 %v2889, %v2888
  %v2901 = vpack.c.b16 %v2891, %v2890
  %v2902 = vpack.c.b16 %v2893, %v2892
  %v2903 = vpack.c.b16 %v2895, %v2894
  %2912 = vmatpush.bf16.msra.mxu0 %v2903
  %2913 = vmatpush.bf16.msra.mxu0 %v2902
  %2914 = vmatpush.bf16.msra.mxu0 %v2901
  %2915 = vmatpush.bf16.msra.mxu0 %v2900
  %2916 = vmatpush.bf16.msra.mxu0 %v2899
  %2917 = vmatpush.bf16.msra.mxu0 %v2898
  %2918 = vmatpush.bf16.msra.mxu0 %v2897
  %2919 = vmatpush.bf16.msra.mxu0 %v2896
  %2920 = vmatmul.bf16.gmra.mxu0 %v2840
  %v2921 = vpop.f32.mrf.mxu0
  %v2922 = vadd.f32 %v2862, %v2921
  %v2923 = vpop.f32.mrf.mxu0
  %v2924 = vadd.f32 %v2862, %v2923
  %2925 = vmatmul.bf16.gmra.mxu0 %v2841
  %v2926 = vpop.f32.mrf.mxu0
  %v2927 = vadd.f32 %v2862, %v2926
  %v2928 = vpop.f32.mrf.mxu0
  %v2929 = vadd.f32 %v2862, %v2928
  %2930 = vmatmul.bf16.gmra.mxu0 %v2842
  %v2931 = vpop.f32.mrf.mxu0
  %v2932 = vadd.f32 %v2862, %v2931
  %v2933 = vpop.f32.mrf.mxu0
  %v2934 = vadd.f32 %v2862, %v2933
  %2935 = vmatmul.bf16.gmra.mxu0 %v2843
  %v2936 = vpop.f32.mrf.mxu0
  %v2937 = vadd.f32 %v2862, %v2936
  %v2938 = vpop.f32.mrf.mxu0
  %v2939 = vadd.f32 %v2862, %v2938
  %2940 = vdwg.mxu0
  %2941 = vst [vmem:[%s5] sm:$0xff] %v2922
  %2942 = vst [vmem:[%s5 + $0x8] sm:$0xff] %v2924
  %2943 = vst [vmem:[%s5 + $0x10] sm:$0xff] %v2927
  %2944 = vst [vmem:[%s5 + $0x18] sm:$0xff] %v2929
  %2945 = vst [vmem:[%s5 + $0x20] sm:$0xff] %v2932
  %2946 = vst [vmem:[%s5 + $0x28] sm:$0xff] %v2934
  %2947 = vst [vmem:[%s5 + $0x30] sm:$0xff] %v2937
  %2948 = vst [vmem:[%s5 + $0x38] sm:$0xff] %v2939
  // Predicated region
  $region22: #{_lambda_.2} parent=0 // pred_check
    _
  $region23: #{_lambda_.2} parent=0 // pred_check_branch
    %2950 = sbr.rel (0) target = $region25
  $region24: #{_lambda_.2} parent=0 // pred_region
    _
  $region25: #{_lambda_.2} parent=0 // pred_fallthru
    _
  // Predicated region
  $region26: #{_lambda_.2} parent=0 // pred_check
    _
  $region27: #{_lambda_.2} parent=0 // pred_check_branch
    %2952 = sbr.rel (0) target = $region29
  $region28: #{_lambda_.2} parent=0 // pred_region
    _
  $region29: #{_lambda_.2} parent=0 // pred_fallthru
    _

// kernel: _lambda_.3
$region0: #{_lambda_.3}
  #allocation0 [shape = 'u32[]', space=smem, size = 0x4, offset = 0x4, fixed_abs, tag = 'smem constant byte address 0x4 - core index']
  #allocation1 [shape = 'u32[72,128]{1,0:T(1,128)}', space=vmem, size = 0x9000, scoped, tag = 'internal scratch']
  %s0 = inlined_call_operand.vmem [shape: f32[2,5,8,128], index: 0, kind: input, shape index: {}]
  %s1 = inlined_call_operand.vmem [shape: f32[2,128,24], index: 1, kind: input, shape index: {}]
  %s2 = inlined_call_operand.vmem [shape: bf16[2,256,384], index: 2, kind: input, shape index: {}]
  %s3 = inlined_call_operand.vmem [shape: bf16[2,128,128], index: 3, kind: input, shape index: {}]
  %s4 = inlined_call_operand.vmem [shape: f32[2,1,384], index: 4, kind: input, shape index: {}]
  %s5 = inlined_call_operand.vmem [shape: bf16[128,128], index: 5, kind: input, shape index: {}]
  %s6 = inlined_call_operand.vmem [shape: f32[1,128], index: 6, kind: input, shape index: {}]
  %s7 = inlined_call_operand.vmem [shape: bf16[128,128], index: 7, kind: input, shape index: {}]
  %s8 = inlined_call_operand.vmem [shape: f32[1,128], index: 8, kind: input, shape index: {}]
  %s9 = inlined_call_operand.vmem [shape: bf16[128,128], index: 9, kind: input, shape index: {}]
  %s10 = inlined_call_operand.vmem [shape: f32[2,1,1], index: 10, kind: output, shape index: {}]
  %s11 = sld [smem:[#allocation0]]
  $region73: #{_lambda_.3} parent=0
    _
  %s13 = ssub.s32 1, %s11
  %s14 = scalar_select 0, %s13, %s11
  loop: start=0, step=1, limit=4
  $region2: #{_lambda_.3} parent=0 // loop_pre_header
    _
  $region3: #{_lambda_.3} parent=0 // loop_header
    %s16 = sphi 0, %s20
    %p17 = scmp.ge.s32.totalorder %s16, 4
    %s26 = sphi 0, %s28
    %s29 = sphi 0, %s26
    %s30 = sphi 0, %s29
    %s46 = sphi 0, %s30
    %s52 = sphi 0, %s54
    %s55 = sphi 0, %s52
    %s56 = sphi 0, %s55
    %s72 = sphi 0, %s56
    %s78 = sphi 0, %s80
    %s81 = sphi 0, %s78
    %s82 = sphi 0, %s81
    %s98 = sphi 0, %s82
    %s104 = sphi 0, %s106
    %s107 = sphi 0, %s104
    %s108 = sphi 0, %s107
    %s124 = sphi 0, %s108
    %s130 = sphi 0, %s132
    %s133 = sphi 0, %s130
    %s134 = sphi 0, %s133
    %s150 = sphi 0, %s134
    %s154 = sphi 0, %s154
    %s156 = sphi 0, %s154
    %s157 = sphi 0, %s156
    %s171 = sphi 0, %s157
    %s175 = sphi 0, %s175
    %s177 = sphi 0, %s175
    %s178 = sphi 0, %s177
    %s192 = sphi 0, %s178
    %s196 = sphi 0, %s196
    %s198 = sphi 0, %s196
    %s199 = sphi 0, %s198
    %s213 = sphi 0, %s199
    %s217 = sphi 0, %s217
    %s219 = sphi 0, %s217
    %s220 = sphi 0, %s219
    %s234 = sphi 0, %s220
    %s238 = sphi 0, %s238
    %s240 = sphi 0, %s238
    %s241 = sphi 0, %s240
    %s255 = sphi 0, %s241
    %s261 = sphi 0, %s263
    %s264 = sphi 0, %s261
    %s265 = sphi 0, %s264
    %s281 = sphi 0, %s265
  $region4: #{_lambda_.3} parent=0 // loop_header_branch
    %19 = sbr.rel (%p17) target = $region8
  $region5: #{_lambda_.3} parent=0 // loop_body
    %s21 = ssub.s32 %s16, 1
    %s22 = ssub.s32 %s16, 2
    %s23 = sadd.s32 %s16, 1
    %s24 = ssub.s32 %s16, %s23
    %p25 = scmp.eq.s32.totalorder %s24, 0
    %s27 = sadd.s32 %s26, 1
    %s28 = scalar_select %p25, %s26, %s27
    %p31 = pneg %p25
    %p32 = scmp.eq.s32.totalorder %s16, 1
    %p33 = por %p31, %p32
    %p34 = scmp.ne.s32.totalorder %s26, %s29
    %p35 = scmp.eq.s32.totalorder %s16, 0
    %p36 = por %p34, %p35
    %p37 = scmp.ne.s32.totalorder %s26, %s29
    %p38 = scmp.eq.s32.totalorder %s21, 1
    %p39 = por %p37, %p38
    %p40 = scmp.ne.s32.totalorder %s29, %s30
    %p41 = scmp.eq.s32.totalorder %s21, 0
    %p42 = por %p40, %p41
    %p43 = scmp.ne.s32.totalorder %s29, %s30
    %p44 = scmp.eq.s32.totalorder %s22, 1
    %p45 = por %p43, %p44
    %p47 = scmp.ne.s32.totalorder %s30, %s46
    %p48 = scmp.eq.s32.totalorder %s22, 0
    %p49 = por %p47, %p48
    %s50 = ssub.s32 %s16, %s23
    %p51 = scmp.eq.s32.totalorder %s50, 0
    %s53 = sadd.s32 %s52, 1
    %s54 = scalar_select %p51, %s52, %s53
    %p57 = pneg %p51
    %p58 = scmp.eq.s32.totalorder %s16, 1
    %p59 = por %p57, %p58
    %p60 = scmp.ne.s32.totalorder %s52, %s55
    %p61 = scmp.eq.s32.totalorder %s16, 0
    %p62 = por %p60, %p61
    %p63 = scmp.ne.s32.totalorder %s52, %s55
    %p64 = scmp.eq.s32.totalorder %s21, 1
    %p65 = por %p63, %p64
    %p66 = scmp.ne.s32.totalorder %s55, %s56
    %p67 = scmp.eq.s32.totalorder %s21, 0
    %p68 = por %p66, %p67
    %p69 = scmp.ne.s32.totalorder %s55, %s56
    %p70 = scmp.eq.s32.totalorder %s22, 1
    %p71 = por %p69, %p70
    %p73 = scmp.ne.s32.totalorder %s56, %s72
    %p74 = scmp.eq.s32.totalorder %s22, 0
    %p75 = por %p73, %p74
    %s76 = ssub.s32 %s16, %s23
    %p77 = scmp.eq.s32.totalorder %s76, 0
    %s79 = sadd.s32 %s78, 1
    %s80 = scalar_select %p77, %s78, %s79
    %p83 = pneg %p77
    %p84 = scmp.eq.s32.totalorder %s16, 1
    %p85 = por %p83, %p84
    %p86 = scmp.ne.s32.totalorder %s78, %s81
    %p87 = scmp.eq.s32.totalorder %s16, 0
    %p88 = por %p86, %p87
    %p89 = scmp.ne.s32.totalorder %s78, %s81
    %p90 = scmp.eq.s32.totalorder %s21, 1
    %p91 = por %p89, %p90
    %p92 = scmp.ne.s32.totalorder %s81, %s82
    %p93 = scmp.eq.s32.totalorder %s21, 0
    %p94 = por %p92, %p93
    %p95 = scmp.ne.s32.totalorder %s81, %s82
    %p96 = scmp.eq.s32.totalorder %s22, 1
    %p97 = por %p95, %p96
    %p99 = scmp.ne.s32.totalorder %s82, %s98
    %p100 = scmp.eq.s32.totalorder %s22, 0
    %p101 = por %p99, %p100
    %s102 = ssub.s32 %s16, %s23
    %p103 = scmp.eq.s32.totalorder %s102, 0
    %s105 = sadd.s32 %s104, 1
    %s106 = scalar_select %p103, %s104, %s105
    %p109 = pneg %p103
    %p110 = scmp.eq.s32.totalorder %s16, 1
    %p111 = por %p109, %p110
    %p112 = scmp.ne.s32.totalorder %s104, %s107
    %p113 = scmp.eq.s32.totalorder %s16, 0
    %p114 = por %p112, %p113
    %p115 = scmp.ne.s32.totalorder %s104, %s107
    %p116 = scmp.eq.s32.totalorder %s21, 1
    %p117 = por %p115, %p116
    %p118 = scmp.ne.s32.totalorder %s107, %s108
    %p119 = scmp.eq.s32.totalorder %s21, 0
    %p120 = por %p118, %p119
    %p121 = scmp.ne.s32.totalorder %s107, %s108
    %p122 = scmp.eq.s32.totalorder %s22, 1
    %p123 = por %p121, %p122
    %p125 = scmp.ne.s32.totalorder %s108, %s124
    %p126 = scmp.eq.s32.totalorder %s22, 0
    %p127 = por %p125, %p126
    %s128 = ssub.s32 %s16, %s23
    %p129 = scmp.eq.s32.totalorder %s128, 0
    %s131 = sadd.s32 %s130, 1
    %s132 = scalar_select %p129, %s130, %s131
    %p135 = pneg %p129
    %p136 = scmp.eq.s32.totalorder %s16, 1
    %p137 = por %p135, %p136
    %p138 = scmp.ne.s32.totalorder %s130, %s133
    %p139 = scmp.eq.s32.totalorder %s16, 0
    %p140 = por %p138, %p139
    %p141 = scmp.ne.s32.totalorder %s130, %s133
    %p142 = scmp.eq.s32.totalorder %s21, 1
    %p143 = por %p141, %p142
    %p144 = scmp.ne.s32.totalorder %s133, %s134
    %p145 = scmp.eq.s32.totalorder %s21, 0
    %p146 = por %p144, %p145
    %p147 = scmp.ne.s32.totalorder %s133, %s134
    %p148 = scmp.eq.s32.totalorder %s22, 1
    %p149 = por %p147, %p148
    %p151 = scmp.ne.s32.totalorder %s134, %s150
    %p152 = scmp.eq.s32.totalorder %s22, 0
    %p153 = por %p151, %p152
    %s155 = sadd.s32 %s154, 1
    %p158 = scmp.eq.s32.totalorder %s16, 1
    %p159 = scmp.ne.s32.totalorder %s154, %s156
    %p160 = scmp.eq.s32.totalorder %s16, 0
    %p161 = por %p159, %p160
    %p162 = scmp.ne.s32.totalorder %s154, %s156
    %p163 = scmp.eq.s32.totalorder %s21, 1
    %p164 = por %p162, %p163
    %p165 = scmp.ne.s32.totalorder %s156, %s157
    %p166 = scmp.eq.s32.totalorder %s21, 0
    %p167 = por %p165, %p166
    %p168 = scmp.ne.s32.totalorder %s156, %s157
    %p169 = scmp.eq.s32.totalorder %s22, 1
    %p170 = por %p168, %p169
    %p172 = scmp.ne.s32.totalorder %s157, %s171
    %p173 = scmp.eq.s32.totalorder %s22, 0
    %p174 = por %p172, %p173
    %s176 = sadd.s32 %s175, 1
    %p179 = scmp.eq.s32.totalorder %s16, 1
    %p180 = scmp.ne.s32.totalorder %s175, %s177
    %p181 = scmp.eq.s32.totalorder %s16, 0
    %p182 = por %p180, %p181
    %p183 = scmp.ne.s32.totalorder %s175, %s177
    %p184 = scmp.eq.s32.totalorder %s21, 1
    %p185 = por %p183, %p184
    %p186 = scmp.ne.s32.totalorder %s177, %s178
    %p187 = scmp.eq.s32.totalorder %s21, 0
    %p188 = por %p186, %p187
    %p189 = scmp.ne.s32.totalorder %s177, %s178
    %p190 = scmp.eq.s32.totalorder %s22, 1
    %p191 = por %p189, %p190
    %p193 = scmp.ne.s32.totalorder %s178, %s192
    %p194 = scmp.eq.s32.totalorder %s22, 0
    %p195 = por %p193, %p194
    %s197 = sadd.s32 %s196, 1
    %p200 = scmp.eq.s32.totalorder %s16, 1
    %p201 = scmp.ne.s32.totalorder %s196, %s198
    %p202 = scmp.eq.s32.totalorder %s16, 0
    %p203 = por %p201, %p202
    %p204 = scmp.ne.s32.totalorder %s196, %s198
    %p205 = scmp.eq.s32.totalorder %s21, 1
    %p206 = por %p204, %p205
    %p207 = scmp.ne.s32.totalorder %s198, %s199
    %p208 = scmp.eq.s32.totalorder %s21, 0
    %p209 = por %p207, %p208
    %p210 = scmp.ne.s32.totalorder %s198, %s199
    %p211 = scmp.eq.s32.totalorder %s22, 1
    %p212 = por %p210, %p211
    %p214 = scmp.ne.s32.totalorder %s199, %s213
    %p215 = scmp.eq.s32.totalorder %s22, 0
    %p216 = por %p214, %p215
    %s218 = sadd.s32 %s217, 1
    %p221 = scmp.eq.s32.totalorder %s16, 1
    %p222 = scmp.ne.s32.totalorder %s217, %s219
    %p223 = scmp.eq.s32.totalorder %s16, 0
    %p224 = por %p222, %p223
    %p225 = scmp.ne.s32.totalorder %s217, %s219
    %p226 = scmp.eq.s32.totalorder %s21, 1
    %p227 = por %p225, %p226
    %p228 = scmp.ne.s32.totalorder %s219, %s220
    %p229 = scmp.eq.s32.totalorder %s21, 0
    %p230 = por %p228, %p229
    %p231 = scmp.ne.s32.totalorder %s219, %s220
    %p232 = scmp.eq.s32.totalorder %s22, 1
    %p233 = por %p231, %p232
    %p235 = scmp.ne.s32.totalorder %s220, %s234
    %p236 = scmp.eq.s32.totalorder %s22, 0
    %p237 = por %p235, %p236
    %s239 = sadd.s32 %s238, 1
    %p242 = scmp.eq.s32.totalorder %s16, 1
    %p243 = scmp.ne.s32.totalorder %s238, %s240
    %p244 = scmp.eq.s32.totalorder %s16, 0
    %p245 = por %p243, %p244
    %p246 = scmp.ne.s32.totalorder %s238, %s240
    %p247 = scmp.eq.s32.totalorder %s21, 1
    %p248 = por %p246, %p247
    %p249 = scmp.ne.s32.totalorder %s240, %s241
    %p250 = scmp.eq.s32.totalorder %s21, 0
    %p251 = por %p249, %p250
    %p252 = scmp.ne.s32.totalorder %s240, %s241
    %p253 = scmp.eq.s32.totalorder %s22, 1
    %p254 = por %p252, %p253
    %p256 = scmp.ne.s32.totalorder %s241, %s255
    %p257 = scmp.eq.s32.totalorder %s22, 0
    %p258 = por %p256, %p257
    %s259 = ssub.s32 %s16, %s23
    %p260 = scmp.eq.s32.totalorder %s259, 0
    %s262 = sadd.s32 %s261, 1
    %s263 = scalar_select %p260, %s261, %s262
    %p266 = pneg %p260
    %p267 = scmp.eq.s32.totalorder %s16, 1
    %p268 = por %p266, %p267
    %p269 = scmp.ne.s32.totalorder %s261, %s264
    %p270 = scmp.eq.s32.totalorder %s16, 0
    %p271 = por %p269, %p270
    %p272 = scmp.ne.s32.totalorder %s261, %s264
    %p273 = scmp.eq.s32.totalorder %s21, 1
    %p274 = por %p272, %p273
    %p275 = scmp.ne.s32.totalorder %s264, %s265
    %p276 = scmp.eq.s32.totalorder %s21, 0
    %p277 = por %p275, %p276
    %p278 = scmp.ne.s32.totalorder %s264, %s265
    %p279 = scmp.eq.s32.totalorder %s22, 1
    %p280 = por %p278, %p279
    %p282 = scmp.ne.s32.totalorder %s265, %s281
    %p283 = scmp.eq.s32.totalorder %s22, 0
    %p284 = por %p282, %p283
    %p285 = scmp.le.s32.totalorder 1, %s16
    %p286 = scmp.lt.s32.totalorder %s16, 3
    %p287 = pnand %p285, %p286
    %p288 = pneg %p287
    // Predicated region
    $region9: #{_lambda_.3} parent=5 // pred_check
      _
    $region10: #{_lambda_.3} parent=5 // pred_check_branch
      %290 = sbr.rel (%p287) target = $region12
    $region11: #{_lambda_.3} parent=5 // pred_region
      %s291 = ssub.s32 %s16, 1
      // Predicated region
      $region13: #{_lambda_.3} parent=11 // pred_check
        %p292 = pneg %p167
      $region14: #{_lambda_.3} parent=11 // pred_check_branch
        %294 = sbr.rel (%p292) target = $region16
      $region15: #{_lambda_.3} parent=11 // pred_region
        _
      $region16: #{_lambda_.3} parent=11 // pred_fallthru
        _
      // Predicated region
      $region17: #{_lambda_.3} parent=11 // pred_check
        %p295 = pneg %p188
      $region18: #{_lambda_.3} parent=11 // pred_check_branch
        %297 = sbr.rel (%p295) target = $region20
      $region19: #{_lambda_.3} parent=11 // pred_region
        _
      $region20: #{_lambda_.3} parent=11 // pred_fallthru
        _
      // Predicated region
      $region21: #{_lambda_.3} parent=11 // pred_check
        %p298 = pneg %p209
      $region22: #{_lambda_.3} parent=11 // pred_check_branch
        %300 = sbr.rel (%p298) target = $region24
      $region23: #{_lambda_.3} parent=11 // pred_region
        _
      $region24: #{_lambda_.3} parent=11 // pred_fallthru
        _
      // Predicated region
      $region25: #{_lambda_.3} parent=11 // pred_check
        %p301 = pneg %p230
      $region26: #{_lambda_.3} parent=11 // pred_check_branch
        %303 = sbr.rel (%p301) target = $region28
      $region27: #{_lambda_.3} parent=11 // pred_region
        _
      $region28: #{_lambda_.3} parent=11 // pred_fallthru
        _
      // Predicated region
      $region29: #{_lambda_.3} parent=11 // pred_check
        %p304 = pneg %p251
      $region30: #{_lambda_.3} parent=11 // pred_check_branch
        %306 = sbr.rel (%p304) target = $region32
      $region31: #{_lambda_.3} parent=11 // pred_region
        _
      $region32: #{_lambda_.3} parent=11 // pred_fallthru
        _
    $region12: #{_lambda_.3} parent=5 // pred_fallthru
      _
    %p307 = scmp.lt.s32.totalorder %s16, 2
    // Predicated region
    $region33: #{_lambda_.3} parent=5 // pred_check
      %p308 = pneg %p307
    $region34: #{_lambda_.3} parent=5 // pred_check_branch
      %310 = sbr.rel (%p308) target = $region36
    $region35: #{_lambda_.3} parent=5 // pred_region
      // Predicated region
      $region37: #{_lambda_.3} parent=35 // pred_check
        %p311 = pneg %p36
      $region38: #{_lambda_.3} parent=35 // pred_check_branch
        %313 = sbr.rel (%p311) target = $region40
      $region39: #{_lambda_.3} parent=35 // pred_region
        %p314 = scmp.lt.s32.totalorder %s16, 1
        %s315 = scalar_select %p314, %s16, 1
        %s316 = smul.addr %s315, 5
        %s317 = smul.addr %s316, 8
        %s318 = scalar_lea.vmem %s0, %s317
      $region40: #{_lambda_.3} parent=35 // pred_fallthru
        _
      // Predicated region
      $region41: #{_lambda_.3} parent=35 // pred_check
        %p319 = pneg %p62
      $region42: #{_lambda_.3} parent=35 // pred_check_branch
        %321 = sbr.rel (%p319) target = $region44
      $region43: #{_lambda_.3} parent=35 // pred_region
        %p322 = scmp.lt.s32.totalorder %s16, 1
        %s323 = scalar_select %p322, %s16, 1
        %s324 = smul.addr %s323, 16
        %s325 = smul.addr %s324, 8
        %s326 = scalar_lea.vmem %s1, %s325
      $region44: #{_lambda_.3} parent=35 // pred_fallthru
        _
      // Predicated region
      $region45: #{_lambda_.3} parent=35 // pred_check
        %p327 = pneg %p88
      $region46: #{_lambda_.3} parent=35 // pred_check_branch
        %329 = sbr.rel (%p327) target = $region48
      $region47: #{_lambda_.3} parent=35 // pred_region
        %p330 = scmp.lt.s32.totalorder %s16, 1
        %s331 = scalar_select %p330, %s16, 1
        %s332 = smul.addr %s331, 96
        %s333 = smul.addr %s332, 4
        %s334 = scalar_lea.vmem %s2, %s333
      $region48: #{_lambda_.3} parent=35 // pred_fallthru
        _
      // Predicated region
      $region49: #{_lambda_.3} parent=35 // pred_check
        %p335 = pneg %p114
      $region50: #{_lambda_.3} parent=35 // pred_check_branch
        %337 = sbr.rel (%p335) target = $region52
      $region51: #{_lambda_.3} parent=35 // pred_region
        %p338 = scmp.lt.s32.totalorder %s16, 1
        %s339 = scalar_select %p338, %s16, 1
        %s340 = smul.addr %s339, 16
        %s341 = smul.addr %s340, 4
        %s342 = scalar_lea.vmem %s3, %s341
      $region52: #{_lambda_.3} parent=35 // pred_fallthru
        _
      // Predicated region
      $region53: #{_lambda_.3} parent=35 // pred_check
        %p343 = pneg %p140
      $region54: #{_lambda_.3} parent=35 // pred_check_branch
        %345 = sbr.rel (%p343) target = $region56
      $region55: #{_lambda_.3} parent=35 // pred_region
        %p346 = scmp.lt.s32.totalorder %s16, 1
        %s347 = scalar_select %p346, %s16, 1
        %s348 = smul.addr %s347, 3
        %s349 = scalar_lea.vmem %s4, %s348
      $region56: #{_lambda_.3} parent=35 // pred_fallthru
        _
    $region36: #{_lambda_.3} parent=5 // pred_fallthru
      _
    %p350 = scmp.le.s32.totalorder 1, %s16
    %p351 = scmp.lt.s32.totalorder %s16, 3
    %p352 = pnand %p350, %p351
    %p353 = pneg %p352
    // Predicated region
    $region57: #{_lambda_.3} parent=5 // pred_check
      _
    $region58: #{_lambda_.3} parent=5 // pred_check_branch
      %355 = sbr.rel (%p352) target = $region60
    $region59: #{_lambda_.3} parent=5 // pred_region
      %s356 = ssub.s32 %s16, 1
      %p357 = scmp.lt.s32.totalorder %s21, 1
      %s358 = scalar_select %p357, %s21, 1
      %s359 = smul.addr %s358, 5
      %s360 = smul.addr %s359, 8
      %s361 = scalar_lea.vmem %s0, %s360
      %p362 = pneg %p42
      %p363 = pneg %p39
      %p364 = scmp.lt.s32.totalorder %s21, 1
      %s365 = scalar_select %p364, %s21, 1
      %s366 = smul.addr %s365, 16
      %s367 = smul.addr %s366, 8
      %s368 = scalar_lea.vmem %s1, %s367
      %p369 = pneg %p68
      %p370 = pneg %p65
      %p371 = scmp.lt.s32.totalorder %s21, 1
      %s372 = scalar_select %p371, %s21, 1
      %s373 = smul.addr %s372, 96
      %s374 = smul.addr %s373, 4
      %s375 = scalar_lea.vmem %s2, %s374
      %p376 = pneg %p94
      %p377 = pneg %p91
      %p378 = scmp.lt.s32.totalorder %s21, 1
      %s379 = scalar_select %p378, %s21, 1
      %s380 = smul.addr %s379, 16
      %s381 = smul.addr %s380, 4
      %s382 = scalar_lea.vmem %s3, %s381
      %p383 = pneg %p120
      %p384 = pneg %p117
      %p385 = scmp.lt.s32.totalorder %s21, 1
      %s386 = scalar_select %p385, %s21, 1
      %s387 = smul.addr %s386, 3
      %s388 = scalar_lea.vmem %s4, %s387
      %p389 = pneg %p146
      %p390 = pneg %p143
      %p391 = pneg %p167
      %p392 = pneg %p164
      %p393 = pneg %p188
      %p394 = pneg %p185
      %p395 = pneg %p209
      %p396 = pneg %p206
      %p397 = pneg %p230
      %p398 = pneg %p227
      %p399 = pneg %p251
      %p400 = pneg %p248
      %p401 = pneg %p277
      %p402 = pneg %p274
      %p403 = scmp.lt.s32.totalorder %s21, 1
      %s404 = scalar_select %p403, %s21, 1
      %s405 = scalar_lea.vmem %s10, %s404
      %p406 = scmp.lt.s32.totalorder %s21, 1
      %s407 = scalar_select %p406, %s21, 1
      %s408 = smul.addr %s407, 5
      %s409 = smul.addr %s408, 8
      %s410 = scalar_lea.vmem %s0, %s409
      %p411 = scmp.lt.s32.totalorder %s21, 1
      %s412 = scalar_select %p411, %s21, 1
      %s413 = smul.addr %s412, 16
      %s414 = smul.addr %s413, 8
      %s415 = scalar_lea.vmem %s1, %s414
      %p416 = scmp.lt.s32.totalorder %s21, 1
      %s417 = scalar_select %p416, %s21, 1
      %s418 = smul.addr %s417, 96
      %s419 = smul.addr %s418, 4
      %s420 = scalar_lea.vmem %s2, %s419
      %p421 = scmp.lt.s32.totalorder %s21, 1
      %s422 = scalar_select %p421, %s21, 1
      %s423 = smul.addr %s422, 16
      %s424 = smul.addr %s423, 4
      %s425 = scalar_lea.vmem %s3, %s424
      %p426 = scmp.lt.s32.totalorder %s21, 1
      %s427 = scalar_select %p426, %s21, 1
      %s428 = smul.addr %s427, 3
      %s429 = scalar_lea.vmem %s4, %s428
      %p430 = scmp.lt.s32.totalorder %s21, 1
      %s431 = scalar_select %p430, %s21, 1
      %s432 = scalar_lea.vmem %s10, %s431
      %v434 = vld [vmem:[%s420] sm:$0xff]
      %v435 = vld [vmem:[%s420 + $0x8] sm:$0xf]
      %v436 = vld [vmem:[%s420 + $0xc] sm:$0xff]
      %v437 = vld [vmem:[%s420 + $0x14] sm:$0xf]
      %v438 = vld [vmem:[%s420 + $0x18] sm:$0xff]
      %v439 = vld [vmem:[%s420 + $0x20] sm:$0xf]
      %v440 = vld [vmem:[%s420 + $0x24] sm:$0xff]
      %v441 = vld [vmem:[%s420 + $0x2c] sm:$0xf]
      %v442 = vld [vmem:[%s420 + $0x30] sm:$0xff]
      %v443 = vld [vmem:[%s420 + $0x38] sm:$0xf]
      %v444 = vld [vmem:[%s420 + $0x3c] sm:$0xff]
      %v445 = vld [vmem:[%s420 + $0x44] sm:$0xf]
      %v446 = vld [vmem:[%s420 + $0x48] sm:$0xff]
      %v447 = vld [vmem:[%s420 + $0x50] sm:$0xf]
      %v448 = vld [vmem:[%s420 + $0x54] sm:$0xff]
      %v449 = vld [vmem:[%s420 + $0x5c] sm:$0xf]
      %v450 = vld [vmem:[%s420 + $0x60] sm:$0xff]
      %v451 = vld [vmem:[%s420 + $0x68] sm:$0xf]
      %v452 = vld [vmem:[%s420 + $0x6c] sm:$0xff]
      %v453 = vld [vmem:[%s420 + $0x74] sm:$0xf]
      %v454 = vld [vmem:[%s420 + $0x78] sm:$0xff]
      %v455 = vld [vmem:[%s420 + $0x80] sm:$0xf]
      %v456 = vld [vmem:[%s420 + $0x84] sm:$0xff]
      %v457 = vld [vmem:[%s420 + $0x8c] sm:$0xf]
      %v458 = vld [vmem:[%s420 + $0x90] sm:$0xff]
      %v459 = vld [vmem:[%s420 + $0x98] sm:$0xf]
      %v460 = vld [vmem:[%s420 + $0x9c] sm:$0xff]
      %v461 = vld [vmem:[%s420 + $0xa4] sm:$0xf]
      %v462 = vld [vmem:[%s420 + $0xa8] sm:$0xff]
      %v463 = vld [vmem:[%s420 + $0xb0] sm:$0xf]
      %v464 = vld [vmem:[%s420 + $0xb4] sm:$0xff]
      %v465 = vld [vmem:[%s420 + $0xbc] sm:$0xf]
      %v466 = vld [vmem:[%s420 + $0xc0] sm:$0xff]
      %v467 = vld [vmem:[%s420 + $0xc8] sm:$0xf]
      %v468 = vld [vmem:[%s420 + $0xcc] sm:$0xff]
      %v469 = vld [vmem:[%s420 + $0xd4] sm:$0xf]
      %v470 = vld [vmem:[%s420 + $0xd8] sm:$0xff]
      %v471 = vld [vmem:[%s420 + $0xe0] sm:$0xf]
      %v472 = vld [vmem:[%s420 + $0xe4] sm:$0xff]
      %v473 = vld [vmem:[%s420 + $0xec] sm:$0xf]
      %v474 = vld [vmem:[%s420 + $0xf0] sm:$0xff]
      %v475 = vld [vmem:[%s420 + $0xf8] sm:$0xf]
      %v476 = vld [vmem:[%s420 + $0xfc] sm:$0xff]
      %v477 = vld [vmem:[%s420 + $0x104] sm:$0xf]
      %v478 = vld [vmem:[%s420 + $0x108] sm:$0xff]
      %v479 = vld [vmem:[%s420 + $0x110] sm:$0xf]
      %v480 = vld [vmem:[%s420 + $0x114] sm:$0xff]
      %v481 = vld [vmem:[%s420 + $0x11c] sm:$0xf]
      %v482 = vld [vmem:[%s420 + $0x120] sm:$0xff]
      %v483 = vld [vmem:[%s420 + $0x128] sm:$0xf]
      %v484 = vld [vmem:[%s420 + $0x12c] sm:$0xff]
      %v485 = vld [vmem:[%s420 + $0x134] sm:$0xf]
      %v486 = vld [vmem:[%s420 + $0x138] sm:$0xff]
      %v487 = vld [vmem:[%s420 + $0x140] sm:$0xf]
      %v488 = vld [vmem:[%s420 + $0x144] sm:$0xff]
      %v489 = vld [vmem:[%s420 + $0x14c] sm:$0xf]
      %v490 = vld [vmem:[%s420 + $0x150] sm:$0xff]
      %v491 = vld [vmem:[%s420 + $0x158] sm:$0xf]
      %v492 = vld [vmem:[%s420 + $0x15c] sm:$0xff]
      %v493 = vld [vmem:[%s420 + $0x164] sm:$0xf]
      %v494 = vld [vmem:[%s420 + $0x168] sm:$0xff]
      %v495 = vld [vmem:[%s420 + $0x170] sm:$0xf]
      %v496 = vld [vmem:[%s420 + $0x174] sm:$0xff]
      %v497 = vld [vmem:[%s420 + $0x17c] sm:$0xf]
      %v498 = vld [vmem:[%s425] sm:$0xf]
      %v499 = vld [vmem:[%s425 + $0x4] sm:$0xf]
      %v500 = vld [vmem:[%s425 + $0x8] sm:$0xf]
      %v501 = vld [vmem:[%s425 + $0xc] sm:$0xf]
      %v502 = vld [vmem:[%s425 + $0x10] sm:$0xf]
      %v503 = vld [vmem:[%s425 + $0x14] sm:$0xf]
      %v504 = vld [vmem:[%s425 + $0x18] sm:$0xf]
      %v505 = vld [vmem:[%s425 + $0x1c] sm:$0xf]
      %v506 = vld [vmem:[%s425 + $0x20] sm:$0xf]
      %v507 = vld [vmem:[%s425 + $0x24] sm:$0xf]
      %v508 = vld [vmem:[%s425 + $0x28] sm:$0xf]
      %v509 = vld [vmem:[%s425 + $0x2c] sm:$0xf]
      %v510 = vld [vmem:[%s425 + $0x30] sm:$0xf]
      %v511 = vld [vmem:[%s425 + $0x34] sm:$0xf]
      %v512 = vld [vmem:[%s425 + $0x38] sm:$0xf]
      %v513 = vld [vmem:[%s425 + $0x3c] sm:$0xf]
      %v514 = vld [vmem:[%s429] sm:$0x1]
      %v515 = vld [vmem:[%s429 + $0x1] sm:$0x1]
      %v516 = vld [vmem:[%s429 + $0x2] sm:$0x1]
      %v517 = vld [vmem:[%s5] sm:$0xf]
      %v518 = vld [vmem:[%s5 + $0x4] sm:$0xf]
      %v519 = vld [vmem:[%s5 + $0x8] sm:$0xf]
      %v520 = vld [vmem:[%s5 + $0xc] sm:$0xf]
      %v521 = vld [vmem:[%s5 + $0x10] sm:$0xf]
      %v522 = vld [vmem:[%s5 + $0x14] sm:$0xf]
      %v523 = vld [vmem:[%s5 + $0x18] sm:$0xf]
      %v524 = vld [vmem:[%s5 + $0x1c] sm:$0xf]
      %v525 = vld [vmem:[%s5 + $0x20] sm:$0xf]
      %v526 = vld [vmem:[%s5 + $0x24] sm:$0xf]
      %v527 = vld [vmem:[%s5 + $0x28] sm:$0xf]
      %v528 = vld [vmem:[%s5 + $0x2c] sm:$0xf]
      %v529 = vld [vmem:[%s5 + $0x30] sm:$0xf]
      %v530 = vld [vmem:[%s5 + $0x34] sm:$0xf]
      %v531 = vld [vmem:[%s5 + $0x38] sm:$0xf]
      %v532 = vld [vmem:[%s5 + $0x3c] sm:$0xf]
      %v533 = vld [vmem:[%s6] sm:$0x1]
      %v534 = vld [vmem:[%s7] sm:$0xf]
      %v535 = vld [vmem:[%s7 + $0x4] sm:$0xf]
      %v536 = vld [vmem:[%s7 + $0x8] sm:$0xf]
      %v537 = vld [vmem:[%s7 + $0xc] sm:$0xf]
      %v538 = vld [vmem:[%s7 + $0x10] sm:$0xf]
      %v539 = vld [vmem:[%s7 + $0x14] sm:$0xf]
      %v540 = vld [vmem:[%s7 + $0x18] sm:$0xf]
      %v541 = vld [vmem:[%s7 + $0x1c] sm:$0xf]
      %v542 = vld [vmem:[%s7 + $0x20] sm:$0xf]
      %v543 = vld [vmem:[%s7 + $0x24] sm:$0xf]
      %v544 = vld [vmem:[%s7 + $0x28] sm:$0xf]
      %v545 = vld [vmem:[%s7 + $0x2c] sm:$0xf]
      %v546 = vld [vmem:[%s7 + $0x30] sm:$0xf]
      %v547 = vld [vmem:[%s7 + $0x34] sm:$0xf]
      %v548 = vld [vmem:[%s7 + $0x38] sm:$0xf]
      %v549 = vld [vmem:[%s7 + $0x3c] sm:$0xf]
      %v550 = vld [vmem:[%s8] sm:$0x1]
      %v551 = vld [vmem:[%s9] sm:$0xf]
      %v552 = vld [vmem:[%s9 + $0x4] sm:$0xf]
      %v553 = vld [vmem:[%s9 + $0x8] sm:$0xf]
      %v554 = vld [vmem:[%s9 + $0xc] sm:$0xf]
      %v555 = vld [vmem:[%s9 + $0x10] sm:$0xf]
      %v556 = vld [vmem:[%s9 + $0x14] sm:$0xf]
      %v557 = vld [vmem:[%s9 + $0x18] sm:$0xf]
      %v558 = vld [vmem:[%s9 + $0x1c] sm:$0xf]
      %v559 = vld [vmem:[%s9 + $0x20] sm:$0xf]
      %v560 = vld [vmem:[%s9 + $0x24] sm:$0xf]
      %v561 = vld [vmem:[%s9 + $0x28] sm:$0xf]
      %v562 = vld [vmem:[%s9 + $0x2c] sm:$0xf]
      %v563 = vld [vmem:[%s9 + $0x30] sm:$0xf]
      %v564 = vld [vmem:[%s9 + $0x34] sm:$0xf]
      %v565 = vld [vmem:[%s9 + $0x38] sm:$0xf]
      %v566 = vld [vmem:[%s9 + $0x3c] sm:$0xf]
      %v567 = vld [vmem:[%s415] sm:$0xff]
      %v568 = vld [vmem:[%s415 + $0x8] sm:$0xff]
      %v569 = vld [vmem:[%s415 + $0x10] sm:$0xff]
      %v570 = vld [vmem:[%s415 + $0x18] sm:$0xff]
      %v571 = vld [vmem:[%s415 + $0x20] sm:$0xff]
      %v572 = vld [vmem:[%s415 + $0x28] sm:$0xff]
      %v573 = vld [vmem:[%s415 + $0x30] sm:$0xff]
      %v574 = vld [vmem:[%s415 + $0x38] sm:$0xff]
      %v575 = vld [vmem:[%s415 + $0x40] sm:$0xff]
      %v576 = vld [vmem:[%s415 + $0x48] sm:$0xff]
      %v577 = vld [vmem:[%s415 + $0x50] sm:$0xff]
      %v578 = vld [vmem:[%s415 + $0x58] sm:$0xff]
      %v579 = vld [vmem:[%s415 + $0x60] sm:$0xff]
      %v580 = vld [vmem:[%s415 + $0x68] sm:$0xff]
      %v581 = vld [vmem:[%s415 + $0x70] sm:$0xff]
      %v582 = vld [vmem:[%s415 + $0x78] sm:$0xff]
      %v583 = vld [vmem:[%s410] sm:$0xff]
      %v584 = vmax.f32 %v583, 0.0
      %v585 = vpack.c.bf16 %v584, %v584
      %v650 = vunpack.c.l.b16 %v434
      %v651 = vunpack.c.h.b16 %v434
      %v652 = vunpack.c.l.b16 %v435
      %v653 = vunpack.c.l.b16 %v436
      %v654 = vunpack.c.h.b16 %v436
      %v655 = vunpack.c.l.b16 %v437
      %v656 = vunpack.c.l.b16 %v438
      %v657 = vunpack.c.h.b16 %v438
      %v658 = vunpack.c.l.b16 %v439
      %v659 = vunpack.c.l.b16 %v440
      %v660 = vunpack.c.h.b16 %v440
      %v661 = vunpack.c.l.b16 %v441
      %v662 = vunpack.c.l.b16 %v442
      %v663 = vunpack.c.h.b16 %v442
      %v664 = vunpack.c.l.b16 %v443
      %v665 = vunpack.c.l.b16 %v444
      %v666 = vunpack.c.h.b16 %v444
      %v667 = vunpack.c.l.b16 %v445
      %v668 = vunpack.c.l.b16 %v446
      %v669 = vunpack.c.h.b16 %v446
      %v670 = vunpack.c.l.b16 %v447
      %v671 = vunpack.c.l.b16 %v448
      %v672 = vunpack.c.h.b16 %v448
      %v673 = vunpack.c.l.b16 %v449
      %v674 = vunpack.c.l.b16 %v450
      %v675 = vunpack.c.h.b16 %v450
      %v676 = vunpack.c.l.b16 %v451
      %v677 = vunpack.c.l.b16 %v452
      %v678 = vunpack.c.h.b16 %v452
      %v679 = vunpack.c.l.b16 %v453
      %v680 = vunpack.c.l.b16 %v454
      %v681 = vunpack.c.h.b16 %v454
      %v682 = vunpack.c.l.b16 %v455
      %v683 = vunpack.c.l.b16 %v456
      %v684 = vunpack.c.h.b16 %v456
      %v685 = vunpack.c.l.b16 %v457
      %v686 = vunpack.c.l.b16 %v458
      %v687 = vunpack.c.h.b16 %v458
      %v688 = vunpack.c.l.b16 %v459
      %v689 = vunpack.c.l.b16 %v460
      %v690 = vunpack.c.h.b16 %v460
      %v691 = vunpack.c.l.b16 %v461
      %v692 = vunpack.c.l.b16 %v462
      %v693 = vunpack.c.h.b16 %v462
      %v694 = vunpack.c.l.b16 %v463
      %v695 = vunpack.c.l.b16 %v464
      %v696 = vunpack.c.h.b16 %v464
      %v697 = vunpack.c.l.b16 %v465
      %v698 = vunpack.c.l.b16 %v466
      %v699 = vunpack.c.h.b16 %v466
      %v700 = vunpack.c.l.b16 %v467
      %v701 = vunpack.c.l.b16 %v468
      %v702 = vunpack.c.h.b16 %v468
      %v703 = vunpack.c.l.b16 %v469
      %v704 = vunpack.c.l.b16 %v470
      %v705 = vunpack.c.h.b16 %v470
      %v706 = vunpack.c.l.b16 %v471
      %v707 = vunpack.c.l.b16 %v472
      %v708 = vunpack.c.h.b16 %v472
      %v709 = vunpack.c.l.b16 %v473
      %v710 = vunpack.c.l.b16 %v474
      %v711 = vunpack.c.h.b16 %v474
      %v712 = vunpack.c.l.b16 %v475
      %v713 = vunpack.c.l.b16 %v476
      %v714 = vunpack.c.h.b16 %v476
      %v715 = vunpack.c.l.b16 %v477
      %v716 = vunpack.c.l.b16 %v478
      %v717 = vunpack.c.h.b16 %v478
      %v718 = vunpack.c.l.b16 %v479
      %v719 = vunpack.c.l.b16 %v480
      %v720 = vunpack.c.h.b16 %v480
      %v721 = vunpack.c.l.b16 %v481
      %v722 = vunpack.c.l.b16 %v482
      %v723 = vunpack.c.h.b16 %v482
      %v724 = vunpack.c.l.b16 %v483
      %v725 = vunpack.c.l.b16 %v484
      %v726 = vunpack.c.h.b16 %v484
      %v727 = vunpack.c.l.b16 %v485
      %v728 = vunpack.c.l.b16 %v486
      %v729 = vunpack.c.h.b16 %v486
      %v730 = vunpack.c.l.b16 %v487
      %v731 = vunpack.c.l.b16 %v488
      %v732 = vunpack.c.h.b16 %v488
      %v733 = vunpack.c.l.b16 %v489
      %v734 = vunpack.c.l.b16 %v490
      %v735 = vunpack.c.h.b16 %v490
      %v736 = vunpack.c.l.b16 %v491
      %v737 = vunpack.c.l.b16 %v492
      %v738 = vunpack.c.h.b16 %v492
      %v739 = vunpack.c.l.b16 %v493
      %v740 = vunpack.c.l.b16 %v494
      %v741 = vunpack.c.h.b16 %v494
      %v742 = vunpack.c.l.b16 %v495
      %v743 = vunpack.c.l.b16 %v496
      %v744 = vunpack.c.h.b16 %v496
      %v745 = vunpack.c.l.b16 %v497
      %v746 = vpack.c.b16 %v653, %v650
      %v747 = vpack.c.b16 %v654, %v651
      %v748 = vpack.c.b16 %v655, %v652
      %v749 = vpack.c.b16 %v659, %v656
      %v750 = vpack.c.b16 %v660, %v657
      %v751 = vpack.c.b16 %v661, %v658
      %v752 = vpack.c.b16 %v665, %v662
      %v753 = vpack.c.b16 %v666, %v663
      %v754 = vpack.c.b16 %v667, %v664
      %v755 = vpack.c.b16 %v671, %v668
      %v756 = vpack.c.b16 %v672, %v669
      %v757 = vpack.c.b16 %v673, %v670
      %v758 = vpack.c.b16 %v677, %v674
      %v759 = vpack.c.b16 %v678, %v675
      %v760 = vpack.c.b16 %v679, %v676
      %v761 = vpack.c.b16 %v683, %v680
      %v762 = vpack.c.b16 %v684, %v681
      %v763 = vpack.c.b16 %v685, %v682
      %v764 = vpack.c.b16 %v689, %v686
      %v765 = vpack.c.b16 %v690, %v687
      %v766 = vpack.c.b16 %v691, %v688
      %v767 = vpack.c.b16 %v695, %v692
      %v768 = vpack.c.b16 %v696, %v693
      %v769 = vpack.c.b16 %v697, %v694
      %v770 = vpack.c.b16 %v701, %v698
      %v771 = vpack.c.b16 %v702, %v699
      %v772 = vpack.c.b16 %v703, %v700
      %v773 = vpack.c.b16 %v707, %v704
      %v774 = vpack.c.b16 %v708, %v705
      %v775 = vpack.c.b16 %v709, %v706
      %v776 = vpack.c.b16 %v713, %v710
      %v777 = vpack.c.b16 %v714, %v711
      %v778 = vpack.c.b16 %v715, %v712
      %v779 = vpack.c.b16 %v719, %v716
      %v780 = vpack.c.b16 %v720, %v717
      %v781 = vpack.c.b16 %v721, %v718
      %v782 = vpack.c.b16 %v725, %v722
      %v783 = vpack.c.b16 %v726, %v723
      %v784 = vpack.c.b16 %v727, %v724
      %v785 = vpack.c.b16 %v731, %v728
      %v786 = vpack.c.b16 %v732, %v729
      %v787 = vpack.c.b16 %v733, %v730
      %v788 = vpack.c.b16 %v737, %v734
      %v789 = vpack.c.b16 %v738, %v735
      %v790 = vpack.c.b16 %v739, %v736
      %v791 = vpack.c.b16 %v743, %v740
      %v792 = vpack.c.b16 %v744, %v741
      %v793 = vpack.c.b16 %v745, %v742
      %842 = vmatpush.bf16.msra.mxu0 %v767
      %843 = vmatpush.bf16.msra.mxu0 %v764
      %844 = vmatpush.bf16.msra.mxu0 %v761
      %845 = vmatpush.bf16.msra.mxu0 %v758
      %846 = vmatpush.bf16.msra.mxu0 %v755
      %847 = vmatpush.bf16.msra.mxu0 %v752
      %848 = vmatpush.bf16.msra.mxu0 %v749
      %849 = vmatpush.bf16.msra.mxu0 %v746
      %850 = vmatmul.bf16.gmra.mxu0 %v585
      %v851 = vpop.f32.mrf.mxu0
      %v852 = vadd.f32 0.0, %v851
      %v853 = vpop.f32.mrf.mxu0
      %854 = vdwg.mxu0
      %855 = vmatpush.bf16.msra.mxu0 %v791
      %856 = vmatpush.bf16.msra.mxu0 %v788
      %857 = vmatpush.bf16.msra.mxu0 %v785
      %858 = vmatpush.bf16.msra.mxu0 %v782
      %859 = vmatpush.bf16.msra.mxu0 %v779
      %860 = vmatpush.bf16.msra.mxu0 %v776
      %861 = vmatpush.bf16.msra.mxu0 %v773
      %862 = vmatpush.bf16.msra.mxu0 %v770
      %863 = vmatmul.bf16.gmra.mxu0 0
      %v864 = vpop.f32.mrf.mxu0
      %v865 = vadd.f32 %v852, %v864
      %v866 = vpop.f32.mrf.mxu0
      %867 = vdwg.mxu0
      %868 = vmatpush.bf16.msra.mxu0 %v768
      %869 = vmatpush.bf16.msra.mxu0 %v765
      %870 = vmatpush.bf16.msra.mxu0 %v762
      %871 = vmatpush.bf16.msra.mxu0 %v759
      %872 = vmatpush.bf16.msra.mxu0 %v756
      %873 = vmatpush.bf16.msra.mxu0 %v753
      %874 = vmatpush.bf16.msra.mxu0 %v750
      %875 = vmatpush.bf16.msra.mxu0 %v747
      %876 = vmatmul.bf16.gmra.mxu0 %v585
      %v877 = vpop.f32.mrf.mxu0
      %v878 = vadd.f32 0.0, %v877
      %v879 = vpop.f32.mrf.mxu0
      %880 = vdwg.mxu0
      %881 = vmatpush.bf16.msra.mxu0 %v792
      %882 = vmatpush.bf16.msra.mxu0 %v789
      %883 = vmatpush.bf16.msra.mxu0 %v786
      %884 = vmatpush.bf16.msra.mxu0 %v783
      %885 = vmatpush.bf16.msra.mxu0 %v780
      %886 = vmatpush.bf16.msra.mxu0 %v777
      %887 = vmatpush.bf16.msra.mxu0 %v774
      %888 = vmatpush.bf16.msra.mxu0 %v771
      %889 = vmatmul.bf16.gmra.mxu0 0
      %v890 = vpop.f32.mrf.mxu0
      %v891 = vadd.f32 %v878, %v890
      %v892 = vpop.f32.mrf.mxu0
      %893 = vdwg.mxu0
      %894 = vmatpush.bf16.msra.mxu0 %v769
      %895 = vmatpush.bf16.msra.mxu0 %v766
      %896 = vmatpush.bf16.msra.mxu0 %v763
      %897 = vmatpush.bf16.msra.mxu0 %v760
      %898 = vmatpush.bf16.msra.mxu0 %v757
      %899 = vmatpush.bf16.msra.mxu0 %v754
      %900 = vmatpush.bf16.msra.mxu0 %v751
      %901 = vmatpush.bf16.msra.mxu0 %v748
      %902 = vmatmul.bf16.gmra.mxu0 %v585
      %v903 = vpop.f32.mrf.mxu0
      %v904 = vadd.f32 0.0, %v903
      %v905 = vpop.f32.mrf.mxu0
      %906 = vdwg.mxu0
      %907 = vmatpush.bf16.msra.mxu0 %v793
      %908 = vmatpush.bf16.msra.mxu0 %v790
      %909 = vmatpush.bf16.msra.mxu0 %v787
      %910 = vmatpush.bf16.msra.mxu0 %v784
      %911 = vmatpush.bf16.msra.mxu0 %v781
      %912 = vmatpush.bf16.msra.mxu0 %v778
      %913 = vmatpush.bf16.msra.mxu0 %v775
      %914 = vmatpush.bf16.msra.mxu0 %v772
      %915 = vmatmul.bf16.gmra.mxu0 0
      %v916 = vpop.f32.mrf.mxu0
      %v917 = vadd.f32 %v904, %v916
      %v918 = vpop.f32.mrf.mxu0
      %919 = vdwg.mxu0
      %v921 = vperm.slane %v514, 0
      %v923 = vadd.f32 %v865, %v921
      %v924 = vxor.u32 %v923, 2147483648
      %v925 = vmul.f32 %v924, 1.442695
      %v926 = vpow.pop %v925
      %v927 = vadd.f32 %v926, 1.0
      %v928 = vrcp.pop %v927
      %v929 = vmul.f32 %v927, %v928
      %v930 = vsub.f32 1.0, %v929
      %v931 = vmul.f32 %v928, %v930
      %v932 = vadd.f32 %v928, %v931
      %vm933 = vweird.f32 %v927
      %vm934 = vweird.f32 %v928
      %vm935 = vmor %vm933, %vm934
      %v936 = vsel %vm935, %v928, %v932
      %v937 = vand.u32 2147483647, %v927
      %vm938 = vcmp.eq.f32.partialorder %v937, 8.507059e+37
      %v939 = vand.u32 %v927, 2147483648
      %v940 = vor.u32 1.1754944e-38, %v939
      %v941 = vsel %vm938, %v940, %v936
      %v942 = vmul.f32 1.0, %v941
      %v944 = vperm.slane %v515, 0
      %v946 = vadd.f32 %v891, %v944
      %v947 = vxor.u32 %v946, 2147483648
      %v948 = vmul.f32 %v947, 1.442695
      %v949 = vpow.pop %v948
      %v950 = vadd.f32 %v949, 1.0
      %v951 = vrcp.pop %v950
      %v952 = vmul.f32 %v950, %v951
      %v953 = vsub.f32 1.0, %v952
      %v954 = vmul.f32 %v951, %v953
      %v955 = vadd.f32 %v951, %v954
      %vm956 = vweird.f32 %v950
      %vm957 = vweird.f32 %v951
      %vm958 = vmor %vm956, %vm957
      %v959 = vsel %vm958, %v951, %v955
      %v960 = vand.u32 2147483647, %v950
      %vm961 = vcmp.eq.f32.partialorder %v960, 8.507059e+37
      %v962 = vand.u32 %v950, 2147483648
      %v963 = vor.u32 1.1754944e-38, %v962
      %v964 = vsel %vm961, %v963, %v959
      %v965 = vmul.f32 1.0, %v964
      %v966 = vmul.f32 %v965, 0.0
      %v967 = vpack.c.bf16 %v966, %v966
      %v984 = vunpack.c.l.b16 %v498
      %v985 = vunpack.c.l.b16 %v499
      %v986 = vunpack.c.l.b16 %v500
      %v987 = vunpack.c.l.b16 %v501
      %v988 = vunpack.c.l.b16 %v502
      %v989 = vunpack.c.l.b16 %v503
      %v990 = vunpack.c.l.b16 %v504
      %v991 = vunpack.c.l.b16 %v505
      %v992 = vunpack.c.l.b16 %v506
      %v993 = vunpack.c.l.b16 %v507
      %v994 = vunpack.c.l.b16 %v508
      %v995 = vunpack.c.l.b16 %v509
      %v996 = vunpack.c.l.b16 %v510
      %v997 = vunpack.c.l.b16 %v511
      %v998 = vunpack.c.l.b16 %v512
      %v999 = vunpack.c.l.b16 %v513
      %v1000 = vpack.c.b16 %v985, %v984
      %v1001 = vpack.c.b16 %v987, %v986
      %v1002 = vpack.c.b16 %v989, %v988
      %v1003 = vpack.c.b16 %v991, %v990
      %v1004 = vpack.c.b16 %v993, %v992
      %v1005 = vpack.c.b16 %v995, %v994
      %v1006 = vpack.c.b16 %v997, %v996
      %v1007 = vpack.c.b16 %v999, %v998
      %1016 = vmatpush.bf16.msra.mxu0 %v1007
      %1017 = vmatpush.bf16.msra.mxu0 %v1006
      %1018 = vmatpush.bf16.msra.mxu0 %v1005
      %1019 = vmatpush.bf16.msra.mxu0 %v1004
      %1020 = vmatpush.bf16.msra.mxu0 %v1003
      %1021 = vmatpush.bf16.msra.mxu0 %v1002
      %1022 = vmatpush.bf16.msra.mxu0 %v1001
      %1023 = vmatpush.bf16.msra.mxu0 %v1000
      %1024 = vmatmul.bf16.gmra.mxu0 %v967
      %v1025 = vpop.f32.mrf.mxu0
      %v1026 = vadd.f32 0.0, %v1025
      %v1027 = vpop.f32.mrf.mxu0
      %1028 = vdwg.mxu0
      %v1029 = vadd.f32 %v917, %v1026
      %v1031 = vperm.slane %v516, 0
      %v1033 = vadd.f32 %v1029, %v1031
      %v1034 = vtanh.pop %v1033
      %v1035 = vsub.f32 1.0, %v942
      %v1036 = vmul.f32 %v1035, 0.0
      %v1037 = vmul.f32 %v1034, %v942
      %v1038 = vadd.f32 %v1036, %v1037
      %s1039 = scalar_lea.vmem %s410, 8
      %v1040 = vld [vmem:[%s1039] sm:$0xff]
      %v1041 = vmax.f32 %v1040, 0.0
      %v1042 = vpack.c.bf16 %v1041, %v1041
      %v1043 = vpack.c.bf16 %v1038, %v1038
      %1044 = vmatpush.bf16.msra.mxu0 %v767
      %1045 = vmatpush.bf16.msra.mxu0 %v764
      %1046 = vmatpush.bf16.msra.mxu0 %v761
      %1047 = vmatpush.bf16.msra.mxu0 %v758
      %1048 = vmatpush.bf16.msra.mxu0 %v755
      %1049 = vmatpush.bf16.msra.mxu0 %v752
      %1050 = vmatpush.bf16.msra.mxu0 %v749
      %1051 = vmatpush.bf16.msra.mxu0 %v746
      %1052 = vmatmul.bf16.gmra.mxu0 %v1042
      %v1053 = vpop.f32.mrf.mxu0
      %v1054 = vadd.f32 0.0, %v1053
      %v1055 = vpop.f32.mrf.mxu0
      %1056 = vdwg.mxu0
      %1057 = vmatpush.bf16.msra.mxu0 %v791
      %1058 = vmatpush.bf16.msra.mxu0 %v788
      %1059 = vmatpush.bf16.msra.mxu0 %v785
      %1060 = vmatpush.bf16.msra.mxu0 %v782
      %1061 = vmatpush.bf16.msra.mxu0 %v779
      %1062 = vmatpush.bf16.msra.mxu0 %v776
      %1063 = vmatpush.bf16.msra.mxu0 %v773
      %1064 = vmatpush.bf16.msra.mxu0 %v770
      %1065 = vmatmul.bf16.gmra.mxu0 %v1043
      %v1066 = vpop.f32.mrf.mxu0
      %v1067 = vadd.f32 %v1054, %v1066
      %v1068 = vpop.f32.mrf.mxu0
      %1069 = vdwg.mxu0
      %1070 = vmatpush.bf16.msra.mxu0 %v768
      %1071 = vmatpush.bf16.msra.mxu0 %v765
      %1072 = vmatpush.bf16.msra.mxu0 %v762
      %1073 = vmatpush.bf16.msra.mxu0 %v759
      %1074 = vmatpush.bf16.msra.mxu0 %v756
      %1075 = vmatpush.bf16.msra.mxu0 %v753
      %1076 = vmatpush.bf16.msra.mxu0 %v750
      %1077 = vmatpush.bf16.msra.mxu0 %v747
      %1078 = vmatmul.bf16.gmra.mxu0 %v1042
      %v1079 = vpop.f32.mrf.mxu0
      %v1080 = vadd.f32 0.0, %v1079
      %v1081 = vpop.f32.mrf.mxu0
      %1082 = vdwg.mxu0
      %1083 = vmatpush.bf16.msra.mxu0 %v792
      %1084 = vmatpush.bf16.msra.mxu0 %v789
      %1085 = vmatpush.bf16.msra.mxu0 %v786
      %1086 = vmatpush.bf16.msra.mxu0 %v783
      %1087 = vmatpush.bf16.msra.mxu0 %v780
      %1088 = vmatpush.bf16.msra.mxu0 %v777
      %1089 = vmatpush.bf16.msra.mxu0 %v774
      %1090 = vmatpush.bf16.msra.mxu0 %v771
      %1091 = vmatmul.bf16.gmra.mxu0 %v1043
      %v1092 = vpop.f32.mrf.mxu0
      %v1093 = vadd.f32 %v1080, %v1092
      %v1094 = vpop.f32.mrf.mxu0
      %1095 = vdwg.mxu0
      %1096 = vmatpush.bf16.msra.mxu0 %v769
      %1097 = vmatpush.bf16.msra.mxu0 %v766
      %1098 = vmatpush.bf16.msra.mxu0 %v763
      %1099 = vmatpush.bf16.msra.mxu0 %v760
      %1100 = vmatpush.bf16.msra.mxu0 %v757
      %1101 = vmatpush.bf16.msra.mxu0 %v754
      %1102 = vmatpush.bf16.msra.mxu0 %v751
      %1103 = vmatpush.bf16.msra.mxu0 %v748
      %1104 = vmatmul.bf16.gmra.mxu0 %v1042
      %v1105 = vpop.f32.mrf.mxu0
      %v1106 = vadd.f32 0.0, %v1105
      %v1107 = vpop.f32.mrf.mxu0
      %1108 = vdwg.mxu0
      %1109 = vmatpush.bf16.msra.mxu0 %v793
      %1110 = vmatpush.bf16.msra.mxu0 %v790
      %1111 = vmatpush.bf16.msra.mxu0 %v787
      %1112 = vmatpush.bf16.msra.mxu0 %v784
      %1113 = vmatpush.bf16.msra.mxu0 %v781
      %1114 = vmatpush.bf16.msra.mxu0 %v778
      %1115 = vmatpush.bf16.msra.mxu0 %v775
      %1116 = vmatpush.bf16.msra.mxu0 %v772
      %1117 = vmatmul.bf16.gmra.mxu0 %v1043
      %v1118 = vpop.f32.mrf.mxu0
      %v1119 = vadd.f32 %v1106, %v1118
      %v1120 = vpop.f32.mrf.mxu0
      %1121 = vdwg.mxu0
      %v1122 = vadd.f32 %v1067, %v921
      %v1123 = vxor.u32 %v1122, 2147483648
      %v1124 = vmul.f32 %v1123, 1.442695
      %v1125 = vpow.pop %v1124
      %v1126 = vadd.f32 %v1125, 1.0
      %v1127 = vrcp.pop %v1126
      %v1128 = vmul.f32 %v1126, %v1127
      %v1129 = vsub.f32 1.0, %v1128
      %v1130 = vmul.f32 %v1127, %v1129
      %v1131 = vadd.f32 %v1127, %v1130
      %vm1132 = vweird.f32 %v1126
      %vm1133 = vweird.f32 %v1127
      %vm1134 = vmor %vm1132, %vm1133
      %v1135 = vsel %vm1134, %v1127, %v1131
      %v1136 = vand.u32 2147483647, %v1126
      %vm1137 = vcmp.eq.f32.partialorder %v1136, 8.507059e+37
      %v1138 = vand.u32 %v1126, 2147483648
      %v1139 = vor.u32 1.1754944e-38, %v1138
      %v1140 = vsel %vm1137, %v1139, %v1135
      %v1141 = vmul.f32 1.0, %v1140
      %v1142 = vadd.f32 %v1093, %v944
      %v1143 = vxor.u32 %v1142, 2147483648
      %v1144 = vmul.f32 %v1143, 1.442695
      %v1145 = vpow.pop %v1144
      %v1146 = vadd.f32 %v1145, 1.0
      %v1147 = vrcp.pop %v1146
      %v1148 = vmul.f32 %v1146, %v1147
      %v1149 = vsub.f32 1.0, %v1148
      %v1150 = vmul.f32 %v1147, %v1149
      %v1151 = vadd.f32 %v1147, %v1150
      %vm1152 = vweird.f32 %v1146
      %vm1153 = vweird.f32 %v1147
      %vm1154 = vmor %vm1152, %vm1153
      %v1155 = vsel %vm1154, %v1147, %v1151
      %v1156 = vand.u32 2147483647, %v1146
      %vm1157 = vcmp.eq.f32.partialorder %v1156, 8.507059e+37
      %v1158 = vand.u32 %v1146, 2147483648
      %v1159 = vor.u32 1.1754944e-38, %v1158
      %v1160 = vsel %vm1157, %v1159, %v1155
      %v1161 = vmul.f32 1.0, %v1160
      %v1162 = vmul.f32 %v1038, %v1161
      %v1163 = vpack.c.bf16 %v1162, %v1162
      %1164 = vmatpush.bf16.msra.mxu0 %v1007
      %1165 = vmatpush.bf16.msra.mxu0 %v1006
      %1166 = vmatpush.bf16.msra.mxu0 %v1005
      %1167 = vmatpush.bf16.msra.mxu0 %v1004
      %1168 = vmatpush.bf16.msra.mxu0 %v1003
      %1169 = vmatpush.bf16.msra.mxu0 %v1002
      %1170 = vmatpush.bf16.msra.mxu0 %v1001
      %1171 = vmatpush.bf16.msra.mxu0 %v1000
      %1172 = vmatmul.bf16.gmra.mxu0 %v1163
      %v1173 = vpop.f32.mrf.mxu0
      %v1174 = vadd.f32 0.0, %v1173
      %v1175 = vpop.f32.mrf.mxu0
      %1176 = vdwg.mxu0
      %v1177 = vadd.f32 %v1119, %v1174
      %v1178 = vadd.f32 %v1177, %v1031
      %v1179 = vtanh.pop %v1178
      %v1180 = vsub.f32 1.0, %v1141
      %v1181 = vmul.f32 %v1038, %v1180
      %v1182 = vmul.f32 %v1179, %v1141
      %v1183 = vadd.f32 %v1181, %v1182
      %s1184 = scalar_lea.vmem %s410, 16
      %v1185 = vld [vmem:[%s1184] sm:$0xff]
      %v1186 = vmax.f32 %v1185, 0.0
      %v1187 = vpack.c.bf16 %v1186, %v1186
      %v1188 = vpack.c.bf16 %v1183, %v1183
      %1189 = vmatpush.bf16.msra.mxu0 %v767
      %1190 = vmatpush.bf16.msra.mxu0 %v764
      %1191 = vmatpush.bf16.msra.mxu0 %v761
      %1192 = vmatpush.bf16.msra.mxu0 %v758
      %1193 = vmatpush.bf16.msra.mxu0 %v755
      %1194 = vmatpush.bf16.msra.mxu0 %v752
      %1195 = vmatpush.bf16.msra.mxu0 %v749
      %1196 = vmatpush.bf16.msra.mxu0 %v746
      %1197 = vmatmul.bf16.gmra.mxu0 %v1187
      %v1198 = vpop.f32.mrf.mxu0
      %v1199 = vadd.f32 0.0, %v1198
      %v1200 = vpop.f32.mrf.mxu0
      %1201 = vdwg.mxu0
      %1202 = vmatpush.bf16.msra.mxu0 %v791
      %1203 = vmatpush.bf16.msra.mxu0 %v788
      %1204 = vmatpush.bf16.msra.mxu0 %v785
      %1205 = vmatpush.bf16.msra.mxu0 %v782
      %1206 = vmatpush.bf16.msra.mxu0 %v779
      %1207 = vmatpush.bf16.msra.mxu0 %v776
      %1208 = vmatpush.bf16.msra.mxu0 %v773
      %1209 = vmatpush.bf16.msra.mxu0 %v770
      %1210 = vmatmul.bf16.gmra.mxu0 %v1188
      %v1211 = vpop.f32.mrf.mxu0
      %v1212 = vadd.f32 %v1199, %v1211
      %v1213 = vpop.f32.mrf.mxu0
      %1214 = vdwg.mxu0
      %1215 = vmatpush.bf16.msra.mxu0 %v768
      %1216 = vmatpush.bf16.msra.mxu0 %v765
      %1217 = vmatpush.bf16.msra.mxu0 %v762
      %1218 = vmatpush.bf16.msra.mxu0 %v759
      %1219 = vmatpush.bf16.msra.mxu0 %v756
      %1220 = vmatpush.bf16.msra.mxu0 %v753
      %1221 = vmatpush.bf16.msra.mxu0 %v750
      %1222 = vmatpush.bf16.msra.mxu0 %v747
      %1223 = vmatmul.bf16.gmra.mxu0 %v1187
      %v1224 = vpop.f32.mrf.mxu0
      %v1225 = vadd.f32 0.0, %v1224
      %v1226 = vpop.f32.mrf.mxu0
      %1227 = vdwg.mxu0
      %1228 = vmatpush.bf16.msra.mxu0 %v792
      %1229 = vmatpush.bf16.msra.mxu0 %v789
      %1230 = vmatpush.bf16.msra.mxu0 %v786
      %1231 = vmatpush.bf16.msra.mxu0 %v783
      %1232 = vmatpush.bf16.msra.mxu0 %v780
      %1233 = vmatpush.bf16.msra.mxu0 %v777
      %1234 = vmatpush.bf16.msra.mxu0 %v774
      %1235 = vmatpush.bf16.msra.mxu0 %v771
      %1236 = vmatmul.bf16.gmra.mxu0 %v1188
      %v1237 = vpop.f32.mrf.mxu0
      %v1238 = vadd.f32 %v1225, %v1237
      %v1239 = vpop.f32.mrf.mxu0
      %1240 = vdwg.mxu0
      %1241 = vmatpush.bf16.msra.mxu0 %v769
      %1242 = vmatpush.bf16.msra.mxu0 %v766
      %1243 = vmatpush.bf16.msra.mxu0 %v763
      %1244 = vmatpush.bf16.msra.mxu0 %v760
      %1245 = vmatpush.bf16.msra.mxu0 %v757
      %1246 = vmatpush.bf16.msra.mxu0 %v754
      %1247 = vmatpush.bf16.msra.mxu0 %v751
      %1248 = vmatpush.bf16.msra.mxu0 %v748
      %1249 = vmatmul.bf16.gmra.mxu0 %v1187
      %v1250 = vpop.f32.mrf.mxu0
      %v1251 = vadd.f32 0.0, %v1250
      %v1252 = vpop.f32.mrf.mxu0
      %1253 = vdwg.mxu0
      %1254 = vmatpush.bf16.msra.mxu0 %v793
      %1255 = vmatpush.bf16.msra.mxu0 %v790
      %1256 = vmatpush.bf16.msra.mxu0 %v787
      %1257 = vmatpush.bf16.msra.mxu0 %v784
      %1258 = vmatpush.bf16.msra.mxu0 %v781
      %1259 = vmatpush.bf16.msra.mxu0 %v778
      %1260 = vmatpush.bf16.msra.mxu0 %v775
      %1261 = vmatpush.bf16.msra.mxu0 %v772
      %1262 = vmatmul.bf16.gmra.mxu0 %v1188
      %v1263 = vpop.f32.mrf.mxu0
      %v1264 = vadd.f32 %v1251, %v1263
      %v1265 = vpop.f32.mrf.mxu0
      %1266 = vdwg.mxu0
      %v1267 = vadd.f32 %v1212, %v921
      %v1268 = vxor.u32 %v1267, 2147483648
      %v1269 = vmul.f32 %v1268, 1.442695
      %v1270 = vpow.pop %v1269
      %v1271 = vadd.f32 %v1270, 1.0
      %v1272 = vrcp.pop %v1271
      %v1273 = vmul.f32 %v1271, %v1272
      %v1274 = vsub.f32 1.0, %v1273
      %v1275 = vmul.f32 %v1272, %v1274
      %v1276 = vadd.f32 %v1272, %v1275
      %vm1277 = vweird.f32 %v1271
      %vm1278 = vweird.f32 %v1272
      %vm1279 = vmor %vm1277, %vm1278
      %v1280 = vsel %vm1279, %v1272, %v1276
      %v1281 = vand.u32 2147483647, %v1271
      %vm1282 = vcmp.eq.f32.partialorder %v1281, 8.507059e+37
      %v1283 = vand.u32 %v1271, 2147483648
      %v1284 = vor.u32 1.1754944e-38, %v1283
      %v1285 = vsel %vm1282, %v1284, %v1280
      %v1286 = vmul.f32 1.0, %v1285
      %v1287 = vadd.f32 %v1238, %v944
      %v1288 = vxor.u32 %v1287, 2147483648
      %v1289 = vmul.f32 %v1288, 1.442695
      %v1290 = vpow.pop %v1289
      %v1291 = vadd.f32 %v1290, 1.0
      %v1292 = vrcp.pop %v1291
      %v1293 = vmul.f32 %v1291, %v1292
      %v1294 = vsub.f32 1.0, %v1293
      %v1295 = vmul.f32 %v1292, %v1294
      %v1296 = vadd.f32 %v1292, %v1295
      %vm1297 = vweird.f32 %v1291
      %vm1298 = vweird.f32 %v1292
      %vm1299 = vmor %vm1297, %vm1298
      %v1300 = vsel %vm1299, %v1292, %v1296
      %v1301 = vand.u32 2147483647, %v1291
      %vm1302 = vcmp.eq.f32.partialorder %v1301, 8.507059e+37
      %v1303 = vand.u32 %v1291, 2147483648
      %v1304 = vor.u32 1.1754944e-38, %v1303
      %v1305 = vsel %vm1302, %v1304, %v1300
      %v1306 = vmul.f32 1.0, %v1305
      %v1307 = vmul.f32 %v1183, %v1306
      %v1308 = vpack.c.bf16 %v1307, %v1307
      %1309 = vmatpush.bf16.msra.mxu0 %v1007
      %1310 = vmatpush.bf16.msra.mxu0 %v1006
      %1311 = vmatpush.bf16.msra.mxu0 %v1005
      %1312 = vmatpush.bf16.msra.mxu0 %v1004
      %1313 = vmatpush.bf16.msra.mxu0 %v1003
      %1314 = vmatpush.bf16.msra.mxu0 %v1002
      %1315 = vmatpush.bf16.msra.mxu0 %v1001
      %1316 = vmatpush.bf16.msra.mxu0 %v1000
      %1317 = vmatmul.bf16.gmra.mxu0 %v1308
      %v1318 = vpop.f32.mrf.mxu0
      %v1319 = vadd.f32 0.0, %v1318
      %v1320 = vpop.f32.mrf.mxu0
      %1321 = vdwg.mxu0
      %v1322 = vadd.f32 %v1264, %v1319
      %v1323 = vadd.f32 %v1322, %v1031
      %v1324 = vtanh.pop %v1323
      %v1325 = vsub.f32 1.0, %v1286
      %v1326 = vmul.f32 %v1183, %v1325
      %v1327 = vmul.f32 %v1324, %v1286
      %v1328 = vadd.f32 %v1326, %v1327
      %s1329 = scalar_lea.vmem %s410, 24
      %v1330 = vld [vmem:[%s1329] sm:$0xff]
      %v1331 = vmax.f32 %v1330, 0.0
      %v1332 = vpack.c.bf16 %v1331, %v1331
      %v1333 = vpack.c.bf16 %v1328, %v1328
      %1334 = vmatpush.bf16.msra.mxu0 %v767
      %1335 = vmatpush.bf16.msra.mxu0 %v764
      %1336 = vmatpush.bf16.msra.mxu0 %v761
      %1337 = vmatpush.bf16.msra.mxu0 %v758
      %1338 = vmatpush.bf16.msra.mxu0 %v755
      %1339 = vmatpush.bf16.msra.mxu0 %v752
      %1340 = vmatpush.bf16.msra.mxu0 %v749
      %1341 = vmatpush.bf16.msra.mxu0 %v746
      %1342 = vmatmul.bf16.gmra.mxu0 %v1332
      %v1343 = vpop.f32.mrf.mxu0
      %v1344 = vadd.f32 0.0, %v1343
      %v1345 = vpop.f32.mrf.mxu0
      %1346 = vdwg.mxu0
      %1347 = vmatpush.bf16.msra.mxu0 %v791
      %1348 = vmatpush.bf16.msra.mxu0 %v788
      %1349 = vmatpush.bf16.msra.mxu0 %v785
      %1350 = vmatpush.bf16.msra.mxu0 %v782
      %1351 = vmatpush.bf16.msra.mxu0 %v779
      %1352 = vmatpush.bf16.msra.mxu0 %v776
      %1353 = vmatpush.bf16.msra.mxu0 %v773
      %1354 = vmatpush.bf16.msra.mxu0 %v770
      %1355 = vmatmul.bf16.gmra.mxu0 %v1333
      %v1356 = vpop.f32.mrf.mxu0
      %v1357 = vadd.f32 %v1344, %v1356
      %v1358 = vpop.f32.mrf.mxu0
      %1359 = vdwg.mxu0
      %1360 = vmatpush.bf16.msra.mxu0 %v768
      %1361 = vmatpush.bf16.msra.mxu0 %v765
      %1362 = vmatpush.bf16.msra.mxu0 %v762
      %1363 = vmatpush.bf16.msra.mxu0 %v759
      %1364 = vmatpush.bf16.msra.mxu0 %v756
      %1365 = vmatpush.bf16.msra.mxu0 %v753
      %1366 = vmatpush.bf16.msra.mxu0 %v750
      %1367 = vmatpush.bf16.msra.mxu0 %v747
      %1368 = vmatmul.bf16.gmra.mxu0 %v1332
      %v1369 = vpop.f32.mrf.mxu0
      %v1370 = vadd.f32 0.0, %v1369
      %v1371 = vpop.f32.mrf.mxu0
      %1372 = vdwg.mxu0
      %1373 = vmatpush.bf16.msra.mxu0 %v792
      %1374 = vmatpush.bf16.msra.mxu0 %v789
      %1375 = vmatpush.bf16.msra.mxu0 %v786
      %1376 = vmatpush.bf16.msra.mxu0 %v783
      %1377 = vmatpush.bf16.msra.mxu0 %v780
      %1378 = vmatpush.bf16.msra.mxu0 %v777
      %1379 = vmatpush.bf16.msra.mxu0 %v774
      %1380 = vmatpush.bf16.msra.mxu0 %v771
      %1381 = vmatmul.bf16.gmra.mxu0 %v1333
      %v1382 = vpop.f32.mrf.mxu0
      %v1383 = vadd.f32 %v1370, %v1382
      %v1384 = vpop.f32.mrf.mxu0
      %1385 = vdwg.mxu0
      %1386 = vmatpush.bf16.msra.mxu0 %v769
      %1387 = vmatpush.bf16.msra.mxu0 %v766
      %1388 = vmatpush.bf16.msra.mxu0 %v763
      %1389 = vmatpush.bf16.msra.mxu0 %v760
      %1390 = vmatpush.bf16.msra.mxu0 %v757
      %1391 = vmatpush.bf16.msra.mxu0 %v754
      %1392 = vmatpush.bf16.msra.mxu0 %v751
      %1393 = vmatpush.bf16.msra.mxu0 %v748
      %1394 = vmatmul.bf16.gmra.mxu0 %v1332
      %v1395 = vpop.f32.mrf.mxu0
      %v1396 = vadd.f32 0.0, %v1395
      %v1397 = vpop.f32.mrf.mxu0
      %1398 = vdwg.mxu0
      %1399 = vmatpush.bf16.msra.mxu0 %v793
      %1400 = vmatpush.bf16.msra.mxu0 %v790
      %1401 = vmatpush.bf16.msra.mxu0 %v787
      %1402 = vmatpush.bf16.msra.mxu0 %v784
      %1403 = vmatpush.bf16.msra.mxu0 %v781
      %1404 = vmatpush.bf16.msra.mxu0 %v778
      %1405 = vmatpush.bf16.msra.mxu0 %v775
      %1406 = vmatpush.bf16.msra.mxu0 %v772
      %1407 = vmatmul.bf16.gmra.mxu0 %v1333
      %v1408 = vpop.f32.mrf.mxu0
      %v1409 = vadd.f32 %v1396, %v1408
      %v1410 = vpop.f32.mrf.mxu0
      %1411 = vdwg.mxu0
      %v1412 = vadd.f32 %v1357, %v921
      %v1413 = vxor.u32 %v1412, 2147483648
      %v1414 = vmul.f32 %v1413, 1.442695
      %v1415 = vpow.pop %v1414
      %v1416 = vadd.f32 %v1415, 1.0
      %v1417 = vrcp.pop %v1416
      %v1418 = vmul.f32 %v1416, %v1417
      %v1419 = vsub.f32 1.0, %v1418
      %v1420 = vmul.f32 %v1417, %v1419
      %v1421 = vadd.f32 %v1417, %v1420
      %vm1422 = vweird.f32 %v1416
      %vm1423 = vweird.f32 %v1417
      %vm1424 = vmor %vm1422, %vm1423
      %v1425 = vsel %vm1424, %v1417, %v1421
      %v1426 = vand.u32 2147483647, %v1416
      %vm1427 = vcmp.eq.f32.partialorder %v1426, 8.507059e+37
      %v1428 = vand.u32 %v1416, 2147483648
      %v1429 = vor.u32 1.1754944e-38, %v1428
      %v1430 = vsel %vm1427, %v1429, %v1425
      %v1431 = vmul.f32 1.0, %v1430
      %v1432 = vadd.f32 %v1383, %v944
      %v1433 = vxor.u32 %v1432, 2147483648
      %v1434 = vmul.f32 %v1433, 1.442695
      %v1435 = vpow.pop %v1434
      %v1436 = vadd.f32 %v1435, 1.0
      %v1437 = vrcp.pop %v1436
      %v1438 = vmul.f32 %v1436, %v1437
      %v1439 = vsub.f32 1.0, %v1438
      %v1440 = vmul.f32 %v1437, %v1439
      %v1441 = vadd.f32 %v1437, %v1440
      %vm1442 = vweird.f32 %v1436
      %vm1443 = vweird.f32 %v1437
      %vm1444 = vmor %vm1442, %vm1443
      %v1445 = vsel %vm1444, %v1437, %v1441
      %v1446 = vand.u32 2147483647, %v1436
      %vm1447 = vcmp.eq.f32.partialorder %v1446, 8.507059e+37
      %v1448 = vand.u32 %v1436, 2147483648
      %v1449 = vor.u32 1.1754944e-38, %v1448
      %v1450 = vsel %vm1447, %v1449, %v1445
      %v1451 = vmul.f32 1.0, %v1450
      %v1452 = vmul.f32 %v1328, %v1451
      %v1453 = vpack.c.bf16 %v1452, %v1452
      %1454 = vmatpush.bf16.msra.mxu0 %v1007
      %1455 = vmatpush.bf16.msra.mxu0 %v1006
      %1456 = vmatpush.bf16.msra.mxu0 %v1005
      %1457 = vmatpush.bf16.msra.mxu0 %v1004
      %1458 = vmatpush.bf16.msra.mxu0 %v1003
      %1459 = vmatpush.bf16.msra.mxu0 %v1002
      %1460 = vmatpush.bf16.msra.mxu0 %v1001
      %1461 = vmatpush.bf16.msra.mxu0 %v1000
      %1462 = vmatmul.bf16.gmra.mxu0 %v1453
      %v1463 = vpop.f32.mrf.mxu0
      %v1464 = vadd.f32 0.0, %v1463
      %v1465 = vpop.f32.mrf.mxu0
      %1466 = vdwg.mxu0
      %v1467 = vadd.f32 %v1409, %v1464
      %v1468 = vadd.f32 %v1467, %v1031
      %v1469 = vtanh.pop %v1468
      %v1470 = vsub.f32 1.0, %v1431
      %v1471 = vmul.f32 %v1328, %v1470
      %v1472 = vmul.f32 %v1469, %v1431
      %v1473 = vadd.f32 %v1471, %v1472
      %s1474 = scalar_lea.vmem %s410, 32
      %v1475 = vld [vmem:[%s1474] sm:$0xff]
      %v1476 = vmax.f32 %v1475, 0.0
      %v1477 = vpack.c.bf16 %v1476, %v1476
      %v1478 = vpack.c.bf16 %v1473, %v1473
      %1479 = vmatpush.bf16.msra.mxu0 %v767
      %1480 = vmatpush.bf16.msra.mxu0 %v764
      %1481 = vmatpush.bf16.msra.mxu0 %v761
      %1482 = vmatpush.bf16.msra.mxu0 %v758
      %1483 = vmatpush.bf16.msra.mxu0 %v755
      %1484 = vmatpush.bf16.msra.mxu0 %v752
      %1485 = vmatpush.bf16.msra.mxu0 %v749
      %1486 = vmatpush.bf16.msra.mxu0 %v746
      %1487 = vmatmul.bf16.gmra.mxu0 %v1477
      %v1488 = vpop.f32.mrf.mxu0
      %v1489 = vadd.f32 0.0, %v1488
      %v1490 = vpop.f32.mrf.mxu0
      %1491 = vdwg.mxu0
      %1492 = vmatpush.bf16.msra.mxu0 %v791
      %1493 = vmatpush.bf16.msra.mxu0 %v788
      %1494 = vmatpush.bf16.msra.mxu0 %v785
      %1495 = vmatpush.bf16.msra.mxu0 %v782
      %1496 = vmatpush.bf16.msra.mxu0 %v779
      %1497 = vmatpush.bf16.msra.mxu0 %v776
      %1498 = vmatpush.bf16.msra.mxu0 %v773
      %1499 = vmatpush.bf16.msra.mxu0 %v770
      %1500 = vmatmul.bf16.gmra.mxu0 %v1478
      %v1501 = vpop.f32.mrf.mxu0
      %v1502 = vadd.f32 %v1489, %v1501
      %v1503 = vpop.f32.mrf.mxu0
      %1504 = vdwg.mxu0
      %1505 = vmatpush.bf16.msra.mxu0 %v768
      %1506 = vmatpush.bf16.msra.mxu0 %v765
      %1507 = vmatpush.bf16.msra.mxu0 %v762
      %1508 = vmatpush.bf16.msra.mxu0 %v759
      %1509 = vmatpush.bf16.msra.mxu0 %v756
      %1510 = vmatpush.bf16.msra.mxu0 %v753
      %1511 = vmatpush.bf16.msra.mxu0 %v750
      %1512 = vmatpush.bf16.msra.mxu0 %v747
      %1513 = vmatmul.bf16.gmra.mxu0 %v1477
      %v1514 = vpop.f32.mrf.mxu0
      %v1515 = vadd.f32 0.0, %v1514
      %v1516 = vpop.f32.mrf.mxu0
      %1517 = vdwg.mxu0
      %1518 = vmatpush.bf16.msra.mxu0 %v792
      %1519 = vmatpush.bf16.msra.mxu0 %v789
      %1520 = vmatpush.bf16.msra.mxu0 %v786
      %1521 = vmatpush.bf16.msra.mxu0 %v783
      %1522 = vmatpush.bf16.msra.mxu0 %v780
      %1523 = vmatpush.bf16.msra.mxu0 %v777
      %1524 = vmatpush.bf16.msra.mxu0 %v774
      %1525 = vmatpush.bf16.msra.mxu0 %v771
      %1526 = vmatmul.bf16.gmra.mxu0 %v1478
      %v1527 = vpop.f32.mrf.mxu0
      %v1528 = vadd.f32 %v1515, %v1527
      %v1529 = vpop.f32.mrf.mxu0
      %1530 = vdwg.mxu0
      %1531 = vmatpush.bf16.msra.mxu0 %v769
      %1532 = vmatpush.bf16.msra.mxu0 %v766
      %1533 = vmatpush.bf16.msra.mxu0 %v763
      %1534 = vmatpush.bf16.msra.mxu0 %v760
      %1535 = vmatpush.bf16.msra.mxu0 %v757
      %1536 = vmatpush.bf16.msra.mxu0 %v754
      %1537 = vmatpush.bf16.msra.mxu0 %v751
      %1538 = vmatpush.bf16.msra.mxu0 %v748
      %1539 = vmatmul.bf16.gmra.mxu0 %v1477
      %v1540 = vpop.f32.mrf.mxu0
      %v1541 = vadd.f32 0.0, %v1540
      %v1542 = vpop.f32.mrf.mxu0
      %1543 = vdwg.mxu0
      %1544 = vmatpush.bf16.msra.mxu0 %v793
      %1545 = vmatpush.bf16.msra.mxu0 %v790
      %1546 = vmatpush.bf16.msra.mxu0 %v787
      %1547 = vmatpush.bf16.msra.mxu0 %v784
      %1548 = vmatpush.bf16.msra.mxu0 %v781
      %1549 = vmatpush.bf16.msra.mxu0 %v778
      %1550 = vmatpush.bf16.msra.mxu0 %v775
      %1551 = vmatpush.bf16.msra.mxu0 %v772
      %1552 = vmatmul.bf16.gmra.mxu0 %v1478
      %v1553 = vpop.f32.mrf.mxu0
      %v1554 = vadd.f32 %v1541, %v1553
      %v1555 = vpop.f32.mrf.mxu0
      %1556 = vdwg.mxu0
      %v1557 = vadd.f32 %v1502, %v921
      %v1558 = vxor.u32 %v1557, 2147483648
      %v1559 = vmul.f32 %v1558, 1.442695
      %v1560 = vpow.pop %v1559
      %v1561 = vadd.f32 %v1560, 1.0
      %v1562 = vrcp.pop %v1561
      %v1563 = vmul.f32 %v1561, %v1562
      %v1564 = vsub.f32 1.0, %v1563
      %v1565 = vmul.f32 %v1562, %v1564
      %v1566 = vadd.f32 %v1562, %v1565
      %vm1567 = vweird.f32 %v1561
      %vm1568 = vweird.f32 %v1562
      %vm1569 = vmor %vm1567, %vm1568
      %v1570 = vsel %vm1569, %v1562, %v1566
      %v1571 = vand.u32 2147483647, %v1561
      %vm1572 = vcmp.eq.f32.partialorder %v1571, 8.507059e+37
      %v1573 = vand.u32 %v1561, 2147483648
      %v1574 = vor.u32 1.1754944e-38, %v1573
      %v1575 = vsel %vm1572, %v1574, %v1570
      %v1576 = vmul.f32 1.0, %v1575
      %v1577 = vadd.f32 %v1528, %v944
      %v1578 = vxor.u32 %v1577, 2147483648
      %v1579 = vmul.f32 %v1578, 1.442695
      %v1580 = vpow.pop %v1579
      %v1581 = vadd.f32 %v1580, 1.0
      %v1582 = vrcp.pop %v1581
      %v1583 = vmul.f32 %v1581, %v1582
      %v1584 = vsub.f32 1.0, %v1583
      %v1585 = vmul.f32 %v1582, %v1584
      %v1586 = vadd.f32 %v1582, %v1585
      %vm1587 = vweird.f32 %v1581
      %vm1588 = vweird.f32 %v1582
      %vm1589 = vmor %vm1587, %vm1588
      %v1590 = vsel %vm1589, %v1582, %v1586
      %v1591 = vand.u32 2147483647, %v1581
      %vm1592 = vcmp.eq.f32.partialorder %v1591, 8.507059e+37
      %v1593 = vand.u32 %v1581, 2147483648
      %v1594 = vor.u32 1.1754944e-38, %v1593
      %v1595 = vsel %vm1592, %v1594, %v1590
      %v1596 = vmul.f32 1.0, %v1595
      %v1597 = vmul.f32 %v1473, %v1596
      %v1598 = vpack.c.bf16 %v1597, %v1597
      %1599 = vmatpush.bf16.msra.mxu0 %v1007
      %1600 = vmatpush.bf16.msra.mxu0 %v1006
      %1601 = vmatpush.bf16.msra.mxu0 %v1005
      %1602 = vmatpush.bf16.msra.mxu0 %v1004
      %1603 = vmatpush.bf16.msra.mxu0 %v1003
      %1604 = vmatpush.bf16.msra.mxu0 %v1002
      %1605 = vmatpush.bf16.msra.mxu0 %v1001
      %1606 = vmatpush.bf16.msra.mxu0 %v1000
      %1607 = vmatmul.bf16.gmra.mxu0 %v1598
      %v1608 = vpop.f32.mrf.mxu0
      %v1609 = vadd.f32 0.0, %v1608
      %v1610 = vpop.f32.mrf.mxu0
      %1611 = vdwg.mxu0
      %v1612 = vadd.f32 %v1554, %v1609
      %v1613 = vadd.f32 %v1612, %v1031
      %v1614 = vtanh.pop %v1613
      %v1615 = vsub.f32 1.0, %v1576
      %v1616 = vmul.f32 %v1473, %v1615
      %v1617 = vmul.f32 %v1614, %v1576
      %v1618 = vadd.f32 %v1616, %v1617
      %v1619 = vpack.c.bf16 %v1618, %v1618
      %v1621 = vperm.slane %v533, 0
      %v1639 = vunpack.c.l.b16 %v517
      %v1640 = vunpack.c.l.b16 %v518
      %v1641 = vunpack.c.l.b16 %v519
      %v1642 = vunpack.c.l.b16 %v520
      %v1643 = vunpack.c.l.b16 %v521
      %v1644 = vunpack.c.l.b16 %v522
      %v1645 = vunpack.c.l.b16 %v523
      %v1646 = vunpack.c.l.b16 %v524
      %v1647 = vunpack.c.l.b16 %v525
      %v1648 = vunpack.c.l.b16 %v526
      %v1649 = vunpack.c.l.b16 %v527
      %v1650 = vunpack.c.l.b16 %v528
      %v1651 = vunpack.c.l.b16 %v529
      %v1652 = vunpack.c.l.b16 %v530
      %v1653 = vunpack.c.l.b16 %v531
      %v1654 = vunpack.c.l.b16 %v532
      %v1655 = vpack.c.b16 %v1640, %v1639
      %v1656 = vpack.c.b16 %v1642, %v1641
      %v1657 = vpack.c.b16 %v1644, %v1643
      %v1658 = vpack.c.b16 %v1646, %v1645
      %v1659 = vpack.c.b16 %v1648, %v1647
      %v1660 = vpack.c.b16 %v1650, %v1649
      %v1661 = vpack.c.b16 %v1652, %v1651
      %v1662 = vpack.c.b16 %v1654, %v1653
      %1671 = vmatpush.bf16.msra.mxu0 %v1662
      %1672 = vmatpush.bf16.msra.mxu0 %v1661
      %1673 = vmatpush.bf16.msra.mxu0 %v1660
      %1674 = vmatpush.bf16.msra.mxu0 %v1659
      %1675 = vmatpush.bf16.msra.mxu0 %v1658
      %1676 = vmatpush.bf16.msra.mxu0 %v1657
      %1677 = vmatpush.bf16.msra.mxu0 %v1656
      %1678 = vmatpush.bf16.msra.mxu0 %v1655
      %1679 = vmatmul.bf16.gmra.mxu0 %v1619
      %v1680 = vpop.f32.mrf.mxu0
      %v1681 = vadd.f32 %v1621, %v1680
      %v1682 = vpop.f32.mrf.mxu0
      %1683 = vdwg.mxu0
      %v1684 = vmax.f32 %v1681, 0.0
      %v1685 = vpack.c.bf16 %v1684, %v1684
      %v1687 = vperm.slane %v550, 0
      %v1705 = vunpack.c.l.b16 %v534
      %v1706 = vunpack.c.l.b16 %v535
      %v1707 = vunpack.c.l.b16 %v536
      %v1708 = vunpack.c.l.b16 %v537
      %v1709 = vunpack.c.l.b16 %v538
      %v1710 = vunpack.c.l.b16 %v539
      %v1711 = vunpack.c.l.b16 %v540
      %v1712 = vunpack.c.l.b16 %v541
      %v1713 = vunpack.c.l.b16 %v542
      %v1714 = vunpack.c.l.b16 %v543
      %v1715 = vunpack.c.l.b16 %v544
      %v1716 = vunpack.c.l.b16 %v545
      %v1717 = vunpack.c.l.b16 %v546
      %v1718 = vunpack.c.l.b16 %v547
      %v1719 = vunpack.c.l.b16 %v548
      %v1720 = vunpack.c.l.b16 %v549
      %v1721 = vpack.c.b16 %v1706, %v1705
      %v1722 = vpack.c.b16 %v1708, %v1707
      %v1723 = vpack.c.b16 %v1710, %v1709
      %v1724 = vpack.c.b16 %v1712, %v1711
      %v1725 = vpack.c.b16 %v1714, %v1713
      %v1726 = vpack.c.b16 %v1716, %v1715
      %v1727 = vpack.c.b16 %v1718, %v1717
      %v1728 = vpack.c.b16 %v1720, %v1719
      %1737 = vmatpush.bf16.msra.mxu0 %v1728
      %1738 = vmatpush.bf16.msra.mxu0 %v1727
      %1739 = vmatpush.bf16.msra.mxu0 %v1726
      %1740 = vmatpush.bf16.msra.mxu0 %v1725
      %1741 = vmatpush.bf16.msra.mxu0 %v1724
      %1742 = vmatpush.bf16.msra.mxu0 %v1723
      %1743 = vmatpush.bf16.msra.mxu0 %v1722
      %1744 = vmatpush.bf16.msra.mxu0 %v1721
      %1745 = vmatmul.bf16.gmra.mxu0 %v1685
      %v1746 = vpop.f32.mrf.mxu0
      %v1747 = vadd.f32 %v1687, %v1746
      %v1748 = vpop.f32.mrf.mxu0
      %1749 = vdwg.mxu0
      %1750 = vmax.xlane.f32.xlu0 %v1747
      %v1751 = vpop.xlane.xlu0 %1750
      %v1752 = vsub.f32 %v1747, %v1751
      %v1753 = vmul.f32 %v1752, 1.442695
      %v1754 = vpow.pop %v1753
      %1755 = vadd.xlane.f32.xlu0 %v1754
      %v1756 = vpop.xlane.xlu0 %1755
      %v1757 = vpack.c.bf16 %v1754, %v1754
      %v1774 = vunpack.c.l.b16 %v551
      %v1775 = vunpack.c.l.b16 %v552
      %v1776 = vunpack.c.l.b16 %v553
      %v1777 = vunpack.c.l.b16 %v554
      %v1778 = vunpack.c.l.b16 %v555
      %v1779 = vunpack.c.l.b16 %v556
      %v1780 = vunpack.c.l.b16 %v557
      %v1781 = vunpack.c.l.b16 %v558
      %v1782 = vunpack.c.l.b16 %v559
      %v1783 = vunpack.c.l.b16 %v560
      %v1784 = vunpack.c.l.b16 %v561
      %v1785 = vunpack.c.l.b16 %v562
      %v1786 = vunpack.c.l.b16 %v563
      %v1787 = vunpack.c.l.b16 %v564
      %v1788 = vunpack.c.l.b16 %v565
      %v1789 = vunpack.c.l.b16 %v566
      %v1790 = vpack.c.b16 %v1775, %v1774
      %v1791 = vpack.c.b16 %v1777, %v1776
      %v1792 = vpack.c.b16 %v1779, %v1778
      %v1793 = vpack.c.b16 %v1781, %v1780
      %v1794 = vpack.c.b16 %v1783, %v1782
      %v1795 = vpack.c.b16 %v1785, %v1784
      %v1796 = vpack.c.b16 %v1787, %v1786
      %v1797 = vpack.c.b16 %v1789, %v1788
      %1806 = vmatpush.bf16.msra.mxu0 %v1797
      %1807 = vmatpush.bf16.msra.mxu0 %v1796
      %1808 = vmatpush.bf16.msra.mxu0 %v1795
      %1809 = vmatpush.bf16.msra.mxu0 %v1794
      %1810 = vmatpush.bf16.msra.mxu0 %v1793
      %1811 = vmatpush.bf16.msra.mxu0 %v1792
      %1812 = vmatpush.bf16.msra.mxu0 %v1791
      %1813 = vmatpush.bf16.msra.mxu0 %v1790
      %1814 = vmatmul.bf16.gmra.mxu0 %v1757
      %v1815 = vpop.f32.mrf.mxu0
      %v1816 = vadd.f32 0.0, %v1815
      %v1817 = vpop.f32.mrf.mxu0
      %1818 = vdwg.mxu0
      %v1819 = vrcp.pop %v1756
      %v1820 = vmul.f32 %v1816, %v1819
      %1821 = vmatpush.msra.mxu0 %v582
      %1822 = vmatpush.msra.mxu0 %v581
      %1823 = vmatpush.msra.mxu0 %v580
      %1824 = vmatpush.msra.mxu0 %v579
      %1825 = vmatpush.msra.mxu0 %v578
      %1826 = vmatpush.msra.mxu0 %v577
      %1827 = vmatpush.msra.mxu0 %v576
      %1828 = vmatpush.msra.mxu0 %v575
      %1829 = vmatpush.msra.mxu0 %v574
      %1830 = vmatpush.msra.mxu0 %v573
      %1831 = vmatpush.msra.mxu0 %v572
      %1832 = vmatpush.msra.mxu0 %v571
      %1833 = vmatpush.msra.mxu0 %v570
      %1834 = vmatpush.msra.mxu0 %v569
      %1835 = vmatpush.msra.mxu0 %v568
      %1836 = vmatpush.msra.mxu0 %v567
      %1837 = vmatmul.f32.gmra.mxu0 %v1820
      %v1838 = vpop.f32.mrf.mxu0
      %v1839 = vadd.f32 0.0, %v1838
      %1840 = vdwg.mxu0
      %vm1841 = vcmask 195584
      %v1842 = vsel %vm1841, %v1839, -inf
      %1843 = vmax.xlane.f32.xlu0 %v1842
      %v1844 = vpop.xlane.xlu0 %1843
      %v1845 = vsub.f32 %v1839, %v1844
      %v1846 = vmul.f32 %v1845, 1.442695
      %v1847 = vpow.pop %v1846
      %v1848 = vsel %vm1841, %v1847, 0.0
      %1849 = vadd.xlane.f32.xlu0 %v1848
      %v1850 = vpop.xlane.xlu0 %1849
      %v1851 = vlog2.pop %v1850
      %v1852 = vmul.f32 %v1851, 0.6931472
      %v1853 = vadd.f32 %v1852, %v1844
      %v1854 = vlaneseq
      %v1855 = vand.u32 %v1854, 127
      %v1856 = vlaneseq
      %v1857 = vshrl.u32 %v1856, 7
      %vm1858 = vcmp.eq.s32.totalorder %v1855, %v1857
      %v1859 = vsel %vm1858, %v1839, 0.0
      %v1860 = vsel %vm1841, %v1859, 0.0
      %1861 = vadd.xlane.f32.xlu0 %v1860
      %v1862 = vpop.xlane.xlu0 %1861
      %v1863 = vsub.f32 %v1853, %v1862
      %v1864 = vrot.slane %v1863, 4
      %v1865 = vadd.f32 %v1863, %v1864
      %v1866 = vrot.slane %v1865, 2
      %v1867 = vadd.f32 %v1865, %v1866
      %v1868 = vrot.slane %v1867, 1
      %v1869 = vadd.f32 %v1867, %v1868
      %v1870 = vadd.f32 %v1869, 0.0
      %v1871 = vmax.f32 %v1820, 0.0
      %v1872 = vpack.c.bf16 %v1871, %v1871
      %1873 = vmatpush.bf16.msra.mxu0 %v767
      %1874 = vmatpush.bf16.msra.mxu0 %v764
      %1875 = vmatpush.bf16.msra.mxu0 %v761
      %1876 = vmatpush.bf16.msra.mxu0 %v758
      %1877 = vmatpush.bf16.msra.mxu0 %v755
      %1878 = vmatpush.bf16.msra.mxu0 %v752
      %1879 = vmatpush.bf16.msra.mxu0 %v749
      %1880 = vmatpush.bf16.msra.mxu0 %v746
      %1881 = vmatmul.bf16.gmra.mxu0 %v1872
      %v1882 = vpop.f32.mrf.mxu0
      %v1883 = vadd.f32 0.0, %v1882
      %v1884 = vpop.f32.mrf.mxu0
      %1885 = vdwg.mxu0
      %1886 = vmatpush.bf16.msra.mxu0 %v791
      %1887 = vmatpush.bf16.msra.mxu0 %v788
      %1888 = vmatpush.bf16.msra.mxu0 %v785
      %1889 = vmatpush.bf16.msra.mxu0 %v782
      %1890 = vmatpush.bf16.msra.mxu0 %v779
      %1891 = vmatpush.bf16.msra.mxu0 %v776
      %1892 = vmatpush.bf16.msra.mxu0 %v773
      %1893 = vmatpush.bf16.msra.mxu0 %v770
      %1894 = vmatmul.bf16.gmra.mxu0 %v1619
      %v1895 = vpop.f32.mrf.mxu0
      %v1896 = vadd.f32 %v1883, %v1895
      %v1897 = vpop.f32.mrf.mxu0
      %1898 = vdwg.mxu0
      %1899 = vmatpush.bf16.msra.mxu0 %v768
      %1900 = vmatpush.bf16.msra.mxu0 %v765
      %1901 = vmatpush.bf16.msra.mxu0 %v762
      %1902 = vmatpush.bf16.msra.mxu0 %v759
      %1903 = vmatpush.bf16.msra.mxu0 %v756
      %1904 = vmatpush.bf16.msra.mxu0 %v753
      %1905 = vmatpush.bf16.msra.mxu0 %v750
      %1906 = vmatpush.bf16.msra.mxu0 %v747
      %1907 = vmatmul.bf16.gmra.mxu0 %v1872
      %v1908 = vpop.f32.mrf.mxu0
      %v1909 = vadd.f32 0.0, %v1908
      %v1910 = vpop.f32.mrf.mxu0
      %1911 = vdwg.mxu0
      %1912 = vmatpush.bf16.msra.mxu0 %v792
      %1913 = vmatpush.bf16.msra.mxu0 %v789
      %1914 = vmatpush.bf16.msra.mxu0 %v786
      %1915 = vmatpush.bf16.msra.mxu0 %v783
      %1916 = vmatpush.bf16.msra.mxu0 %v780
      %1917 = vmatpush.bf16.msra.mxu0 %v777
      %1918 = vmatpush.bf16.msra.mxu0 %v774
      %1919 = vmatpush.bf16.msra.mxu0 %v771
      %1920 = vmatmul.bf16.gmra.mxu0 %v1619
      %v1921 = vpop.f32.mrf.mxu0
      %v1922 = vadd.f32 %v1909, %v1921
      %v1923 = vpop.f32.mrf.mxu0
      %1924 = vdwg.mxu0
      %1925 = vmatpush.bf16.msra.mxu0 %v769
      %1926 = vmatpush.bf16.msra.mxu0 %v766
      %1927 = vmatpush.bf16.msra.mxu0 %v763
      %1928 = vmatpush.bf16.msra.mxu0 %v760
      %1929 = vmatpush.bf16.msra.mxu0 %v757
      %1930 = vmatpush.bf16.msra.mxu0 %v754
      %1931 = vmatpush.bf16.msra.mxu0 %v751
      %1932 = vmatpush.bf16.msra.mxu0 %v748
      %1933 = vmatmul.bf16.gmra.mxu0 %v1872
      %v1934 = vpop.f32.mrf.mxu0
      %v1935 = vadd.f32 0.0, %v1934
      %v1936 = vpop.f32.mrf.mxu0
      %1937 = vdwg.mxu0
      %1938 = vmatpush.bf16.msra.mxu0 %v793
      %1939 = vmatpush.bf16.msra.mxu0 %v790
      %1940 = vmatpush.bf16.msra.mxu0 %v787
      %1941 = vmatpush.bf16.msra.mxu0 %v784
      %1942 = vmatpush.bf16.msra.mxu0 %v781
      %1943 = vmatpush.bf16.msra.mxu0 %v778
      %1944 = vmatpush.bf16.msra.mxu0 %v775
      %1945 = vmatpush.bf16.msra.mxu0 %v772
      %1946 = vmatmul.bf16.gmra.mxu0 %v1619
      %v1947 = vpop.f32.mrf.mxu0
      %v1948 = vadd.f32 %v1935, %v1947
      %v1949 = vpop.f32.mrf.mxu0
      %1950 = vdwg.mxu0
      %v1951 = vadd.f32 %v1896, %v921
      %v1952 = vxor.u32 %v1951, 2147483648
      %v1953 = vmul.f32 %v1952, 1.442695
      %v1954 = vpow.pop %v1953
      %v1955 = vadd.f32 %v1954, 1.0
      %v1956 = vrcp.pop %v1955
      %v1957 = vmul.f32 %v1955, %v1956
      %v1958 = vsub.f32 1.0, %v1957
      %v1959 = vmul.f32 %v1956, %v1958
      %v1960 = vadd.f32 %v1956, %v1959
      %vm1961 = vweird.f32 %v1955
      %vm1962 = vweird.f32 %v1956
      %vm1963 = vmor %vm1961, %vm1962
      %v1964 = vsel %vm1963, %v1956, %v1960
      %v1965 = vand.u32 2147483647, %v1955
      %vm1966 = vcmp.eq.f32.partialorder %v1965, 8.507059e+37
      %v1967 = vand.u32 %v1955, 2147483648
      %v1968 = vor.u32 1.1754944e-38, %v1967
      %v1969 = vsel %vm1966, %v1968, %v1964
      %v1970 = vmul.f32 1.0, %v1969
      %v1971 = vadd.f32 %v1922, %v944
      %v1972 = vxor.u32 %v1971, 2147483648
      %v1973 = vmul.f32 %v1972, 1.442695
      %v1974 = vpow.pop %v1973
      %v1975 = vadd.f32 %v1974, 1.0
      %v1976 = vrcp.pop %v1975
      %v1977 = vmul.f32 %v1975, %v1976
      %v1978 = vsub.f32 1.0, %v1977
      %v1979 = vmul.f32 %v1976, %v1978
      %v1980 = vadd.f32 %v1976, %v1979
      %vm1981 = vweird.f32 %v1975
      %vm1982 = vweird.f32 %v1976
      %vm1983 = vmor %vm1981, %vm1982
      %v1984 = vsel %vm1983, %v1976, %v1980
      %v1985 = vand.u32 2147483647, %v1975
      %vm1986 = vcmp.eq.f32.partialorder %v1985, 8.507059e+37
      %v1987 = vand.u32 %v1975, 2147483648
      %v1988 = vor.u32 1.1754944e-38, %v1987
      %v1989 = vsel %vm1986, %v1988, %v1984
      %v1990 = vmul.f32 1.0, %v1989
      %v1991 = vmul.f32 %v1618, %v1990
      %v1992 = vpack.c.bf16 %v1991, %v1991
      %1993 = vmatpush.bf16.msra.mxu0 %v1007
      %1994 = vmatpush.bf16.msra.mxu0 %v1006
      %1995 = vmatpush.bf16.msra.mxu0 %v1005
      %1996 = vmatpush.bf16.msra.mxu0 %v1004
      %1997 = vmatpush.bf16.msra.mxu0 %v1003
      %1998 = vmatpush.bf16.msra.mxu0 %v1002
      %1999 = vmatpush.bf16.msra.mxu0 %v1001
      %2000 = vmatpush.bf16.msra.mxu0 %v1000
      %2001 = vmatmul.bf16.gmra.mxu0 %v1992
      %v2002 = vpop.f32.mrf.mxu0
      %v2003 = vadd.f32 0.0, %v2002
      %v2004 = vpop.f32.mrf.mxu0
      %2005 = vdwg.mxu0
      %v2006 = vadd.f32 %v1948, %v2003
      %v2007 = vadd.f32 %v2006, %v1031
      %v2008 = vtanh.pop %v2007
      %v2009 = vsub.f32 1.0, %v1970
      %v2010 = vmul.f32 %v1618, %v2009
      %v2011 = vmul.f32 %v2008, %v1970
      %v2012 = vadd.f32 %v2010, %v2011
      %v2013 = vpack.c.bf16 %v2012, %v2012
      %2014 = vmatpush.bf16.msra.mxu0 %v1662
      %2015 = vmatpush.bf16.msra.mxu0 %v1661
      %2016 = vmatpush.bf16.msra.mxu0 %v1660
      %2017 = vmatpush.bf16.msra.mxu0 %v1659
      %2018 = vmatpush.bf16.msra.mxu0 %v1658
      %2019 = vmatpush.bf16.msra.mxu0 %v1657
      %2020 = vmatpush.bf16.msra.mxu0 %v1656
      %2021 = vmatpush.bf16.msra.mxu0 %v1655
      %2022 = vmatmul.bf16.gmra.mxu0 %v2013
      %v2023 = vpop.f32.mrf.mxu0
      %v2024 = vadd.f32 %v1621, %v2023
      %v2025 = vpop.f32.mrf.mxu0
      %2026 = vdwg.mxu0
      %v2027 = vmax.f32 %v2024, 0.0
      %v2028 = vpack.c.bf16 %v2027, %v2027
      %2029 = vmatpush.bf16.msra.mxu0 %v1728
      %2030 = vmatpush.bf16.msra.mxu0 %v1727
      %2031 = vmatpush.bf16.msra.mxu0 %v1726
      %2032 = vmatpush.bf16.msra.mxu0 %v1725
      %2033 = vmatpush.bf16.msra.mxu0 %v1724
      %2034 = vmatpush.bf16.msra.mxu0 %v1723
      %2035 = vmatpush.bf16.msra.mxu0 %v1722
      %2036 = vmatpush.bf16.msra.mxu0 %v1721
      %2037 = vmatmul.bf16.gmra.mxu0 %v2028
      %v2038 = vpop.f32.mrf.mxu0
      %v2039 = vadd.f32 %v1687, %v2038
      %v2040 = vpop.f32.mrf.mxu0
      %2041 = vdwg.mxu0
      %2042 = vmax.xlane.f32.xlu0 %v2039
      %v2043 = vpop.xlane.xlu0 %2042
      %v2044 = vsub.f32 %v2039, %v2043
      %v2045 = vmul.f32 %v2044, 1.442695
      %v2046 = vpow.pop %v2045
      %2047 = vadd.xlane.f32.xlu0 %v2046
      %v2048 = vpop.xlane.xlu0 %2047
      %v2049 = vpack.c.bf16 %v2046, %v2046
      %2050 = vmatpush.bf16.msra.mxu0 %v1797
      %2051 = vmatpush.bf16.msra.mxu0 %v1796
      %2052 = vmatpush.bf16.msra.mxu0 %v1795
      %2053 = vmatpush.bf16.msra.mxu0 %v1794
      %2054 = vmatpush.bf16.msra.mxu0 %v1793
      %2055 = vmatpush.bf16.msra.mxu0 %v1792
      %2056 = vmatpush.bf16.msra.mxu0 %v1791
      %2057 = vmatpush.bf16.msra.mxu0 %v1790
      %2058 = vmatmul.bf16.gmra.mxu0 %v2049
      %v2059 = vpop.f32.mrf.mxu0
      %v2060 = vadd.f32 0.0, %v2059
      %v2061 = vpop.f32.mrf.mxu0
      %2062 = vdwg.mxu0
      %v2063 = vrcp.pop %v2048
      %v2064 = vmul.f32 %v2060, %v2063
      %2065 = vmatpush.msra.mxu0 %v582
      %2066 = vmatpush.msra.mxu0 %v581
      %2067 = vmatpush.msra.mxu0 %v580
      %2068 = vmatpush.msra.mxu0 %v579
      %2069 = vmatpush.msra.mxu0 %v578
      %2070 = vmatpush.msra.mxu0 %v577
      %2071 = vmatpush.msra.mxu0 %v576
      %2072 = vmatpush.msra.mxu0 %v575
      %2073 = vmatpush.msra.mxu0 %v574
      %2074 = vmatpush.msra.mxu0 %v573
      %2075 = vmatpush.msra.mxu0 %v572
      %2076 = vmatpush.msra.mxu0 %v571
      %2077 = vmatpush.msra.mxu0 %v570
      %2078 = vmatpush.msra.mxu0 %v569
      %2079 = vmatpush.msra.mxu0 %v568
      %2080 = vmatpush.msra.mxu0 %v567
      %2081 = vmatmul.f32.gmra.mxu0 %v2064
      %v2082 = vpop.f32.mrf.mxu0
      %v2083 = vadd.f32 0.0, %v2082
      %2084 = vdwg.mxu0
      %v2085 = vsel %vm1841, %v2083, -inf
      %2086 = vmax.xlane.f32.xlu0 %v2085
      %v2087 = vpop.xlane.xlu0 %2086
      %v2088 = vsub.f32 %v2083, %v2087
      %v2089 = vmul.f32 %v2088, 1.442695
      %v2090 = vpow.pop %v2089
      %v2091 = vsel %vm1841, %v2090, 0.0
      %2092 = vadd.xlane.f32.xlu0 %v2091
      %v2093 = vpop.xlane.xlu0 %2092
      %v2094 = vlog2.pop %v2093
      %v2095 = vmul.f32 %v2094, 0.6931472
      %v2096 = vadd.f32 %v2095, %v2087
      %v2097 = vadd.s32 %v1857, 8
      %vm2098 = vcmp.eq.s32.totalorder %v1855, %v2097
      %v2099 = vsel %vm2098, %v2083, 0.0
      %v2100 = vsel %vm1841, %v2099, 0.0
      %2101 = vadd.xlane.f32.xlu0 %v2100
      %v2102 = vpop.xlane.xlu0 %2101
      %v2103 = vsub.f32 %v2096, %v2102
      %v2104 = vrot.slane %v2103, 4
      %v2105 = vadd.f32 %v2103, %v2104
      %v2106 = vrot.slane %v2105, 2
      %v2107 = vadd.f32 %v2105, %v2106
      %v2108 = vrot.slane %v2107, 1
      %v2109 = vadd.f32 %v2107, %v2108
      %v2110 = vadd.f32 %v1870, %v2109
      %v2111 = vmax.f32 %v2064, 0.0
      %v2112 = vpack.c.bf16 %v2111, %v2111
      %2113 = vmatpush.bf16.msra.mxu0 %v767
      %2114 = vmatpush.bf16.msra.mxu0 %v764
      %2115 = vmatpush.bf16.msra.mxu0 %v761
      %2116 = vmatpush.bf16.msra.mxu0 %v758
      %2117 = vmatpush.bf16.msra.mxu0 %v755
      %2118 = vmatpush.bf16.msra.mxu0 %v752
      %2119 = vmatpush.bf16.msra.mxu0 %v749
      %2120 = vmatpush.bf16.msra.mxu0 %v746
      %2121 = vmatmul.bf16.gmra.mxu0 %v2112
      %v2122 = vpop.f32.mrf.mxu0
      %v2123 = vadd.f32 0.0, %v2122
      %v2124 = vpop.f32.mrf.mxu0
      %2125 = vdwg.mxu0
      %2126 = vmatpush.bf16.msra.mxu0 %v791
      %2127 = vmatpush.bf16.msra.mxu0 %v788
      %2128 = vmatpush.bf16.msra.mxu0 %v785
      %2129 = vmatpush.bf16.msra.mxu0 %v782
      %2130 = vmatpush.bf16.msra.mxu0 %v779
      %2131 = vmatpush.bf16.msra.mxu0 %v776
      %2132 = vmatpush.bf16.msra.mxu0 %v773
      %2133 = vmatpush.bf16.msra.mxu0 %v770
      %2134 = vmatmul.bf16.gmra.mxu0 %v2013
      %v2135 = vpop.f32.mrf.mxu0
      %v2136 = vadd.f32 %v2123, %v2135
      %v2137 = vpop.f32.mrf.mxu0
      %2138 = vdwg.mxu0
      %2139 = vmatpush.bf16.msra.mxu0 %v768
      %2140 = vmatpush.bf16.msra.mxu0 %v765
      %2141 = vmatpush.bf16.msra.mxu0 %v762
      %2142 = vmatpush.bf16.msra.mxu0 %v759
      %2143 = vmatpush.bf16.msra.mxu0 %v756
      %2144 = vmatpush.bf16.msra.mxu0 %v753
      %2145 = vmatpush.bf16.msra.mxu0 %v750
      %2146 = vmatpush.bf16.msra.mxu0 %v747
      %2147 = vmatmul.bf16.gmra.mxu0 %v2112
      %v2148 = vpop.f32.mrf.mxu0
      %v2149 = vadd.f32 0.0, %v2148
      %v2150 = vpop.f32.mrf.mxu0
      %2151 = vdwg.mxu0
      %2152 = vmatpush.bf16.msra.mxu0 %v792
      %2153 = vmatpush.bf16.msra.mxu0 %v789
      %2154 = vmatpush.bf16.msra.mxu0 %v786
      %2155 = vmatpush.bf16.msra.mxu0 %v783
      %2156 = vmatpush.bf16.msra.mxu0 %v780
      %2157 = vmatpush.bf16.msra.mxu0 %v777
      %2158 = vmatpush.bf16.msra.mxu0 %v774
      %2159 = vmatpush.bf16.msra.mxu0 %v771
      %2160 = vmatmul.bf16.gmra.mxu0 %v2013
      %v2161 = vpop.f32.mrf.mxu0
      %v2162 = vadd.f32 %v2149, %v2161
      %v2163 = vpop.f32.mrf.mxu0
      %2164 = vdwg.mxu0
      %2165 = vmatpush.bf16.msra.mxu0 %v769
      %2166 = vmatpush.bf16.msra.mxu0 %v766
      %2167 = vmatpush.bf16.msra.mxu0 %v763
      %2168 = vmatpush.bf16.msra.mxu0 %v760
      %2169 = vmatpush.bf16.msra.mxu0 %v757
      %2170 = vmatpush.bf16.msra.mxu0 %v754
      %2171 = vmatpush.bf16.msra.mxu0 %v751
      %2172 = vmatpush.bf16.msra.mxu0 %v748
      %2173 = vmatmul.bf16.gmra.mxu0 %v2112
      %v2174 = vpop.f32.mrf.mxu0
      %v2175 = vadd.f32 0.0, %v2174
      %v2176 = vpop.f32.mrf.mxu0
      %2177 = vdwg.mxu0
      %2178 = vmatpush.bf16.msra.mxu0 %v793
      %2179 = vmatpush.bf16.msra.mxu0 %v790
      %2180 = vmatpush.bf16.msra.mxu0 %v787
      %2181 = vmatpush.bf16.msra.mxu0 %v784
      %2182 = vmatpush.bf16.msra.mxu0 %v781
      %2183 = vmatpush.bf16.msra.mxu0 %v778
      %2184 = vmatpush.bf16.msra.mxu0 %v775
      %2185 = vmatpush.bf16.msra.mxu0 %v772
      %2186 = vmatmul.bf16.gmra.mxu0 %v2013
      %v2187 = vpop.f32.mrf.mxu0
      %v2188 = vadd.f32 %v2175, %v2187
      %v2189 = vpop.f32.mrf.mxu0
      %2190 = vdwg.mxu0
      %v2191 = vadd.f32 %v2136, %v921
      %v2192 = vxor.u32 %v2191, 2147483648
      %v2193 = vmul.f32 %v2192, 1.442695
      %v2194 = vpow.pop %v2193
      %v2195 = vadd.f32 %v2194, 1.0
      %v2196 = vrcp.pop %v2195
      %v2197 = vmul.f32 %v2195, %v2196
      %v2198 = vsub.f32 1.0, %v2197
      %v2199 = vmul.f32 %v2196, %v2198
      %v2200 = vadd.f32 %v2196, %v2199
      %vm2201 = vweird.f32 %v2195
      %vm2202 = vweird.f32 %v2196
      %vm2203 = vmor %vm2201, %vm2202
      %v2204 = vsel %vm2203, %v2196, %v2200
      %v2205 = vand.u32 2147483647, %v2195
      %vm2206 = vcmp.eq.f32.partialorder %v2205, 8.507059e+37
      %v2207 = vand.u32 %v2195, 2147483648
      %v2208 = vor.u32 1.1754944e-38, %v2207
      %v2209 = vsel %vm2206, %v2208, %v2204
      %v2210 = vmul.f32 1.0, %v2209
      %v2211 = vadd.f32 %v2162, %v944
      %v2212 = vxor.u32 %v2211, 2147483648
      %v2213 = vmul.f32 %v2212, 1.442695
      %v2214 = vpow.pop %v2213
      %v2215 = vadd.f32 %v2214, 1.0
      %v2216 = vrcp.pop %v2215
      %v2217 = vmul.f32 %v2215, %v2216
      %v2218 = vsub.f32 1.0, %v2217
      %v2219 = vmul.f32 %v2216, %v2218
      %v2220 = vadd.f32 %v2216, %v2219
      %vm2221 = vweird.f32 %v2215
      %vm2222 = vweird.f32 %v2216
      %vm2223 = vmor %vm2221, %vm2222
      %v2224 = vsel %vm2223, %v2216, %v2220
      %v2225 = vand.u32 2147483647, %v2215
      %vm2226 = vcmp.eq.f32.partialorder %v2225, 8.507059e+37
      %v2227 = vand.u32 %v2215, 2147483648
      %v2228 = vor.u32 1.1754944e-38, %v2227
      %v2229 = vsel %vm2226, %v2228, %v2224
      %v2230 = vmul.f32 1.0, %v2229
      %v2231 = vmul.f32 %v2012, %v2230
      %v2232 = vpack.c.bf16 %v2231, %v2231
      %2233 = vmatpush.bf16.msra.mxu0 %v1007
      %2234 = vmatpush.bf16.msra.mxu0 %v1006
      %2235 = vmatpush.bf16.msra.mxu0 %v1005
      %2236 = vmatpush.bf16.msra.mxu0 %v1004
      %2237 = vmatpush.bf16.msra.mxu0 %v1003
      %2238 = vmatpush.bf16.msra.mxu0 %v1002
      %2239 = vmatpush.bf16.msra.mxu0 %v1001
      %2240 = vmatpush.bf16.msra.mxu0 %v1000
      %2241 = vmatmul.bf16.gmra.mxu0 %v2232
      %v2242 = vpop.f32.mrf.mxu0
      %v2243 = vadd.f32 0.0, %v2242
      %v2244 = vpop.f32.mrf.mxu0
      %2245 = vdwg.mxu0
      %v2246 = vadd.f32 %v2188, %v2243
      %v2247 = vadd.f32 %v2246, %v1031
      %v2248 = vtanh.pop %v2247
      %v2249 = vsub.f32 1.0, %v2210
      %v2250 = vmul.f32 %v2012, %v2249
      %v2251 = vmul.f32 %v2248, %v2210
      %v2252 = vadd.f32 %v2250, %v2251
      %v2253 = vpack.c.bf16 %v2252, %v2252
      %2254 = vmatpush.bf16.msra.mxu0 %v1662
      %2255 = vmatpush.bf16.msra.mxu0 %v1661
      %2256 = vmatpush.bf16.msra.mxu0 %v1660
      %2257 = vmatpush.bf16.msra.mxu0 %v1659
      %2258 = vmatpush.bf16.msra.mxu0 %v1658
      %2259 = vmatpush.bf16.msra.mxu0 %v1657
      %2260 = vmatpush.bf16.msra.mxu0 %v1656
      %2261 = vmatpush.bf16.msra.mxu0 %v1655
      %2262 = vmatmul.bf16.gmra.mxu0 %v2253
      %v2263 = vpop.f32.mrf.mxu0
      %v2264 = vadd.f32 %v1621, %v2263
      %v2265 = vpop.f32.mrf.mxu0
      %2266 = vdwg.mxu0
      %v2267 = vmax.f32 %v2264, 0.0
      %v2268 = vpack.c.bf16 %v2267, %v2267
      %2269 = vmatpush.bf16.msra.mxu0 %v1728
      %2270 = vmatpush.bf16.msra.mxu0 %v1727
      %2271 = vmatpush.bf16.msra.mxu0 %v1726
      %2272 = vmatpush.bf16.msra.mxu0 %v1725
      %2273 = vmatpush.bf16.msra.mxu0 %v1724
      %2274 = vmatpush.bf16.msra.mxu0 %v1723
      %2275 = vmatpush.bf16.msra.mxu0 %v1722
      %2276 = vmatpush.bf16.msra.mxu0 %v1721
      %2277 = vmatmul.bf16.gmra.mxu0 %v2268
      %v2278 = vpop.f32.mrf.mxu0
      %v2279 = vadd.f32 %v1687, %v2278
      %v2280 = vpop.f32.mrf.mxu0
      %2281 = vdwg.mxu0
      %2282 = vmax.xlane.f32.xlu0 %v2279
      %v2283 = vpop.xlane.xlu0 %2282
      %v2284 = vsub.f32 %v2279, %v2283
      %v2285 = vmul.f32 %v2284, 1.442695
      %v2286 = vpow.pop %v2285
      %2287 = vadd.xlane.f32.xlu0 %v2286
      %v2288 = vpop.xlane.xlu0 %2287
      %v2289 = vpack.c.bf16 %v2286, %v2286
      %2290 = vmatpush.bf16.msra.mxu0 %v1797
      %2291 = vmatpush.bf16.msra.mxu0 %v1796
      %2292 = vmatpush.bf16.msra.mxu0 %v1795
      %2293 = vmatpush.bf16.msra.mxu0 %v1794
      %2294 = vmatpush.bf16.msra.mxu0 %v1793
      %2295 = vmatpush.bf16.msra.mxu0 %v1792
      %2296 = vmatpush.bf16.msra.mxu0 %v1791
      %2297 = vmatpush.bf16.msra.mxu0 %v1790
      %2298 = vmatmul.bf16.gmra.mxu0 %v2289
      %v2299 = vpop.f32.mrf.mxu0
      %v2300 = vadd.f32 0.0, %v2299
      %v2301 = vpop.f32.mrf.mxu0
      %2302 = vdwg.mxu0
      %v2303 = vrcp.pop %v2288
      %v2304 = vmul.f32 %v2300, %v2303
      %2305 = vmatpush.msra.mxu0 %v582
      %2306 = vmatpush.msra.mxu0 %v581
      %2307 = vmatpush.msra.mxu0 %v580
      %2308 = vmatpush.msra.mxu0 %v579
      %2309 = vmatpush.msra.mxu0 %v578
      %2310 = vmatpush.msra.mxu0 %v577
      %2311 = vmatpush.msra.mxu0 %v576
      %2312 = vmatpush.msra.mxu0 %v575
      %2313 = vmatpush.msra.mxu0 %v574
      %2314 = vmatpush.msra.mxu0 %v573
      %2315 = vmatpush.msra.mxu0 %v572
      %2316 = vmatpush.msra.mxu0 %v571
      %2317 = vmatpush.msra.mxu0 %v570
      %2318 = vmatpush.msra.mxu0 %v569
      %2319 = vmatpush.msra.mxu0 %v568
      %2320 = vmatpush.msra.mxu0 %v567
      %2321 = vmatmul.f32.gmra.mxu0 %v2304
      %v2322 = vpop.f32.mrf.mxu0
      %v2323 = vadd.f32 0.0, %v2322
      %2324 = vdwg.mxu0
      %v2325 = vsel %vm1841, %v2323, -inf
      %2326 = vmax.xlane.f32.xlu0 %v2325
      %v2327 = vpop.xlane.xlu0 %2326
      %v2328 = vsub.f32 %v2323, %v2327
      %v2329 = vmul.f32 %v2328, 1.442695
      %v2330 = vpow.pop %v2329
      %v2331 = vsel %vm1841, %v2330, 0.0
      %2332 = vadd.xlane.f32.xlu0 %v2331
      %v2333 = vpop.xlane.xlu0 %2332
      %v2334 = vlog2.pop %v2333
      %v2335 = vmul.f32 %v2334, 0.6931472
      %v2336 = vadd.f32 %v2335, %v2327
      %v2337 = vadd.s32 %v1857, 16
      %vm2338 = vcmp.eq.s32.totalorder %v1855, %v2337
      %v2339 = vsel %vm2338, %v2323, 0.0
      %v2340 = vsel %vm1841, %v2339, 0.0
      %2341 = vadd.xlane.f32.xlu0 %v2340
      %v2342 = vpop.xlane.xlu0 %2341
      %v2343 = vsub.f32 %v2336, %v2342
      %v2344 = vrot.slane %v2343, 4
      %v2345 = vadd.f32 %v2343, %v2344
      %v2346 = vrot.slane %v2345, 2
      %v2347 = vadd.f32 %v2345, %v2346
      %v2348 = vrot.slane %v2347, 1
      %v2349 = vadd.f32 %v2347, %v2348
      %v2350 = vadd.f32 %v2110, %v2349
      %v2351 = vrcp.pop 24.0
      %v2352 = vmul.f32 24.0, %v2351
      %v2353 = vsub.f32 1.0, %v2352
      %v2354 = vmul.f32 %v2351, %v2353
      %v2355 = vadd.f32 %v2351, %v2354
      %vm2356 = vweird.f32 %v2351
      %v2357 = vsel %vm2356, %v2351, %v2355
      %v2358 = vmul.f32 %v2350, %v2357
      %vm2359 = vcmask 0
      %2360 = vst.msk [vmem:[%s432] sm:$0x1] %vm2359, %v2358
      %p2361 = scmp.lt.s32.totalorder %s21, 1
      %s2362 = scalar_select %p2361, %s21, 1
      %s2363 = scalar_lea.vmem %s10, %s2362
      // Predicated region
      $region61: #{_lambda_.3} parent=59 // pred_check
        %p2364 = pneg %p274
      $region62: #{_lambda_.3} parent=59 // pred_check_branch
        %2366 = sbr.rel (%p2364) target = $region64
      $region63: #{_lambda_.3} parent=59 // pred_region
        _
      $region64: #{_lambda_.3} parent=59 // pred_fallthru
        _
    $region60: #{_lambda_.3} parent=5 // pred_fallthru
      _
    %p2367 = scmp.le.s32.totalorder 2, %s16
    // Predicated region
    $region65: #{_lambda_.3} parent=5 // pred_check
      %p2368 = pneg %p2367
    $region66: #{_lambda_.3} parent=5 // pred_check_branch
      %2370 = sbr.rel (%p2368) target = $region68
    $region67: #{_lambda_.3} parent=5 // pred_region
      %s2371 = ssub.s32 %s16, 2
      // Predicated region
      $region69: #{_lambda_.3} parent=67 // pred_check
        %p2372 = pneg %p280
      $region70: #{_lambda_.3} parent=67 // pred_check_branch
        %2374 = sbr.rel (%p2372) target = $region72
      $region71: #{_lambda_.3} parent=67 // pred_region
        %p2375 = scmp.lt.s32.totalorder %s22, 1
        %s2376 = scalar_select %p2375, %s22, 1
        %s2377 = scalar_lea.vmem %s10, %s2376
      $region72: #{_lambda_.3} parent=67 // pred_fallthru
        _
    $region68: #{_lambda_.3} parent=5 // pred_fallthru
      _
  $region6: #{_lambda_.3} parent=0 // loop_footer
    %s20 = sadd.s32 1, %s16
  $region7: #{_lambda_.3} parent=0 // loop_footer_branch
    %15 = sbr.rel target = $region3
  $region8: #{_lambda_.3} parent=0 // loop_exit
    _

</llo_original>
